<compile_context>
chip_gen: v7x
topology: tpu7x:2x2x1
jax: 0.10.0
libtpu: 0.0.40
codegen_flags: <defaults>
</compile_context>

<pallas_src>
import jax
import jax.numpy as jnp
import numpy as np
from jax.experimental import pallas as pl
from jax.experimental.pallas import tpu as pltpu

# ----------------------------- static shapes --------------------------------
H0, W0 = 28, 28                         # input spatial (pinned by fc1 = 64*3*3)
C1, H1, W1 = 24, 26, 26                 # conv1 out
H1P, W1P = 13, 13                       # pool1 out
C2, H2, W2 = 48, 11, 11                 # conv2 out
H2P, W2P = 5, 5                         # pool2 out
C3, H3, W3 = 64, 3, 3                   # conv3 out
L1, L1P = W1 * C1, W1P * C1             # 624, 312
L2, L2P = W2 * C2, W2P * C2             # 528, 240
L3 = W3 * C3                            # 192
FEAT, HID, NCLS = H3 * L3, 576, 26      # 576, 576, 26


# ------------------------- host-side weight lowering -------------------------
def _lower_conv(w_oihw, win):
    """Lower an OIHW 3x3 'valid' conv to 3 dense (Win*Cin, Wout*Cout) matrices.

    With activations stored as 2-D (H, W*Cin) slabs, the conv becomes
        out2d = sum_kh  x2d[kh:kh+Hout, :] @ A[kh]
    i.e. 3 whole-image MXU matmuls (zeros in A are redundant FLOPs, but the
    network is tiny and the MXU is otherwise idle -- this removes all per-row
    loops and keeps every operand lane-dense).
    """
    co, ci, kh_sz, kw_sz = w_oihw.shape
    wout = win - kw_sz + 1
    a = np.zeros((kh_sz, win * ci, wout * co), np.float32)
    for kh in range(kh_sz):
        for kw in range(kw_sz):
            blk = np.asarray(w_oihw[:, :, kh, kw], np.float32).T   # (Cin, Cout)
            for w in range(wout):
                a[kh, (w + kw) * ci:(w + kw + 1) * ci,
                  w * co:(w + 1) * co] = blk
    return a


def _pool_selectors(hin, win, c):
    """0/1 matrices that downsample the pairwise-max rows / column-blocks."""
    hp, wp = hin // 2, win // 2            # PyTorch MaxPool2d(2) floor mode
    rs = np.zeros((hp, hin - 1), np.float32)
    rs[np.arange(hp), 2 * np.arange(hp)] = 1.0
    cs = np.zeros(((win - 1) * c, wp * c), np.float32)
    for j in range(wp):
        cs[(2 * j) * c + np.arange(c), j * c + np.arange(c)] = 1.0
    return rs, cs


def prepare_params(tp):
    """One-time host-side re-layout of the PyTorch-layout parameters."""
    w1, b1 = np.asarray(tp["w1"], np.float32), np.asarray(tp["b1"], np.float32)
    w2, b2 = np.asarray(tp["w2"], np.float32), np.asarray(tp["b2"], np.float32)
    w3, b3 = np.asarray(tp["w3"], np.float32), np.asarray(tp["b3"], np.float32)
    wf1, bf1 = np.asarray(tp["wf1"], np.float32), np.asarray(tp["bf1"], np.float32)
    wf2, bf2 = np.asarray(tp["wf2"], np.float32), np.asarray(tp["bf2"], np.float32)

    a1 = _lower_conv(w1, W0)               # (3, 28, 624)
    a2 = _lower_conv(w2, W1P)              # (3, 312, 528)
    a3 = _lower_conv(w3, W2P)              # (3, 240, 192)
    rs1, cs1 = _pool_selectors(H1, W1, C1)  # (13,25), (600,312)
    rs2, cs2 = _pool_selectors(H2, W2, C2)  # (5,10),  (480,240)

    # fc1 column permutation: torch flattens NCHW (c*9 + h*3 + w); the kernel
    # produces features in NHWC order (h*192 + w*64 + c).
    hh, ww, cc = np.meshgrid(np.arange(H3), np.arange(W3), np.arange(C3),
                             indexing="ij")
    perm = (cc * (H3 * W3) + hh * W3 + ww).reshape(-1)
    wf1_k = np.ascontiguousarray(wf1[:, perm].T)        # (576_in_nhwc, 576_out)

    return {
        "a1": jnp.asarray(a1), "b1r": jnp.asarray(np.tile(b1, W1)[None, :]),
        "rs1": jnp.asarray(rs1), "cs1": jnp.asarray(cs1),
        "a2": jnp.asarray(a2), "b2r": jnp.asarray(np.tile(b2, W2)[None, :]),
        "rs2": jnp.asarray(rs2), "cs2": jnp.asarray(cs2),
        "a3": jnp.asarray(a3), "b3r": jnp.asarray(np.tile(b3, W3)[None, :]),
        "wf1": jnp.asarray(wf1_k), "bf1": jnp.asarray(bf1[None, :]),
        "wf2": jnp.asarray(np.ascontiguousarray(wf2.T)),  # (576, 26)
        "bf2": jnp.asarray(bf2[None, :]),
    }


# ------------------------------ fused kernel --------------------------------
def _e2e_fused_kernel(x_ref, a1_ref, b1_ref, rs1_ref, cs1_ref,
                      a2_ref, b2_ref, rs2_ref, cs2_ref,
                      a3_ref, b3_ref, wf1_ref, bf1_ref, wf2_ref, bf2_ref,
                      o_ref):
    f32 = jnp.float32

    def mm(a, b):
        # Single-pass MXU matmul (DEFAULT precision), f32 accumulation.
        return jnp.dot(a, b, preferred_element_type=f32)

    def conv3x3(x2d, a_ref, bias_ref, hout):
        # x2d: (Hin, Win*Cin) -> (Hout, Wout*Cout); 3 whole-image matmuls.
        y = mm(x2d[0:hout, :], a_ref[0])
        y = y + mm(x2d[1:hout + 1, :], a_ref[1])
        y = y + mm(x2d[2:hout + 2, :], a_ref[2])
        return jnp.maximum(y + bias_ref[...], 0.0)       # fused bias + ReLU

    def pool2x2(x2d, rs_ref, cs_ref, c):
        # Adjacent-row max + 0/1 row-downsample matmul, then adjacent-column
        # (channel-block) max + 0/1 column-downsample matmul.  Fully
        # vectorized; no per-row/column loops, no strided slices.
        hin, wc = x2d.shape
        a = jnp.maximum(x2d[0:hin - 1, :], x2d[1:hin, :])          # (Hin-1, W*C)
        b = mm(rs_ref[...], a)                                     # (Hp,   W*C)
        m = jnp.maximum(b[:, 0:wc - c], b[:, c:wc])                # (Hp,(W-1)*C)
        return mm(m, cs_ref[...])                                  # (Hp,  Wp*C)

    x = x_ref[0]                                       # (28, 28)
    act = conv3x3(x, a1_ref, b1_ref, H1)               # (26, 624)
    act = pool2x2(act, rs1_ref, cs1_ref, C1)           # (13, 312)
    act = conv3x3(act, a2_ref, b2_ref, H2)             # (11, 528)
    act = pool2x2(act, rs2_ref, cs2_ref, C2)           # (5, 240)
    act = conv3x3(act, a3_ref, b3_ref, H3)             # (3, 192)
    # TODO(synk): Dropout2d(0.6) is inference-mode identity; training-mode
    # channel dropout is not implemented in the kernel.

    # fc1: consume the (3, 192) NHWC slab row-by-row (fc1 weight rows were
    # pre-permuted on the host to NHWC flatten order) -- no in-kernel reshape.
    h = bf1_ref[...]                                             # (1, 576)
    h = h + mm(act[0:1, :], wf1_ref[0 * L3:1 * L3, :])
    h = h + mm(act[1:2, :], wf1_ref[1 * L3:2 * L3, :])
    h = h + mm(act[2:3, :], wf1_ref[2 * L3:3 * L3, :])
    h = jnp.maximum(h, 0.0)

    z = jnp.maximum(mm(h, wf2_ref[...]) + bf2_ref[...], 0.0)     # (1, 26)
    zmax = jnp.max(z, axis=1, keepdims=True)
    ez = jnp.exp(z - zmax)
    o_ref[0] = z - zmax - jnp.log(jnp.sum(ez, axis=1, keepdims=True))


def e2e_forward_pallas(x_nchw, p):
    n = x_nchw.shape[0]
    assert x_nchw.shape[1:] == (1, H0, W0), "fc1 pins the input to (N,1,28,28)"
    # Cin == 1, so NCHW -> (N, H, W) is a pure relabel (reshape, no transpose).
    x2d = x_nchw.reshape(n, H0, W0).astype(jnp.float32)

    const2 = lambda i: (0, 0)
    const3 = lambda i: (0, 0, 0)
    out = pl.pallas_call(
        _e2e_fused_kernel,
        out_shape=jax.ShapeDtypeStruct((n, 1, NCLS), jnp.float32),
        grid=(n,),
        in_specs=[
            pl.BlockSpec((1, H0, W0), lambda i: (i, 0, 0)),       # image
            pl.BlockSpec((3, W0, L1), const3),                    # conv1 lowered
            pl.BlockSpec((1, L1), const2),                        # bias1 row
            pl.BlockSpec((H1P, H1 - 1), const2),                  # pool1 row sel
            pl.BlockSpec(((W1 - 1) * C1, L1P), const2),           # pool1 col sel
            pl.BlockSpec((3, L1P, L2), const3),                   # conv2 lowered
            pl.BlockSpec((1, L2), const2),                        # bias2 row
            pl.BlockSpec((H2P, H2 - 1), const2),                  # pool2 row sel
            pl.BlockSpec(((W2 - 1) * C2, L2P), const2),           # pool2 col sel
            pl.BlockSpec((3, L2P, L3), const3),                   # conv3 lowered
            pl.BlockSpec((1, L3), const2),                        # bias3 row
            pl.BlockSpec((FEAT, HID), const2),                    # fc1 (in,out)
            pl.BlockSpec((1, HID), const2),                       # fc1 bias
            pl.BlockSpec((HID, NCLS), const2),                    # fc2 (in,out)
            pl.BlockSpec((1, NCLS), const2),                      # fc2 bias
        ],
        out_specs=pl.BlockSpec((1, 1, NCLS), lambda i: (i, 0, 0)),
        compiler_params=pltpu.CompilerParams(
            dimension_semantics=("parallel",),
            vmem_limit_bytes=32 * 1024 * 1024),
    )(x2d, p["a1"], p["b1r"], p["rs1"], p["cs1"],
      p["a2"], p["b2r"], p["rs2"], p["cs2"],
      p["a3"], p["b3r"], p["wf1"], p["bf1"], p["wf2"], p["bf2"])
    return out.reshape(n, NCLS)


# ------------------------ pure-JAX reference (f32) ---------------------------
def e2e_forward_reference(x_nchw, tp):
    """Replica of the PyTorch module (NCHW / OIHW / torch flatten), HIGHEST prec."""
    prec = jax.lax.Precision.HIGHEST

    def conv(x, w, b):
        y = jax.lax.conv_general_dilated(
            x, w, window_strides=(1, 1), padding="VALID",
            dimension_numbers=("NCHW", "OIHW", "NCHW"), precision=prec)
        return y + b[None, :, None, None]

    def pool(x):
        return jax.lax.reduce_window(
            x, -jnp.inf, jax.lax.max,
            window_dimensions=(1, 1, 2, 2), window_strides=(1, 1, 2, 2),
            padding="VALID")

    relu = lambda v: jnp.maximum(v, 0.0)
    x = pool(relu(conv(x_nchw, tp["w1"], tp["b1"])))
    x = pool(relu(conv(x, tp["w2"], tp["b2"])))
    x = relu(conv(x, tp["w3"], tp["b3"]))
    x = x.reshape(x.shape[0], -1)                      # torch .view (NCHW order)
    x = relu(jnp.dot(x, tp["wf1"].T, precision=prec) + tp["bf1"])
    x = relu(jnp.dot(x, tp["wf2"].T, precision=prec) + tp["bf2"])
    return jax.nn.log_softmax(x, axis=1)


# ---------------------------------- main -------------------------------------
if __name__ == "__main__":
    key = jax.random.PRNGKey(0)
    ks = jax.random.split(key, 11)
    n = 2
    x = jax.random.normal(ks[0], (n, 1, H0, W0), jnp.float32)

    # Parameters in PyTorch layouts (OIHW conv weights, (out, in) Linear).
    tp = {
        "w1": jax.random.normal(ks[1], (24, 1, 3, 3), jnp.float32) * 0.30,
        "b1": jax.random.normal(ks[2], (24,), jnp.float32) * 0.10,
        "w2": jax.random.normal(ks[3], (48, 24, 3, 3), jnp.float32) * 0.07,
        "b2": jax.random.normal(ks[4], (48,), jnp.float32) * 0.10,
        "w3": jax.random.normal(ks[5], (64, 48, 3, 3), jnp.float32) * 0.05,
        "b3": jax.random.normal(ks[6], (64,), jnp.float32) * 0.10,
        "wf1": jax.random.normal(ks[7], (576, 576), jnp.float32) * 0.03,
        "bf1": jax.random.normal(ks[8], (576,), jnp.float32) * 0.10,
        "wf2": jax.random.normal(ks[9], (26, 576), jnp.float32) * 0.03,
        "bf2": jax.random.normal(ks[10], (26,), jnp.float32) * 0.10,
    }

    p = prepare_params(tp)                      # one-time host-side re-layout
    fwd = jax.jit(e2e_forward_pallas)
    out = jax.block_until_ready(fwd(x, p))

    ref = jax.block_until_ready(e2e_forward_reference(x, tp))
    out_np, ref_np = np.asarray(out), np.asarray(ref)
    err = float(np.max(np.abs(out_np - ref_np)))
    # Kernel dots run at DEFAULT (single-pass) MXU precision vs a HIGHEST-
    # precision f32 reference, so allow bf16-level rounding accumulated over
    # ~7 GEMM stages; any real layout/indexing bug is orders of magnitude off.
    if not np.allclose(out_np, ref_np, atol=5e-2, rtol=5e-2):
        raise SystemExit(f"Pallas output mismatch vs reference: max|err|={err:.3e}")
    print("KERNEL_OK")
</pallas_src>

<mosaic_0001>
module attributes {stable_mosaic.version = 11 : i64} {
  func.func @_e2e_fused_kernel(%arg0: i32, %arg1: memref<1x28x28xf32, #tpu.memory_space<vmem>>, %arg2: memref<3x28x624xf32, #tpu.memory_space<vmem>>, %arg3: memref<1x624xf32, #tpu.memory_space<vmem>>, %arg4: memref<13x25xf32, #tpu.memory_space<vmem>>, %arg5: memref<600x312xf32, #tpu.memory_space<vmem>>, %arg6: memref<3x312x528xf32, #tpu.memory_space<vmem>>, %arg7: memref<1x528xf32, #tpu.memory_space<vmem>>, %arg8: memref<5x10xf32, #tpu.memory_space<vmem>>, %arg9: memref<480x240xf32, #tpu.memory_space<vmem>>, %arg10: memref<3x240x192xf32, #tpu.memory_space<vmem>>, %arg11: memref<1x192xf32, #tpu.memory_space<vmem>>, %arg12: memref<576x576xf32, #tpu.memory_space<vmem>>, %arg13: memref<1x576xf32, #tpu.memory_space<vmem>>, %arg14: memref<576x26xf32, #tpu.memory_space<vmem>>, %arg15: memref<1x26xf32, #tpu.memory_space<vmem>>, %arg16: memref<1x1x26xf32, #tpu.memory_space<vmem>>) attributes {dimension_semantics = [#tpu.dimension_semantics<parallel>], iteration_bounds = array<i64: 2>, scalar_prefetch = 0 : i64, scratch_operands = 0 : i64, tpu.core_type = #tpu.core_type<tc>, window_params = [{transform_indices = @transform_0, window_bounds = array<i64: 1, 28, 28>}, {pipeline_mode = #tpu.pipeline_mode<synchronous>, transform_indices = @transform_1, window_bounds = array<i64: 3, 28, 624>}, {pipeline_mode = #tpu.pipeline_mode<synchronous>, transform_indices = @transform_2, window_bounds = array<i64: 1, 624>}, {pipeline_mode = #tpu.pipeline_mode<synchronous>, transform_indices = @transform_3, window_bounds = array<i64: 13, 25>}, {pipeline_mode = #tpu.pipeline_mode<synchronous>, transform_indices = @transform_4, window_bounds = array<i64: 600, 312>}, {pipeline_mode = #tpu.pipeline_mode<synchronous>, transform_indices = @transform_5, window_bounds = array<i64: 3, 312, 528>}, {pipeline_mode = #tpu.pipeline_mode<synchronous>, transform_indices = @transform_6, window_bounds = array<i64: 1, 528>}, {pipeline_mode = #tpu.pipeline_mode<synchronous>, transform_indices = @transform_7, window_bounds = array<i64: 5, 10>}, {pipeline_mode = #tpu.pipeline_mode<synchronous>, transform_indices = @transform_8, window_bounds = array<i64: 480, 240>}, {pipeline_mode = #tpu.pipeline_mode<synchronous>, transform_indices = @transform_9, window_bounds = array<i64: 3, 240, 192>}, {pipeline_mode = #tpu.pipeline_mode<synchronous>, transform_indices = @transform_10, window_bounds = array<i64: 1, 192>}, {pipeline_mode = #tpu.pipeline_mode<synchronous>, transform_indices = @transform_11, window_bounds = array<i64: 576, 576>}, {pipeline_mode = #tpu.pipeline_mode<synchronous>, transform_indices = @transform_12, window_bounds = array<i64: 1, 576>}, {pipeline_mode = #tpu.pipeline_mode<synchronous>, transform_indices = @transform_13, window_bounds = array<i64: 576, 26>}, {pipeline_mode = #tpu.pipeline_mode<synchronous>, transform_indices = @transform_14, window_bounds = array<i64: 1, 26>}, {transform_indices = @transform_15, window_bounds = array<i64: 1, 1, 26>}]} {
    %c0 = arith.constant 0 : index
    %c0_0 = arith.constant 0 : index
    %c0_1 = arith.constant 0 : index
    %0 = vector.load %arg1[%c0, %c0_0, %c0_1] : memref<1x28x28xf32, #tpu.memory_space<vmem>>, vector<1x28x28xf32>
    %1 = vector.shape_cast %0 : vector<1x28x28xf32> to vector<28x28xf32>
    %2 = vector.extract_strided_slice %1 {offsets = [0, 0], sizes = [26, 28], strides = [1, 1]} : vector<28x28xf32> to vector<26x28xf32>
    %c0_2 = arith.constant 0 : index
    %c0_3 = arith.constant 0 : index
    %c0_4 = arith.constant 0 : index
    %3 = vector.load %arg2[%c0_2, %c0_3, %c0_4] : memref<3x28x624xf32, #tpu.memory_space<vmem>>, vector<1x28x624xf32>
    %4 = vector.shape_cast %3 : vector<1x28x624xf32> to vector<28x624xf32>
    %cst = arith.constant dense<0.000000e+00> : vector<26x624xf32>
    %5 = tpu.matmul %2, %4, %cst {dimension_numbers = #tpu.dot_dimension_numbers<[1], [0], [0], [1], [0, 0, 1, 1], [], []>} : vector<26x28xf32>, vector<28x624xf32>, vector<26x624xf32> -> vector<26x624xf32>
    %6 = vector.extract_strided_slice %1 {offsets = [1, 0], sizes = [26, 28], strides = [1, 1]} : vector<28x28xf32> to vector<26x28xf32>
    %c1 = arith.constant 1 : index
    %c0_5 = arith.constant 0 : index
    %c0_6 = arith.constant 0 : index
    %7 = vector.load %arg2[%c1, %c0_5, %c0_6] : memref<3x28x624xf32, #tpu.memory_space<vmem>>, vector<1x28x624xf32>
    %8 = vector.shape_cast %7 : vector<1x28x624xf32> to vector<28x624xf32>
    %cst_7 = arith.constant dense<0.000000e+00> : vector<26x624xf32>
    %9 = tpu.matmul %6, %8, %cst_7 {dimension_numbers = #tpu.dot_dimension_numbers<[1], [0], [0], [1], [0, 0, 1, 1], [], []>} : vector<26x28xf32>, vector<28x624xf32>, vector<26x624xf32> -> vector<26x624xf32>
    %10 = arith.addf %5, %9 : vector<26x624xf32>
    %11 = vector.extract_strided_slice %1 {offsets = [2, 0], sizes = [26, 28], strides = [1, 1]} : vector<28x28xf32> to vector<26x28xf32>
    %c2 = arith.constant 2 : index
    %c0_8 = arith.constant 0 : index
    %c0_9 = arith.constant 0 : index
    %12 = vector.load %arg2[%c2, %c0_8, %c0_9] : memref<3x28x624xf32, #tpu.memory_space<vmem>>, vector<1x28x624xf32>
    %13 = vector.shape_cast %12 : vector<1x28x624xf32> to vector<28x624xf32>
    %cst_10 = arith.constant dense<0.000000e+00> : vector<26x624xf32>
    %14 = tpu.matmul %11, %13, %cst_10 {dimension_numbers = #tpu.dot_dimension_numbers<[1], [0], [0], [1], [0, 0, 1, 1], [], []>} : vector<26x28xf32>, vector<28x624xf32>, vector<26x624xf32> -> vector<26x624xf32>
    %15 = arith.addf %10, %14 : vector<26x624xf32>
    %c0_11 = arith.constant 0 : index
    %c0_12 = arith.constant 0 : index
    %16 = vector.load %arg3[%c0_11, %c0_12] : memref<1x624xf32, #tpu.memory_space<vmem>>, vector<1x624xf32>
    %17 = vector.broadcast %16 : vector<1x624xf32> to vector<26x624xf32>
    %18 = arith.addf %15, %17 : vector<26x624xf32>
    %cst_13 = arith.constant 0.000000e+00 : f32
    %19 = vector.broadcast %cst_13 : f32 to vector<26x624xf32>
    %20 = arith.maximumf %18, %19 : vector<26x624xf32>
    %21 = vector.extract_strided_slice %20 {offsets = [0, 0], sizes = [25, 624], strides = [1, 1]} : vector<26x624xf32> to vector<25x624xf32>
    %22 = vector.extract_strided_slice %20 {offsets = [1, 0], sizes = [25, 624], strides = [1, 1]} : vector<26x624xf32> to vector<25x624xf32>
    %23 = arith.maximumf %21, %22 : vector<25x624xf32>
    %c0_14 = arith.constant 0 : index
    %c0_15 = arith.constant 0 : index
    %24 = vector.load %arg4[%c0_14, %c0_15] : memref<13x25xf32, #tpu.memory_space<vmem>>, vector<13x25xf32>
    %cst_16 = arith.constant dense<0.000000e+00> : vector<13x624xf32>
    %25 = tpu.matmul %24, %23, %cst_16 {dimension_numbers = #tpu.dot_dimension_numbers<[1], [0], [0], [1], [0, 0, 1, 1], [], []>} : vector<13x25xf32>, vector<25x624xf32>, vector<13x624xf32> -> vector<13x624xf32>
    %26 = vector.extract_strided_slice %25 {offsets = [0, 0], sizes = [13, 600], strides = [1, 1]} : vector<13x624xf32> to vector<13x600xf32>
    %27 = vector.extract_strided_slice %25 {offsets = [0, 24], sizes = [13, 600], strides = [1, 1]} : vector<13x624xf32> to vector<13x600xf32>
    %28 = arith.maximumf %26, %27 : vector<13x600xf32>
    %c0_17 = arith.constant 0 : index
    %c0_18 = arith.constant 0 : index
    %29 = vector.load %arg5[%c0_17, %c0_18] : memref<600x312xf32, #tpu.memory_space<vmem>>, vector<600x312xf32>
    %cst_19 = arith.constant dense<0.000000e+00> : vector<13x312xf32>
    %30 = tpu.matmul %28, %29, %cst_19 {dimension_numbers = #tpu.dot_dimension_numbers<[1], [0], [0], [1], [0, 0, 1, 1], [], []>} : vector<13x600xf32>, vector<600x312xf32>, vector<13x312xf32> -> vector<13x312xf32>
    %31 = vector.extract_strided_slice %30 {offsets = [0, 0], sizes = [11, 312], strides = [1, 1]} : vector<13x312xf32> to vector<11x312xf32>
    %c0_20 = arith.constant 0 : index
    %c0_21 = arith.constant 0 : index
    %c0_22 = arith.constant 0 : index
    %32 = vector.load %arg6[%c0_20, %c0_21, %c0_22] : memref<3x312x528xf32, #tpu.memory_space<vmem>>, vector<1x312x528xf32>
    %33 = vector.shape_cast %32 : vector<1x312x528xf32> to vector<312x528xf32>
    %cst_23 = arith.constant dense<0.000000e+00> : vector<11x528xf32>
    %34 = tpu.matmul %31, %33, %cst_23 {dimension_numbers = #tpu.dot_dimension_numbers<[1], [0], [0], [1], [0, 0, 1, 1], [], []>} : vector<11x312xf32>, vector<312x528xf32>, vector<11x528xf32> -> vector<11x528xf32>
    %35 = vector.extract_strided_slice %30 {offsets = [1, 0], sizes = [11, 312], strides = [1, 1]} : vector<13x312xf32> to vector<11x312xf32>
    %c1_24 = arith.constant 1 : index
    %c0_25 = arith.constant 0 : index
    %c0_26 = arith.constant 0 : index
    %36 = vector.load %arg6[%c1_24, %c0_25, %c0_26] : memref<3x312x528xf32, #tpu.memory_space<vmem>>, vector<1x312x528xf32>
    %37 = vector.shape_cast %36 : vector<1x312x528xf32> to vector<312x528xf32>
    %cst_27 = arith.constant dense<0.000000e+00> : vector<11x528xf32>
    %38 = tpu.matmul %35, %37, %cst_27 {dimension_numbers = #tpu.dot_dimension_numbers<[1], [0], [0], [1], [0, 0, 1, 1], [], []>} : vector<11x312xf32>, vector<312x528xf32>, vector<11x528xf32> -> vector<11x528xf32>
    %39 = arith.addf %34, %38 : vector<11x528xf32>
    %40 = vector.extract_strided_slice %30 {offsets = [2, 0], sizes = [11, 312], strides = [1, 1]} : vector<13x312xf32> to vector<11x312xf32>
    %c2_28 = arith.constant 2 : index
    %c0_29 = arith.constant 0 : index
    %c0_30 = arith.constant 0 : index
    %41 = vector.load %arg6[%c2_28, %c0_29, %c0_30] : memref<3x312x528xf32, #tpu.memory_space<vmem>>, vector<1x312x528xf32>
    %42 = vector.shape_cast %41 : vector<1x312x528xf32> to vector<312x528xf32>
    %cst_31 = arith.constant dense<0.000000e+00> : vector<11x528xf32>
    %43 = tpu.matmul %40, %42, %cst_31 {dimension_numbers = #tpu.dot_dimension_numbers<[1], [0], [0], [1], [0, 0, 1, 1], [], []>} : vector<11x312xf32>, vector<312x528xf32>, vector<11x528xf32> -> vector<11x528xf32>
    %44 = arith.addf %39, %43 : vector<11x528xf32>
    %c0_32 = arith.constant 0 : index
    %c0_33 = arith.constant 0 : index
    %45 = vector.load %arg7[%c0_32, %c0_33] : memref<1x528xf32, #tpu.memory_space<vmem>>, vector<1x528xf32>
    %46 = vector.broadcast %45 : vector<1x528xf32> to vector<11x528xf32>
    %47 = arith.addf %44, %46 : vector<11x528xf32>
    %cst_34 = arith.constant 0.000000e+00 : f32
    %48 = vector.broadcast %cst_34 : f32 to vector<11x528xf32>
    %49 = arith.maximumf %47, %48 : vector<11x528xf32>
    %50 = vector.extract_strided_slice %49 {offsets = [0, 0], sizes = [10, 528], strides = [1, 1]} : vector<11x528xf32> to vector<10x528xf32>
    %51 = vector.extract_strided_slice %49 {offsets = [1, 0], sizes = [10, 528], strides = [1, 1]} : vector<11x528xf32> to vector<10x528xf32>
    %52 = arith.maximumf %50, %51 : vector<10x528xf32>
    %c0_35 = arith.constant 0 : index
    %c0_36 = arith.constant 0 : index
    %53 = vector.load %arg8[%c0_35, %c0_36] : memref<5x10xf32, #tpu.memory_space<vmem>>, vector<5x10xf32>
    %cst_37 = arith.constant dense<0.000000e+00> : vector<5x528xf32>
    %54 = tpu.matmul %53, %52, %cst_37 {dimension_numbers = #tpu.dot_dimension_numbers<[1], [0], [0], [1], [0, 0, 1, 1], [], []>} : vector<5x10xf32>, vector<10x528xf32>, vector<5x528xf32> -> vector<5x528xf32>
    %55 = vector.extract_strided_slice %54 {offsets = [0, 0], sizes = [5, 480], strides = [1, 1]} : vector<5x528xf32> to vector<5x480xf32>
    %56 = vector.extract_strided_slice %54 {offsets = [0, 48], sizes = [5, 480], strides = [1, 1]} : vector<5x528xf32> to vector<5x480xf32>
    %57 = arith.maximumf %55, %56 : vector<5x480xf32>
    %c0_38 = arith.constant 0 : index
    %c0_39 = arith.constant 0 : index
    %58 = vector.load %arg9[%c0_38, %c0_39] : memref<480x240xf32, #tpu.memory_space<vmem>>, vector<480x240xf32>
    %cst_40 = arith.constant dense<0.000000e+00> : vector<5x240xf32>
    %59 = tpu.matmul %57, %58, %cst_40 {dimension_numbers = #tpu.dot_dimension_numbers<[1], [0], [0], [1], [0, 0, 1, 1], [], []>} : vector<5x480xf32>, vector<480x240xf32>, vector<5x240xf32> -> vector<5x240xf32>
    %60 = vector.extract_strided_slice %59 {offsets = [0, 0], sizes = [3, 240], strides = [1, 1]} : vector<5x240xf32> to vector<3x240xf32>
    %c0_41 = arith.constant 0 : index
    %c0_42 = arith.constant 0 : index
    %c0_43 = arith.constant 0 : index
    %61 = vector.load %arg10[%c0_41, %c0_42, %c0_43] : memref<3x240x192xf32, #tpu.memory_space<vmem>>, vector<1x240x192xf32>
    %62 = vector.shape_cast %61 : vector<1x240x192xf32> to vector<240x192xf32>
    %cst_44 = arith.constant dense<0.000000e+00> : vector<3x192xf32>
    %63 = tpu.matmul %60, %62, %cst_44 {dimension_numbers = #tpu.dot_dimension_numbers<[1], [0], [0], [1], [0, 0, 1, 1], [], []>} : vector<3x240xf32>, vector<240x192xf32>, vector<3x192xf32> -> vector<3x192xf32>
    %64 = vector.extract_strided_slice %59 {offsets = [1, 0], sizes = [3, 240], strides = [1, 1]} : vector<5x240xf32> to vector<3x240xf32>
    %c1_45 = arith.constant 1 : index
    %c0_46 = arith.constant 0 : index
    %c0_47 = arith.constant 0 : index
    %65 = vector.load %arg10[%c1_45, %c0_46, %c0_47] : memref<3x240x192xf32, #tpu.memory_space<vmem>>, vector<1x240x192xf32>
    %66 = vector.shape_cast %65 : vector<1x240x192xf32> to vector<240x192xf32>
    %cst_48 = arith.constant dense<0.000000e+00> : vector<3x192xf32>
    %67 = tpu.matmul %64, %66, %cst_48 {dimension_numbers = #tpu.dot_dimension_numbers<[1], [0], [0], [1], [0, 0, 1, 1], [], []>} : vector<3x240xf32>, vector<240x192xf32>, vector<3x192xf32> -> vector<3x192xf32>
    %68 = arith.addf %63, %67 : vector<3x192xf32>
    %69 = vector.extract_strided_slice %59 {offsets = [2, 0], sizes = [3, 240], strides = [1, 1]} : vector<5x240xf32> to vector<3x240xf32>
    %c2_49 = arith.constant 2 : index
    %c0_50 = arith.constant 0 : index
    %c0_51 = arith.constant 0 : index
    %70 = vector.load %arg10[%c2_49, %c0_50, %c0_51] : memref<3x240x192xf32, #tpu.memory_space<vmem>>, vector<1x240x192xf32>
    %71 = vector.shape_cast %70 : vector<1x240x192xf32> to vector<240x192xf32>
    %cst_52 = arith.constant dense<0.000000e+00> : vector<3x192xf32>
    %72 = tpu.matmul %69, %71, %cst_52 {dimension_numbers = #tpu.dot_dimension_numbers<[1], [0], [0], [1], [0, 0, 1, 1], [], []>} : vector<3x240xf32>, vector<240x192xf32>, vector<3x192xf32> -> vector<3x192xf32>
    %73 = arith.addf %68, %72 : vector<3x192xf32>
    %c0_53 = arith.constant 0 : index
    %c0_54 = arith.constant 0 : index
    %74 = vector.load %arg11[%c0_53, %c0_54] : memref<1x192xf32, #tpu.memory_space<vmem>>, vector<1x192xf32>
    %75 = vector.broadcast %74 : vector<1x192xf32> to vector<3x192xf32>
    %76 = arith.addf %73, %75 : vector<3x192xf32>
    %cst_55 = arith.constant 0.000000e+00 : f32
    %77 = vector.broadcast %cst_55 : f32 to vector<3x192xf32>
    %78 = arith.maximumf %76, %77 : vector<3x192xf32>
    %c0_56 = arith.constant 0 : index
    %c0_57 = arith.constant 0 : index
    %79 = vector.load %arg13[%c0_56, %c0_57] : memref<1x576xf32, #tpu.memory_space<vmem>>, vector<1x576xf32>
    %80 = vector.extract_strided_slice %78 {offsets = [0, 0], sizes = [1, 192], strides = [1, 1]} : vector<3x192xf32> to vector<1x192xf32>
    %c0_58 = arith.constant 0 : index
    %c0_59 = arith.constant 0 : index
    %81 = vector.load %arg12[%c0_58, %c0_59] : memref<576x576xf32, #tpu.memory_space<vmem>>, vector<192x576xf32>
    %cst_60 = arith.constant dense<0.000000e+00> : vector<1x576xf32>
    %82 = tpu.matmul %80, %81, %cst_60 {dimension_numbers = #tpu.dot_dimension_numbers<[1], [0], [0], [1], [0, 0, 1, 1], [], []>} : vector<1x192xf32>, vector<192x576xf32>, vector<1x576xf32> -> vector<1x576xf32>
    %83 = arith.addf %79, %82 : vector<1x576xf32>
    %84 = vector.extract_strided_slice %78 {offsets = [1, 0], sizes = [1, 192], strides = [1, 1]} : vector<3x192xf32> to vector<1x192xf32>
    %c192 = arith.constant 192 : index
    %c0_61 = arith.constant 0 : index
    %85 = vector.load %arg12[%c192, %c0_61] : memref<576x576xf32, #tpu.memory_space<vmem>>, vector<192x576xf32>
    %cst_62 = arith.constant dense<0.000000e+00> : vector<1x576xf32>
    %86 = tpu.matmul %84, %85, %cst_62 {dimension_numbers = #tpu.dot_dimension_numbers<[1], [0], [0], [1], [0, 0, 1, 1], [], []>} : vector<1x192xf32>, vector<192x576xf32>, vector<1x576xf32> -> vector<1x576xf32>
    %87 = arith.addf %83, %86 : vector<1x576xf32>
    %88 = vector.extract_strided_slice %78 {offsets = [2, 0], sizes = [1, 192], strides = [1, 1]} : vector<3x192xf32> to vector<1x192xf32>
    %c384 = arith.constant 384 : index
    %c0_63 = arith.constant 0 : index
    %89 = vector.load %arg12[%c384, %c0_63] : memref<576x576xf32, #tpu.memory_space<vmem>>, vector<192x576xf32>
    %cst_64 = arith.constant dense<0.000000e+00> : vector<1x576xf32>
    %90 = tpu.matmul %88, %89, %cst_64 {dimension_numbers = #tpu.dot_dimension_numbers<[1], [0], [0], [1], [0, 0, 1, 1], [], []>} : vector<1x192xf32>, vector<192x576xf32>, vector<1x576xf32> -> vector<1x576xf32>
    %91 = arith.addf %87, %90 : vector<1x576xf32>
    %cst_65 = arith.constant 0.000000e+00 : f32
    %92 = vector.broadcast %cst_65 : f32 to vector<1x576xf32>
    %93 = arith.maximumf %91, %92 : vector<1x576xf32>
    %c0_66 = arith.constant 0 : index
    %c0_67 = arith.constant 0 : index
    %94 = vector.load %arg14[%c0_66, %c0_67] : memref<576x26xf32, #tpu.memory_space<vmem>>, vector<576x26xf32>
    %cst_68 = arith.constant dense<0.000000e+00> : vector<1x26xf32>
    %95 = tpu.matmul %93, %94, %cst_68 {dimension_numbers = #tpu.dot_dimension_numbers<[1], [0], [0], [1], [0, 0, 1, 1], [], []>} : vector<1x576xf32>, vector<576x26xf32>, vector<1x26xf32> -> vector<1x26xf32>
    %c0_69 = arith.constant 0 : index
    %c0_70 = arith.constant 0 : index
    %96 = vector.load %arg15[%c0_69, %c0_70] : memref<1x26xf32, #tpu.memory_space<vmem>>, vector<1x26xf32>
    %97 = arith.addf %95, %96 : vector<1x26xf32>
    %cst_71 = arith.constant 0.000000e+00 : f32
    %98 = vector.broadcast %cst_71 : f32 to vector<1x26xf32>
    %99 = arith.maximumf %97, %98 : vector<1x26xf32>
    %cst_72 = arith.constant dense<0xFF800000> : vector<1xf32>
    %100 = vector.multi_reduction <maximumf>, %99, %cst_72 [1] : vector<1x26xf32> to vector<1xf32>
    %101 = vector.shape_cast %100 : vector<1xf32> to vector<1x1xf32>
    %102 = vector.broadcast %101 : vector<1x1xf32> to vector<1x26xf32>
    %103 = arith.subf %99, %102 : vector<1x26xf32>
    %104 = math.exp %103 : vector<1x26xf32>
    %105 = vector.broadcast %101 : vector<1x1xf32> to vector<1x26xf32>
    %106 = arith.subf %99, %105 : vector<1x26xf32>
    %cst_73 = arith.constant dense<0.000000e+00> : vector<1xf32>
    %107 = vector.multi_reduction <add>, %104, %cst_73 [1] : vector<1x26xf32> to vector<1xf32>
    %108 = vector.shape_cast %107 : vector<1xf32> to vector<1x1xf32>
    %109 = math.log %108 : vector<1x1xf32>
    %110 = vector.broadcast %109 : vector<1x1xf32> to vector<1x26xf32>
    %111 = arith.subf %106, %110 : vector<1x26xf32>
    %c0_74 = arith.constant 0 : index
    %c0_75 = arith.constant 0 : index
    %c0_76 = arith.constant 0 : index
    %112 = vector.load %arg16[%c0_74, %c0_75, %c0_76] : memref<1x1x26xf32, #tpu.memory_space<vmem>>, vector<1x1x26xf32>
    %113 = vector.shape_cast %112 : vector<1x1x26xf32> to vector<1x26xf32>
    %114 = vector.shape_cast %111 : vector<1x26xf32> to vector<1x1x26xf32>
    tpu.vector_store %arg16[%c0_74, %c0_75, %c0_76], %114 {strides = array<i32>} : memref<1x1x26xf32, #tpu.memory_space<vmem>>, vector<1x1x26xf32>,
    return
  }
  func.func @transform_0(%arg0: i32) -> (i32, i32, i32) {
    %c0_i32 = arith.constant 0 : i32
    %c0_i32_0 = arith.constant 0 : i32
    %c0_i32_1 = arith.constant 0 : i32
    return %arg0, %c0_i32, %c0_i32_0 : i32, i32, i32
  }
  func.func @transform_1(%arg0: i32) -> (i32, i32, i32) {
    %c0_i32 = arith.constant 0 : i32
    %c0_i32_0 = arith.constant 0 : i32
    %c0_i32_1 = arith.constant 0 : i32
    %c0_i32_2 = arith.constant 0 : i32
    return %c0_i32, %c0_i32_0, %c0_i32_1 : i32, i32, i32
  }
  func.func @transform_2(%arg0: i32) -> (i32, i32) {
    %c0_i32 = arith.constant 0 : i32
    %c0_i32_0 = arith.constant 0 : i32
    %c0_i32_1 = arith.constant 0 : i32
    return %c0_i32, %c0_i32_0 : i32, i32
  }
  func.func @transform_3(%arg0: i32) -> (i32, i32) {
    %c0_i32 = arith.constant 0 : i32
    %c0_i32_0 = arith.constant 0 : i32
    %c0_i32_1 = arith.constant 0 : i32
    return %c0_i32, %c0_i32_0 : i32, i32
  }
  func.func @transform_4(%arg0: i32) -> (i32, i32) {
    %c0_i32 = arith.constant 0 : i32
    %c0_i32_0 = arith.constant 0 : i32
    %c0_i32_1 = arith.constant 0 : i32
    return %c0_i32, %c0_i32_0 : i32, i32
  }
  func.func @transform_5(%arg0: i32) -> (i32, i32, i32) {
    %c0_i32 = arith.constant 0 : i32
    %c0_i32_0 = arith.constant 0 : i32
    %c0_i32_1 = arith.constant 0 : i32
    %c0_i32_2 = arith.constant 0 : i32
    return %c0_i32, %c0_i32_0, %c0_i32_1 : i32, i32, i32
  }
  func.func @transform_6(%arg0: i32) -> (i32, i32) {
    %c0_i32 = arith.constant 0 : i32
    %c0_i32_0 = arith.constant 0 : i32
    %c0_i32_1 = arith.constant 0 : i32
    return %c0_i32, %c0_i32_0 : i32, i32
  }
  func.func @transform_7(%arg0: i32) -> (i32, i32) {
    %c0_i32 = arith.constant 0 : i32
    %c0_i32_0 = arith.constant 0 : i32
    %c0_i32_1 = arith.constant 0 : i32
    return %c0_i32, %c0_i32_0 : i32, i32
  }
  func.func @transform_8(%arg0: i32) -> (i32, i32) {
    %c0_i32 = arith.constant 0 : i32
    %c0_i32_0 = arith.constant 0 : i32
    %c0_i32_1 = arith.constant 0 : i32
    return %c0_i32, %c0_i32_0 : i32, i32
  }
  func.func @transform_9(%arg0: i32) -> (i32, i32, i32) {
    %c0_i32 = arith.constant 0 : i32
    %c0_i32_0 = arith.constant 0 : i32
    %c0_i32_1 = arith.constant 0 : i32
    %c0_i32_2 = arith.constant 0 : i32
    return %c0_i32, %c0_i32_0, %c0_i32_1 : i32, i32, i32
  }
  func.func @transform_10(%arg0: i32) -> (i32, i32) {
    %c0_i32 = arith.constant 0 : i32
    %c0_i32_0 = arith.constant 0 : i32
    %c0_i32_1 = arith.constant 0 : i32
    return %c0_i32, %c0_i32_0 : i32, i32
  }
  func.func @transform_11(%arg0: i32) -> (i32, i32) {
    %c0_i32 = arith.constant 0 : i32
    %c0_i32_0 = arith.constant 0 : i32
    %c0_i32_1 = arith.constant 0 : i32
    return %c0_i32, %c0_i32_0 : i32, i32
  }
  func.func @transform_12(%arg0: i32) -> (i32, i32) {
    %c0_i32 = arith.constant 0 : i32
    %c0_i32_0 = arith.constant 0 : i32
    %c0_i32_1 = arith.constant 0 : i32
    return %c0_i32, %c0_i32_0 : i32, i32
  }
  func.func @transform_13(%arg0: i32) -> (i32, i32) {
    %c0_i32 = arith.constant 0 : i32
    %c0_i32_0 = arith.constant 0 : i32
    %c0_i32_1 = arith.constant 0 : i32
    return %c0_i32, %c0_i32_0 : i32, i32
  }
  func.func @transform_14(%arg0: i32) -> (i32, i32) {
    %c0_i32 = arith.constant 0 : i32
    %c0_i32_0 = arith.constant 0 : i32
    %c0_i32_1 = arith.constant 0 : i32
    return %c0_i32, %c0_i32_0 : i32, i32
  }
  func.func @transform_15(%arg0: i32) -> (i32, i32, i32) {
    %c0_i32 = arith.constant 0 : i32
    %c0_i32_0 = arith.constant 0 : i32
    %c0_i32_1 = arith.constant 0 : i32
    return %arg0, %c0_i32, %c0_i32_0 : i32, i32, i32
  }
}

</mosaic_0001>

<llo_original>
// kernel: e2e_forward_pallas.1
$region0: #{e2e_forward_pallas.1}
  #allocation0 [shape = 'u32[]', space=smem, size = 0x4, offset = 0x4, fixed_abs, tag = 'smem constant byte address 0x4 - core index']
  #allocation1 [shape = 'u32[144,128]{1,0:T(1,128)}', space=vmem, size = 0x12000, scoped, tag = 'internal scratch']
  %s0 = inlined_call_operand.vmem [shape: f32[2,28,28], index: 0, kind: input, shape index: {}]
  %s1 = inlined_call_operand.vmem [shape: f32[3,28,624], index: 1, kind: input, shape index: {}]
  %s2 = inlined_call_operand.vmem [shape: f32[1,624], index: 2, kind: input, shape index: {}]
  %s3 = inlined_call_operand.vmem [shape: f32[13,25], index: 3, kind: input, shape index: {}]
  %s4 = inlined_call_operand.vmem [shape: f32[600,312], index: 4, kind: input, shape index: {}]
  %s5 = inlined_call_operand.vmem [shape: f32[3,312,528], index: 5, kind: input, shape index: {}]
  %s6 = inlined_call_operand.vmem [shape: f32[1,528], index: 6, kind: input, shape index: {}]
  %s7 = inlined_call_operand.vmem [shape: f32[5,10], index: 7, kind: input, shape index: {}]
  %s8 = inlined_call_operand.vmem [shape: f32[480,240], index: 8, kind: input, shape index: {}]
  %s9 = inlined_call_operand.vmem [shape: f32[3,240,192], index: 9, kind: input, shape index: {}]
  %s10 = inlined_call_operand.vmem [shape: f32[1,192], index: 10, kind: input, shape index: {}]
  %s11 = inlined_call_operand.hbm [shape: f32[576,576], index: 11, kind: input, shape index: {}]
  %s12 = inlined_call_operand.vmem [shape: f32[1,576], index: 12, kind: input, shape index: {}]
  %s13 = inlined_call_operand.vmem [shape: f32[576,26], index: 13, kind: input, shape index: {}]
  %s14 = inlined_call_operand.vmem [shape: f32[1,26], index: 14, kind: input, shape index: {}]
  %s15 = inlined_call_operand.hbm [shape: f32[2,1,26], index: 15, kind: output, shape index: {}]
  %s16 = sld [smem:[#allocation0]]
  $region97: #{e2e_forward_pallas.1} parent=0
    _
  %s18 = ssub.s32 1, %s16
  %s19 = scalar_select 0, %s18, %s16
  $region1: #{e2e_forward_pallas.1} parent=0
    #allocation2 [shape = 'u8[1474560]{0}', space=vmem, size = 0x168000, scoped, tag = 'input window, operand 11, single buffered']
    #allocation3 [shape = 's32[2]{0}', space=sflag, size = 0x8, scoped, tag = 'scoped memory for e2e_forward_pallas.1']
    #allocation4 [shape = 's32[2]{0}', space=sflag, size = 0x8, scoped, tag = 'scoped memory for e2e_forward_pallas.1']
    #allocation5 [shape = 'u8[1024]{0}', space=vmem, size = 0x400, scoped, tag = 'output window, operand 0']
    %20 = vsyncpa [#allocation3], 0
    %21 = vsyncpa [#allocation4], 0
    %s22 = scalar_lea.sflag [#allocation4], 1
    %23 = vsyncpa %s22, 0
    loop: start=0, step=1, limit=4
    $region2: #{e2e_forward_pallas.1} parent=1 // loop_pre_header
      _
    $region3: #{e2e_forward_pallas.1} parent=1 // loop_header
      %s25 = sphi 0, %s29
      %p26 = scmp.ge.s32.totalorder %s25, 4
      %s35 = sphi 0, %s37
      %s38 = sphi 0, %s35
      %s39 = sphi 0, %s38
      %s55 = sphi 0, %s39
      %s59 = sphi 0, %s59
      %s61 = sphi 0, %s59
      %s62 = sphi 0, %s61
      %s76 = sphi 0, %s62
      %s80 = sphi 0, %s80
      %s82 = sphi 0, %s80
      %s83 = sphi 0, %s82
      %s97 = sphi 0, %s83
      %s101 = sphi 0, %s101
      %s103 = sphi 0, %s101
      %s104 = sphi 0, %s103
      %s118 = sphi 0, %s104
      %s122 = sphi 0, %s122
      %s124 = sphi 0, %s122
      %s125 = sphi 0, %s124
      %s139 = sphi 0, %s125
      %s143 = sphi 0, %s143
      %s145 = sphi 0, %s143
      %s146 = sphi 0, %s145
      %s160 = sphi 0, %s146
      %s164 = sphi 0, %s164
      %s166 = sphi 0, %s164
      %s167 = sphi 0, %s166
      %s181 = sphi 0, %s167
      %s185 = sphi 0, %s185
      %s187 = sphi 0, %s185
      %s188 = sphi 0, %s187
      %s202 = sphi 0, %s188
      %s206 = sphi 0, %s206
      %s208 = sphi 0, %s206
      %s209 = sphi 0, %s208
      %s223 = sphi 0, %s209
      %s227 = sphi 0, %s227
      %s229 = sphi 0, %s227
      %s230 = sphi 0, %s229
      %s244 = sphi 0, %s230
      %s248 = sphi 0, %s248
      %s250 = sphi 0, %s248
      %s251 = sphi 0, %s250
      %s265 = sphi 0, %s251
      %s269 = sphi 0, %s269
      %s271 = sphi 0, %s269
      %s272 = sphi 0, %s271
      %s286 = sphi 0, %s272
      %s290 = sphi 0, %s290
      %s292 = sphi 0, %s290
      %s293 = sphi 0, %s292
      %s307 = sphi 0, %s293
      %s311 = sphi 0, %s311
      %s313 = sphi 0, %s311
      %s314 = sphi 0, %s313
      %s328 = sphi 0, %s314
      %s332 = sphi 0, %s332
      %s334 = sphi 0, %s332
      %s335 = sphi 0, %s334
      %s349 = sphi 0, %s335
      %s355 = sphi 0, %s357
      %s358 = sphi 0, %s355
      %s359 = sphi 0, %s358
      %s375 = sphi 0, %s359
    $region4: #{e2e_forward_pallas.1} parent=1 // loop_header_branch
      %28 = sbr.rel (%p26) target = $region8
    $region5: #{e2e_forward_pallas.1} parent=1 // loop_body
      %s30 = ssub.s32 %s25, 1
      %s31 = ssub.s32 %s25, 2
      %s32 = sadd.s32 %s25, 1
      %s33 = ssub.s32 %s25, %s32
      %p34 = scmp.eq.s32.totalorder %s33, 0
      %s36 = sadd.s32 %s35, 1
      %s37 = scalar_select %p34, %s35, %s36
      %p40 = pneg %p34
      %p41 = scmp.eq.s32.totalorder %s25, 1
      %p42 = por %p40, %p41
      %p43 = scmp.ne.s32.totalorder %s35, %s38
      %p44 = scmp.eq.s32.totalorder %s25, 0
      %p45 = por %p43, %p44
      %p46 = scmp.ne.s32.totalorder %s35, %s38
      %p47 = scmp.eq.s32.totalorder %s30, 1
      %p48 = por %p46, %p47
      %p49 = scmp.ne.s32.totalorder %s38, %s39
      %p50 = scmp.eq.s32.totalorder %s30, 0
      %p51 = por %p49, %p50
      %p52 = scmp.ne.s32.totalorder %s38, %s39
      %p53 = scmp.eq.s32.totalorder %s31, 1
      %p54 = por %p52, %p53
      %p56 = scmp.ne.s32.totalorder %s39, %s55
      %p57 = scmp.eq.s32.totalorder %s31, 0
      %p58 = por %p56, %p57
      %s60 = sadd.s32 %s59, 1
      %p63 = scmp.eq.s32.totalorder %s25, 1
      %p64 = scmp.ne.s32.totalorder %s59, %s61
      %p65 = scmp.eq.s32.totalorder %s25, 0
      %p66 = por %p64, %p65
      %p67 = scmp.ne.s32.totalorder %s59, %s61
      %p68 = scmp.eq.s32.totalorder %s30, 1
      %p69 = por %p67, %p68
      %p70 = scmp.ne.s32.totalorder %s61, %s62
      %p71 = scmp.eq.s32.totalorder %s30, 0
      %p72 = por %p70, %p71
      %p73 = scmp.ne.s32.totalorder %s61, %s62
      %p74 = scmp.eq.s32.totalorder %s31, 1
      %p75 = por %p73, %p74
      %p77 = scmp.ne.s32.totalorder %s62, %s76
      %p78 = scmp.eq.s32.totalorder %s31, 0
      %p79 = por %p77, %p78
      %s81 = sadd.s32 %s80, 1
      %p84 = scmp.eq.s32.totalorder %s25, 1
      %p85 = scmp.ne.s32.totalorder %s80, %s82
      %p86 = scmp.eq.s32.totalorder %s25, 0
      %p87 = por %p85, %p86
      %p88 = scmp.ne.s32.totalorder %s80, %s82
      %p89 = scmp.eq.s32.totalorder %s30, 1
      %p90 = por %p88, %p89
      %p91 = scmp.ne.s32.totalorder %s82, %s83
      %p92 = scmp.eq.s32.totalorder %s30, 0
      %p93 = por %p91, %p92
      %p94 = scmp.ne.s32.totalorder %s82, %s83
      %p95 = scmp.eq.s32.totalorder %s31, 1
      %p96 = por %p94, %p95
      %p98 = scmp.ne.s32.totalorder %s83, %s97
      %p99 = scmp.eq.s32.totalorder %s31, 0
      %p100 = por %p98, %p99
      %s102 = sadd.s32 %s101, 1
      %p105 = scmp.eq.s32.totalorder %s25, 1
      %p106 = scmp.ne.s32.totalorder %s101, %s103
      %p107 = scmp.eq.s32.totalorder %s25, 0
      %p108 = por %p106, %p107
      %p109 = scmp.ne.s32.totalorder %s101, %s103
      %p110 = scmp.eq.s32.totalorder %s30, 1
      %p111 = por %p109, %p110
      %p112 = scmp.ne.s32.totalorder %s103, %s104
      %p113 = scmp.eq.s32.totalorder %s30, 0
      %p114 = por %p112, %p113
      %p115 = scmp.ne.s32.totalorder %s103, %s104
      %p116 = scmp.eq.s32.totalorder %s31, 1
      %p117 = por %p115, %p116
      %p119 = scmp.ne.s32.totalorder %s104, %s118
      %p120 = scmp.eq.s32.totalorder %s31, 0
      %p121 = por %p119, %p120
      %s123 = sadd.s32 %s122, 1
      %p126 = scmp.eq.s32.totalorder %s25, 1
      %p127 = scmp.ne.s32.totalorder %s122, %s124
      %p128 = scmp.eq.s32.totalorder %s25, 0
      %p129 = por %p127, %p128
      %p130 = scmp.ne.s32.totalorder %s122, %s124
      %p131 = scmp.eq.s32.totalorder %s30, 1
      %p132 = por %p130, %p131
      %p133 = scmp.ne.s32.totalorder %s124, %s125
      %p134 = scmp.eq.s32.totalorder %s30, 0
      %p135 = por %p133, %p134
      %p136 = scmp.ne.s32.totalorder %s124, %s125
      %p137 = scmp.eq.s32.totalorder %s31, 1
      %p138 = por %p136, %p137
      %p140 = scmp.ne.s32.totalorder %s125, %s139
      %p141 = scmp.eq.s32.totalorder %s31, 0
      %p142 = por %p140, %p141
      %s144 = sadd.s32 %s143, 1
      %p147 = scmp.eq.s32.totalorder %s25, 1
      %p148 = scmp.ne.s32.totalorder %s143, %s145
      %p149 = scmp.eq.s32.totalorder %s25, 0
      %p150 = por %p148, %p149
      %p151 = scmp.ne.s32.totalorder %s143, %s145
      %p152 = scmp.eq.s32.totalorder %s30, 1
      %p153 = por %p151, %p152
      %p154 = scmp.ne.s32.totalorder %s145, %s146
      %p155 = scmp.eq.s32.totalorder %s30, 0
      %p156 = por %p154, %p155
      %p157 = scmp.ne.s32.totalorder %s145, %s146
      %p158 = scmp.eq.s32.totalorder %s31, 1
      %p159 = por %p157, %p158
      %p161 = scmp.ne.s32.totalorder %s146, %s160
      %p162 = scmp.eq.s32.totalorder %s31, 0
      %p163 = por %p161, %p162
      %s165 = sadd.s32 %s164, 1
      %p168 = scmp.eq.s32.totalorder %s25, 1
      %p169 = scmp.ne.s32.totalorder %s164, %s166
      %p170 = scmp.eq.s32.totalorder %s25, 0
      %p171 = por %p169, %p170
      %p172 = scmp.ne.s32.totalorder %s164, %s166
      %p173 = scmp.eq.s32.totalorder %s30, 1
      %p174 = por %p172, %p173
      %p175 = scmp.ne.s32.totalorder %s166, %s167
      %p176 = scmp.eq.s32.totalorder %s30, 0
      %p177 = por %p175, %p176
      %p178 = scmp.ne.s32.totalorder %s166, %s167
      %p179 = scmp.eq.s32.totalorder %s31, 1
      %p180 = por %p178, %p179
      %p182 = scmp.ne.s32.totalorder %s167, %s181
      %p183 = scmp.eq.s32.totalorder %s31, 0
      %p184 = por %p182, %p183
      %s186 = sadd.s32 %s185, 1
      %p189 = scmp.eq.s32.totalorder %s25, 1
      %p190 = scmp.ne.s32.totalorder %s185, %s187
      %p191 = scmp.eq.s32.totalorder %s25, 0
      %p192 = por %p190, %p191
      %p193 = scmp.ne.s32.totalorder %s185, %s187
      %p194 = scmp.eq.s32.totalorder %s30, 1
      %p195 = por %p193, %p194
      %p196 = scmp.ne.s32.totalorder %s187, %s188
      %p197 = scmp.eq.s32.totalorder %s30, 0
      %p198 = por %p196, %p197
      %p199 = scmp.ne.s32.totalorder %s187, %s188
      %p200 = scmp.eq.s32.totalorder %s31, 1
      %p201 = por %p199, %p200
      %p203 = scmp.ne.s32.totalorder %s188, %s202
      %p204 = scmp.eq.s32.totalorder %s31, 0
      %p205 = por %p203, %p204
      %s207 = sadd.s32 %s206, 1
      %p210 = scmp.eq.s32.totalorder %s25, 1
      %p211 = scmp.ne.s32.totalorder %s206, %s208
      %p212 = scmp.eq.s32.totalorder %s25, 0
      %p213 = por %p211, %p212
      %p214 = scmp.ne.s32.totalorder %s206, %s208
      %p215 = scmp.eq.s32.totalorder %s30, 1
      %p216 = por %p214, %p215
      %p217 = scmp.ne.s32.totalorder %s208, %s209
      %p218 = scmp.eq.s32.totalorder %s30, 0
      %p219 = por %p217, %p218
      %p220 = scmp.ne.s32.totalorder %s208, %s209
      %p221 = scmp.eq.s32.totalorder %s31, 1
      %p222 = por %p220, %p221
      %p224 = scmp.ne.s32.totalorder %s209, %s223
      %p225 = scmp.eq.s32.totalorder %s31, 0
      %p226 = por %p224, %p225
      %s228 = sadd.s32 %s227, 1
      %p231 = scmp.eq.s32.totalorder %s25, 1
      %p232 = scmp.ne.s32.totalorder %s227, %s229
      %p233 = scmp.eq.s32.totalorder %s25, 0
      %p234 = por %p232, %p233
      %p235 = scmp.ne.s32.totalorder %s227, %s229
      %p236 = scmp.eq.s32.totalorder %s30, 1
      %p237 = por %p235, %p236
      %p238 = scmp.ne.s32.totalorder %s229, %s230
      %p239 = scmp.eq.s32.totalorder %s30, 0
      %p240 = por %p238, %p239
      %p241 = scmp.ne.s32.totalorder %s229, %s230
      %p242 = scmp.eq.s32.totalorder %s31, 1
      %p243 = por %p241, %p242
      %p245 = scmp.ne.s32.totalorder %s230, %s244
      %p246 = scmp.eq.s32.totalorder %s31, 0
      %p247 = por %p245, %p246
      %s249 = sadd.s32 %s248, 1
      %p252 = scmp.eq.s32.totalorder %s25, 1
      %p253 = scmp.ne.s32.totalorder %s248, %s250
      %p254 = scmp.eq.s32.totalorder %s25, 0
      %p255 = por %p253, %p254
      %p256 = scmp.ne.s32.totalorder %s248, %s250
      %p257 = scmp.eq.s32.totalorder %s30, 1
      %p258 = por %p256, %p257
      %p259 = scmp.ne.s32.totalorder %s250, %s251
      %p260 = scmp.eq.s32.totalorder %s30, 0
      %p261 = por %p259, %p260
      %p262 = scmp.ne.s32.totalorder %s250, %s251
      %p263 = scmp.eq.s32.totalorder %s31, 1
      %p264 = por %p262, %p263
      %p266 = scmp.ne.s32.totalorder %s251, %s265
      %p267 = scmp.eq.s32.totalorder %s31, 0
      %p268 = por %p266, %p267
      %s270 = sadd.s32 %s269, 1
      %p273 = scmp.eq.s32.totalorder %s25, 1
      %p274 = scmp.ne.s32.totalorder %s269, %s271
      %p275 = scmp.eq.s32.totalorder %s25, 0
      %p276 = por %p274, %p275
      %p277 = scmp.ne.s32.totalorder %s269, %s271
      %p278 = scmp.eq.s32.totalorder %s30, 1
      %p279 = por %p277, %p278
      %p280 = scmp.ne.s32.totalorder %s271, %s272
      %p281 = scmp.eq.s32.totalorder %s30, 0
      %p282 = por %p280, %p281
      %p283 = scmp.ne.s32.totalorder %s271, %s272
      %p284 = scmp.eq.s32.totalorder %s31, 1
      %p285 = por %p283, %p284
      %p287 = scmp.ne.s32.totalorder %s272, %s286
      %p288 = scmp.eq.s32.totalorder %s31, 0
      %p289 = por %p287, %p288
      %s291 = sadd.s32 %s290, 1
      %p294 = scmp.eq.s32.totalorder %s25, 1
      %p295 = scmp.ne.s32.totalorder %s290, %s292
      %p296 = scmp.eq.s32.totalorder %s25, 0
      %p297 = por %p295, %p296
      %p298 = scmp.ne.s32.totalorder %s290, %s292
      %p299 = scmp.eq.s32.totalorder %s30, 1
      %p300 = por %p298, %p299
      %p301 = scmp.ne.s32.totalorder %s292, %s293
      %p302 = scmp.eq.s32.totalorder %s30, 0
      %p303 = por %p301, %p302
      %p304 = scmp.ne.s32.totalorder %s292, %s293
      %p305 = scmp.eq.s32.totalorder %s31, 1
      %p306 = por %p304, %p305
      %p308 = scmp.ne.s32.totalorder %s293, %s307
      %p309 = scmp.eq.s32.totalorder %s31, 0
      %p310 = por %p308, %p309
      %s312 = sadd.s32 %s311, 1
      %p315 = scmp.eq.s32.totalorder %s25, 1
      %p316 = scmp.ne.s32.totalorder %s311, %s313
      %p317 = scmp.eq.s32.totalorder %s25, 0
      %p318 = por %p316, %p317
      %p319 = scmp.ne.s32.totalorder %s311, %s313
      %p320 = scmp.eq.s32.totalorder %s30, 1
      %p321 = por %p319, %p320
      %p322 = scmp.ne.s32.totalorder %s313, %s314
      %p323 = scmp.eq.s32.totalorder %s30, 0
      %p324 = por %p322, %p323
      %p325 = scmp.ne.s32.totalorder %s313, %s314
      %p326 = scmp.eq.s32.totalorder %s31, 1
      %p327 = por %p325, %p326
      %p329 = scmp.ne.s32.totalorder %s314, %s328
      %p330 = scmp.eq.s32.totalorder %s31, 0
      %p331 = por %p329, %p330
      %s333 = sadd.s32 %s332, 1
      %p336 = scmp.eq.s32.totalorder %s25, 1
      %p337 = scmp.ne.s32.totalorder %s332, %s334
      %p338 = scmp.eq.s32.totalorder %s25, 0
      %p339 = por %p337, %p338
      %p340 = scmp.ne.s32.totalorder %s332, %s334
      %p341 = scmp.eq.s32.totalorder %s30, 1
      %p342 = por %p340, %p341
      %p343 = scmp.ne.s32.totalorder %s334, %s335
      %p344 = scmp.eq.s32.totalorder %s30, 0
      %p345 = por %p343, %p344
      %p346 = scmp.ne.s32.totalorder %s334, %s335
      %p347 = scmp.eq.s32.totalorder %s31, 1
      %p348 = por %p346, %p347
      %p350 = scmp.ne.s32.totalorder %s335, %s349
      %p351 = scmp.eq.s32.totalorder %s31, 0
      %p352 = por %p350, %p351
      %s353 = ssub.s32 %s25, %s32
      %p354 = scmp.eq.s32.totalorder %s353, 0
      %s356 = sadd.s32 %s355, 1
      %s357 = scalar_select %p354, %s355, %s356
      %p360 = pneg %p354
      %p361 = scmp.eq.s32.totalorder %s25, 1
      %p362 = por %p360, %p361
      %p363 = scmp.ne.s32.totalorder %s355, %s358
      %p364 = scmp.eq.s32.totalorder %s25, 0
      %p365 = por %p363, %p364
      %p366 = scmp.ne.s32.totalorder %s355, %s358
      %p367 = scmp.eq.s32.totalorder %s30, 1
      %p368 = por %p366, %p367
      %p369 = scmp.ne.s32.totalorder %s358, %s359
      %p370 = scmp.eq.s32.totalorder %s30, 0
      %p371 = por %p369, %p370
      %p372 = scmp.ne.s32.totalorder %s358, %s359
      %p373 = scmp.eq.s32.totalorder %s31, 1
      %p374 = por %p372, %p373
      %p376 = scmp.ne.s32.totalorder %s359, %s375
      %p377 = scmp.eq.s32.totalorder %s31, 0
      %p378 = por %p376, %p377
      %p379 = scmp.le.s32.totalorder 1, %s25
      %p380 = scmp.lt.s32.totalorder %s25, 3
      %p381 = pnand %p379, %p380
      %p382 = pneg %p381
      // Predicated region
      $region9: #{e2e_forward_pallas.1} parent=5 // pred_check
        _
      $region10: #{e2e_forward_pallas.1} parent=5 // pred_check_branch
        %384 = sbr.rel (%p381) target = $region12
      $region11: #{e2e_forward_pallas.1} parent=5 // pred_region
        %s385 = ssub.s32 %s25, 1
        // Predicated region
        $region13: #{e2e_forward_pallas.1} parent=11 // pred_check
          %p386 = pneg %p72
        $region14: #{e2e_forward_pallas.1} parent=11 // pred_check_branch
          %388 = sbr.rel (%p386) target = $region16
        $region15: #{e2e_forward_pallas.1} parent=11 // pred_region
          _
        $region16: #{e2e_forward_pallas.1} parent=11 // pred_fallthru
          _
        // Predicated region
        $region17: #{e2e_forward_pallas.1} parent=11 // pred_check
          %p389 = pneg %p93
        $region18: #{e2e_forward_pallas.1} parent=11 // pred_check_branch
          %391 = sbr.rel (%p389) target = $region20
        $region19: #{e2e_forward_pallas.1} parent=11 // pred_region
          _
        $region20: #{e2e_forward_pallas.1} parent=11 // pred_fallthru
          _
        // Predicated region
        $region21: #{e2e_forward_pallas.1} parent=11 // pred_check
          %p392 = pneg %p114
        $region22: #{e2e_forward_pallas.1} parent=11 // pred_check_branch
          %394 = sbr.rel (%p392) target = $region24
        $region23: #{e2e_forward_pallas.1} parent=11 // pred_region
          _
        $region24: #{e2e_forward_pallas.1} parent=11 // pred_fallthru
          _
        // Predicated region
        $region25: #{e2e_forward_pallas.1} parent=11 // pred_check
          %p395 = pneg %p135
        $region26: #{e2e_forward_pallas.1} parent=11 // pred_check_branch
          %397 = sbr.rel (%p395) target = $region28
        $region27: #{e2e_forward_pallas.1} parent=11 // pred_region
          _
        $region28: #{e2e_forward_pallas.1} parent=11 // pred_fallthru
          _
        // Predicated region
        $region29: #{e2e_forward_pallas.1} parent=11 // pred_check
          %p398 = pneg %p156
        $region30: #{e2e_forward_pallas.1} parent=11 // pred_check_branch
          %400 = sbr.rel (%p398) target = $region32
        $region31: #{e2e_forward_pallas.1} parent=11 // pred_region
          _
        $region32: #{e2e_forward_pallas.1} parent=11 // pred_fallthru
          _
        // Predicated region
        $region33: #{e2e_forward_pallas.1} parent=11 // pred_check
          %p401 = pneg %p177
        $region34: #{e2e_forward_pallas.1} parent=11 // pred_check_branch
          %403 = sbr.rel (%p401) target = $region36
        $region35: #{e2e_forward_pallas.1} parent=11 // pred_region
          _
        $region36: #{e2e_forward_pallas.1} parent=11 // pred_fallthru
          _
        // Predicated region
        $region37: #{e2e_forward_pallas.1} parent=11 // pred_check
          %p404 = pneg %p198
        $region38: #{e2e_forward_pallas.1} parent=11 // pred_check_branch
          %406 = sbr.rel (%p404) target = $region40
        $region39: #{e2e_forward_pallas.1} parent=11 // pred_region
          _
        $region40: #{e2e_forward_pallas.1} parent=11 // pred_fallthru
          _
        // Predicated region
        $region41: #{e2e_forward_pallas.1} parent=11 // pred_check
          %p407 = pneg %p219
        $region42: #{e2e_forward_pallas.1} parent=11 // pred_check_branch
          %409 = sbr.rel (%p407) target = $region44
        $region43: #{e2e_forward_pallas.1} parent=11 // pred_region
          _
        $region44: #{e2e_forward_pallas.1} parent=11 // pred_fallthru
          _
        // Predicated region
        $region45: #{e2e_forward_pallas.1} parent=11 // pred_check
          %p410 = pneg %p240
        $region46: #{e2e_forward_pallas.1} parent=11 // pred_check_branch
          %412 = sbr.rel (%p410) target = $region48
        $region47: #{e2e_forward_pallas.1} parent=11 // pred_region
          _
        $region48: #{e2e_forward_pallas.1} parent=11 // pred_fallthru
          _
        // Predicated region
        $region49: #{e2e_forward_pallas.1} parent=11 // pred_check
          %p413 = pneg %p261
        $region50: #{e2e_forward_pallas.1} parent=11 // pred_check_branch
          %415 = sbr.rel (%p413) target = $region52
        $region51: #{e2e_forward_pallas.1} parent=11 // pred_region
          _
        $region52: #{e2e_forward_pallas.1} parent=11 // pred_fallthru
          _
        // Predicated region
        $region53: #{e2e_forward_pallas.1} parent=11 // pred_check
          %p416 = pneg %p282
        $region54: #{e2e_forward_pallas.1} parent=11 // pred_check_branch
          %418 = sbr.rel (%p416) target = $region56
        $region55: #{e2e_forward_pallas.1} parent=11 // pred_region
          %s420 = ssub.s32 46080, 46080
          %421 = vsyncadd [#allocation3], %s420
          %s422 = sshll.u32 [#allocation2], 4
          %s423 = int_to_ptr.vmem [resolvable:$true] %s422
          %428 = dma.hbm_to_vmem [thread:$0]  %s11, 46080, %s423, [#allocation3], 640, 640, 40
        $region56: #{e2e_forward_pallas.1} parent=11 // pred_fallthru
          _
        // Predicated region
        $region57: #{e2e_forward_pallas.1} parent=11 // pred_check
          %p429 = pneg %p303
        $region58: #{e2e_forward_pallas.1} parent=11 // pred_check_branch
          %431 = sbr.rel (%p429) target = $region60
        $region59: #{e2e_forward_pallas.1} parent=11 // pred_region
          _
        $region60: #{e2e_forward_pallas.1} parent=11 // pred_fallthru
          _
        // Predicated region
        $region61: #{e2e_forward_pallas.1} parent=11 // pred_check
          %p432 = pneg %p324
        $region62: #{e2e_forward_pallas.1} parent=11 // pred_check_branch
          %434 = sbr.rel (%p432) target = $region64
        $region63: #{e2e_forward_pallas.1} parent=11 // pred_region
          _
        $region64: #{e2e_forward_pallas.1} parent=11 // pred_fallthru
          _
        // Predicated region
        $region65: #{e2e_forward_pallas.1} parent=11 // pred_check
          %p435 = pneg %p345
        $region66: #{e2e_forward_pallas.1} parent=11 // pred_check_branch
          %437 = sbr.rel (%p435) target = $region68
        $region67: #{e2e_forward_pallas.1} parent=11 // pred_region
          _
        $region68: #{e2e_forward_pallas.1} parent=11 // pred_fallthru
          _
      $region12: #{e2e_forward_pallas.1} parent=5 // pred_fallthru
        _
      %p438 = scmp.lt.s32.totalorder %s25, 2
      // Predicated region
      $region69: #{e2e_forward_pallas.1} parent=5 // pred_check
        %p439 = pneg %p438
      $region70: #{e2e_forward_pallas.1} parent=5 // pred_check_branch
        %441 = sbr.rel (%p439) target = $region72
      $region71: #{e2e_forward_pallas.1} parent=5 // pred_region
        // Predicated region
        $region73: #{e2e_forward_pallas.1} parent=71 // pred_check
          %p442 = pneg %p45
        $region74: #{e2e_forward_pallas.1} parent=71 // pred_check_branch
          %444 = sbr.rel (%p442) target = $region76
        $region75: #{e2e_forward_pallas.1} parent=71 // pred_region
          %p445 = scmp.lt.s32.totalorder %s25, 1
          %s446 = scalar_select %p445, %s25, 1
          %s447 = smul.addr %s446, 4
          %s448 = smul.addr %s447, 8
          %s449 = scalar_lea.vmem %s0, %s448
        $region76: #{e2e_forward_pallas.1} parent=71 // pred_fallthru
          _
      $region72: #{e2e_forward_pallas.1} parent=5 // pred_fallthru
        _
      %p450 = scmp.le.s32.totalorder 1, %s25
      %p451 = scmp.lt.s32.totalorder %s25, 3
      %p452 = pnand %p450, %p451
      %p453 = pneg %p452
      // Predicated region
      $region77: #{e2e_forward_pallas.1} parent=5 // pred_check
        _
      $region78: #{e2e_forward_pallas.1} parent=5 // pred_check_branch
        %455 = sbr.rel (%p452) target = $region80
      $region79: #{e2e_forward_pallas.1} parent=5 // pred_region
        %s456 = ssub.s32 %s25, 1
        // Predicated region
        $region81: #{e2e_forward_pallas.1} parent=79 // pred_check
          %p457 = pneg %p282
        $region82: #{e2e_forward_pallas.1} parent=79 // pred_check_branch
          %459 = sbr.rel (%p457) target = $region84
        $region83: #{e2e_forward_pallas.1} parent=79 // pred_region
          %460 = dma.done [#allocation3], 46080
        $region84: #{e2e_forward_pallas.1} parent=79 // pred_fallthru
          _
        %p461 = scmp.lt.s32.totalorder %s30, 1
        %s462 = scalar_select %p461, %s30, 1
        %s463 = smul.addr %s462, 4
        %s464 = smul.addr %s463, 8
        %s465 = scalar_lea.vmem %s0, %s464
        %p466 = pneg %p51
        %p467 = pneg %p48
        %p468 = pneg %p72
        %p469 = pneg %p69
        %p470 = pneg %p93
        %p471 = pneg %p90
        %p472 = pneg %p114
        %p473 = pneg %p111
        %p474 = pneg %p135
        %p475 = pneg %p132
        %p476 = pneg %p156
        %p477 = pneg %p153
        %p478 = pneg %p177
        %p479 = pneg %p174
        %p480 = pneg %p198
        %p481 = pneg %p195
        %p482 = pneg %p219
        %p483 = pneg %p216
        %p484 = pneg %p240
        %p485 = pneg %p237
        %p486 = pneg %p261
        %p487 = pneg %p258
        %p488 = pneg %p282
        %p489 = pneg %p279
        %p490 = pneg %p303
        %p491 = pneg %p300
        %p492 = pneg %p324
        %p493 = pneg %p321
        %p494 = pneg %p345
        %p495 = pneg %p342
        %p496 = pneg %p371
        %p497 = pneg %p368
        %s498 = sand.u32 %s358, 1
        %s499 = scalar_lea.sflag [#allocation4], %s498
        %s500 = sand.u32 %s358, 1
        %s501 = scalar_lea.vmem [#allocation5], %s500
        %p502 = scmp.lt.s32.totalorder %s30, 1
        %s503 = scalar_select %p502, %s30, 1
        %s504 = smul.addr %s503, 4
        %s505 = smul.addr %s504, 8
        %s506 = scalar_lea.vmem %s0, %s505
        %v507 = vld [vmem:[%s506] sm:$0xff]
        %v508 = vld [vmem:[%s506 + $0x8] sm:$0xff]
        %v509 = vld [vmem:[%s506 + $0x10] sm:$0xff]
        %v510 = vld [vmem:[%s506 + $0x18] sm:$0xf]
        %v511 = vld [vmem:[%s1] sm:$0xff]
        %v512 = vld [vmem:[%s1 + $0x8] sm:$0xff]
        %v513 = vld [vmem:[%s1 + $0x10] sm:$0xff]
        %v514 = vld [vmem:[%s1 + $0x18] sm:$0xff]
        %v515 = vld [vmem:[%s1 + $0x20] sm:$0xff]
        %v516 = vld [vmem:[%s1 + $0x28] sm:$0xff]
        %v517 = vld [vmem:[%s1 + $0x30] sm:$0xff]
        %v518 = vld [vmem:[%s1 + $0x38] sm:$0xff]
        %v519 = vld [vmem:[%s1 + $0x40] sm:$0xff]
        %v520 = vld [vmem:[%s1 + $0x48] sm:$0xff]
        %v521 = vld [vmem:[%s1 + $0x50] sm:$0xff]
        %v522 = vld [vmem:[%s1 + $0x58] sm:$0xff]
        %v523 = vld [vmem:[%s1 + $0x60] sm:$0xff]
        %v524 = vld [vmem:[%s1 + $0x68] sm:$0xff]
        %v525 = vld [vmem:[%s1 + $0x70] sm:$0xff]
        %v526 = vld [vmem:[%s1 + $0x78] sm:$0xf]
        %v527 = vld [vmem:[%s1 + $0x80] sm:$0xf]
        %v528 = vld [vmem:[%s1 + $0x88] sm:$0xf]
        %v529 = vld [vmem:[%s1 + $0x90] sm:$0xf]
        %v530 = vld [vmem:[%s1 + $0x98] sm:$0xf]
        %s531 = scalar_lea.vmem %s1, 160
        %v532 = vld [vmem:[%s531] sm:$0xff]
        %v533 = vld [vmem:[%s531 + $0x8] sm:$0xff]
        %v534 = vld [vmem:[%s531 + $0x10] sm:$0xff]
        %v535 = vld [vmem:[%s531 + $0x18] sm:$0xff]
        %v536 = vld [vmem:[%s531 + $0x20] sm:$0xff]
        %v537 = vld [vmem:[%s531 + $0x28] sm:$0xff]
        %v538 = vld [vmem:[%s531 + $0x30] sm:$0xff]
        %v539 = vld [vmem:[%s531 + $0x38] sm:$0xff]
        %v540 = vld [vmem:[%s531 + $0x40] sm:$0xff]
        %v541 = vld [vmem:[%s531 + $0x48] sm:$0xff]
        %v542 = vld [vmem:[%s531 + $0x50] sm:$0xff]
        %v543 = vld [vmem:[%s531 + $0x58] sm:$0xff]
        %v544 = vld [vmem:[%s531 + $0x60] sm:$0xff]
        %v545 = vld [vmem:[%s531 + $0x68] sm:$0xff]
        %v546 = vld [vmem:[%s531 + $0x70] sm:$0xff]
        %v547 = vld [vmem:[%s531 + $0x78] sm:$0xf]
        %v548 = vld [vmem:[%s531 + $0x80] sm:$0xf]
        %v549 = vld [vmem:[%s531 + $0x88] sm:$0xf]
        %v550 = vld [vmem:[%s531 + $0x90] sm:$0xf]
        %v551 = vld [vmem:[%s531 + $0x98] sm:$0xf]
        %vm556 = vcmask 1046528
        %v557 = vrot.slane %v507, 1
        %v558 = vrot.slane %v508, 1
        %v559 = vsel %vm556, %v557, %v558
        %v560 = vrot.slane %v509, 1
        %v561 = vsel %vm556, %v558, %v560
        %v562 = vrot.slane %v510, 1
        %v563 = vsel %vm556, %v560, %v562
        %vm564 = vcmask 228352
        %v565 = vsel %vm564, %v559, 0
        %v567 = vsel %vm564, %v561, 0
        %v569 = vsel %vm564, %v563, 0
        %v571 = vsel %vm564, %v562, 0
        %vm573 = vcmask 1043456
        %v575 = vsel %vm573, %v547, 0
        %v578 = vsel %vm573, %v548, 0
        %v581 = vsel %vm573, %v549, 0
        %v584 = vsel %vm573, %v550, 0
        %v587 = vsel %vm573, %v551, 0
        %589 = vmatprep.subr.mxu0 %v533
        %590 = vmatpush1.msra.mxu0 %v532
        %591 = vmatprep.subr.mxu0 %v538
        %592 = vmatpush1.msra.mxu0 %v537
        %593 = vmatprep.subr.mxu0 %v543
        %594 = vmatpush1.msra.mxu0 %v542
        %595 = vmatprep.subr.mxu0 %v578
        %596 = vmatpush1.msra.mxu0 %v575
        %597 = vmatprep.subr.mxu0 0.0
        %598 = vmatpush1.msra.mxu0 0.0
        %599 = vmatprep.subr.mxu0 0.0
        %600 = vmatpush1.msra.mxu0 0.0
        %601 = vmatprep.subr.mxu0 0.0
        %602 = vmatpush1.msra.mxu0 0.0
        %603 = vmatprep.subr.mxu0 0.0
        %604 = vmatpush1.msra.mxu0 0.0
        %605 = vmatprep.subr.mxu0 0.0
        %606 = vmatpush1.msra.mxu0 0.0
        %607 = vmatprep.subr.mxu0 0.0
        %608 = vmatpush1.msra.mxu0 0.0
        %609 = vmatprep.subr.mxu0 0.0
        %610 = vmatpush1.msra.mxu0 0.0
        %611 = vmatprep.subr.mxu0 0.0
        %612 = vmatpush1.msra.mxu0 0.0
        %613 = vmatprep.subr.mxu0 0.0
        %614 = vmatpush1.msra.mxu0 0.0
        %615 = vmatprep.subr.mxu0 0.0
        %616 = vmatpush1.msra.mxu0 0.0
        %617 = vmatprep.subr.mxu0 0.0
        %618 = vmatpush1.msra.mxu0 0.0
        %619 = vmatprep.subr.mxu0 0.0
        %620 = vmatpush1.msra.mxu0 0.0
        %621 = vmatprep.subr.mxu0 0.0
        %622 = vmatpush1.msra.mxu0 0.0
        %623 = vmatprep.subr.mxu0 0.0
        %624 = vmatpush1.msra.mxu0 0.0
        %625 = vmatprep.subr.mxu0 0.0
        %626 = vmatpush1.msra.mxu0 0.0
        %627 = vmatprep.subr.mxu0 0.0
        %628 = vmatpush1.msra.mxu0 0.0
        %629 = vmatprep.subr.mxu0 0.0
        %630 = vmatpush1.msra.mxu0 0.0
        %631 = vmatprep.subr.mxu0 0.0
        %632 = vmatpush1.msra.mxu0 0.0
        %633 = vmatprep.subr.mxu0 0.0
        %634 = vmatpush1.msra.mxu0 0.0
        %635 = vmatprep.subr.mxu0 0.0
        %636 = vmatpush1.msra.mxu0 0.0
        %637 = vmatprep.subr.mxu0 0.0
        %638 = vmatpush1.msra.mxu0 0.0
        %639 = vmatprep.subr.mxu0 0.0
        %640 = vmatpush1.msra.mxu0 0.0
        %641 = vmatprep.subr.mxu0 0.0
        %642 = vmatpush1.msra.mxu0 0.0
        %643 = vmatprep.subr.mxu0 0.0
        %644 = vmatpush1.msra.mxu0 0.0
        %645 = vmatprep.subr.mxu0 0.0
        %646 = vmatpush1.msra.mxu0 0.0
        %647 = vmatprep.subr.mxu0 0.0
        %648 = vmatpush1.msra.mxu0 0.0
        %649 = vmatprep.subr.mxu0 0.0
        %650 = vmatpush1.msra.mxu0 0.0
        %651 = vmatprep.subr.mxu0 0.0
        %652 = vmatpush1.msra.mxu0 0.0
        %653 = vmatprep.mubr.f32.mxu0 0.0
        %654 = vmatmul.mubr.f32.gmra.mrb[0].mxu0 %v565
        %v655 = vpop.f32.mrb[0].mxu0
        %v656 = vadd.f32 0.0, %v655
        %v657 = vpop.f32.mrb[0].mxu0
        %v658 = vadd.f32 0.0, %v657
        %659 = vmatprep.mubr.f32.mxu0 0.0
        %660 = vmatmul.mubr.f32.gmra.mrb[0].mxu0 %v567
        %v661 = vpop.f32.mrb[0].mxu0
        %v662 = vadd.f32 0.0, %v661
        %v663 = vpop.f32.mrb[0].mxu0
        %v664 = vadd.f32 0.0, %v663
        %665 = vmatprep.mubr.f32.mxu0 0.0
        %666 = vmatmul.mubr.f32.gmra.mrb[0].mxu0 %v569
        %v667 = vpop.f32.mrb[0].mxu0
        %v668 = vadd.f32 0.0, %v667
        %v669 = vpop.f32.mrb[0].mxu0
        %v670 = vadd.f32 0.0, %v669
        %671 = vmatprep.mubr.f32.mxu0 0.0
        %672 = vmatmul.mubr.f32.gmra.mrb[0].mxu0 %v571
        %v673 = vpop.f32.mrb[0].mxu0
        %v674 = vadd.f32 0.0, %v673
        %v675 = vpop.f32.mrb[0].mxu0
        %v676 = vadd.f32 0.0, %v675
        %677 = vdwg.mxu0
        %678 = vmatprep.subr.mxu0 %v535
        %679 = vmatpush1.msra.mxu0 %v534
        %680 = vmatprep.subr.mxu0 %v540
        %681 = vmatpush1.msra.mxu0 %v539
        %682 = vmatprep.subr.mxu0 %v545
        %683 = vmatpush1.msra.mxu0 %v544
        %684 = vmatprep.subr.mxu0 %v584
        %685 = vmatpush1.msra.mxu0 %v581
        %686 = vmatprep.subr.mxu0 0.0
        %687 = vmatpush1.msra.mxu0 0.0
        %688 = vmatprep.subr.mxu0 0.0
        %689 = vmatpush1.msra.mxu0 0.0
        %690 = vmatprep.subr.mxu0 0.0
        %691 = vmatpush1.msra.mxu0 0.0
        %692 = vmatprep.subr.mxu0 0.0
        %693 = vmatpush1.msra.mxu0 0.0
        %694 = vmatprep.subr.mxu0 0.0
        %695 = vmatpush1.msra.mxu0 0.0
        %696 = vmatprep.subr.mxu0 0.0
        %697 = vmatpush1.msra.mxu0 0.0
        %698 = vmatprep.subr.mxu0 0.0
        %699 = vmatpush1.msra.mxu0 0.0
        %700 = vmatprep.subr.mxu0 0.0
        %701 = vmatpush1.msra.mxu0 0.0
        %702 = vmatprep.subr.mxu0 0.0
        %703 = vmatpush1.msra.mxu0 0.0
        %704 = vmatprep.subr.mxu0 0.0
        %705 = vmatpush1.msra.mxu0 0.0
        %706 = vmatprep.subr.mxu0 0.0
        %707 = vmatpush1.msra.mxu0 0.0
        %708 = vmatprep.subr.mxu0 0.0
        %709 = vmatpush1.msra.mxu0 0.0
        %710 = vmatprep.subr.mxu0 0.0
        %711 = vmatpush1.msra.mxu0 0.0
        %712 = vmatprep.subr.mxu0 0.0
        %713 = vmatpush1.msra.mxu0 0.0
        %714 = vmatprep.subr.mxu0 0.0
        %715 = vmatpush1.msra.mxu0 0.0
        %716 = vmatprep.subr.mxu0 0.0
        %717 = vmatpush1.msra.mxu0 0.0
        %718 = vmatprep.subr.mxu0 0.0
        %719 = vmatpush1.msra.mxu0 0.0
        %720 = vmatprep.subr.mxu0 0.0
        %721 = vmatpush1.msra.mxu0 0.0
        %722 = vmatprep.subr.mxu0 0.0
        %723 = vmatpush1.msra.mxu0 0.0
        %724 = vmatprep.subr.mxu0 0.0
        %725 = vmatpush1.msra.mxu0 0.0
        %726 = vmatprep.subr.mxu0 0.0
        %727 = vmatpush1.msra.mxu0 0.0
        %728 = vmatprep.subr.mxu0 0.0
        %729 = vmatpush1.msra.mxu0 0.0
        %730 = vmatprep.subr.mxu0 0.0
        %731 = vmatpush1.msra.mxu0 0.0
        %732 = vmatprep.subr.mxu0 0.0
        %733 = vmatpush1.msra.mxu0 0.0
        %734 = vmatprep.subr.mxu0 0.0
        %735 = vmatpush1.msra.mxu0 0.0
        %736 = vmatprep.subr.mxu0 0.0
        %737 = vmatpush1.msra.mxu0 0.0
        %738 = vmatprep.subr.mxu0 0.0
        %739 = vmatpush1.msra.mxu0 0.0
        %740 = vmatprep.subr.mxu0 0.0
        %741 = vmatpush1.msra.mxu0 0.0
        %742 = vmatprep.mubr.f32.mxu0 0.0
        %743 = vmatmul.mubr.f32.gmra.mrb[0].mxu0 %v565
        %v744 = vpop.f32.mrb[0].mxu0
        %v745 = vadd.f32 0.0, %v744
        %v746 = vpop.f32.mrb[0].mxu0
        %v747 = vadd.f32 0.0, %v746
        %748 = vmatprep.mubr.f32.mxu0 0.0
        %749 = vmatmul.mubr.f32.gmra.mrb[0].mxu0 %v567
        %v750 = vpop.f32.mrb[0].mxu0
        %v751 = vadd.f32 0.0, %v750
        %v752 = vpop.f32.mrb[0].mxu0
        %v753 = vadd.f32 0.0, %v752
        %754 = vmatprep.mubr.f32.mxu0 0.0
        %755 = vmatmul.mubr.f32.gmra.mrb[0].mxu0 %v569
        %v756 = vpop.f32.mrb[0].mxu0
        %v757 = vadd.f32 0.0, %v756
        %v758 = vpop.f32.mrb[0].mxu0
        %v759 = vadd.f32 0.0, %v758
        %760 = vmatprep.mubr.f32.mxu0 0.0
        %761 = vmatmul.mubr.f32.gmra.mrb[0].mxu0 %v571
        %v762 = vpop.f32.mrb[0].mxu0
        %v763 = vadd.f32 0.0, %v762
        %v764 = vpop.f32.mrb[0].mxu0
        %v765 = vadd.f32 0.0, %v764
        %766 = vdwg.mxu0
        %767 = vmatprep.subr.mxu0 0.0
        %768 = vmatpush1.msra.mxu0 %v536
        %769 = vmatprep.subr.mxu0 0.0
        %770 = vmatpush1.msra.mxu0 %v541
        %771 = vmatprep.subr.mxu0 0.0
        %772 = vmatpush1.msra.mxu0 %v546
        %773 = vmatprep.subr.mxu0 0.0
        %774 = vmatpush1.msra.mxu0 %v587
        %775 = vmatprep.subr.mxu0 0.0
        %776 = vmatpush1.msra.mxu0 0.0
        %777 = vmatprep.subr.mxu0 0.0
        %778 = vmatpush1.msra.mxu0 0.0
        %779 = vmatprep.subr.mxu0 0.0
        %780 = vmatpush1.msra.mxu0 0.0
        %781 = vmatprep.subr.mxu0 0.0
        %782 = vmatpush1.msra.mxu0 0.0
        %783 = vmatprep.subr.mxu0 0.0
        %784 = vmatpush1.msra.mxu0 0.0
        %785 = vmatprep.subr.mxu0 0.0
        %786 = vmatpush1.msra.mxu0 0.0
        %787 = vmatprep.subr.mxu0 0.0
        %788 = vmatpush1.msra.mxu0 0.0
        %789 = vmatprep.subr.mxu0 0.0
        %790 = vmatpush1.msra.mxu0 0.0
        %791 = vmatprep.subr.mxu0 0.0
        %792 = vmatpush1.msra.mxu0 0.0
        %793 = vmatprep.subr.mxu0 0.0
        %794 = vmatpush1.msra.mxu0 0.0
        %795 = vmatprep.subr.mxu0 0.0
        %796 = vmatpush1.msra.mxu0 0.0
        %797 = vmatprep.subr.mxu0 0.0
        %798 = vmatpush1.msra.mxu0 0.0
        %799 = vmatprep.subr.mxu0 0.0
        %800 = vmatpush1.msra.mxu0 0.0
        %801 = vmatprep.subr.mxu0 0.0
        %802 = vmatpush1.msra.mxu0 0.0
        %803 = vmatprep.subr.mxu0 0.0
        %804 = vmatpush1.msra.mxu0 0.0
        %805 = vmatprep.subr.mxu0 0.0
        %806 = vmatpush1.msra.mxu0 0.0
        %807 = vmatprep.subr.mxu0 0.0
        %808 = vmatpush1.msra.mxu0 0.0
        %809 = vmatprep.subr.mxu0 0.0
        %810 = vmatpush1.msra.mxu0 0.0
        %811 = vmatprep.subr.mxu0 0.0
        %812 = vmatpush1.msra.mxu0 0.0
        %813 = vmatprep.subr.mxu0 0.0
        %814 = vmatpush1.msra.mxu0 0.0
        %815 = vmatprep.subr.mxu0 0.0
        %816 = vmatpush1.msra.mxu0 0.0
        %817 = vmatprep.subr.mxu0 0.0
        %818 = vmatpush1.msra.mxu0 0.0
        %819 = vmatprep.subr.mxu0 0.0
        %820 = vmatpush1.msra.mxu0 0.0
        %821 = vmatprep.subr.mxu0 0.0
        %822 = vmatpush1.msra.mxu0 0.0
        %823 = vmatprep.subr.mxu0 0.0
        %824 = vmatpush1.msra.mxu0 0.0
        %825 = vmatprep.subr.mxu0 0.0
        %826 = vmatpush1.msra.mxu0 0.0
        %827 = vmatprep.subr.mxu0 0.0
        %828 = vmatpush1.msra.mxu0 0.0
        %829 = vmatprep.subr.mxu0 0.0
        %830 = vmatpush1.msra.mxu0 0.0
        %831 = vmatprep.mubr.f32.mxu0 0.0
        %832 = vmatmul.mubr.f32.gmra.mrb[0].mxu0 %v565
        %v833 = vpop.f32.mrb[0].mxu0
        %v834 = vadd.f32 0.0, %v833
        %v835 = vpop.f32.mrb[0].mxu0
        %836 = vmatprep.mubr.f32.mxu0 0.0
        %837 = vmatmul.mubr.f32.gmra.mrb[0].mxu0 %v567
        %v838 = vpop.f32.mrb[0].mxu0
        %v839 = vadd.f32 0.0, %v838
        %v840 = vpop.f32.mrb[0].mxu0
        %841 = vmatprep.mubr.f32.mxu0 0.0
        %842 = vmatmul.mubr.f32.gmra.mrb[0].mxu0 %v569
        %v843 = vpop.f32.mrb[0].mxu0
        %v844 = vadd.f32 0.0, %v843
        %v845 = vpop.f32.mrb[0].mxu0
        %846 = vmatprep.mubr.f32.mxu0 0.0
        %847 = vmatmul.mubr.f32.gmra.mrb[0].mxu0 %v571
        %v848 = vpop.f32.mrb[0].mxu0
        %v849 = vadd.f32 0.0, %v848
        %v850 = vpop.f32.mrb[0].mxu0
        %851 = vdwg.mxu0
        %v852 = vsel %vm564, %v507, 0
        %v854 = vsel %vm564, %v508, 0
        %v856 = vsel %vm564, %v509, 0
        %v858 = vsel %vm564, %v510, 0
        %v861 = vsel %vm573, %v526, 0
        %v864 = vsel %vm573, %v527, 0
        %v867 = vsel %vm573, %v528, 0
        %v870 = vsel %vm573, %v529, 0
        %v873 = vsel %vm573, %v530, 0
        %875 = vmatprep.subr.mxu0 %v512
        %876 = vmatpush1.msra.mxu0 %v511
        %877 = vmatprep.subr.mxu0 %v517
        %878 = vmatpush1.msra.mxu0 %v516
        %879 = vmatprep.subr.mxu0 %v522
        %880 = vmatpush1.msra.mxu0 %v521
        %881 = vmatprep.subr.mxu0 %v864
        %882 = vmatpush1.msra.mxu0 %v861
        %883 = vmatprep.subr.mxu0 0.0
        %884 = vmatpush1.msra.mxu0 0.0
        %885 = vmatprep.subr.mxu0 0.0
        %886 = vmatpush1.msra.mxu0 0.0
        %887 = vmatprep.subr.mxu0 0.0
        %888 = vmatpush1.msra.mxu0 0.0
        %889 = vmatprep.subr.mxu0 0.0
        %890 = vmatpush1.msra.mxu0 0.0
        %891 = vmatprep.subr.mxu0 0.0
        %892 = vmatpush1.msra.mxu0 0.0
        %893 = vmatprep.subr.mxu0 0.0
        %894 = vmatpush1.msra.mxu0 0.0
        %895 = vmatprep.subr.mxu0 0.0
        %896 = vmatpush1.msra.mxu0 0.0
        %897 = vmatprep.subr.mxu0 0.0
        %898 = vmatpush1.msra.mxu0 0.0
        %899 = vmatprep.subr.mxu0 0.0
        %900 = vmatpush1.msra.mxu0 0.0
        %901 = vmatprep.subr.mxu0 0.0
        %902 = vmatpush1.msra.mxu0 0.0
        %903 = vmatprep.subr.mxu0 0.0
        %904 = vmatpush1.msra.mxu0 0.0
        %905 = vmatprep.subr.mxu0 0.0
        %906 = vmatpush1.msra.mxu0 0.0
        %907 = vmatprep.subr.mxu0 0.0
        %908 = vmatpush1.msra.mxu0 0.0
        %909 = vmatprep.subr.mxu0 0.0
        %910 = vmatpush1.msra.mxu0 0.0
        %911 = vmatprep.subr.mxu0 0.0
        %912 = vmatpush1.msra.mxu0 0.0
        %913 = vmatprep.subr.mxu0 0.0
        %914 = vmatpush1.msra.mxu0 0.0
        %915 = vmatprep.subr.mxu0 0.0
        %916 = vmatpush1.msra.mxu0 0.0
        %917 = vmatprep.subr.mxu0 0.0
        %918 = vmatpush1.msra.mxu0 0.0
        %919 = vmatprep.subr.mxu0 0.0
        %920 = vmatpush1.msra.mxu0 0.0
        %921 = vmatprep.subr.mxu0 0.0
        %922 = vmatpush1.msra.mxu0 0.0
        %923 = vmatprep.subr.mxu0 0.0
        %924 = vmatpush1.msra.mxu0 0.0
        %925 = vmatprep.subr.mxu0 0.0
        %926 = vmatpush1.msra.mxu0 0.0
        %927 = vmatprep.subr.mxu0 0.0
        %928 = vmatpush1.msra.mxu0 0.0
        %929 = vmatprep.subr.mxu0 0.0
        %930 = vmatpush1.msra.mxu0 0.0
        %931 = vmatprep.subr.mxu0 0.0
        %932 = vmatpush1.msra.mxu0 0.0
        %933 = vmatprep.subr.mxu0 0.0
        %934 = vmatpush1.msra.mxu0 0.0
        %935 = vmatprep.subr.mxu0 0.0
        %936 = vmatpush1.msra.mxu0 0.0
        %937 = vmatprep.subr.mxu0 0.0
        %938 = vmatpush1.msra.mxu0 0.0
        %939 = vmatprep.mubr.f32.mxu0 0.0
        %940 = vmatmul.mubr.f32.gmra.mrb[0].mxu0 %v852
        %v941 = vpop.f32.mrb[0].mxu0
        %v942 = vadd.f32 %v656, %v941
        %v943 = vpop.f32.mrb[0].mxu0
        %v944 = vadd.f32 %v658, %v943
        %945 = vmatprep.mubr.f32.mxu0 0.0
        %946 = vmatmul.mubr.f32.gmra.mrb[0].mxu0 %v854
        %v947 = vpop.f32.mrb[0].mxu0
        %v948 = vadd.f32 %v662, %v947
        %v949 = vpop.f32.mrb[0].mxu0
        %v950 = vadd.f32 %v664, %v949
        %951 = vmatprep.mubr.f32.mxu0 0.0
        %952 = vmatmul.mubr.f32.gmra.mrb[0].mxu0 %v856
        %v953 = vpop.f32.mrb[0].mxu0
        %v954 = vadd.f32 %v668, %v953
        %v955 = vpop.f32.mrb[0].mxu0
        %v956 = vadd.f32 %v670, %v955
        %957 = vmatprep.mubr.f32.mxu0 0.0
        %958 = vmatmul.mubr.f32.gmra.mrb[0].mxu0 %v858
        %v959 = vpop.f32.mrb[0].mxu0
        %v960 = vadd.f32 %v674, %v959
        %v961 = vpop.f32.mrb[0].mxu0
        %v962 = vadd.f32 %v676, %v961
        %963 = vdwg.mxu0
        %964 = vmatprep.subr.mxu0 %v514
        %965 = vmatpush1.msra.mxu0 %v513
        %966 = vmatprep.subr.mxu0 %v519
        %967 = vmatpush1.msra.mxu0 %v518
        %968 = vmatprep.subr.mxu0 %v524
        %969 = vmatpush1.msra.mxu0 %v523
        %970 = vmatprep.subr.mxu0 %v870
        %971 = vmatpush1.msra.mxu0 %v867
        %972 = vmatprep.subr.mxu0 0.0
        %973 = vmatpush1.msra.mxu0 0.0
        %974 = vmatprep.subr.mxu0 0.0
        %975 = vmatpush1.msra.mxu0 0.0
        %976 = vmatprep.subr.mxu0 0.0
        %977 = vmatpush1.msra.mxu0 0.0
        %978 = vmatprep.subr.mxu0 0.0
        %979 = vmatpush1.msra.mxu0 0.0
        %980 = vmatprep.subr.mxu0 0.0
        %981 = vmatpush1.msra.mxu0 0.0
        %982 = vmatprep.subr.mxu0 0.0
        %983 = vmatpush1.msra.mxu0 0.0
        %984 = vmatprep.subr.mxu0 0.0
        %985 = vmatpush1.msra.mxu0 0.0
        %986 = vmatprep.subr.mxu0 0.0
        %987 = vmatpush1.msra.mxu0 0.0
        %988 = vmatprep.subr.mxu0 0.0
        %989 = vmatpush1.msra.mxu0 0.0
        %990 = vmatprep.subr.mxu0 0.0
        %991 = vmatpush1.msra.mxu0 0.0
        %992 = vmatprep.subr.mxu0 0.0
        %993 = vmatpush1.msra.mxu0 0.0
        %994 = vmatprep.subr.mxu0 0.0
        %995 = vmatpush1.msra.mxu0 0.0
        %996 = vmatprep.subr.mxu0 0.0
        %997 = vmatpush1.msra.mxu0 0.0
        %998 = vmatprep.subr.mxu0 0.0
        %999 = vmatpush1.msra.mxu0 0.0
        %1000 = vmatprep.subr.mxu0 0.0
        %1001 = vmatpush1.msra.mxu0 0.0
        %1002 = vmatprep.subr.mxu0 0.0
        %1003 = vmatpush1.msra.mxu0 0.0
        %1004 = vmatprep.subr.mxu0 0.0
        %1005 = vmatpush1.msra.mxu0 0.0
        %1006 = vmatprep.subr.mxu0 0.0
        %1007 = vmatpush1.msra.mxu0 0.0
        %1008 = vmatprep.subr.mxu0 0.0
        %1009 = vmatpush1.msra.mxu0 0.0
        %1010 = vmatprep.subr.mxu0 0.0
        %1011 = vmatpush1.msra.mxu0 0.0
        %1012 = vmatprep.subr.mxu0 0.0
        %1013 = vmatpush1.msra.mxu0 0.0
        %1014 = vmatprep.subr.mxu0 0.0
        %1015 = vmatpush1.msra.mxu0 0.0
        %1016 = vmatprep.subr.mxu0 0.0
        %1017 = vmatpush1.msra.mxu0 0.0
        %1018 = vmatprep.subr.mxu0 0.0
        %1019 = vmatpush1.msra.mxu0 0.0
        %1020 = vmatprep.subr.mxu0 0.0
        %1021 = vmatpush1.msra.mxu0 0.0
        %1022 = vmatprep.subr.mxu0 0.0
        %1023 = vmatpush1.msra.mxu0 0.0
        %1024 = vmatprep.subr.mxu0 0.0
        %1025 = vmatpush1.msra.mxu0 0.0
        %1026 = vmatprep.subr.mxu0 0.0
        %1027 = vmatpush1.msra.mxu0 0.0
        %1028 = vmatprep.mubr.f32.mxu0 0.0
        %1029 = vmatmul.mubr.f32.gmra.mrb[0].mxu0 %v852
        %v1030 = vpop.f32.mrb[0].mxu0
        %v1031 = vadd.f32 %v745, %v1030
        %v1032 = vpop.f32.mrb[0].mxu0
        %v1033 = vadd.f32 %v747, %v1032
        %1034 = vmatprep.mubr.f32.mxu0 0.0
        %1035 = vmatmul.mubr.f32.gmra.mrb[0].mxu0 %v854
        %v1036 = vpop.f32.mrb[0].mxu0
        %v1037 = vadd.f32 %v751, %v1036
        %v1038 = vpop.f32.mrb[0].mxu0
        %v1039 = vadd.f32 %v753, %v1038
        %1040 = vmatprep.mubr.f32.mxu0 0.0
        %1041 = vmatmul.mubr.f32.gmra.mrb[0].mxu0 %v856
        %v1042 = vpop.f32.mrb[0].mxu0
        %v1043 = vadd.f32 %v757, %v1042
        %v1044 = vpop.f32.mrb[0].mxu0
        %v1045 = vadd.f32 %v759, %v1044
        %1046 = vmatprep.mubr.f32.mxu0 0.0
        %1047 = vmatmul.mubr.f32.gmra.mrb[0].mxu0 %v858
        %v1048 = vpop.f32.mrb[0].mxu0
        %v1049 = vadd.f32 %v763, %v1048
        %v1050 = vpop.f32.mrb[0].mxu0
        %v1051 = vadd.f32 %v765, %v1050
        %1052 = vdwg.mxu0
        %1053 = vmatprep.subr.mxu0 0.0
        %1054 = vmatpush1.msra.mxu0 %v515
        %1055 = vmatprep.subr.mxu0 0.0
        %1056 = vmatpush1.msra.mxu0 %v520
        %1057 = vmatprep.subr.mxu0 0.0
        %1058 = vmatpush1.msra.mxu0 %v525
        %1059 = vmatprep.subr.mxu0 0.0
        %1060 = vmatpush1.msra.mxu0 %v873
        %1061 = vmatprep.subr.mxu0 0.0
        %1062 = vmatpush1.msra.mxu0 0.0
        %1063 = vmatprep.subr.mxu0 0.0
        %1064 = vmatpush1.msra.mxu0 0.0
        %1065 = vmatprep.subr.mxu0 0.0
        %1066 = vmatpush1.msra.mxu0 0.0
        %1067 = vmatprep.subr.mxu0 0.0
        %1068 = vmatpush1.msra.mxu0 0.0
        %1069 = vmatprep.subr.mxu0 0.0
        %1070 = vmatpush1.msra.mxu0 0.0
        %1071 = vmatprep.subr.mxu0 0.0
        %1072 = vmatpush1.msra.mxu0 0.0
        %1073 = vmatprep.subr.mxu0 0.0
        %1074 = vmatpush1.msra.mxu0 0.0
        %1075 = vmatprep.subr.mxu0 0.0
        %1076 = vmatpush1.msra.mxu0 0.0
        %1077 = vmatprep.subr.mxu0 0.0
        %1078 = vmatpush1.msra.mxu0 0.0
        %1079 = vmatprep.subr.mxu0 0.0
        %1080 = vmatpush1.msra.mxu0 0.0
        %1081 = vmatprep.subr.mxu0 0.0
        %1082 = vmatpush1.msra.mxu0 0.0
        %1083 = vmatprep.subr.mxu0 0.0
        %1084 = vmatpush1.msra.mxu0 0.0
        %1085 = vmatprep.subr.mxu0 0.0
        %1086 = vmatpush1.msra.mxu0 0.0
        %1087 = vmatprep.subr.mxu0 0.0
        %1088 = vmatpush1.msra.mxu0 0.0
        %1089 = vmatprep.subr.mxu0 0.0
        %1090 = vmatpush1.msra.mxu0 0.0
        %1091 = vmatprep.subr.mxu0 0.0
        %1092 = vmatpush1.msra.mxu0 0.0
        %1093 = vmatprep.subr.mxu0 0.0
        %1094 = vmatpush1.msra.mxu0 0.0
        %1095 = vmatprep.subr.mxu0 0.0
        %1096 = vmatpush1.msra.mxu0 0.0
        %1097 = vmatprep.subr.mxu0 0.0
        %1098 = vmatpush1.msra.mxu0 0.0
        %1099 = vmatprep.subr.mxu0 0.0
        %1100 = vmatpush1.msra.mxu0 0.0
        %1101 = vmatprep.subr.mxu0 0.0
        %1102 = vmatpush1.msra.mxu0 0.0
        %1103 = vmatprep.subr.mxu0 0.0
        %1104 = vmatpush1.msra.mxu0 0.0
        %1105 = vmatprep.subr.mxu0 0.0
        %1106 = vmatpush1.msra.mxu0 0.0
        %1107 = vmatprep.subr.mxu0 0.0
        %1108 = vmatpush1.msra.mxu0 0.0
        %1109 = vmatprep.subr.mxu0 0.0
        %1110 = vmatpush1.msra.mxu0 0.0
        %1111 = vmatprep.subr.mxu0 0.0
        %1112 = vmatpush1.msra.mxu0 0.0
        %1113 = vmatprep.subr.mxu0 0.0
        %1114 = vmatpush1.msra.mxu0 0.0
        %1115 = vmatprep.subr.mxu0 0.0
        %1116 = vmatpush1.msra.mxu0 0.0
        %1117 = vmatprep.mubr.f32.mxu0 0.0
        %1118 = vmatmul.mubr.f32.gmra.mrb[0].mxu0 %v852
        %v1119 = vpop.f32.mrb[0].mxu0
        %v1120 = vadd.f32 %v834, %v1119
        %v1121 = vpop.f32.mrb[0].mxu0
        %1122 = vmatprep.mubr.f32.mxu0 0.0
        %1123 = vmatmul.mubr.f32.gmra.mrb[0].mxu0 %v854
        %v1124 = vpop.f32.mrb[0].mxu0
        %v1125 = vadd.f32 %v839, %v1124
        %v1126 = vpop.f32.mrb[0].mxu0
        %1127 = vmatprep.mubr.f32.mxu0 0.0
        %1128 = vmatmul.mubr.f32.gmra.mrb[0].mxu0 %v856
        %v1129 = vpop.f32.mrb[0].mxu0
        %v1130 = vadd.f32 %v844, %v1129
        %v1131 = vpop.f32.mrb[0].mxu0
        %1132 = vmatprep.mubr.f32.mxu0 0.0
        %1133 = vmatmul.mubr.f32.gmra.mrb[0].mxu0 %v858
        %v1134 = vpop.f32.mrb[0].mxu0
        %v1135 = vadd.f32 %v849, %v1134
        %v1136 = vpop.f32.mrb[0].mxu0
        %1137 = vdwg.mxu0
        %s1138 = scalar_lea.vmem %s1, 320
        %v1139 = vld [vmem:[%s1138] sm:$0xff]
        %v1140 = vld [vmem:[%s1138 + $0x8] sm:$0xff]
        %v1141 = vld [vmem:[%s1138 + $0x10] sm:$0xff]
        %v1142 = vld [vmem:[%s1138 + $0x18] sm:$0xff]
        %v1143 = vld [vmem:[%s1138 + $0x20] sm:$0xff]
        %v1144 = vld [vmem:[%s1138 + $0x28] sm:$0xff]
        %v1145 = vld [vmem:[%s1138 + $0x30] sm:$0xff]
        %v1146 = vld [vmem:[%s1138 + $0x38] sm:$0xff]
        %v1147 = vld [vmem:[%s1138 + $0x40] sm:$0xff]
        %v1148 = vld [vmem:[%s1138 + $0x48] sm:$0xff]
        %v1149 = vld [vmem:[%s1138 + $0x50] sm:$0xff]
        %v1150 = vld [vmem:[%s1138 + $0x58] sm:$0xff]
        %v1151 = vld [vmem:[%s1138 + $0x60] sm:$0xff]
        %v1152 = vld [vmem:[%s1138 + $0x68] sm:$0xff]
        %v1153 = vld [vmem:[%s1138 + $0x70] sm:$0xff]
        %v1154 = vld [vmem:[%s1138 + $0x78] sm:$0xf]
        %v1155 = vld [vmem:[%s1138 + $0x80] sm:$0xf]
        %v1156 = vld [vmem:[%s1138 + $0x88] sm:$0xf]
        %v1157 = vld [vmem:[%s1138 + $0x90] sm:$0xf]
        %v1158 = vld [vmem:[%s1138 + $0x98] sm:$0xf]
        %vm1159 = vcmask 1045504
        %v1160 = vrot.slane %v507, 2
        %v1161 = vrot.slane %v508, 2
        %v1162 = vsel %vm1159, %v1160, %v1161
        %v1163 = vrot.slane %v509, 2
        %v1164 = vsel %vm1159, %v1161, %v1163
        %v1165 = vrot.slane %v510, 2
        %v1166 = vsel %vm1159, %v1163, %v1165
        %v1167 = vsel %vm564, %v1162, 0
        %v1169 = vsel %vm564, %v1164, 0
        %v1171 = vsel %vm564, %v1166, 0
        %v1173 = vsel %vm564, %v1165, 0
        %v1176 = vsel %vm573, %v1154, 0
        %v1179 = vsel %vm573, %v1155, 0
        %v1182 = vsel %vm573, %v1156, 0
        %v1185 = vsel %vm573, %v1157, 0
        %v1188 = vsel %vm573, %v1158, 0
        %1190 = vmatprep.subr.mxu0 %v1140
        %1191 = vmatpush1.msra.mxu0 %v1139
        %1192 = vmatprep.subr.mxu0 %v1145
        %1193 = vmatpush1.msra.mxu0 %v1144
        %1194 = vmatprep.subr.mxu0 %v1150
        %1195 = vmatpush1.msra.mxu0 %v1149
        %1196 = vmatprep.subr.mxu0 %v1179
        %1197 = vmatpush1.msra.mxu0 %v1176
        %1198 = vmatprep.subr.mxu0 0.0
        %1199 = vmatpush1.msra.mxu0 0.0
        %1200 = vmatprep.subr.mxu0 0.0
        %1201 = vmatpush1.msra.mxu0 0.0
        %1202 = vmatprep.subr.mxu0 0.0
        %1203 = vmatpush1.msra.mxu0 0.0
        %1204 = vmatprep.subr.mxu0 0.0
        %1205 = vmatpush1.msra.mxu0 0.0
        %1206 = vmatprep.subr.mxu0 0.0
        %1207 = vmatpush1.msra.mxu0 0.0
        %1208 = vmatprep.subr.mxu0 0.0
        %1209 = vmatpush1.msra.mxu0 0.0
        %1210 = vmatprep.subr.mxu0 0.0
        %1211 = vmatpush1.msra.mxu0 0.0
        %1212 = vmatprep.subr.mxu0 0.0
        %1213 = vmatpush1.msra.mxu0 0.0
        %1214 = vmatprep.subr.mxu0 0.0
        %1215 = vmatpush1.msra.mxu0 0.0
        %1216 = vmatprep.subr.mxu0 0.0
        %1217 = vmatpush1.msra.mxu0 0.0
        %1218 = vmatprep.subr.mxu0 0.0
        %1219 = vmatpush1.msra.mxu0 0.0
        %1220 = vmatprep.subr.mxu0 0.0
        %1221 = vmatpush1.msra.mxu0 0.0
        %1222 = vmatprep.subr.mxu0 0.0
        %1223 = vmatpush1.msra.mxu0 0.0
        %1224 = vmatprep.subr.mxu0 0.0
        %1225 = vmatpush1.msra.mxu0 0.0
        %1226 = vmatprep.subr.mxu0 0.0
        %1227 = vmatpush1.msra.mxu0 0.0
        %1228 = vmatprep.subr.mxu0 0.0
        %1229 = vmatpush1.msra.mxu0 0.0
        %1230 = vmatprep.subr.mxu0 0.0
        %1231 = vmatpush1.msra.mxu0 0.0
        %1232 = vmatprep.subr.mxu0 0.0
        %1233 = vmatpush1.msra.mxu0 0.0
        %1234 = vmatprep.subr.mxu0 0.0
        %1235 = vmatpush1.msra.mxu0 0.0
        %1236 = vmatprep.subr.mxu0 0.0
        %1237 = vmatpush1.msra.mxu0 0.0
        %1238 = vmatprep.subr.mxu0 0.0
        %1239 = vmatpush1.msra.mxu0 0.0
        %1240 = vmatprep.subr.mxu0 0.0
        %1241 = vmatpush1.msra.mxu0 0.0
        %1242 = vmatprep.subr.mxu0 0.0
        %1243 = vmatpush1.msra.mxu0 0.0
        %1244 = vmatprep.subr.mxu0 0.0
        %1245 = vmatpush1.msra.mxu0 0.0
        %1246 = vmatprep.subr.mxu0 0.0
        %1247 = vmatpush1.msra.mxu0 0.0
        %1248 = vmatprep.subr.mxu0 0.0
        %1249 = vmatpush1.msra.mxu0 0.0
        %1250 = vmatprep.subr.mxu0 0.0
        %1251 = vmatpush1.msra.mxu0 0.0
        %1252 = vmatprep.subr.mxu0 0.0
        %1253 = vmatpush1.msra.mxu0 0.0
        %1254 = vmatprep.mubr.f32.mxu0 0.0
        %1255 = vmatmul.mubr.f32.gmra.mrb[0].mxu0 %v1167
        %v1256 = vpop.f32.mrb[0].mxu0
        %v1257 = vadd.f32 0.0, %v1256
        %v1258 = vpop.f32.mrb[0].mxu0
        %v1259 = vadd.f32 0.0, %v1258
        %1260 = vmatprep.mubr.f32.mxu0 0.0
        %1261 = vmatmul.mubr.f32.gmra.mrb[0].mxu0 %v1169
        %v1262 = vpop.f32.mrb[0].mxu0
        %v1263 = vadd.f32 0.0, %v1262
        %v1264 = vpop.f32.mrb[0].mxu0
        %v1265 = vadd.f32 0.0, %v1264
        %1266 = vmatprep.mubr.f32.mxu0 0.0
        %1267 = vmatmul.mubr.f32.gmra.mrb[0].mxu0 %v1171
        %v1268 = vpop.f32.mrb[0].mxu0
        %v1269 = vadd.f32 0.0, %v1268
        %v1270 = vpop.f32.mrb[0].mxu0
        %v1271 = vadd.f32 0.0, %v1270
        %1272 = vmatprep.mubr.f32.mxu0 0.0
        %1273 = vmatmul.mubr.f32.gmra.mrb[0].mxu0 %v1173
        %v1274 = vpop.f32.mrb[0].mxu0
        %v1275 = vadd.f32 0.0, %v1274
        %v1276 = vpop.f32.mrb[0].mxu0
        %v1277 = vadd.f32 0.0, %v1276
        %1278 = vdwg.mxu0
        %1279 = vmatprep.subr.mxu0 %v1142
        %1280 = vmatpush1.msra.mxu0 %v1141
        %1281 = vmatprep.subr.mxu0 %v1147
        %1282 = vmatpush1.msra.mxu0 %v1146
        %1283 = vmatprep.subr.mxu0 %v1152
        %1284 = vmatpush1.msra.mxu0 %v1151
        %1285 = vmatprep.subr.mxu0 %v1185
        %1286 = vmatpush1.msra.mxu0 %v1182
        %1287 = vmatprep.subr.mxu0 0.0
        %1288 = vmatpush1.msra.mxu0 0.0
        %1289 = vmatprep.subr.mxu0 0.0
        %1290 = vmatpush1.msra.mxu0 0.0
        %1291 = vmatprep.subr.mxu0 0.0
        %1292 = vmatpush1.msra.mxu0 0.0
        %1293 = vmatprep.subr.mxu0 0.0
        %1294 = vmatpush1.msra.mxu0 0.0
        %1295 = vmatprep.subr.mxu0 0.0
        %1296 = vmatpush1.msra.mxu0 0.0
        %1297 = vmatprep.subr.mxu0 0.0
        %1298 = vmatpush1.msra.mxu0 0.0
        %1299 = vmatprep.subr.mxu0 0.0
        %1300 = vmatpush1.msra.mxu0 0.0
        %1301 = vmatprep.subr.mxu0 0.0
        %1302 = vmatpush1.msra.mxu0 0.0
        %1303 = vmatprep.subr.mxu0 0.0
        %1304 = vmatpush1.msra.mxu0 0.0
        %1305 = vmatprep.subr.mxu0 0.0
        %1306 = vmatpush1.msra.mxu0 0.0
        %1307 = vmatprep.subr.mxu0 0.0
        %1308 = vmatpush1.msra.mxu0 0.0
        %1309 = vmatprep.subr.mxu0 0.0
        %1310 = vmatpush1.msra.mxu0 0.0
        %1311 = vmatprep.subr.mxu0 0.0
        %1312 = vmatpush1.msra.mxu0 0.0
        %1313 = vmatprep.subr.mxu0 0.0
        %1314 = vmatpush1.msra.mxu0 0.0
        %1315 = vmatprep.subr.mxu0 0.0
        %1316 = vmatpush1.msra.mxu0 0.0
        %1317 = vmatprep.subr.mxu0 0.0
        %1318 = vmatpush1.msra.mxu0 0.0
        %1319 = vmatprep.subr.mxu0 0.0
        %1320 = vmatpush1.msra.mxu0 0.0
        %1321 = vmatprep.subr.mxu0 0.0
        %1322 = vmatpush1.msra.mxu0 0.0
        %1323 = vmatprep.subr.mxu0 0.0
        %1324 = vmatpush1.msra.mxu0 0.0
        %1325 = vmatprep.subr.mxu0 0.0
        %1326 = vmatpush1.msra.mxu0 0.0
        %1327 = vmatprep.subr.mxu0 0.0
        %1328 = vmatpush1.msra.mxu0 0.0
        %1329 = vmatprep.subr.mxu0 0.0
        %1330 = vmatpush1.msra.mxu0 0.0
        %1331 = vmatprep.subr.mxu0 0.0
        %1332 = vmatpush1.msra.mxu0 0.0
        %1333 = vmatprep.subr.mxu0 0.0
        %1334 = vmatpush1.msra.mxu0 0.0
        %1335 = vmatprep.subr.mxu0 0.0
        %1336 = vmatpush1.msra.mxu0 0.0
        %1337 = vmatprep.subr.mxu0 0.0
        %1338 = vmatpush1.msra.mxu0 0.0
        %1339 = vmatprep.subr.mxu0 0.0
        %1340 = vmatpush1.msra.mxu0 0.0
        %1341 = vmatprep.subr.mxu0 0.0
        %1342 = vmatpush1.msra.mxu0 0.0
        %1343 = vmatprep.mubr.f32.mxu0 0.0
        %1344 = vmatmul.mubr.f32.gmra.mrb[0].mxu0 %v1167
        %v1345 = vpop.f32.mrb[0].mxu0
        %v1346 = vadd.f32 0.0, %v1345
        %v1347 = vpop.f32.mrb[0].mxu0
        %v1348 = vadd.f32 0.0, %v1347
        %1349 = vmatprep.mubr.f32.mxu0 0.0
        %1350 = vmatmul.mubr.f32.gmra.mrb[0].mxu0 %v1169
        %v1351 = vpop.f32.mrb[0].mxu0
        %v1352 = vadd.f32 0.0, %v1351
        %v1353 = vpop.f32.mrb[0].mxu0
        %v1354 = vadd.f32 0.0, %v1353
        %1355 = vmatprep.mubr.f32.mxu0 0.0
        %1356 = vmatmul.mubr.f32.gmra.mrb[0].mxu0 %v1171
        %v1357 = vpop.f32.mrb[0].mxu0
        %v1358 = vadd.f32 0.0, %v1357
        %v1359 = vpop.f32.mrb[0].mxu0
        %v1360 = vadd.f32 0.0, %v1359
        %1361 = vmatprep.mubr.f32.mxu0 0.0
        %1362 = vmatmul.mubr.f32.gmra.mrb[0].mxu0 %v1173
        %v1363 = vpop.f32.mrb[0].mxu0
        %v1364 = vadd.f32 0.0, %v1363
        %v1365 = vpop.f32.mrb[0].mxu0
        %v1366 = vadd.f32 0.0, %v1365
        %1367 = vdwg.mxu0
        %1368 = vmatprep.subr.mxu0 0.0
        %1369 = vmatpush1.msra.mxu0 %v1143
        %1370 = vmatprep.subr.mxu0 0.0
        %1371 = vmatpush1.msra.mxu0 %v1148
        %1372 = vmatprep.subr.mxu0 0.0
        %1373 = vmatpush1.msra.mxu0 %v1153
        %1374 = vmatprep.subr.mxu0 0.0
        %1375 = vmatpush1.msra.mxu0 %v1188
        %1376 = vmatprep.subr.mxu0 0.0
        %1377 = vmatpush1.msra.mxu0 0.0
        %1378 = vmatprep.subr.mxu0 0.0
        %1379 = vmatpush1.msra.mxu0 0.0
        %1380 = vmatprep.subr.mxu0 0.0
        %1381 = vmatpush1.msra.mxu0 0.0
        %1382 = vmatprep.subr.mxu0 0.0
        %1383 = vmatpush1.msra.mxu0 0.0
        %1384 = vmatprep.subr.mxu0 0.0
        %1385 = vmatpush1.msra.mxu0 0.0
        %1386 = vmatprep.subr.mxu0 0.0
        %1387 = vmatpush1.msra.mxu0 0.0
        %1388 = vmatprep.subr.mxu0 0.0
        %1389 = vmatpush1.msra.mxu0 0.0
        %1390 = vmatprep.subr.mxu0 0.0
        %1391 = vmatpush1.msra.mxu0 0.0
        %1392 = vmatprep.subr.mxu0 0.0
        %1393 = vmatpush1.msra.mxu0 0.0
        %1394 = vmatprep.subr.mxu0 0.0
        %1395 = vmatpush1.msra.mxu0 0.0
        %1396 = vmatprep.subr.mxu0 0.0
        %1397 = vmatpush1.msra.mxu0 0.0
        %1398 = vmatprep.subr.mxu0 0.0
        %1399 = vmatpush1.msra.mxu0 0.0
        %1400 = vmatprep.subr.mxu0 0.0
        %1401 = vmatpush1.msra.mxu0 0.0
        %1402 = vmatprep.subr.mxu0 0.0
        %1403 = vmatpush1.msra.mxu0 0.0
        %1404 = vmatprep.subr.mxu0 0.0
        %1405 = vmatpush1.msra.mxu0 0.0
        %1406 = vmatprep.subr.mxu0 0.0
        %1407 = vmatpush1.msra.mxu0 0.0
        %1408 = vmatprep.subr.mxu0 0.0
        %1409 = vmatpush1.msra.mxu0 0.0
        %1410 = vmatprep.subr.mxu0 0.0
        %1411 = vmatpush1.msra.mxu0 0.0
        %1412 = vmatprep.subr.mxu0 0.0
        %1413 = vmatpush1.msra.mxu0 0.0
        %1414 = vmatprep.subr.mxu0 0.0
        %1415 = vmatpush1.msra.mxu0 0.0
        %1416 = vmatprep.subr.mxu0 0.0
        %1417 = vmatpush1.msra.mxu0 0.0
        %1418 = vmatprep.subr.mxu0 0.0
        %1419 = vmatpush1.msra.mxu0 0.0
        %1420 = vmatprep.subr.mxu0 0.0
        %1421 = vmatpush1.msra.mxu0 0.0
        %1422 = vmatprep.subr.mxu0 0.0
        %1423 = vmatpush1.msra.mxu0 0.0
        %1424 = vmatprep.subr.mxu0 0.0
        %1425 = vmatpush1.msra.mxu0 0.0
        %1426 = vmatprep.subr.mxu0 0.0
        %1427 = vmatpush1.msra.mxu0 0.0
        %1428 = vmatprep.subr.mxu0 0.0
        %1429 = vmatpush1.msra.mxu0 0.0
        %1430 = vmatprep.subr.mxu0 0.0
        %1431 = vmatpush1.msra.mxu0 0.0
        %1432 = vmatprep.mubr.f32.mxu0 0.0
        %1433 = vmatmul.mubr.f32.gmra.mrb[0].mxu0 %v1167
        %v1434 = vpop.f32.mrb[0].mxu0
        %v1435 = vadd.f32 0.0, %v1434
        %v1436 = vpop.f32.mrb[0].mxu0
        %1437 = vmatprep.mubr.f32.mxu0 0.0
        %1438 = vmatmul.mubr.f32.gmra.mrb[0].mxu0 %v1169
        %v1439 = vpop.f32.mrb[0].mxu0
        %v1440 = vadd.f32 0.0, %v1439
        %v1441 = vpop.f32.mrb[0].mxu0
        %1442 = vmatprep.mubr.f32.mxu0 0.0
        %1443 = vmatmul.mubr.f32.gmra.mrb[0].mxu0 %v1171
        %v1444 = vpop.f32.mrb[0].mxu0
        %v1445 = vadd.f32 0.0, %v1444
        %v1446 = vpop.f32.mrb[0].mxu0
        %1447 = vmatprep.mubr.f32.mxu0 0.0
        %1448 = vmatmul.mubr.f32.gmra.mrb[0].mxu0 %v1173
        %v1449 = vpop.f32.mrb[0].mxu0
        %v1450 = vadd.f32 0.0, %v1449
        %v1451 = vpop.f32.mrb[0].mxu0
        %1452 = vdwg.mxu0
        %v1453 = vadd.f32 %v942, %v1257
        %v1454 = vadd.f32 %v944, %v1259
        %v1455 = vadd.f32 %v1031, %v1346
        %v1456 = vadd.f32 %v1033, %v1348
        %v1457 = vadd.f32 %v1120, %v1435
        %v1458 = vadd.f32 %v948, %v1263
        %v1459 = vadd.f32 %v950, %v1265
        %v1460 = vadd.f32 %v1037, %v1352
        %v1461 = vadd.f32 %v1039, %v1354
        %v1462 = vadd.f32 %v1125, %v1440
        %v1463 = vadd.f32 %v954, %v1269
        %v1464 = vadd.f32 %v956, %v1271
        %v1465 = vadd.f32 %v1043, %v1358
        %v1466 = vadd.f32 %v1045, %v1360
        %v1467 = vadd.f32 %v1130, %v1445
        %v1468 = vadd.f32 %v960, %v1275
        %v1469 = vadd.f32 %v962, %v1277
        %v1470 = vadd.f32 %v1049, %v1364
        %v1471 = vadd.f32 %v1051, %v1366
        %v1472 = vadd.f32 %v1135, %v1450
        %v1473 = vld [vmem:[%s2] sm:$0x1f]
        %v1475 = vlaneseq
        %v1476 = vshrl.u32 %v1475, 7
        %v1477 = vsub.s32 0, %v1476
        %v1478 = vrot.slane %v1473, %v1477
        %v1479 = vlaneseq
        %v1480 = vshrl.u32 %v1479, 7
        %v1481 = vsub.s32 1, %v1480
        %v1482 = vrot.slane %v1473, %v1481
        %v1483 = vlaneseq
        %v1484 = vshrl.u32 %v1483, 7
        %v1485 = vsub.s32 2, %v1484
        %v1486 = vrot.slane %v1473, %v1485
        %v1487 = vlaneseq
        %v1488 = vshrl.u32 %v1487, 7
        %v1489 = vsub.s32 3, %v1488
        %v1490 = vrot.slane %v1473, %v1489
        %v1491 = vlaneseq
        %v1492 = vshrl.u32 %v1491, 7
        %v1493 = vsub.s32 4, %v1492
        %v1494 = vrot.slane %v1473, %v1493
        %v1500 = vadd.f32 %v1453, %v1478
        %v1501 = vadd.f32 %v1454, %v1482
        %v1502 = vadd.f32 %v1455, %v1486
        %v1503 = vadd.f32 %v1456, %v1490
        %v1504 = vadd.f32 %v1457, %v1494
        %v1505 = vadd.f32 %v1458, %v1478
        %v1506 = vadd.f32 %v1459, %v1482
        %v1507 = vadd.f32 %v1460, %v1486
        %v1508 = vadd.f32 %v1461, %v1490
        %v1509 = vadd.f32 %v1462, %v1494
        %v1510 = vadd.f32 %v1463, %v1478
        %v1511 = vadd.f32 %v1464, %v1482
        %v1512 = vadd.f32 %v1465, %v1486
        %v1513 = vadd.f32 %v1466, %v1490
        %v1514 = vadd.f32 %v1467, %v1494
        %v1515 = vadd.f32 %v1468, %v1478
        %v1516 = vadd.f32 %v1469, %v1482
        %v1517 = vadd.f32 %v1470, %v1486
        %v1518 = vadd.f32 %v1471, %v1490
        %v1519 = vadd.f32 %v1472, %v1494
        %v1520 = vmax.f32 %v1500, 0.0
        %v1521 = vmax.f32 %v1501, 0.0
        %v1522 = vmax.f32 %v1502, 0.0
        %v1523 = vmax.f32 %v1503, 0.0
        %v1524 = vmax.f32 %v1504, 0.0
        %v1525 = vmax.f32 %v1505, 0.0
        %v1526 = vmax.f32 %v1506, 0.0
        %v1527 = vmax.f32 %v1507, 0.0
        %v1528 = vmax.f32 %v1508, 0.0
        %v1529 = vmax.f32 %v1509, 0.0
        %v1530 = vmax.f32 %v1510, 0.0
        %v1531 = vmax.f32 %v1511, 0.0
        %v1532 = vmax.f32 %v1512, 0.0
        %v1533 = vmax.f32 %v1513, 0.0
        %v1534 = vmax.f32 %v1514, 0.0
        %v1535 = vmax.f32 %v1515, 0.0
        %v1536 = vmax.f32 %v1516, 0.0
        %v1537 = vmax.f32 %v1517, 0.0
        %v1538 = vmax.f32 %v1518, 0.0
        %v1539 = vmax.f32 %v1519, 0.0
        %v1560 = vrot.slane %v1520, 1
        %v1561 = vrot.slane %v1525, 1
        %v1562 = vsel %vm556, %v1560, %v1561
        %v1563 = vrot.slane %v1521, 1
        %v1564 = vrot.slane %v1526, 1
        %v1565 = vsel %vm556, %v1563, %v1564
        %v1566 = vrot.slane %v1522, 1
        %v1567 = vrot.slane %v1527, 1
        %v1568 = vsel %vm556, %v1566, %v1567
        %v1569 = vrot.slane %v1523, 1
        %v1570 = vrot.slane %v1528, 1
        %v1571 = vsel %vm556, %v1569, %v1570
        %v1572 = vrot.slane %v1524, 1
        %v1573 = vrot.slane %v1529, 1
        %v1574 = vsel %vm556, %v1572, %v1573
        %v1575 = vrot.slane %v1530, 1
        %v1576 = vsel %vm556, %v1561, %v1575
        %v1577 = vrot.slane %v1531, 1
        %v1578 = vsel %vm556, %v1564, %v1577
        %v1579 = vrot.slane %v1532, 1
        %v1580 = vsel %vm556, %v1567, %v1579
        %v1581 = vrot.slane %v1533, 1
        %v1582 = vsel %vm556, %v1570, %v1581
        %v1583 = vrot.slane %v1534, 1
        %v1584 = vsel %vm556, %v1573, %v1583
        %v1585 = vrot.slane %v1535, 1
        %v1586 = vsel %vm556, %v1575, %v1585
        %v1587 = vrot.slane %v1536, 1
        %v1588 = vsel %vm556, %v1577, %v1587
        %v1589 = vrot.slane %v1537, 1
        %v1590 = vsel %vm556, %v1579, %v1589
        %v1591 = vrot.slane %v1538, 1
        %v1592 = vsel %vm556, %v1581, %v1591
        %v1593 = vrot.slane %v1539, 1
        %v1594 = vsel %vm556, %v1583, %v1593
        %v1615 = vmax.f32 %v1520, %v1562
        %v1616 = vmax.f32 %v1521, %v1565
        %v1617 = vmax.f32 %v1522, %v1568
        %v1618 = vmax.f32 %v1523, %v1571
        %v1619 = vmax.f32 %v1524, %v1574
        %v1620 = vmax.f32 %v1525, %v1576
        %v1621 = vmax.f32 %v1526, %v1578
        %v1622 = vmax.f32 %v1527, %v1580
        %v1623 = vmax.f32 %v1528, %v1582
        %v1624 = vmax.f32 %v1529, %v1584
        %v1625 = vmax.f32 %v1530, %v1586
        %v1626 = vmax.f32 %v1531, %v1588
        %v1627 = vmax.f32 %v1532, %v1590
        %v1628 = vmax.f32 %v1533, %v1592
        %v1629 = vmax.f32 %v1534, %v1594
        %v1630 = vmax.f32 %v1535, %v1585
        %v1631 = vmax.f32 %v1536, %v1587
        %v1632 = vmax.f32 %v1537, %v1589
        %v1633 = vmax.f32 %v1538, %v1591
        %v1634 = vmax.f32 %v1539, %v1593
        %v1635 = vld [vmem:[%s3] sm:$0xff]
        %v1636 = vld [vmem:[%s3 + $0x8] sm:$0x1f]
        %vm1637 = vcmask 203776
        %v1639 = vsel %vm1637, %v1635, 0
        %v1642 = vsel %vm1637, %v1636, 0
        %vm1644 = vcmask 1040384
        %v1646 = vsel %vm1644, %v1630, 0
        %v1649 = vsel %vm1644, %v1631, 0
        %v1652 = vsel %vm1644, %v1632, 0
        %v1655 = vsel %vm1644, %v1633, 0
        %v1658 = vsel %vm1644, %v1634, 0
        %1660 = vmatprep.subr.mxu0 %v1616
        %1661 = vmatpush1.msra.mxu0 %v1615
        %1662 = vmatprep.subr.mxu0 %v1621
        %1663 = vmatpush1.msra.mxu0 %v1620
        %1664 = vmatprep.subr.mxu0 %v1626
        %1665 = vmatpush1.msra.mxu0 %v1625
        %1666 = vmatprep.subr.mxu0 %v1649
        %1667 = vmatpush1.msra.mxu0 %v1646
        %1668 = vmatprep.subr.mxu0 0.0
        %1669 = vmatpush1.msra.mxu0 0.0
        %1670 = vmatprep.subr.mxu0 0.0
        %1671 = vmatpush1.msra.mxu0 0.0
        %1672 = vmatprep.subr.mxu0 0.0
        %1673 = vmatpush1.msra.mxu0 0.0
        %1674 = vmatprep.subr.mxu0 0.0
        %1675 = vmatpush1.msra.mxu0 0.0
        %1676 = vmatprep.subr.mxu0 0.0
        %1677 = vmatpush1.msra.mxu0 0.0
        %1678 = vmatprep.subr.mxu0 0.0
        %1679 = vmatpush1.msra.mxu0 0.0
        %1680 = vmatprep.subr.mxu0 0.0
        %1681 = vmatpush1.msra.mxu0 0.0
        %1682 = vmatprep.subr.mxu0 0.0
        %1683 = vmatpush1.msra.mxu0 0.0
        %1684 = vmatprep.subr.mxu0 0.0
        %1685 = vmatpush1.msra.mxu0 0.0
        %1686 = vmatprep.subr.mxu0 0.0
        %1687 = vmatpush1.msra.mxu0 0.0
        %1688 = vmatprep.subr.mxu0 0.0
        %1689 = vmatpush1.msra.mxu0 0.0
        %1690 = vmatprep.subr.mxu0 0.0
        %1691 = vmatpush1.msra.mxu0 0.0
        %1692 = vmatprep.subr.mxu0 0.0
        %1693 = vmatpush1.msra.mxu0 0.0
        %1694 = vmatprep.subr.mxu0 0.0
        %1695 = vmatpush1.msra.mxu0 0.0
        %1696 = vmatprep.subr.mxu0 0.0
        %1697 = vmatpush1.msra.mxu0 0.0
        %1698 = vmatprep.subr.mxu0 0.0
        %1699 = vmatpush1.msra.mxu0 0.0
        %1700 = vmatprep.subr.mxu0 0.0
        %1701 = vmatpush1.msra.mxu0 0.0
        %1702 = vmatprep.subr.mxu0 0.0
        %1703 = vmatpush1.msra.mxu0 0.0
        %1704 = vmatprep.subr.mxu0 0.0
        %1705 = vmatpush1.msra.mxu0 0.0
        %1706 = vmatprep.subr.mxu0 0.0
        %1707 = vmatpush1.msra.mxu0 0.0
        %1708 = vmatprep.subr.mxu0 0.0
        %1709 = vmatpush1.msra.mxu0 0.0
        %1710 = vmatprep.subr.mxu0 0.0
        %1711 = vmatpush1.msra.mxu0 0.0
        %1712 = vmatprep.subr.mxu0 0.0
        %1713 = vmatpush1.msra.mxu0 0.0
        %1714 = vmatprep.subr.mxu0 0.0
        %1715 = vmatpush1.msra.mxu0 0.0
        %1716 = vmatprep.subr.mxu0 0.0
        %1717 = vmatpush1.msra.mxu0 0.0
        %1718 = vmatprep.subr.mxu0 0.0
        %1719 = vmatpush1.msra.mxu0 0.0
        %1720 = vmatprep.subr.mxu0 0.0
        %1721 = vmatpush1.msra.mxu0 0.0
        %1722 = vmatprep.subr.mxu0 0.0
        %1723 = vmatpush1.msra.mxu0 0.0
        %1724 = vmatprep.mubr.f32.mxu0 0.0
        %1725 = vmatmul.mubr.f32.gmra.mrb[0].mxu0 %v1639
        %v1726 = vpop.f32.mrb[0].mxu0
        %v1727 = vadd.f32 0.0, %v1726
        %v1728 = vpop.f32.mrb[0].mxu0
        %v1729 = vadd.f32 0.0, %v1728
        %1730 = vmatprep.mubr.f32.mxu0 0.0
        %1731 = vmatmul.mubr.f32.gmra.mrb[0].mxu0 %v1642
        %v1732 = vpop.f32.mrb[0].mxu0
        %v1733 = vadd.f32 0.0, %v1732
        %v1734 = vpop.f32.mrb[0].mxu0
        %v1735 = vadd.f32 0.0, %v1734
        %1736 = vdwg.mxu0
        %1737 = vmatprep.subr.mxu0 %v1618
        %1738 = vmatpush1.msra.mxu0 %v1617
        %1739 = vmatprep.subr.mxu0 %v1623
        %1740 = vmatpush1.msra.mxu0 %v1622
        %1741 = vmatprep.subr.mxu0 %v1628
        %1742 = vmatpush1.msra.mxu0 %v1627
        %1743 = vmatprep.subr.mxu0 %v1655
        %1744 = vmatpush1.msra.mxu0 %v1652
        %1745 = vmatprep.subr.mxu0 0.0
        %1746 = vmatpush1.msra.mxu0 0.0
        %1747 = vmatprep.subr.mxu0 0.0
        %1748 = vmatpush1.msra.mxu0 0.0
        %1749 = vmatprep.subr.mxu0 0.0
        %1750 = vmatpush1.msra.mxu0 0.0
        %1751 = vmatprep.subr.mxu0 0.0
        %1752 = vmatpush1.msra.mxu0 0.0
        %1753 = vmatprep.subr.mxu0 0.0
        %1754 = vmatpush1.msra.mxu0 0.0
        %1755 = vmatprep.subr.mxu0 0.0
        %1756 = vmatpush1.msra.mxu0 0.0
        %1757 = vmatprep.subr.mxu0 0.0
        %1758 = vmatpush1.msra.mxu0 0.0
        %1759 = vmatprep.subr.mxu0 0.0
        %1760 = vmatpush1.msra.mxu0 0.0
        %1761 = vmatprep.subr.mxu0 0.0
        %1762 = vmatpush1.msra.mxu0 0.0
        %1763 = vmatprep.subr.mxu0 0.0
        %1764 = vmatpush1.msra.mxu0 0.0
        %1765 = vmatprep.subr.mxu0 0.0
        %1766 = vmatpush1.msra.mxu0 0.0
        %1767 = vmatprep.subr.mxu0 0.0
        %1768 = vmatpush1.msra.mxu0 0.0
        %1769 = vmatprep.subr.mxu0 0.0
        %1770 = vmatpush1.msra.mxu0 0.0
        %1771 = vmatprep.subr.mxu0 0.0
        %1772 = vmatpush1.msra.mxu0 0.0
        %1773 = vmatprep.subr.mxu0 0.0
        %1774 = vmatpush1.msra.mxu0 0.0
        %1775 = vmatprep.subr.mxu0 0.0
        %1776 = vmatpush1.msra.mxu0 0.0
        %1777 = vmatprep.subr.mxu0 0.0
        %1778 = vmatpush1.msra.mxu0 0.0
        %1779 = vmatprep.subr.mxu0 0.0
        %1780 = vmatpush1.msra.mxu0 0.0
        %1781 = vmatprep.subr.mxu0 0.0
        %1782 = vmatpush1.msra.mxu0 0.0
        %1783 = vmatprep.subr.mxu0 0.0
        %1784 = vmatpush1.msra.mxu0 0.0
        %1785 = vmatprep.subr.mxu0 0.0
        %1786 = vmatpush1.msra.mxu0 0.0
        %1787 = vmatprep.subr.mxu0 0.0
        %1788 = vmatpush1.msra.mxu0 0.0
        %1789 = vmatprep.subr.mxu0 0.0
        %1790 = vmatpush1.msra.mxu0 0.0
        %1791 = vmatprep.subr.mxu0 0.0
        %1792 = vmatpush1.msra.mxu0 0.0
        %1793 = vmatprep.subr.mxu0 0.0
        %1794 = vmatpush1.msra.mxu0 0.0
        %1795 = vmatprep.subr.mxu0 0.0
        %1796 = vmatpush1.msra.mxu0 0.0
        %1797 = vmatprep.subr.mxu0 0.0
        %1798 = vmatpush1.msra.mxu0 0.0
        %1799 = vmatprep.subr.mxu0 0.0
        %1800 = vmatpush1.msra.mxu0 0.0
        %1801 = vmatprep.mubr.f32.mxu0 0.0
        %1802 = vmatmul.mubr.f32.gmra.mrb[0].mxu0 %v1639
        %v1803 = vpop.f32.mrb[0].mxu0
        %v1804 = vadd.f32 0.0, %v1803
        %v1805 = vpop.f32.mrb[0].mxu0
        %v1806 = vadd.f32 0.0, %v1805
        %1807 = vmatprep.mubr.f32.mxu0 0.0
        %1808 = vmatmul.mubr.f32.gmra.mrb[0].mxu0 %v1642
        %v1809 = vpop.f32.mrb[0].mxu0
        %v1810 = vadd.f32 0.0, %v1809
        %v1811 = vpop.f32.mrb[0].mxu0
        %v1812 = vadd.f32 0.0, %v1811
        %1813 = vdwg.mxu0
        %1814 = vmatprep.subr.mxu0 0.0
        %1815 = vmatpush1.msra.mxu0 %v1619
        %1816 = vmatprep.subr.mxu0 0.0
        %1817 = vmatpush1.msra.mxu0 %v1624
        %1818 = vmatprep.subr.mxu0 0.0
        %1819 = vmatpush1.msra.mxu0 %v1629
        %1820 = vmatprep.subr.mxu0 0.0
        %1821 = vmatpush1.msra.mxu0 %v1658
        %1822 = vmatprep.subr.mxu0 0.0
        %1823 = vmatpush1.msra.mxu0 0.0
        %1824 = vmatprep.subr.mxu0 0.0
        %1825 = vmatpush1.msra.mxu0 0.0
        %1826 = vmatprep.subr.mxu0 0.0
        %1827 = vmatpush1.msra.mxu0 0.0
        %1828 = vmatprep.subr.mxu0 0.0
        %1829 = vmatpush1.msra.mxu0 0.0
        %1830 = vmatprep.subr.mxu0 0.0
        %1831 = vmatpush1.msra.mxu0 0.0
        %1832 = vmatprep.subr.mxu0 0.0
        %1833 = vmatpush1.msra.mxu0 0.0
        %1834 = vmatprep.subr.mxu0 0.0
        %1835 = vmatpush1.msra.mxu0 0.0
        %1836 = vmatprep.subr.mxu0 0.0
        %1837 = vmatpush1.msra.mxu0 0.0
        %1838 = vmatprep.subr.mxu0 0.0
        %1839 = vmatpush1.msra.mxu0 0.0
        %1840 = vmatprep.subr.mxu0 0.0
        %1841 = vmatpush1.msra.mxu0 0.0
        %1842 = vmatprep.subr.mxu0 0.0
        %1843 = vmatpush1.msra.mxu0 0.0
        %1844 = vmatprep.subr.mxu0 0.0
        %1845 = vmatpush1.msra.mxu0 0.0
        %1846 = vmatprep.subr.mxu0 0.0
        %1847 = vmatpush1.msra.mxu0 0.0
        %1848 = vmatprep.subr.mxu0 0.0
        %1849 = vmatpush1.msra.mxu0 0.0
        %1850 = vmatprep.subr.mxu0 0.0
        %1851 = vmatpush1.msra.mxu0 0.0
        %1852 = vmatprep.subr.mxu0 0.0
        %1853 = vmatpush1.msra.mxu0 0.0
        %1854 = vmatprep.subr.mxu0 0.0
        %1855 = vmatpush1.msra.mxu0 0.0
        %1856 = vmatprep.subr.mxu0 0.0
        %1857 = vmatpush1.msra.mxu0 0.0
        %1858 = vmatprep.subr.mxu0 0.0
        %1859 = vmatpush1.msra.mxu0 0.0
        %1860 = vmatprep.subr.mxu0 0.0
        %1861 = vmatpush1.msra.mxu0 0.0
        %1862 = vmatprep.subr.mxu0 0.0
        %1863 = vmatpush1.msra.mxu0 0.0
        %1864 = vmatprep.subr.mxu0 0.0
        %1865 = vmatpush1.msra.mxu0 0.0
        %1866 = vmatprep.subr.mxu0 0.0
        %1867 = vmatpush1.msra.mxu0 0.0
        %1868 = vmatprep.subr.mxu0 0.0
        %1869 = vmatpush1.msra.mxu0 0.0
        %1870 = vmatprep.subr.mxu0 0.0
        %1871 = vmatpush1.msra.mxu0 0.0
        %1872 = vmatprep.subr.mxu0 0.0
        %1873 = vmatpush1.msra.mxu0 0.0
        %1874 = vmatprep.subr.mxu0 0.0
        %1875 = vmatpush1.msra.mxu0 0.0
        %1876 = vmatprep.subr.mxu0 0.0
        %1877 = vmatpush1.msra.mxu0 0.0
        %1878 = vmatprep.mubr.f32.mxu0 0.0
        %1879 = vmatmul.mubr.f32.gmra.mrb[0].mxu0 %v1639
        %v1880 = vpop.f32.mrb[0].mxu0
        %v1881 = vadd.f32 0.0, %v1880
        %v1882 = vpop.f32.mrb[0].mxu0
        %1883 = vmatprep.mubr.f32.mxu0 0.0
        %1884 = vmatmul.mubr.f32.gmra.mrb[0].mxu0 %v1642
        %v1885 = vpop.f32.mrb[0].mxu0
        %v1886 = vadd.f32 0.0, %v1885
        %v1887 = vpop.f32.mrb[0].mxu0
        %1888 = vdwg.mxu0
        %1899 = vrot.lane.b32.xlu0 %v1727, 104
        %v1900 = vpop.permute.xlu0 %1899
        %1901 = vrot.lane.b32.xlu0 %v1729, 104
        %v1902 = vpop.permute.xlu0 %1901
        %1903 = vrot.lane.b32.xlu0 %v1804, 104
        %v1904 = vpop.permute.xlu0 %1903
        %1905 = vrot.lane.b32.xlu0 %v1806, 104
        %v1906 = vpop.permute.xlu0 %1905
        %1907 = vrot.lane.b32.xlu0 %v1881, 104
        %v1908 = vpop.permute.xlu0 %1907
        %1909 = vrot.lane.b32.xlu0 %v1733, 104
        %v1910 = vpop.permute.xlu0 %1909
        %1911 = vrot.lane.b32.xlu0 %v1735, 104
        %v1912 = vpop.permute.xlu0 %1911
        %1913 = vrot.lane.b32.xlu0 %v1810, 104
        %v1914 = vpop.permute.xlu0 %1913
        %1915 = vrot.lane.b32.xlu0 %v1812, 104
        %v1916 = vpop.permute.xlu0 %1915
        %1917 = vrot.lane.b32.xlu0 %v1886, 104
        %v1918 = vpop.permute.xlu0 %1917
        %vm1919 = vcmask 850944
        %v1920 = vsel %vm1919, %v1900, %v1902
        %v1921 = vsel %vm1919, %v1902, %v1904
        %v1922 = vsel %vm1919, %v1904, %v1906
        %v1923 = vsel %vm1919, %v1906, %v1908
        %v1924 = vsel %vm1919, %v1910, %v1912
        %v1925 = vsel %vm1919, %v1912, %v1914
        %v1926 = vsel %vm1919, %v1914, %v1916
        %v1927 = vsel %vm1919, %v1916, %v1918
        %v1938 = vmax.f32 %v1727, %v1920
        %v1939 = vmax.f32 %v1729, %v1921
        %v1940 = vmax.f32 %v1804, %v1922
        %v1941 = vmax.f32 %v1806, %v1923
        %v1942 = vmax.f32 %v1881, %v1908
        %v1943 = vmax.f32 %v1733, %v1924
        %v1944 = vmax.f32 %v1735, %v1925
        %v1945 = vmax.f32 %v1810, %v1926
        %v1946 = vmax.f32 %v1812, %v1927
        %v1947 = vmax.f32 %v1886, %v1918
        %v1948 = vld [vmem:[%s4] sm:$0xff]
        %v1949 = vld [vmem:[%s4 + $0x8] sm:$0xff]
        %v1950 = vld [vmem:[%s4 + $0x10] sm:$0xff]
        %v1951 = vld [vmem:[%s4 + $0x18] sm:$0xff]
        %v1952 = vld [vmem:[%s4 + $0x20] sm:$0xff]
        %v1953 = vld [vmem:[%s4 + $0x28] sm:$0xff]
        %v1954 = vld [vmem:[%s4 + $0x30] sm:$0xff]
        %v1955 = vld [vmem:[%s4 + $0x38] sm:$0xff]
        %v1956 = vld [vmem:[%s4 + $0x40] sm:$0xff]
        %v1957 = vld [vmem:[%s4 + $0x48] sm:$0xff]
        %v1958 = vld [vmem:[%s4 + $0x50] sm:$0xff]
        %v1959 = vld [vmem:[%s4 + $0x58] sm:$0xff]
        %v1960 = vld [vmem:[%s4 + $0x60] sm:$0xff]
        %v1961 = vld [vmem:[%s4 + $0x68] sm:$0xff]
        %v1962 = vld [vmem:[%s4 + $0x70] sm:$0xff]
        %v1963 = vld [vmem:[%s4 + $0x78] sm:$0xff]
        %v1964 = vld [vmem:[%s4 + $0x80] sm:$0xff]
        %v1965 = vld [vmem:[%s4 + $0x88] sm:$0xff]
        %v1966 = vld [vmem:[%s4 + $0x90] sm:$0xff]
        %v1967 = vld [vmem:[%s4 + $0x98] sm:$0xff]
        %v1968 = vld [vmem:[%s4 + $0xa0] sm:$0xff]
        %v1969 = vld [vmem:[%s4 + $0xa8] sm:$0xff]
        %v1970 = vld [vmem:[%s4 + $0xb0] sm:$0xff]
        %v1971 = vld [vmem:[%s4 + $0xb8] sm:$0xff]
        %v1972 = vld [vmem:[%s4 + $0xc0] sm:$0xff]
        %v1973 = vld [vmem:[%s4 + $0xc8] sm:$0xff]
        %v1974 = vld [vmem:[%s4 + $0xd0] sm:$0xff]
        %v1975 = vld [vmem:[%s4 + $0xd8] sm:$0xff]
        %v1976 = vld [vmem:[%s4 + $0xe0] sm:$0xff]
        %v1977 = vld [vmem:[%s4 + $0xe8] sm:$0xff]
        %v1978 = vld [vmem:[%s4 + $0xf0] sm:$0xff]
        %v1979 = vld [vmem:[%s4 + $0xf8] sm:$0xff]
        %v1980 = vld [vmem:[%s4 + $0x100] sm:$0xff]
        %v1981 = vld [vmem:[%s4 + $0x108] sm:$0xff]
        %v1982 = vld [vmem:[%s4 + $0x110] sm:$0xff]
        %v1983 = vld [vmem:[%s4 + $0x118] sm:$0xff]
        %v1984 = vld [vmem:[%s4 + $0x120] sm:$0xff]
        %v1985 = vld [vmem:[%s4 + $0x128] sm:$0xff]
        %v1986 = vld [vmem:[%s4 + $0x130] sm:$0xff]
        %v1987 = vld [vmem:[%s4 + $0x138] sm:$0xff]
        %v1988 = vld [vmem:[%s4 + $0x140] sm:$0xff]
        %v1989 = vld [vmem:[%s4 + $0x148] sm:$0xff]
        %v1990 = vld [vmem:[%s4 + $0x150] sm:$0xff]
        %v1991 = vld [vmem:[%s4 + $0x158] sm:$0xff]
        %v1992 = vld [vmem:[%s4 + $0x160] sm:$0xff]
        %v1993 = vld [vmem:[%s4 + $0x168] sm:$0xff]
        %v1994 = vld [vmem:[%s4 + $0x170] sm:$0xff]
        %v1995 = vld [vmem:[%s4 + $0x178] sm:$0xff]
        %v1996 = vld [vmem:[%s4 + $0x180] sm:$0xff]
        %v1997 = vld [vmem:[%s4 + $0x188] sm:$0xff]
        %v1998 = vld [vmem:[%s4 + $0x190] sm:$0xff]
        %v1999 = vld [vmem:[%s4 + $0x198] sm:$0xff]
        %v2000 = vld [vmem:[%s4 + $0x1a0] sm:$0xff]
        %v2001 = vld [vmem:[%s4 + $0x1a8] sm:$0xff]
        %v2002 = vld [vmem:[%s4 + $0x1b0] sm:$0xff]
        %v2003 = vld [vmem:[%s4 + $0x1b8] sm:$0xff]
        %v2004 = vld [vmem:[%s4 + $0x1c0] sm:$0xff]
        %v2005 = vld [vmem:[%s4 + $0x1c8] sm:$0xff]
        %v2006 = vld [vmem:[%s4 + $0x1d0] sm:$0xff]
        %v2007 = vld [vmem:[%s4 + $0x1d8] sm:$0xff]
        %v2008 = vld [vmem:[%s4 + $0x1e0] sm:$0xff]
        %v2009 = vld [vmem:[%s4 + $0x1e8] sm:$0xff]
        %v2010 = vld [vmem:[%s4 + $0x1f0] sm:$0xff]
        %v2011 = vld [vmem:[%s4 + $0x1f8] sm:$0xff]
        %v2012 = vld [vmem:[%s4 + $0x200] sm:$0xff]
        %v2013 = vld [vmem:[%s4 + $0x208] sm:$0xff]
        %v2014 = vld [vmem:[%s4 + $0x210] sm:$0xff]
        %v2015 = vld [vmem:[%s4 + $0x218] sm:$0xff]
        %v2016 = vld [vmem:[%s4 + $0x220] sm:$0xff]
        %v2017 = vld [vmem:[%s4 + $0x228] sm:$0xff]
        %v2018 = vld [vmem:[%s4 + $0x230] sm:$0xff]
        %v2019 = vld [vmem:[%s4 + $0x238] sm:$0xff]
        %v2020 = vld [vmem:[%s4 + $0x240] sm:$0xff]
        %v2021 = vld [vmem:[%s4 + $0x248] sm:$0xff]
        %v2022 = vld [vmem:[%s4 + $0x250] sm:$0xff]
        %v2023 = vld [vmem:[%s4 + $0x258] sm:$0xff]
        %v2024 = vld [vmem:[%s4 + $0x260] sm:$0xff]
        %v2025 = vld [vmem:[%s4 + $0x268] sm:$0xff]
        %v2026 = vld [vmem:[%s4 + $0x270] sm:$0xff]
        %v2027 = vld [vmem:[%s4 + $0x278] sm:$0xff]
        %v2028 = vld [vmem:[%s4 + $0x280] sm:$0xff]
        %v2029 = vld [vmem:[%s4 + $0x288] sm:$0xff]
        %v2030 = vld [vmem:[%s4 + $0x290] sm:$0xff]
        %v2031 = vld [vmem:[%s4 + $0x298] sm:$0xff]
        %v2032 = vld [vmem:[%s4 + $0x2a0] sm:$0xff]
        %v2033 = vld [vmem:[%s4 + $0x2a8] sm:$0xff]
        %v2034 = vld [vmem:[%s4 + $0x2b0] sm:$0xff]
        %v2035 = vld [vmem:[%s4 + $0x2b8] sm:$0xff]
        %v2036 = vld [vmem:[%s4 + $0x2c0] sm:$0xff]
        %v2037 = vld [vmem:[%s4 + $0x2c8] sm:$0xff]
        %v2038 = vld [vmem:[%s4 + $0x2d0] sm:$0xff]
        %v2039 = vld [vmem:[%s4 + $0x2d8] sm:$0xff]
        %v2040 = vld [vmem:[%s4 + $0x2e0] sm:$0xff]
        %v2041 = vld [vmem:[%s4 + $0x2e8] sm:$0xff]
        %v2042 = vld [vmem:[%s4 + $0x2f0] sm:$0xff]
        %v2043 = vld [vmem:[%s4 + $0x2f8] sm:$0xff]
        %v2044 = vld [vmem:[%s4 + $0x300] sm:$0xff]
        %v2045 = vld [vmem:[%s4 + $0x308] sm:$0xff]
        %v2046 = vld [vmem:[%s4 + $0x310] sm:$0xff]
        %v2047 = vld [vmem:[%s4 + $0x318] sm:$0xff]
        %v2048 = vld [vmem:[%s4 + $0x320] sm:$0xff]
        %v2049 = vld [vmem:[%s4 + $0x328] sm:$0xff]
        %v2050 = vld [vmem:[%s4 + $0x330] sm:$0xff]
        %v2051 = vld [vmem:[%s4 + $0x338] sm:$0xff]
        %v2052 = vld [vmem:[%s4 + $0x340] sm:$0xff]
        %v2053 = vld [vmem:[%s4 + $0x348] sm:$0xff]
        %v2054 = vld [vmem:[%s4 + $0x350] sm:$0xff]
        %v2055 = vld [vmem:[%s4 + $0x358] sm:$0xff]
        %v2056 = vld [vmem:[%s4 + $0x360] sm:$0xff]
        %v2057 = vld [vmem:[%s4 + $0x368] sm:$0xff]
        %v2058 = vld [vmem:[%s4 + $0x370] sm:$0xff]
        %v2059 = vld [vmem:[%s4 + $0x378] sm:$0xff]
        %v2060 = vld [vmem:[%s4 + $0x380] sm:$0xff]
        %v2061 = vld [vmem:[%s4 + $0x388] sm:$0xff]
        %v2062 = vld [vmem:[%s4 + $0x390] sm:$0xff]
        %v2063 = vld [vmem:[%s4 + $0x398] sm:$0xff]
        %v2064 = vld [vmem:[%s4 + $0x3a0] sm:$0xff]
        %v2065 = vld [vmem:[%s4 + $0x3a8] sm:$0xff]
        %v2066 = vld [vmem:[%s4 + $0x3b0] sm:$0xff]
        %v2067 = vld [vmem:[%s4 + $0x3b8] sm:$0xff]
        %v2068 = vld [vmem:[%s4 + $0x3c0] sm:$0xff]
        %v2069 = vld [vmem:[%s4 + $0x3c8] sm:$0xff]
        %v2070 = vld [vmem:[%s4 + $0x3d0] sm:$0xff]
        %v2071 = vld [vmem:[%s4 + $0x3d8] sm:$0xff]
        %v2072 = vld [vmem:[%s4 + $0x3e0] sm:$0xff]
        %v2073 = vld [vmem:[%s4 + $0x3e8] sm:$0xff]
        %v2074 = vld [vmem:[%s4 + $0x3f0] sm:$0xff]
        %v2075 = vld [vmem:[%s4 + $0x3f8] sm:$0xff]
        %v2076 = vld [vmem:[%s4 + $0x400] sm:$0xff]
        %v2077 = vld [vmem:[%s4 + $0x408] sm:$0xff]
        %v2078 = vld [vmem:[%s4 + $0x410] sm:$0xff]
        %v2079 = vld [vmem:[%s4 + $0x418] sm:$0xff]
        %v2080 = vld [vmem:[%s4 + $0x420] sm:$0xff]
        %v2081 = vld [vmem:[%s4 + $0x428] sm:$0xff]
        %v2082 = vld [vmem:[%s4 + $0x430] sm:$0xff]
        %v2083 = vld [vmem:[%s4 + $0x438] sm:$0xff]
        %v2084 = vld [vmem:[%s4 + $0x440] sm:$0xff]
        %v2085 = vld [vmem:[%s4 + $0x448] sm:$0xff]
        %v2086 = vld [vmem:[%s4 + $0x450] sm:$0xff]
        %v2087 = vld [vmem:[%s4 + $0x458] sm:$0xff]
        %v2088 = vld [vmem:[%s4 + $0x460] sm:$0xff]
        %v2089 = vld [vmem:[%s4 + $0x468] sm:$0xff]
        %v2090 = vld [vmem:[%s4 + $0x470] sm:$0xff]
        %v2091 = vld [vmem:[%s4 + $0x478] sm:$0xff]
        %v2092 = vld [vmem:[%s4 + $0x480] sm:$0xff]
        %v2093 = vld [vmem:[%s4 + $0x488] sm:$0xff]
        %v2094 = vld [vmem:[%s4 + $0x490] sm:$0xff]
        %v2095 = vld [vmem:[%s4 + $0x498] sm:$0xff]
        %v2096 = vld [vmem:[%s4 + $0x4a0] sm:$0xff]
        %v2097 = vld [vmem:[%s4 + $0x4a8] sm:$0xff]
        %v2098 = vld [vmem:[%s4 + $0x4b0] sm:$0xff]
        %v2099 = vld [vmem:[%s4 + $0x4b8] sm:$0xff]
        %v2100 = vld [vmem:[%s4 + $0x4c0] sm:$0xff]
        %v2101 = vld [vmem:[%s4 + $0x4c8] sm:$0xff]
        %v2102 = vld [vmem:[%s4 + $0x4d0] sm:$0xff]
        %v2103 = vld [vmem:[%s4 + $0x4d8] sm:$0xff]
        %v2104 = vld [vmem:[%s4 + $0x4e0] sm:$0xff]
        %v2105 = vld [vmem:[%s4 + $0x4e8] sm:$0xff]
        %v2106 = vld [vmem:[%s4 + $0x4f0] sm:$0xff]
        %v2107 = vld [vmem:[%s4 + $0x4f8] sm:$0xff]
        %v2108 = vld [vmem:[%s4 + $0x500] sm:$0xff]
        %v2109 = vld [vmem:[%s4 + $0x508] sm:$0xff]
        %v2110 = vld [vmem:[%s4 + $0x510] sm:$0xff]
        %v2111 = vld [vmem:[%s4 + $0x518] sm:$0xff]
        %v2112 = vld [vmem:[%s4 + $0x520] sm:$0xff]
        %v2113 = vld [vmem:[%s4 + $0x528] sm:$0xff]
        %v2114 = vld [vmem:[%s4 + $0x530] sm:$0xff]
        %v2115 = vld [vmem:[%s4 + $0x538] sm:$0xff]
        %v2116 = vld [vmem:[%s4 + $0x540] sm:$0xff]
        %v2117 = vld [vmem:[%s4 + $0x548] sm:$0xff]
        %v2118 = vld [vmem:[%s4 + $0x550] sm:$0xff]
        %v2119 = vld [vmem:[%s4 + $0x558] sm:$0xff]
        %v2120 = vld [vmem:[%s4 + $0x560] sm:$0xff]
        %v2121 = vld [vmem:[%s4 + $0x568] sm:$0xff]
        %v2122 = vld [vmem:[%s4 + $0x570] sm:$0xff]
        %v2123 = vld [vmem:[%s4 + $0x578] sm:$0xff]
        %v2124 = vld [vmem:[%s4 + $0x580] sm:$0xff]
        %v2125 = vld [vmem:[%s4 + $0x588] sm:$0xff]
        %v2126 = vld [vmem:[%s4 + $0x590] sm:$0xff]
        %v2127 = vld [vmem:[%s4 + $0x598] sm:$0xff]
        %v2128 = vld [vmem:[%s4 + $0x5a0] sm:$0xff]
        %v2129 = vld [vmem:[%s4 + $0x5a8] sm:$0xff]
        %v2130 = vld [vmem:[%s4 + $0x5b0] sm:$0xff]
        %v2131 = vld [vmem:[%s4 + $0x5b8] sm:$0xff]
        %v2132 = vld [vmem:[%s4 + $0x5c0] sm:$0xff]
        %v2133 = vld [vmem:[%s4 + $0x5c8] sm:$0xff]
        %v2134 = vld [vmem:[%s4 + $0x5d0] sm:$0xff]
        %v2135 = vld [vmem:[%s4 + $0x5d8] sm:$0xff]
        %v2136 = vld [vmem:[%s4 + $0x5e0] sm:$0xff]
        %v2137 = vld [vmem:[%s4 + $0x5e8] sm:$0xff]
        %v2138 = vld [vmem:[%s4 + $0x5f0] sm:$0xff]
        %v2139 = vld [vmem:[%s4 + $0x5f8] sm:$0xff]
        %v2140 = vld [vmem:[%s4 + $0x600] sm:$0xff]
        %v2141 = vld [vmem:[%s4 + $0x608] sm:$0xff]
        %v2142 = vld [vmem:[%s4 + $0x610] sm:$0xff]
        %v2143 = vld [vmem:[%s4 + $0x618] sm:$0xff]
        %v2144 = vld [vmem:[%s4 + $0x620] sm:$0xff]
        %v2145 = vld [vmem:[%s4 + $0x628] sm:$0xff]
        %v2146 = vld [vmem:[%s4 + $0x630] sm:$0xff]
        %v2147 = vld [vmem:[%s4 + $0x638] sm:$0xff]
        %v2148 = vld [vmem:[%s4 + $0x640] sm:$0xff]
        %v2149 = vld [vmem:[%s4 + $0x648] sm:$0xff]
        %v2150 = vld [vmem:[%s4 + $0x650] sm:$0xff]
        %v2151 = vld [vmem:[%s4 + $0x658] sm:$0xff]
        %v2152 = vld [vmem:[%s4 + $0x660] sm:$0xff]
        %v2153 = vld [vmem:[%s4 + $0x668] sm:$0xff]
        %v2154 = vld [vmem:[%s4 + $0x670] sm:$0xff]
        %v2155 = vld [vmem:[%s4 + $0x678] sm:$0xff]
        %v2156 = vld [vmem:[%s4 + $0x680] sm:$0xff]
        %v2157 = vld [vmem:[%s4 + $0x688] sm:$0xff]
        %v2158 = vld [vmem:[%s4 + $0x690] sm:$0xff]
        %v2159 = vld [vmem:[%s4 + $0x698] sm:$0xff]
        %v2160 = vld [vmem:[%s4 + $0x6a0] sm:$0xff]
        %v2161 = vld [vmem:[%s4 + $0x6a8] sm:$0xff]
        %v2162 = vld [vmem:[%s4 + $0x6b0] sm:$0xff]
        %v2163 = vld [vmem:[%s4 + $0x6b8] sm:$0xff]
        %v2164 = vld [vmem:[%s4 + $0x6c0] sm:$0xff]
        %v2165 = vld [vmem:[%s4 + $0x6c8] sm:$0xff]
        %v2166 = vld [vmem:[%s4 + $0x6d0] sm:$0xff]
        %v2167 = vld [vmem:[%s4 + $0x6d8] sm:$0xff]
        %v2168 = vld [vmem:[%s4 + $0x6e0] sm:$0xff]
        %v2169 = vld [vmem:[%s4 + $0x6e8] sm:$0xff]
        %v2170 = vld [vmem:[%s4 + $0x6f0] sm:$0xff]
        %v2171 = vld [vmem:[%s4 + $0x6f8] sm:$0xff]
        %v2172 = vld [vmem:[%s4 + $0x700] sm:$0xff]
        %vm2173 = vcmask 719872
        %v2175 = vsel %vm2173, %v1942, 0
        %v2178 = vsel %vm2173, %v1947, 0
        %2180 = vmatprep.subr.mxu0 %v1949
        %2181 = vmatpush1.msra.mxu0 %v1948
        %2182 = vmatprep.subr.mxu0 %v1952
        %2183 = vmatpush1.msra.mxu0 %v1951
        %2184 = vmatprep.subr.mxu0 %v1955
        %2185 = vmatpush1.msra.mxu0 %v1954
        %2186 = vmatprep.subr.mxu0 %v1958
        %2187 = vmatpush1.msra.mxu0 %v1957
        %2188 = vmatprep.subr.mxu0 %v1961
        %2189 = vmatpush1.msra.mxu0 %v1960
        %2190 = vmatprep.subr.mxu0 %v1964
        %2191 = vmatpush1.msra.mxu0 %v1963
        %2192 = vmatprep.subr.mxu0 %v1967
        %2193 = vmatpush1.msra.mxu0 %v1966
        %2194 = vmatprep.subr.mxu0 %v1970
        %2195 = vmatpush1.msra.mxu0 %v1969
        %2196 = vmatprep.subr.mxu0 %v1973
        %2197 = vmatpush1.msra.mxu0 %v1972
        %2198 = vmatprep.subr.mxu0 %v1976
        %2199 = vmatpush1.msra.mxu0 %v1975
        %2200 = vmatprep.subr.mxu0 %v1979
        %2201 = vmatpush1.msra.mxu0 %v1978
        %2202 = vmatprep.subr.mxu0 %v1982
        %2203 = vmatpush1.msra.mxu0 %v1981
        %2204 = vmatprep.subr.mxu0 %v1985
        %2205 = vmatpush1.msra.mxu0 %v1984
        %2206 = vmatprep.subr.mxu0 %v1988
        %2207 = vmatpush1.msra.mxu0 %v1987
        %2208 = vmatprep.subr.mxu0 %v1991
        %2209 = vmatpush1.msra.mxu0 %v1990
        %2210 = vmatprep.subr.mxu0 %v1994
        %2211 = vmatpush1.msra.mxu0 %v1993
        %2212 = vmatprep.subr.mxu0 %v1997
        %2213 = vmatpush1.msra.mxu0 %v1996
        %2214 = vmatprep.subr.mxu0 %v2000
        %2215 = vmatpush1.msra.mxu0 %v1999
        %2216 = vmatprep.subr.mxu0 %v2003
        %2217 = vmatpush1.msra.mxu0 %v2002
        %2218 = vmatprep.subr.mxu0 %v2006
        %2219 = vmatpush1.msra.mxu0 %v2005
        %2220 = vmatprep.subr.mxu0 %v2009
        %2221 = vmatpush1.msra.mxu0 %v2008
        %2222 = vmatprep.subr.mxu0 %v2012
        %2223 = vmatpush1.msra.mxu0 %v2011
        %2224 = vmatprep.subr.mxu0 %v2015
        %2225 = vmatpush1.msra.mxu0 %v2014
        %2226 = vmatprep.subr.mxu0 %v2018
        %2227 = vmatpush1.msra.mxu0 %v2017
        %2228 = vmatprep.subr.mxu0 %v2021
        %2229 = vmatpush1.msra.mxu0 %v2020
        %2230 = vmatprep.subr.mxu0 %v2024
        %2231 = vmatpush1.msra.mxu0 %v2023
        %2232 = vmatprep.subr.mxu0 %v2027
        %2233 = vmatpush1.msra.mxu0 %v2026
        %2234 = vmatprep.subr.mxu0 %v2030
        %2235 = vmatpush1.msra.mxu0 %v2029
        %2236 = vmatprep.subr.mxu0 %v2033
        %2237 = vmatpush1.msra.mxu0 %v2032
        %2238 = vmatprep.subr.mxu0 %v2036
        %2239 = vmatpush1.msra.mxu0 %v2035
        %2240 = vmatprep.subr.mxu0 %v2039
        %2241 = vmatpush1.msra.mxu0 %v2038
        %2242 = vmatprep.subr.mxu0 %v2042
        %2243 = vmatpush1.msra.mxu0 %v2041
        %2244 = vmatprep.mubr.f32.mxu0 %v1939
        %2245 = vmatmul.mubr.f32.gmra.mrb[0].mxu0 %v1938
        %v2246 = vpop.f32.mrb[0].mxu0
        %v2247 = vadd.f32 0.0, %v2246
        %v2248 = vpop.f32.mrb[0].mxu0
        %v2249 = vadd.f32 0.0, %v2248
        %2250 = vmatprep.mubr.f32.mxu0 %v1944
        %2251 = vmatmul.mubr.f32.gmra.mrb[0].mxu0 %v1943
        %v2252 = vpop.f32.mrb[0].mxu0
        %v2253 = vadd.f32 0.0, %v2252
        %v2254 = vpop.f32.mrb[0].mxu0
        %v2255 = vadd.f32 0.0, %v2254
        %2256 = vdwg.mxu0
        %2257 = vmatprep.subr.mxu0 %v2045
        %2258 = vmatpush1.msra.mxu0 %v2044
        %2259 = vmatprep.subr.mxu0 %v2048
        %2260 = vmatpush1.msra.mxu0 %v2047
        %2261 = vmatprep.subr.mxu0 %v2051
        %2262 = vmatpush1.msra.mxu0 %v2050
        %2263 = vmatprep.subr.mxu0 %v2054
        %2264 = vmatpush1.msra.mxu0 %v2053
        %2265 = vmatprep.subr.mxu0 %v2057
        %2266 = vmatpush1.msra.mxu0 %v2056
        %2267 = vmatprep.subr.mxu0 %v2060
        %2268 = vmatpush1.msra.mxu0 %v2059
        %2269 = vmatprep.subr.mxu0 %v2063
        %2270 = vmatpush1.msra.mxu0 %v2062
        %2271 = vmatprep.subr.mxu0 %v2066
        %2272 = vmatpush1.msra.mxu0 %v2065
        %2273 = vmatprep.subr.mxu0 %v2069
        %2274 = vmatpush1.msra.mxu0 %v2068
        %2275 = vmatprep.subr.mxu0 %v2072
        %2276 = vmatpush1.msra.mxu0 %v2071
        %2277 = vmatprep.subr.mxu0 %v2075
        %2278 = vmatpush1.msra.mxu0 %v2074
        %2279 = vmatprep.subr.mxu0 %v2078
        %2280 = vmatpush1.msra.mxu0 %v2077
        %2281 = vmatprep.subr.mxu0 %v2081
        %2282 = vmatpush1.msra.mxu0 %v2080
        %2283 = vmatprep.subr.mxu0 %v2084
        %2284 = vmatpush1.msra.mxu0 %v2083
        %2285 = vmatprep.subr.mxu0 %v2087
        %2286 = vmatpush1.msra.mxu0 %v2086
        %2287 = vmatprep.subr.mxu0 %v2090
        %2288 = vmatpush1.msra.mxu0 %v2089
        %2289 = vmatprep.subr.mxu0 %v2093
        %2290 = vmatpush1.msra.mxu0 %v2092
        %2291 = vmatprep.subr.mxu0 %v2096
        %2292 = vmatpush1.msra.mxu0 %v2095
        %2293 = vmatprep.subr.mxu0 %v2099
        %2294 = vmatpush1.msra.mxu0 %v2098
        %2295 = vmatprep.subr.mxu0 %v2102
        %2296 = vmatpush1.msra.mxu0 %v2101
        %2297 = vmatprep.subr.mxu0 %v2105
        %2298 = vmatpush1.msra.mxu0 %v2104
        %2299 = vmatprep.subr.mxu0 %v2108
        %2300 = vmatpush1.msra.mxu0 %v2107
        %2301 = vmatprep.subr.mxu0 %v2111
        %2302 = vmatpush1.msra.mxu0 %v2110
        %2303 = vmatprep.subr.mxu0 %v2114
        %2304 = vmatpush1.msra.mxu0 %v2113
        %2305 = vmatprep.subr.mxu0 %v2117
        %2306 = vmatpush1.msra.mxu0 %v2116
        %2307 = vmatprep.subr.mxu0 %v2120
        %2308 = vmatpush1.msra.mxu0 %v2119
        %2309 = vmatprep.subr.mxu0 %v2123
        %2310 = vmatpush1.msra.mxu0 %v2122
        %2311 = vmatprep.subr.mxu0 %v2126
        %2312 = vmatpush1.msra.mxu0 %v2125
        %2313 = vmatprep.subr.mxu0 %v2129
        %2314 = vmatpush1.msra.mxu0 %v2128
        %2315 = vmatprep.subr.mxu0 %v2132
        %2316 = vmatpush1.msra.mxu0 %v2131
        %2317 = vmatprep.subr.mxu0 %v2135
        %2318 = vmatpush1.msra.mxu0 %v2134
        %2319 = vmatprep.subr.mxu0 %v2138
        %2320 = vmatpush1.msra.mxu0 %v2137
        %2321 = vmatprep.mubr.f32.mxu0 %v1941
        %2322 = vmatmul.mubr.f32.gmra.mrb[0].mxu0 %v1940
        %v2323 = vpop.f32.mrb[0].mxu0
        %v2324 = vadd.f32 %v2247, %v2323
        %v2325 = vpop.f32.mrb[0].mxu0
        %v2326 = vadd.f32 %v2249, %v2325
        %2327 = vmatprep.mubr.f32.mxu0 %v1946
        %2328 = vmatmul.mubr.f32.gmra.mrb[0].mxu0 %v1945
        %v2329 = vpop.f32.mrb[0].mxu0
        %v2330 = vadd.f32 %v2253, %v2329
        %v2331 = vpop.f32.mrb[0].mxu0
        %v2332 = vadd.f32 %v2255, %v2331
        %2333 = vdwg.mxu0
        %2334 = vmatprep.subr.mxu0 %v2141
        %2335 = vmatpush1.msra.mxu0 %v2140
        %2336 = vmatprep.subr.mxu0 %v2144
        %2337 = vmatpush1.msra.mxu0 %v2143
        %2338 = vmatprep.subr.mxu0 %v2147
        %2339 = vmatpush1.msra.mxu0 %v2146
        %2340 = vmatprep.subr.mxu0 %v2150
        %2341 = vmatpush1.msra.mxu0 %v2149
        %2342 = vmatprep.subr.mxu0 %v2153
        %2343 = vmatpush1.msra.mxu0 %v2152
        %2344 = vmatprep.subr.mxu0 %v2156
        %2345 = vmatpush1.msra.mxu0 %v2155
        %2346 = vmatprep.subr.mxu0 %v2159
        %2347 = vmatpush1.msra.mxu0 %v2158
        %2348 = vmatprep.subr.mxu0 %v2162
        %2349 = vmatpush1.msra.mxu0 %v2161
        %2350 = vmatprep.subr.mxu0 %v2165
        %2351 = vmatpush1.msra.mxu0 %v2164
        %2352 = vmatprep.subr.mxu0 %v2168
        %2353 = vmatpush1.msra.mxu0 %v2167
        %2354 = vmatprep.subr.mxu0 %v2171
        %2355 = vmatpush1.msra.mxu0 %v2170
        %2356 = vmatprep.subr.mxu0 0.0
        %2357 = vmatpush1.msra.mxu0 0.0
        %2358 = vmatprep.subr.mxu0 0.0
        %2359 = vmatpush1.msra.mxu0 0.0
        %2360 = vmatprep.subr.mxu0 0.0
        %2361 = vmatpush1.msra.mxu0 0.0
        %2362 = vmatprep.subr.mxu0 0.0
        %2363 = vmatpush1.msra.mxu0 0.0
        %2364 = vmatprep.subr.mxu0 0.0
        %2365 = vmatpush1.msra.mxu0 0.0
        %2366 = vmatprep.subr.mxu0 0.0
        %2367 = vmatpush1.msra.mxu0 0.0
        %2368 = vmatprep.subr.mxu0 0.0
        %2369 = vmatpush1.msra.mxu0 0.0
        %2370 = vmatprep.subr.mxu0 0.0
        %2371 = vmatpush1.msra.mxu0 0.0
        %2372 = vmatprep.subr.mxu0 0.0
        %2373 = vmatpush1.msra.mxu0 0.0
        %2374 = vmatprep.subr.mxu0 0.0
        %2375 = vmatpush1.msra.mxu0 0.0
        %2376 = vmatprep.subr.mxu0 0.0
        %2377 = vmatpush1.msra.mxu0 0.0
        %2378 = vmatprep.subr.mxu0 0.0
        %2379 = vmatpush1.msra.mxu0 0.0
        %2380 = vmatprep.subr.mxu0 0.0
        %2381 = vmatpush1.msra.mxu0 0.0
        %2382 = vmatprep.subr.mxu0 0.0
        %2383 = vmatpush1.msra.mxu0 0.0
        %2384 = vmatprep.subr.mxu0 0.0
        %2385 = vmatpush1.msra.mxu0 0.0
        %2386 = vmatprep.subr.mxu0 0.0
        %2387 = vmatpush1.msra.mxu0 0.0
        %2388 = vmatprep.subr.mxu0 0.0
        %2389 = vmatpush1.msra.mxu0 0.0
        %2390 = vmatprep.subr.mxu0 0.0
        %2391 = vmatpush1.msra.mxu0 0.0
        %2392 = vmatprep.subr.mxu0 0.0
        %2393 = vmatpush1.msra.mxu0 0.0
        %2394 = vmatprep.subr.mxu0 0.0
        %2395 = vmatpush1.msra.mxu0 0.0
        %2396 = vmatprep.subr.mxu0 0.0
        %2397 = vmatpush1.msra.mxu0 0.0
        %2398 = vmatprep.mubr.f32.mxu0 0.0
        %2399 = vmatmul.mubr.f32.gmra.mrb[0].mxu0 %v2175
        %v2400 = vpop.f32.mrb[0].mxu0
        %v2401 = vadd.f32 %v2324, %v2400
        %v2402 = vpop.f32.mrb[0].mxu0
        %v2403 = vadd.f32 %v2326, %v2402
        %2404 = vmatprep.mubr.f32.mxu0 0.0
        %2405 = vmatmul.mubr.f32.gmra.mrb[0].mxu0 %v2178
        %v2406 = vpop.f32.mrb[0].mxu0
        %v2407 = vadd.f32 %v2330, %v2406
        %v2408 = vpop.f32.mrb[0].mxu0
        %v2409 = vadd.f32 %v2332, %v2408
        %2410 = vdwg.mxu0
        %2411 = vmatprep.subr.mxu0 0.0
        %2412 = vmatpush1.msra.mxu0 %v1950
        %2413 = vmatprep.subr.mxu0 0.0
        %2414 = vmatpush1.msra.mxu0 %v1953
        %2415 = vmatprep.subr.mxu0 0.0
        %2416 = vmatpush1.msra.mxu0 %v1956
        %2417 = vmatprep.subr.mxu0 0.0
        %2418 = vmatpush1.msra.mxu0 %v1959
        %2419 = vmatprep.subr.mxu0 0.0
        %2420 = vmatpush1.msra.mxu0 %v1962
        %2421 = vmatprep.subr.mxu0 0.0
        %2422 = vmatpush1.msra.mxu0 %v1965
        %2423 = vmatprep.subr.mxu0 0.0
        %2424 = vmatpush1.msra.mxu0 %v1968
        %2425 = vmatprep.subr.mxu0 0.0
        %2426 = vmatpush1.msra.mxu0 %v1971
        %2427 = vmatprep.subr.mxu0 0.0
        %2428 = vmatpush1.msra.mxu0 %v1974
        %2429 = vmatprep.subr.mxu0 0.0
        %2430 = vmatpush1.msra.mxu0 %v1977
        %2431 = vmatprep.subr.mxu0 0.0
        %2432 = vmatpush1.msra.mxu0 %v1980
        %2433 = vmatprep.subr.mxu0 0.0
        %2434 = vmatpush1.msra.mxu0 %v1983
        %2435 = vmatprep.subr.mxu0 0.0
        %2436 = vmatpush1.msra.mxu0 %v1986
        %2437 = vmatprep.subr.mxu0 0.0
        %2438 = vmatpush1.msra.mxu0 %v1989
        %2439 = vmatprep.subr.mxu0 0.0
        %2440 = vmatpush1.msra.mxu0 %v1992
        %2441 = vmatprep.subr.mxu0 0.0
        %2442 = vmatpush1.msra.mxu0 %v1995
        %2443 = vmatprep.subr.mxu0 0.0
        %2444 = vmatpush1.msra.mxu0 %v1998
        %2445 = vmatprep.subr.mxu0 0.0
        %2446 = vmatpush1.msra.mxu0 %v2001
        %2447 = vmatprep.subr.mxu0 0.0
        %2448 = vmatpush1.msra.mxu0 %v2004
        %2449 = vmatprep.subr.mxu0 0.0
        %2450 = vmatpush1.msra.mxu0 %v2007
        %2451 = vmatprep.subr.mxu0 0.0
        %2452 = vmatpush1.msra.mxu0 %v2010
        %2453 = vmatprep.subr.mxu0 0.0
        %2454 = vmatpush1.msra.mxu0 %v2013
        %2455 = vmatprep.subr.mxu0 0.0
        %2456 = vmatpush1.msra.mxu0 %v2016
        %2457 = vmatprep.subr.mxu0 0.0
        %2458 = vmatpush1.msra.mxu0 %v2019
        %2459 = vmatprep.subr.mxu0 0.0
        %2460 = vmatpush1.msra.mxu0 %v2022
        %2461 = vmatprep.subr.mxu0 0.0
        %2462 = vmatpush1.msra.mxu0 %v2025
        %2463 = vmatprep.subr.mxu0 0.0
        %2464 = vmatpush1.msra.mxu0 %v2028
        %2465 = vmatprep.subr.mxu0 0.0
        %2466 = vmatpush1.msra.mxu0 %v2031
        %2467 = vmatprep.subr.mxu0 0.0
        %2468 = vmatpush1.msra.mxu0 %v2034
        %2469 = vmatprep.subr.mxu0 0.0
        %2470 = vmatpush1.msra.mxu0 %v2037
        %2471 = vmatprep.subr.mxu0 0.0
        %2472 = vmatpush1.msra.mxu0 %v2040
        %2473 = vmatprep.subr.mxu0 0.0
        %2474 = vmatpush1.msra.mxu0 %v2043
        %2475 = vmatprep.mubr.f32.mxu0 %v1939
        %2476 = vmatmul.mubr.f32.gmra.mrb[0].mxu0 %v1938
        %v2477 = vpop.f32.mrb[0].mxu0
        %v2478 = vadd.f32 0.0, %v2477
        %v2479 = vpop.f32.mrb[0].mxu0
        %2480 = vmatprep.mubr.f32.mxu0 %v1944
        %2481 = vmatmul.mubr.f32.gmra.mrb[0].mxu0 %v1943
        %v2482 = vpop.f32.mrb[0].mxu0
        %v2483 = vadd.f32 0.0, %v2482
        %v2484 = vpop.f32.mrb[0].mxu0
        %2485 = vdwg.mxu0
        %2486 = vmatprep.subr.mxu0 0.0
        %2487 = vmatpush1.msra.mxu0 %v2046
        %2488 = vmatprep.subr.mxu0 0.0
        %2489 = vmatpush1.msra.mxu0 %v2049
        %2490 = vmatprep.subr.mxu0 0.0
        %2491 = vmatpush1.msra.mxu0 %v2052
        %2492 = vmatprep.subr.mxu0 0.0
        %2493 = vmatpush1.msra.mxu0 %v2055
        %2494 = vmatprep.subr.mxu0 0.0
        %2495 = vmatpush1.msra.mxu0 %v2058
        %2496 = vmatprep.subr.mxu0 0.0
        %2497 = vmatpush1.msra.mxu0 %v2061
        %2498 = vmatprep.subr.mxu0 0.0
        %2499 = vmatpush1.msra.mxu0 %v2064
        %2500 = vmatprep.subr.mxu0 0.0
        %2501 = vmatpush1.msra.mxu0 %v2067
        %2502 = vmatprep.subr.mxu0 0.0
        %2503 = vmatpush1.msra.mxu0 %v2070
        %2504 = vmatprep.subr.mxu0 0.0
        %2505 = vmatpush1.msra.mxu0 %v2073
        %2506 = vmatprep.subr.mxu0 0.0
        %2507 = vmatpush1.msra.mxu0 %v2076
        %2508 = vmatprep.subr.mxu0 0.0
        %2509 = vmatpush1.msra.mxu0 %v2079
        %2510 = vmatprep.subr.mxu0 0.0
        %2511 = vmatpush1.msra.mxu0 %v2082
        %2512 = vmatprep.subr.mxu0 0.0
        %2513 = vmatpush1.msra.mxu0 %v2085
        %2514 = vmatprep.subr.mxu0 0.0
        %2515 = vmatpush1.msra.mxu0 %v2088
        %2516 = vmatprep.subr.mxu0 0.0
        %2517 = vmatpush1.msra.mxu0 %v2091
        %2518 = vmatprep.subr.mxu0 0.0
        %2519 = vmatpush1.msra.mxu0 %v2094
        %2520 = vmatprep.subr.mxu0 0.0
        %2521 = vmatpush1.msra.mxu0 %v2097
        %2522 = vmatprep.subr.mxu0 0.0
        %2523 = vmatpush1.msra.mxu0 %v2100
        %2524 = vmatprep.subr.mxu0 0.0
        %2525 = vmatpush1.msra.mxu0 %v2103
        %2526 = vmatprep.subr.mxu0 0.0
        %2527 = vmatpush1.msra.mxu0 %v2106
        %2528 = vmatprep.subr.mxu0 0.0
        %2529 = vmatpush1.msra.mxu0 %v2109
        %2530 = vmatprep.subr.mxu0 0.0
        %2531 = vmatpush1.msra.mxu0 %v2112
        %2532 = vmatprep.subr.mxu0 0.0
        %2533 = vmatpush1.msra.mxu0 %v2115
        %2534 = vmatprep.subr.mxu0 0.0
        %2535 = vmatpush1.msra.mxu0 %v2118
        %2536 = vmatprep.subr.mxu0 0.0
        %2537 = vmatpush1.msra.mxu0 %v2121
        %2538 = vmatprep.subr.mxu0 0.0
        %2539 = vmatpush1.msra.mxu0 %v2124
        %2540 = vmatprep.subr.mxu0 0.0
        %2541 = vmatpush1.msra.mxu0 %v2127
        %2542 = vmatprep.subr.mxu0 0.0
        %2543 = vmatpush1.msra.mxu0 %v2130
        %2544 = vmatprep.subr.mxu0 0.0
        %2545 = vmatpush1.msra.mxu0 %v2133
        %2546 = vmatprep.subr.mxu0 0.0
        %2547 = vmatpush1.msra.mxu0 %v2136
        %2548 = vmatprep.subr.mxu0 0.0
        %2549 = vmatpush1.msra.mxu0 %v2139
        %2550 = vmatprep.mubr.f32.mxu0 %v1941
        %2551 = vmatmul.mubr.f32.gmra.mrb[0].mxu0 %v1940
        %v2552 = vpop.f32.mrb[0].mxu0
        %v2553 = vadd.f32 %v2478, %v2552
        %v2554 = vpop.f32.mrb[0].mxu0
        %2555 = vmatprep.mubr.f32.mxu0 %v1946
        %2556 = vmatmul.mubr.f32.gmra.mrb[0].mxu0 %v1945
        %v2557 = vpop.f32.mrb[0].mxu0
        %v2558 = vadd.f32 %v2483, %v2557
        %v2559 = vpop.f32.mrb[0].mxu0
        %2560 = vdwg.mxu0
        %2561 = vmatprep.subr.mxu0 0.0
        %2562 = vmatpush1.msra.mxu0 %v2142
        %2563 = vmatprep.subr.mxu0 0.0
        %2564 = vmatpush1.msra.mxu0 %v2145
        %2565 = vmatprep.subr.mxu0 0.0
        %2566 = vmatpush1.msra.mxu0 %v2148
        %2567 = vmatprep.subr.mxu0 0.0
        %2568 = vmatpush1.msra.mxu0 %v2151
        %2569 = vmatprep.subr.mxu0 0.0
        %2570 = vmatpush1.msra.mxu0 %v2154
        %2571 = vmatprep.subr.mxu0 0.0
        %2572 = vmatpush1.msra.mxu0 %v2157
        %2573 = vmatprep.subr.mxu0 0.0
        %2574 = vmatpush1.msra.mxu0 %v2160
        %2575 = vmatprep.subr.mxu0 0.0
        %2576 = vmatpush1.msra.mxu0 %v2163
        %2577 = vmatprep.subr.mxu0 0.0
        %2578 = vmatpush1.msra.mxu0 %v2166
        %2579 = vmatprep.subr.mxu0 0.0
        %2580 = vmatpush1.msra.mxu0 %v2169
        %2581 = vmatprep.subr.mxu0 0.0
        %2582 = vmatpush1.msra.mxu0 %v2172
        %2583 = vmatprep.subr.mxu0 0.0
        %2584 = vmatpush1.msra.mxu0 0.0
        %2585 = vmatprep.subr.mxu0 0.0
        %2586 = vmatpush1.msra.mxu0 0.0
        %2587 = vmatprep.subr.mxu0 0.0
        %2588 = vmatpush1.msra.mxu0 0.0
        %2589 = vmatprep.subr.mxu0 0.0
        %2590 = vmatpush1.msra.mxu0 0.0
        %2591 = vmatprep.subr.mxu0 0.0
        %2592 = vmatpush1.msra.mxu0 0.0
        %2593 = vmatprep.subr.mxu0 0.0
        %2594 = vmatpush1.msra.mxu0 0.0
        %2595 = vmatprep.subr.mxu0 0.0
        %2596 = vmatpush1.msra.mxu0 0.0
        %2597 = vmatprep.subr.mxu0 0.0
        %2598 = vmatpush1.msra.mxu0 0.0
        %2599 = vmatprep.subr.mxu0 0.0
        %2600 = vmatpush1.msra.mxu0 0.0
        %2601 = vmatprep.subr.mxu0 0.0
        %2602 = vmatpush1.msra.mxu0 0.0
        %2603 = vmatprep.subr.mxu0 0.0
        %2604 = vmatpush1.msra.mxu0 0.0
        %2605 = vmatprep.subr.mxu0 0.0
        %2606 = vmatpush1.msra.mxu0 0.0
        %2607 = vmatprep.subr.mxu0 0.0
        %2608 = vmatpush1.msra.mxu0 0.0
        %2609 = vmatprep.subr.mxu0 0.0
        %2610 = vmatpush1.msra.mxu0 0.0
        %2611 = vmatprep.subr.mxu0 0.0
        %2612 = vmatpush1.msra.mxu0 0.0
        %2613 = vmatprep.subr.mxu0 0.0
        %2614 = vmatpush1.msra.mxu0 0.0
        %2615 = vmatprep.subr.mxu0 0.0
        %2616 = vmatpush1.msra.mxu0 0.0
        %2617 = vmatprep.subr.mxu0 0.0
        %2618 = vmatpush1.msra.mxu0 0.0
        %2619 = vmatprep.subr.mxu0 0.0
        %2620 = vmatpush1.msra.mxu0 0.0
        %2621 = vmatprep.subr.mxu0 0.0
        %2622 = vmatpush1.msra.mxu0 0.0
        %2623 = vmatprep.subr.mxu0 0.0
        %2624 = vmatpush1.msra.mxu0 0.0
        %2625 = vmatprep.mubr.f32.mxu0 0.0
        %2626 = vmatmul.mubr.f32.gmra.mrb[0].mxu0 %v2175
        %v2627 = vpop.f32.mrb[0].mxu0
        %v2628 = vadd.f32 %v2553, %v2627
        %v2629 = vpop.f32.mrb[0].mxu0
        %2630 = vmatprep.mubr.f32.mxu0 0.0
        %2631 = vmatmul.mubr.f32.gmra.mrb[0].mxu0 %v2178
        %v2632 = vpop.f32.mrb[0].mxu0
        %v2633 = vadd.f32 %v2558, %v2632
        %v2634 = vpop.f32.mrb[0].mxu0
        %2635 = vdwg.mxu0
        %v2636 = vld [vmem:[%s5] sm:$0xff]
        %v2637 = vld [vmem:[%s5 + $0x8] sm:$0xff]
        %v2638 = vld [vmem:[%s5 + $0x10] sm:$0xff]
        %v2639 = vld [vmem:[%s5 + $0x18] sm:$0xff]
        %v2640 = vld [vmem:[%s5 + $0x20] sm:$0xff]
        %v2641 = vld [vmem:[%s5 + $0x28] sm:$0xff]
        %v2642 = vld [vmem:[%s5 + $0x30] sm:$0xff]
        %v2643 = vld [vmem:[%s5 + $0x38] sm:$0xff]
        %v2644 = vld [vmem:[%s5 + $0x40] sm:$0xff]
        %v2645 = vld [vmem:[%s5 + $0x48] sm:$0xff]
        %v2646 = vld [vmem:[%s5 + $0x50] sm:$0xff]
        %v2647 = vld [vmem:[%s5 + $0x58] sm:$0xff]
        %v2648 = vld [vmem:[%s5 + $0x60] sm:$0xff]
        %v2649 = vld [vmem:[%s5 + $0x68] sm:$0xff]
        %v2650 = vld [vmem:[%s5 + $0x70] sm:$0xff]
        %v2651 = vld [vmem:[%s5 + $0x78] sm:$0xff]
        %v2652 = vld [vmem:[%s5 + $0x80] sm:$0xff]
        %v2653 = vld [vmem:[%s5 + $0x88] sm:$0xff]
        %v2654 = vld [vmem:[%s5 + $0x90] sm:$0xff]
        %v2655 = vld [vmem:[%s5 + $0x98] sm:$0xff]
        %v2656 = vld [vmem:[%s5 + $0xa0] sm:$0xff]
        %v2657 = vld [vmem:[%s5 + $0xa8] sm:$0xff]
        %v2658 = vld [vmem:[%s5 + $0xb0] sm:$0xff]
        %v2659 = vld [vmem:[%s5 + $0xb8] sm:$0xff]
        %v2660 = vld [vmem:[%s5 + $0xc0] sm:$0xff]
        %v2661 = vld [vmem:[%s5 + $0xc8] sm:$0xff]
        %v2662 = vld [vmem:[%s5 + $0xd0] sm:$0xff]
        %v2663 = vld [vmem:[%s5 + $0xd8] sm:$0xff]
        %v2664 = vld [vmem:[%s5 + $0xe0] sm:$0xff]
        %v2665 = vld [vmem:[%s5 + $0xe8] sm:$0xff]
        %v2666 = vld [vmem:[%s5 + $0xf0] sm:$0xff]
        %v2667 = vld [vmem:[%s5 + $0xf8] sm:$0xff]
        %v2668 = vld [vmem:[%s5 + $0x100] sm:$0xff]
        %v2669 = vld [vmem:[%s5 + $0x108] sm:$0xff]
        %v2670 = vld [vmem:[%s5 + $0x110] sm:$0xff]
        %v2671 = vld [vmem:[%s5 + $0x118] sm:$0xff]
        %v2672 = vld [vmem:[%s5 + $0x120] sm:$0xff]
        %v2673 = vld [vmem:[%s5 + $0x128] sm:$0xff]
        %v2674 = vld [vmem:[%s5 + $0x130] sm:$0xff]
        %v2675 = vld [vmem:[%s5 + $0x138] sm:$0xff]
        %v2676 = vld [vmem:[%s5 + $0x140] sm:$0xff]
        %v2677 = vld [vmem:[%s5 + $0x148] sm:$0xff]
        %v2678 = vld [vmem:[%s5 + $0x150] sm:$0xff]
        %v2679 = vld [vmem:[%s5 + $0x158] sm:$0xff]
        %v2680 = vld [vmem:[%s5 + $0x160] sm:$0xff]
        %v2681 = vld [vmem:[%s5 + $0x168] sm:$0xff]
        %v2682 = vld [vmem:[%s5 + $0x170] sm:$0xff]
        %v2683 = vld [vmem:[%s5 + $0x178] sm:$0xff]
        %v2684 = vld [vmem:[%s5 + $0x180] sm:$0xff]
        %v2685 = vld [vmem:[%s5 + $0x188] sm:$0xff]
        %v2686 = vld [vmem:[%s5 + $0x190] sm:$0xff]
        %v2687 = vld [vmem:[%s5 + $0x198] sm:$0xff]
        %v2688 = vld [vmem:[%s5 + $0x1a0] sm:$0xff]
        %v2689 = vld [vmem:[%s5 + $0x1a8] sm:$0xff]
        %v2690 = vld [vmem:[%s5 + $0x1b0] sm:$0xff]
        %v2691 = vld [vmem:[%s5 + $0x1b8] sm:$0xff]
        %v2692 = vld [vmem:[%s5 + $0x1c0] sm:$0xff]
        %v2693 = vld [vmem:[%s5 + $0x1c8] sm:$0xff]
        %v2694 = vld [vmem:[%s5 + $0x1d0] sm:$0xff]
        %v2695 = vld [vmem:[%s5 + $0x1d8] sm:$0xff]
        %v2696 = vld [vmem:[%s5 + $0x1e0] sm:$0xff]
        %v2697 = vld [vmem:[%s5 + $0x1e8] sm:$0xff]
        %v2698 = vld [vmem:[%s5 + $0x1f0] sm:$0xff]
        %v2699 = vld [vmem:[%s5 + $0x1f8] sm:$0xff]
        %v2700 = vld [vmem:[%s5 + $0x200] sm:$0xff]
        %v2701 = vld [vmem:[%s5 + $0x208] sm:$0xff]
        %v2702 = vld [vmem:[%s5 + $0x210] sm:$0xff]
        %v2703 = vld [vmem:[%s5 + $0x218] sm:$0xff]
        %v2704 = vld [vmem:[%s5 + $0x220] sm:$0xff]
        %v2705 = vld [vmem:[%s5 + $0x228] sm:$0xff]
        %v2706 = vld [vmem:[%s5 + $0x230] sm:$0xff]
        %v2707 = vld [vmem:[%s5 + $0x238] sm:$0xff]
        %v2708 = vld [vmem:[%s5 + $0x240] sm:$0xff]
        %v2709 = vld [vmem:[%s5 + $0x248] sm:$0xff]
        %v2710 = vld [vmem:[%s5 + $0x250] sm:$0xff]
        %v2711 = vld [vmem:[%s5 + $0x258] sm:$0xff]
        %v2712 = vld [vmem:[%s5 + $0x260] sm:$0xff]
        %v2713 = vld [vmem:[%s5 + $0x268] sm:$0xff]
        %v2714 = vld [vmem:[%s5 + $0x270] sm:$0xff]
        %v2715 = vld [vmem:[%s5 + $0x278] sm:$0xff]
        %v2716 = vld [vmem:[%s5 + $0x280] sm:$0xff]
        %v2717 = vld [vmem:[%s5 + $0x288] sm:$0xff]
        %v2718 = vld [vmem:[%s5 + $0x290] sm:$0xff]
        %v2719 = vld [vmem:[%s5 + $0x298] sm:$0xff]
        %v2720 = vld [vmem:[%s5 + $0x2a0] sm:$0xff]
        %v2721 = vld [vmem:[%s5 + $0x2a8] sm:$0xff]
        %v2722 = vld [vmem:[%s5 + $0x2b0] sm:$0xff]
        %v2723 = vld [vmem:[%s5 + $0x2b8] sm:$0xff]
        %v2724 = vld [vmem:[%s5 + $0x2c0] sm:$0xff]
        %v2725 = vld [vmem:[%s5 + $0x2c8] sm:$0xff]
        %v2726 = vld [vmem:[%s5 + $0x2d0] sm:$0xff]
        %v2727 = vld [vmem:[%s5 + $0x2d8] sm:$0xff]
        %v2728 = vld [vmem:[%s5 + $0x2e0] sm:$0xff]
        %v2729 = vld [vmem:[%s5 + $0x2e8] sm:$0xff]
        %v2730 = vld [vmem:[%s5 + $0x2f0] sm:$0xff]
        %v2731 = vld [vmem:[%s5 + $0x2f8] sm:$0xff]
        %v2732 = vld [vmem:[%s5 + $0x300] sm:$0xff]
        %v2733 = vld [vmem:[%s5 + $0x308] sm:$0xff]
        %v2734 = vld [vmem:[%s5 + $0x310] sm:$0xff]
        %v2735 = vld [vmem:[%s5 + $0x318] sm:$0xff]
        %v2736 = vld [vmem:[%s5 + $0x320] sm:$0xff]
        %v2737 = vld [vmem:[%s5 + $0x328] sm:$0xff]
        %v2738 = vld [vmem:[%s5 + $0x330] sm:$0xff]
        %v2739 = vld [vmem:[%s5 + $0x338] sm:$0xff]
        %v2740 = vld [vmem:[%s5 + $0x340] sm:$0xff]
        %v2741 = vld [vmem:[%s5 + $0x348] sm:$0xff]
        %v2742 = vld [vmem:[%s5 + $0x350] sm:$0xff]
        %v2743 = vld [vmem:[%s5 + $0x358] sm:$0xff]
        %v2744 = vld [vmem:[%s5 + $0x360] sm:$0xff]
        %v2745 = vld [vmem:[%s5 + $0x368] sm:$0xff]
        %v2746 = vld [vmem:[%s5 + $0x370] sm:$0xff]
        %v2747 = vld [vmem:[%s5 + $0x378] sm:$0xff]
        %v2748 = vld [vmem:[%s5 + $0x380] sm:$0xff]
        %v2749 = vld [vmem:[%s5 + $0x388] sm:$0xff]
        %v2750 = vld [vmem:[%s5 + $0x390] sm:$0xff]
        %v2751 = vld [vmem:[%s5 + $0x398] sm:$0xff]
        %v2752 = vld [vmem:[%s5 + $0x3a0] sm:$0xff]
        %v2753 = vld [vmem:[%s5 + $0x3a8] sm:$0xff]
        %v2754 = vld [vmem:[%s5 + $0x3b0] sm:$0xff]
        %v2755 = vld [vmem:[%s5 + $0x3b8] sm:$0xff]
        %v2756 = vld [vmem:[%s5 + $0x3c0] sm:$0xff]
        %v2757 = vld [vmem:[%s5 + $0x3c8] sm:$0xff]
        %v2758 = vld [vmem:[%s5 + $0x3d0] sm:$0xff]
        %v2759 = vld [vmem:[%s5 + $0x3d8] sm:$0xff]
        %v2760 = vld [vmem:[%s5 + $0x3e0] sm:$0xff]
        %v2761 = vld [vmem:[%s5 + $0x3e8] sm:$0xff]
        %v2762 = vld [vmem:[%s5 + $0x3f0] sm:$0xff]
        %v2763 = vld [vmem:[%s5 + $0x3f8] sm:$0xff]
        %v2764 = vld [vmem:[%s5 + $0x400] sm:$0xff]
        %v2765 = vld [vmem:[%s5 + $0x408] sm:$0xff]
        %v2766 = vld [vmem:[%s5 + $0x410] sm:$0xff]
        %v2767 = vld [vmem:[%s5 + $0x418] sm:$0xff]
        %v2768 = vld [vmem:[%s5 + $0x420] sm:$0xff]
        %v2769 = vld [vmem:[%s5 + $0x428] sm:$0xff]
        %v2770 = vld [vmem:[%s5 + $0x430] sm:$0xff]
        %v2771 = vld [vmem:[%s5 + $0x438] sm:$0xff]
        %v2772 = vld [vmem:[%s5 + $0x440] sm:$0xff]
        %v2773 = vld [vmem:[%s5 + $0x448] sm:$0xff]
        %v2774 = vld [vmem:[%s5 + $0x450] sm:$0xff]
        %v2775 = vld [vmem:[%s5 + $0x458] sm:$0xff]
        %v2776 = vld [vmem:[%s5 + $0x460] sm:$0xff]
        %v2777 = vld [vmem:[%s5 + $0x468] sm:$0xff]
        %v2778 = vld [vmem:[%s5 + $0x470] sm:$0xff]
        %v2779 = vld [vmem:[%s5 + $0x478] sm:$0xff]
        %v2780 = vld [vmem:[%s5 + $0x480] sm:$0xff]
        %v2781 = vld [vmem:[%s5 + $0x488] sm:$0xff]
        %v2782 = vld [vmem:[%s5 + $0x490] sm:$0xff]
        %v2783 = vld [vmem:[%s5 + $0x498] sm:$0xff]
        %v2784 = vld [vmem:[%s5 + $0x4a0] sm:$0xff]
        %v2785 = vld [vmem:[%s5 + $0x4a8] sm:$0xff]
        %v2786 = vld [vmem:[%s5 + $0x4b0] sm:$0xff]
        %v2787 = vld [vmem:[%s5 + $0x4b8] sm:$0xff]
        %v2788 = vld [vmem:[%s5 + $0x4c0] sm:$0xff]
        %v2789 = vld [vmem:[%s5 + $0x4c8] sm:$0xff]
        %v2790 = vld [vmem:[%s5 + $0x4d0] sm:$0xff]
        %v2791 = vld [vmem:[%s5 + $0x4d8] sm:$0xff]
        %v2792 = vld [vmem:[%s5 + $0x4e0] sm:$0xff]
        %v2793 = vld [vmem:[%s5 + $0x4e8] sm:$0xff]
        %v2794 = vld [vmem:[%s5 + $0x4f0] sm:$0xff]
        %v2795 = vld [vmem:[%s5 + $0x4f8] sm:$0xff]
        %v2796 = vld [vmem:[%s5 + $0x500] sm:$0xff]
        %v2797 = vld [vmem:[%s5 + $0x508] sm:$0xff]
        %v2798 = vld [vmem:[%s5 + $0x510] sm:$0xff]
        %v2799 = vld [vmem:[%s5 + $0x518] sm:$0xff]
        %v2800 = vld [vmem:[%s5 + $0x520] sm:$0xff]
        %v2801 = vld [vmem:[%s5 + $0x528] sm:$0xff]
        %v2802 = vld [vmem:[%s5 + $0x530] sm:$0xff]
        %v2803 = vld [vmem:[%s5 + $0x538] sm:$0xff]
        %v2804 = vld [vmem:[%s5 + $0x540] sm:$0xff]
        %v2805 = vld [vmem:[%s5 + $0x548] sm:$0xff]
        %v2806 = vld [vmem:[%s5 + $0x550] sm:$0xff]
        %v2807 = vld [vmem:[%s5 + $0x558] sm:$0xff]
        %v2808 = vld [vmem:[%s5 + $0x560] sm:$0xff]
        %v2809 = vld [vmem:[%s5 + $0x568] sm:$0xff]
        %v2810 = vld [vmem:[%s5 + $0x570] sm:$0xff]
        %v2811 = vld [vmem:[%s5 + $0x578] sm:$0xff]
        %v2812 = vld [vmem:[%s5 + $0x580] sm:$0xff]
        %v2813 = vld [vmem:[%s5 + $0x588] sm:$0xff]
        %v2814 = vld [vmem:[%s5 + $0x590] sm:$0xff]
        %v2815 = vld [vmem:[%s5 + $0x598] sm:$0xff]
        %v2816 = vld [vmem:[%s5 + $0x5a0] sm:$0xff]
        %v2817 = vld [vmem:[%s5 + $0x5a8] sm:$0xff]
        %v2818 = vld [vmem:[%s5 + $0x5b0] sm:$0xff]
        %v2819 = vld [vmem:[%s5 + $0x5b8] sm:$0xff]
        %v2820 = vld [vmem:[%s5 + $0x5c0] sm:$0xff]
        %v2821 = vld [vmem:[%s5 + $0x5c8] sm:$0xff]
        %v2822 = vld [vmem:[%s5 + $0x5d0] sm:$0xff]
        %v2823 = vld [vmem:[%s5 + $0x5d8] sm:$0xff]
        %v2824 = vld [vmem:[%s5 + $0x5e0] sm:$0xff]
        %v2825 = vld [vmem:[%s5 + $0x5e8] sm:$0xff]
        %v2826 = vld [vmem:[%s5 + $0x5f0] sm:$0xff]
        %v2827 = vld [vmem:[%s5 + $0x5f8] sm:$0xff]
        %v2828 = vld [vmem:[%s5 + $0x600] sm:$0xff]
        %v2829 = vld [vmem:[%s5 + $0x608] sm:$0xff]
        %v2830 = vld [vmem:[%s5 + $0x610] sm:$0xff]
        %s2831 = scalar_lea.vmem %s5, 1560
        %v2832 = vld [vmem:[%s2831] sm:$0xff]
        %v2833 = vld [vmem:[%s2831 + $0x8] sm:$0xff]
        %v2834 = vld [vmem:[%s2831 + $0x10] sm:$0xff]
        %v2835 = vld [vmem:[%s2831 + $0x18] sm:$0xff]
        %v2836 = vld [vmem:[%s2831 + $0x20] sm:$0xff]
        %v2837 = vld [vmem:[%s2831 + $0x28] sm:$0xff]
        %v2838 = vld [vmem:[%s2831 + $0x30] sm:$0xff]
        %v2839 = vld [vmem:[%s2831 + $0x38] sm:$0xff]
        %v2840 = vld [vmem:[%s2831 + $0x40] sm:$0xff]
        %v2841 = vld [vmem:[%s2831 + $0x48] sm:$0xff]
        %v2842 = vld [vmem:[%s2831 + $0x50] sm:$0xff]
        %v2843 = vld [vmem:[%s2831 + $0x58] sm:$0xff]
        %v2844 = vld [vmem:[%s2831 + $0x60] sm:$0xff]
        %v2845 = vld [vmem:[%s2831 + $0x68] sm:$0xff]
        %v2846 = vld [vmem:[%s2831 + $0x70] sm:$0xff]
        %v2847 = vld [vmem:[%s2831 + $0x78] sm:$0xff]
        %v2848 = vld [vmem:[%s2831 + $0x80] sm:$0xff]
        %v2849 = vld [vmem:[%s2831 + $0x88] sm:$0xff]
        %v2850 = vld [vmem:[%s2831 + $0x90] sm:$0xff]
        %v2851 = vld [vmem:[%s2831 + $0x98] sm:$0xff]
        %v2852 = vld [vmem:[%s2831 + $0xa0] sm:$0xff]
        %v2853 = vld [vmem:[%s2831 + $0xa8] sm:$0xff]
        %v2854 = vld [vmem:[%s2831 + $0xb0] sm:$0xff]
        %v2855 = vld [vmem:[%s2831 + $0xb8] sm:$0xff]
        %v2856 = vld [vmem:[%s2831 + $0xc0] sm:$0xff]
        %v2857 = vld [vmem:[%s2831 + $0xc8] sm:$0xff]
        %v2858 = vld [vmem:[%s2831 + $0xd0] sm:$0xff]
        %v2859 = vld [vmem:[%s2831 + $0xd8] sm:$0xff]
        %v2860 = vld [vmem:[%s2831 + $0xe0] sm:$0xff]
        %v2861 = vld [vmem:[%s2831 + $0xe8] sm:$0xff]
        %v2862 = vld [vmem:[%s2831 + $0xf0] sm:$0xff]
        %v2863 = vld [vmem:[%s2831 + $0xf8] sm:$0xff]
        %v2864 = vld [vmem:[%s2831 + $0x100] sm:$0xff]
        %v2865 = vld [vmem:[%s2831 + $0x108] sm:$0xff]
        %v2866 = vld [vmem:[%s2831 + $0x110] sm:$0xff]
        %v2867 = vld [vmem:[%s2831 + $0x118] sm:$0xff]
        %v2868 = vld [vmem:[%s2831 + $0x120] sm:$0xff]
        %v2869 = vld [vmem:[%s2831 + $0x128] sm:$0xff]
        %v2870 = vld [vmem:[%s2831 + $0x130] sm:$0xff]
        %v2871 = vld [vmem:[%s2831 + $0x138] sm:$0xff]
        %v2872 = vld [vmem:[%s2831 + $0x140] sm:$0xff]
        %v2873 = vld [vmem:[%s2831 + $0x148] sm:$0xff]
        %v2874 = vld [vmem:[%s2831 + $0x150] sm:$0xff]
        %v2875 = vld [vmem:[%s2831 + $0x158] sm:$0xff]
        %v2876 = vld [vmem:[%s2831 + $0x160] sm:$0xff]
        %v2877 = vld [vmem:[%s2831 + $0x168] sm:$0xff]
        %v2878 = vld [vmem:[%s2831 + $0x170] sm:$0xff]
        %v2879 = vld [vmem:[%s2831 + $0x178] sm:$0xff]
        %v2880 = vld [vmem:[%s2831 + $0x180] sm:$0xff]
        %v2881 = vld [vmem:[%s2831 + $0x188] sm:$0xff]
        %v2882 = vld [vmem:[%s2831 + $0x190] sm:$0xff]
        %v2883 = vld [vmem:[%s2831 + $0x198] sm:$0xff]
        %v2884 = vld [vmem:[%s2831 + $0x1a0] sm:$0xff]
        %v2885 = vld [vmem:[%s2831 + $0x1a8] sm:$0xff]
        %v2886 = vld [vmem:[%s2831 + $0x1b0] sm:$0xff]
        %v2887 = vld [vmem:[%s2831 + $0x1b8] sm:$0xff]
        %v2888 = vld [vmem:[%s2831 + $0x1c0] sm:$0xff]
        %v2889 = vld [vmem:[%s2831 + $0x1c8] sm:$0xff]
        %v2890 = vld [vmem:[%s2831 + $0x1d0] sm:$0xff]
        %v2891 = vld [vmem:[%s2831 + $0x1d8] sm:$0xff]
        %v2892 = vld [vmem:[%s2831 + $0x1e0] sm:$0xff]
        %v2893 = vld [vmem:[%s2831 + $0x1e8] sm:$0xff]
        %v2894 = vld [vmem:[%s2831 + $0x1f0] sm:$0xff]
        %v2895 = vld [vmem:[%s2831 + $0x1f8] sm:$0xff]
        %v2896 = vld [vmem:[%s2831 + $0x200] sm:$0xff]
        %v2897 = vld [vmem:[%s2831 + $0x208] sm:$0xff]
        %v2898 = vld [vmem:[%s2831 + $0x210] sm:$0xff]
        %v2899 = vld [vmem:[%s2831 + $0x218] sm:$0xff]
        %v2900 = vld [vmem:[%s2831 + $0x220] sm:$0xff]
        %v2901 = vld [vmem:[%s2831 + $0x228] sm:$0xff]
        %v2902 = vld [vmem:[%s2831 + $0x230] sm:$0xff]
        %v2903 = vld [vmem:[%s2831 + $0x238] sm:$0xff]
        %v2904 = vld [vmem:[%s2831 + $0x240] sm:$0xff]
        %v2905 = vld [vmem:[%s2831 + $0x248] sm:$0xff]
        %v2906 = vld [vmem:[%s2831 + $0x250] sm:$0xff]
        %v2907 = vld [vmem:[%s2831 + $0x258] sm:$0xff]
        %v2908 = vld [vmem:[%s2831 + $0x260] sm:$0xff]
        %v2909 = vld [vmem:[%s2831 + $0x268] sm:$0xff]
        %v2910 = vld [vmem:[%s2831 + $0x270] sm:$0xff]
        %v2911 = vld [vmem:[%s2831 + $0x278] sm:$0xff]
        %v2912 = vld [vmem:[%s2831 + $0x280] sm:$0xff]
        %v2913 = vld [vmem:[%s2831 + $0x288] sm:$0xff]
        %v2914 = vld [vmem:[%s2831 + $0x290] sm:$0xff]
        %v2915 = vld [vmem:[%s2831 + $0x298] sm:$0xff]
        %v2916 = vld [vmem:[%s2831 + $0x2a0] sm:$0xff]
        %v2917 = vld [vmem:[%s2831 + $0x2a8] sm:$0xff]
        %v2918 = vld [vmem:[%s2831 + $0x2b0] sm:$0xff]
        %v2919 = vld [vmem:[%s2831 + $0x2b8] sm:$0xff]
        %v2920 = vld [vmem:[%s2831 + $0x2c0] sm:$0xff]
        %v2921 = vld [vmem:[%s2831 + $0x2c8] sm:$0xff]
        %v2922 = vld [vmem:[%s2831 + $0x2d0] sm:$0xff]
        %v2923 = vld [vmem:[%s2831 + $0x2d8] sm:$0xff]
        %v2924 = vld [vmem:[%s2831 + $0x2e0] sm:$0xff]
        %v2925 = vld [vmem:[%s2831 + $0x2e8] sm:$0xff]
        %v2926 = vld [vmem:[%s2831 + $0x2f0] sm:$0xff]
        %v2927 = vld [vmem:[%s2831 + $0x2f8] sm:$0xff]
        %v2928 = vld [vmem:[%s2831 + $0x300] sm:$0xff]
        %v2929 = vld [vmem:[%s2831 + $0x308] sm:$0xff]
        %v2930 = vld [vmem:[%s2831 + $0x310] sm:$0xff]
        %v2931 = vld [vmem:[%s2831 + $0x318] sm:$0xff]
        %v2932 = vld [vmem:[%s2831 + $0x320] sm:$0xff]
        %v2933 = vld [vmem:[%s2831 + $0x328] sm:$0xff]
        %v2934 = vld [vmem:[%s2831 + $0x330] sm:$0xff]
        %v2935 = vld [vmem:[%s2831 + $0x338] sm:$0xff]
        %v2936 = vld [vmem:[%s2831 + $0x340] sm:$0xff]
        %v2937 = vld [vmem:[%s2831 + $0x348] sm:$0xff]
        %v2938 = vld [vmem:[%s2831 + $0x350] sm:$0xff]
        %v2939 = vld [vmem:[%s2831 + $0x358] sm:$0xff]
        %v2940 = vld [vmem:[%s2831 + $0x360] sm:$0xff]
        %v2941 = vld [vmem:[%s2831 + $0x368] sm:$0xff]
        %v2942 = vld [vmem:[%s2831 + $0x370] sm:$0xff]
        %v2943 = vld [vmem:[%s2831 + $0x378] sm:$0xff]
        %v2944 = vld [vmem:[%s2831 + $0x380] sm:$0xff]
        %v2945 = vld [vmem:[%s2831 + $0x388] sm:$0xff]
        %v2946 = vld [vmem:[%s2831 + $0x390] sm:$0xff]
        %v2947 = vld [vmem:[%s2831 + $0x398] sm:$0xff]
        %v2948 = vld [vmem:[%s2831 + $0x3a0] sm:$0xff]
        %v2949 = vld [vmem:[%s2831 + $0x3a8] sm:$0xff]
        %v2950 = vld [vmem:[%s2831 + $0x3b0] sm:$0xff]
        %v2951 = vld [vmem:[%s2831 + $0x3b8] sm:$0xff]
        %v2952 = vld [vmem:[%s2831 + $0x3c0] sm:$0xff]
        %v2953 = vld [vmem:[%s2831 + $0x3c8] sm:$0xff]
        %v2954 = vld [vmem:[%s2831 + $0x3d0] sm:$0xff]
        %v2955 = vld [vmem:[%s2831 + $0x3d8] sm:$0xff]
        %v2956 = vld [vmem:[%s2831 + $0x3e0] sm:$0xff]
        %v2957 = vld [vmem:[%s2831 + $0x3e8] sm:$0xff]
        %v2958 = vld [vmem:[%s2831 + $0x3f0] sm:$0xff]
        %v2959 = vld [vmem:[%s2831 + $0x3f8] sm:$0xff]
        %v2960 = vld [vmem:[%s2831 + $0x400] sm:$0xff]
        %v2961 = vld [vmem:[%s2831 + $0x408] sm:$0xff]
        %v2962 = vld [vmem:[%s2831 + $0x410] sm:$0xff]
        %v2963 = vld [vmem:[%s2831 + $0x418] sm:$0xff]
        %v2964 = vld [vmem:[%s2831 + $0x420] sm:$0xff]
        %v2965 = vld [vmem:[%s2831 + $0x428] sm:$0xff]
        %v2966 = vld [vmem:[%s2831 + $0x430] sm:$0xff]
        %v2967 = vld [vmem:[%s2831 + $0x438] sm:$0xff]
        %v2968 = vld [vmem:[%s2831 + $0x440] sm:$0xff]
        %v2969 = vld [vmem:[%s2831 + $0x448] sm:$0xff]
        %v2970 = vld [vmem:[%s2831 + $0x450] sm:$0xff]
        %v2971 = vld [vmem:[%s2831 + $0x458] sm:$0xff]
        %v2972 = vld [vmem:[%s2831 + $0x460] sm:$0xff]
        %v2973 = vld [vmem:[%s2831 + $0x468] sm:$0xff]
        %v2974 = vld [vmem:[%s2831 + $0x470] sm:$0xff]
        %v2975 = vld [vmem:[%s2831 + $0x478] sm:$0xff]
        %v2976 = vld [vmem:[%s2831 + $0x480] sm:$0xff]
        %v2977 = vld [vmem:[%s2831 + $0x488] sm:$0xff]
        %v2978 = vld [vmem:[%s2831 + $0x490] sm:$0xff]
        %v2979 = vld [vmem:[%s2831 + $0x498] sm:$0xff]
        %v2980 = vld [vmem:[%s2831 + $0x4a0] sm:$0xff]
        %v2981 = vld [vmem:[%s2831 + $0x4a8] sm:$0xff]
        %v2982 = vld [vmem:[%s2831 + $0x4b0] sm:$0xff]
        %v2983 = vld [vmem:[%s2831 + $0x4b8] sm:$0xff]
        %v2984 = vld [vmem:[%s2831 + $0x4c0] sm:$0xff]
        %v2985 = vld [vmem:[%s2831 + $0x4c8] sm:$0xff]
        %v2986 = vld [vmem:[%s2831 + $0x4d0] sm:$0xff]
        %v2987 = vld [vmem:[%s2831 + $0x4d8] sm:$0xff]
        %v2988 = vld [vmem:[%s2831 + $0x4e0] sm:$0xff]
        %v2989 = vld [vmem:[%s2831 + $0x4e8] sm:$0xff]
        %v2990 = vld [vmem:[%s2831 + $0x4f0] sm:$0xff]
        %v2991 = vld [vmem:[%s2831 + $0x4f8] sm:$0xff]
        %v2992 = vld [vmem:[%s2831 + $0x500] sm:$0xff]
        %v2993 = vld [vmem:[%s2831 + $0x508] sm:$0xff]
        %v2994 = vld [vmem:[%s2831 + $0x510] sm:$0xff]
        %v2995 = vld [vmem:[%s2831 + $0x518] sm:$0xff]
        %v2996 = vld [vmem:[%s2831 + $0x520] sm:$0xff]
        %v2997 = vld [vmem:[%s2831 + $0x528] sm:$0xff]
        %v2998 = vld [vmem:[%s2831 + $0x530] sm:$0xff]
        %v2999 = vld [vmem:[%s2831 + $0x538] sm:$0xff]
        %v3000 = vld [vmem:[%s2831 + $0x540] sm:$0xff]
        %v3001 = vld [vmem:[%s2831 + $0x548] sm:$0xff]
        %v3002 = vld [vmem:[%s2831 + $0x550] sm:$0xff]
        %v3003 = vld [vmem:[%s2831 + $0x558] sm:$0xff]
        %v3004 = vld [vmem:[%s2831 + $0x560] sm:$0xff]
        %v3005 = vld [vmem:[%s2831 + $0x568] sm:$0xff]
        %v3006 = vld [vmem:[%s2831 + $0x570] sm:$0xff]
        %v3007 = vld [vmem:[%s2831 + $0x578] sm:$0xff]
        %v3008 = vld [vmem:[%s2831 + $0x580] sm:$0xff]
        %v3009 = vld [vmem:[%s2831 + $0x588] sm:$0xff]
        %v3010 = vld [vmem:[%s2831 + $0x590] sm:$0xff]
        %v3011 = vld [vmem:[%s2831 + $0x598] sm:$0xff]
        %v3012 = vld [vmem:[%s2831 + $0x5a0] sm:$0xff]
        %v3013 = vld [vmem:[%s2831 + $0x5a8] sm:$0xff]
        %v3014 = vld [vmem:[%s2831 + $0x5b0] sm:$0xff]
        %v3015 = vld [vmem:[%s2831 + $0x5b8] sm:$0xff]
        %v3016 = vld [vmem:[%s2831 + $0x5c0] sm:$0xff]
        %v3017 = vld [vmem:[%s2831 + $0x5c8] sm:$0xff]
        %v3018 = vld [vmem:[%s2831 + $0x5d0] sm:$0xff]
        %v3019 = vld [vmem:[%s2831 + $0x5d8] sm:$0xff]
        %v3020 = vld [vmem:[%s2831 + $0x5e0] sm:$0xff]
        %v3021 = vld [vmem:[%s2831 + $0x5e8] sm:$0xff]
        %v3022 = vld [vmem:[%s2831 + $0x5f0] sm:$0xff]
        %v3023 = vld [vmem:[%s2831 + $0x5f8] sm:$0xff]
        %v3024 = vld [vmem:[%s2831 + $0x600] sm:$0xff]
        %v3025 = vld [vmem:[%s2831 + $0x608] sm:$0xff]
        %v3026 = vld [vmem:[%s2831 + $0x610] sm:$0xff]
        %v3033 = vrot.slane %v2401, 1
        %v3034 = vrot.slane %v2407, 1
        %v3035 = vsel %vm556, %v3033, %v3034
        %v3036 = vrot.slane %v2403, 1
        %v3037 = vrot.slane %v2409, 1
        %v3038 = vsel %vm556, %v3036, %v3037
        %v3039 = vrot.slane %v2628, 1
        %v3040 = vrot.slane %v2633, 1
        %v3041 = vsel %vm556, %v3039, %v3040
        %vm3046 = vcmask 457728
        %v3047 = vsel %vm3046, %v3041, 0
        %v3049 = vsel %vm3046, %v3040, 0
        %3051 = vmatprep.subr.mxu0 %v2833
        %3052 = vmatpush1.msra.mxu0 %v2832
        %3053 = vmatprep.subr.mxu0 %v2838
        %3054 = vmatpush1.msra.mxu0 %v2837
        %3055 = vmatprep.subr.mxu0 %v2843
        %3056 = vmatpush1.msra.mxu0 %v2842
        %3057 = vmatprep.subr.mxu0 %v2848
        %3058 = vmatpush1.msra.mxu0 %v2847
        %3059 = vmatprep.subr.mxu0 %v2853
        %3060 = vmatpush1.msra.mxu0 %v2852
        %3061 = vmatprep.subr.mxu0 %v2858
        %3062 = vmatpush1.msra.mxu0 %v2857
        %3063 = vmatprep.subr.mxu0 %v2863
        %3064 = vmatpush1.msra.mxu0 %v2862
        %3065 = vmatprep.subr.mxu0 %v2868
        %3066 = vmatpush1.msra.mxu0 %v2867
        %3067 = vmatprep.subr.mxu0 %v2873
        %3068 = vmatpush1.msra.mxu0 %v2872
        %3069 = vmatprep.subr.mxu0 %v2878
        %3070 = vmatpush1.msra.mxu0 %v2877
        %3071 = vmatprep.subr.mxu0 %v2883
        %3072 = vmatpush1.msra.mxu0 %v2882
        %3073 = vmatprep.subr.mxu0 %v2888
        %3074 = vmatpush1.msra.mxu0 %v2887
        %3075 = vmatprep.subr.mxu0 %v2893
        %3076 = vmatpush1.msra.mxu0 %v2892
        %3077 = vmatprep.subr.mxu0 %v2898
        %3078 = vmatpush1.msra.mxu0 %v2897
        %3079 = vmatprep.subr.mxu0 %v2903
        %3080 = vmatpush1.msra.mxu0 %v2902
        %3081 = vmatprep.subr.mxu0 %v2908
        %3082 = vmatpush1.msra.mxu0 %v2907
        %3083 = vmatprep.subr.mxu0 %v2913
        %3084 = vmatpush1.msra.mxu0 %v2912
        %3085 = vmatprep.subr.mxu0 %v2918
        %3086 = vmatpush1.msra.mxu0 %v2917
        %3087 = vmatprep.subr.mxu0 %v2923
        %3088 = vmatpush1.msra.mxu0 %v2922
        %3089 = vmatprep.subr.mxu0 %v2928
        %3090 = vmatpush1.msra.mxu0 %v2927
        %3091 = vmatprep.subr.mxu0 %v2933
        %3092 = vmatpush1.msra.mxu0 %v2932
        %3093 = vmatprep.subr.mxu0 %v2938
        %3094 = vmatpush1.msra.mxu0 %v2937
        %3095 = vmatprep.subr.mxu0 %v2943
        %3096 = vmatpush1.msra.mxu0 %v2942
        %3097 = vmatprep.subr.mxu0 %v2948
        %3098 = vmatpush1.msra.mxu0 %v2947
        %3099 = vmatprep.subr.mxu0 %v2953
        %3100 = vmatpush1.msra.mxu0 %v2952
        %3101 = vmatprep.subr.mxu0 %v2958
        %3102 = vmatpush1.msra.mxu0 %v2957
        %3103 = vmatprep.subr.mxu0 %v2963
        %3104 = vmatpush1.msra.mxu0 %v2962
        %3105 = vmatprep.subr.mxu0 %v2968
        %3106 = vmatpush1.msra.mxu0 %v2967
        %3107 = vmatprep.subr.mxu0 %v2973
        %3108 = vmatpush1.msra.mxu0 %v2972
        %3109 = vmatprep.subr.mxu0 %v2978
        %3110 = vmatpush1.msra.mxu0 %v2977
        %3111 = vmatprep.subr.mxu0 %v2983
        %3112 = vmatpush1.msra.mxu0 %v2982
        %3113 = vmatprep.subr.mxu0 %v2988
        %3114 = vmatpush1.msra.mxu0 %v2987
        %3115 = vmatprep.mubr.f32.mxu0 %v3038
        %3116 = vmatmul.mubr.f32.gmra.mrb[0].mxu0 %v3035
        %v3117 = vpop.f32.mrb[0].mxu0
        %v3118 = vadd.f32 0.0, %v3117
        %v3119 = vpop.f32.mrb[0].mxu0
        %v3120 = vadd.f32 0.0, %v3119
        %3121 = vmatprep.mubr.f32.mxu0 %v3037
        %3122 = vmatmul.mubr.f32.gmra.mrb[0].mxu0 %v3034
        %v3123 = vpop.f32.mrb[0].mxu0
        %v3124 = vadd.f32 0.0, %v3123
        %v3125 = vpop.f32.mrb[0].mxu0
        %v3126 = vadd.f32 0.0, %v3125
        %3127 = vdwg.mxu0
        %3128 = vmatprep.subr.mxu0 %v2993
        %3129 = vmatpush1.msra.mxu0 %v2992
        %3130 = vmatprep.subr.mxu0 %v2998
        %3131 = vmatpush1.msra.mxu0 %v2997
        %3132 = vmatprep.subr.mxu0 %v3003
        %3133 = vmatpush1.msra.mxu0 %v3002
        %3134 = vmatprep.subr.mxu0 %v3008
        %3135 = vmatpush1.msra.mxu0 %v3007
        %3136 = vmatprep.subr.mxu0 %v3013
        %3137 = vmatpush1.msra.mxu0 %v3012
        %3138 = vmatprep.subr.mxu0 %v3018
        %3139 = vmatpush1.msra.mxu0 %v3017
        %3140 = vmatprep.subr.mxu0 %v3023
        %3141 = vmatpush1.msra.mxu0 %v3022
        %3142 = vmatprep.subr.mxu0 0.0
        %3143 = vmatpush1.msra.mxu0 0.0
        %3144 = vmatprep.subr.mxu0 0.0
        %3145 = vmatpush1.msra.mxu0 0.0
        %3146 = vmatprep.subr.mxu0 0.0
        %3147 = vmatpush1.msra.mxu0 0.0
        %3148 = vmatprep.subr.mxu0 0.0
        %3149 = vmatpush1.msra.mxu0 0.0
        %3150 = vmatprep.subr.mxu0 0.0
        %3151 = vmatpush1.msra.mxu0 0.0
        %3152 = vmatprep.subr.mxu0 0.0
        %3153 = vmatpush1.msra.mxu0 0.0
        %3154 = vmatprep.subr.mxu0 0.0
        %3155 = vmatpush1.msra.mxu0 0.0
        %3156 = vmatprep.subr.mxu0 0.0
        %3157 = vmatpush1.msra.mxu0 0.0
        %3158 = vmatprep.subr.mxu0 0.0
        %3159 = vmatpush1.msra.mxu0 0.0
        %3160 = vmatprep.subr.mxu0 0.0
        %3161 = vmatpush1.msra.mxu0 0.0
        %3162 = vmatprep.subr.mxu0 0.0
        %3163 = vmatpush1.msra.mxu0 0.0
        %3164 = vmatprep.subr.mxu0 0.0
        %3165 = vmatpush1.msra.mxu0 0.0
        %3166 = vmatprep.subr.mxu0 0.0
        %3167 = vmatpush1.msra.mxu0 0.0
        %3168 = vmatprep.subr.mxu0 0.0
        %3169 = vmatpush1.msra.mxu0 0.0
        %3170 = vmatprep.subr.mxu0 0.0
        %3171 = vmatpush1.msra.mxu0 0.0
        %3172 = vmatprep.subr.mxu0 0.0
        %3173 = vmatpush1.msra.mxu0 0.0
        %3174 = vmatprep.subr.mxu0 0.0
        %3175 = vmatpush1.msra.mxu0 0.0
        %3176 = vmatprep.subr.mxu0 0.0
        %3177 = vmatpush1.msra.mxu0 0.0
        %3178 = vmatprep.subr.mxu0 0.0
        %3179 = vmatpush1.msra.mxu0 0.0
        %3180 = vmatprep.subr.mxu0 0.0
        %3181 = vmatpush1.msra.mxu0 0.0
        %3182 = vmatprep.subr.mxu0 0.0
        %3183 = vmatpush1.msra.mxu0 0.0
        %3184 = vmatprep.subr.mxu0 0.0
        %3185 = vmatpush1.msra.mxu0 0.0
        %3186 = vmatprep.subr.mxu0 0.0
        %3187 = vmatpush1.msra.mxu0 0.0
        %3188 = vmatprep.subr.mxu0 0.0
        %3189 = vmatpush1.msra.mxu0 0.0
        %3190 = vmatprep.subr.mxu0 0.0
        %3191 = vmatpush1.msra.mxu0 0.0
        %3192 = vmatprep.mubr.f32.mxu0 0.0
        %3193 = vmatmul.mubr.f32.gmra.mrb[0].mxu0 %v3047
        %v3194 = vpop.f32.mrb[0].mxu0
        %v3195 = vadd.f32 %v3118, %v3194
        %v3196 = vpop.f32.mrb[0].mxu0
        %v3197 = vadd.f32 %v3120, %v3196
        %3198 = vmatprep.mubr.f32.mxu0 0.0
        %3199 = vmatmul.mubr.f32.gmra.mrb[0].mxu0 %v3049
        %v3200 = vpop.f32.mrb[0].mxu0
        %v3201 = vadd.f32 %v3124, %v3200
        %v3202 = vpop.f32.mrb[0].mxu0
        %v3203 = vadd.f32 %v3126, %v3202
        %3204 = vdwg.mxu0
        %3205 = vmatprep.subr.mxu0 %v2835
        %3206 = vmatpush1.msra.mxu0 %v2834
        %3207 = vmatprep.subr.mxu0 %v2840
        %3208 = vmatpush1.msra.mxu0 %v2839
        %3209 = vmatprep.subr.mxu0 %v2845
        %3210 = vmatpush1.msra.mxu0 %v2844
        %3211 = vmatprep.subr.mxu0 %v2850
        %3212 = vmatpush1.msra.mxu0 %v2849
        %3213 = vmatprep.subr.mxu0 %v2855
        %3214 = vmatpush1.msra.mxu0 %v2854
        %3215 = vmatprep.subr.mxu0 %v2860
        %3216 = vmatpush1.msra.mxu0 %v2859
        %3217 = vmatprep.subr.mxu0 %v2865
        %3218 = vmatpush1.msra.mxu0 %v2864
        %3219 = vmatprep.subr.mxu0 %v2870
        %3220 = vmatpush1.msra.mxu0 %v2869
        %3221 = vmatprep.subr.mxu0 %v2875
        %3222 = vmatpush1.msra.mxu0 %v2874
        %3223 = vmatprep.subr.mxu0 %v2880
        %3224 = vmatpush1.msra.mxu0 %v2879
        %3225 = vmatprep.subr.mxu0 %v2885
        %3226 = vmatpush1.msra.mxu0 %v2884
        %3227 = vmatprep.subr.mxu0 %v2890
        %3228 = vmatpush1.msra.mxu0 %v2889
        %3229 = vmatprep.subr.mxu0 %v2895
        %3230 = vmatpush1.msra.mxu0 %v2894
        %3231 = vmatprep.subr.mxu0 %v2900
        %3232 = vmatpush1.msra.mxu0 %v2899
        %3233 = vmatprep.subr.mxu0 %v2905
        %3234 = vmatpush1.msra.mxu0 %v2904
        %3235 = vmatprep.subr.mxu0 %v2910
        %3236 = vmatpush1.msra.mxu0 %v2909
        %3237 = vmatprep.subr.mxu0 %v2915
        %3238 = vmatpush1.msra.mxu0 %v2914
        %3239 = vmatprep.subr.mxu0 %v2920
        %3240 = vmatpush1.msra.mxu0 %v2919
        %3241 = vmatprep.subr.mxu0 %v2925
        %3242 = vmatpush1.msra.mxu0 %v2924
        %3243 = vmatprep.subr.mxu0 %v2930
        %3244 = vmatpush1.msra.mxu0 %v2929
        %3245 = vmatprep.subr.mxu0 %v2935
        %3246 = vmatpush1.msra.mxu0 %v2934
        %3247 = vmatprep.subr.mxu0 %v2940
        %3248 = vmatpush1.msra.mxu0 %v2939
        %3249 = vmatprep.subr.mxu0 %v2945
        %3250 = vmatpush1.msra.mxu0 %v2944
        %3251 = vmatprep.subr.mxu0 %v2950
        %3252 = vmatpush1.msra.mxu0 %v2949
        %3253 = vmatprep.subr.mxu0 %v2955
        %3254 = vmatpush1.msra.mxu0 %v2954
        %3255 = vmatprep.subr.mxu0 %v2960
        %3256 = vmatpush1.msra.mxu0 %v2959
        %3257 = vmatprep.subr.mxu0 %v2965
        %3258 = vmatpush1.msra.mxu0 %v2964
        %3259 = vmatprep.subr.mxu0 %v2970
        %3260 = vmatpush1.msra.mxu0 %v2969
        %3261 = vmatprep.subr.mxu0 %v2975
        %3262 = vmatpush1.msra.mxu0 %v2974
        %3263 = vmatprep.subr.mxu0 %v2980
        %3264 = vmatpush1.msra.mxu0 %v2979
        %3265 = vmatprep.subr.mxu0 %v2985
        %3266 = vmatpush1.msra.mxu0 %v2984
        %3267 = vmatprep.subr.mxu0 %v2990
        %3268 = vmatpush1.msra.mxu0 %v2989
        %3269 = vmatprep.mubr.f32.mxu0 %v3038
        %3270 = vmatmul.mubr.f32.gmra.mrb[0].mxu0 %v3035
        %v3271 = vpop.f32.mrb[0].mxu0
        %v3272 = vadd.f32 0.0, %v3271
        %v3273 = vpop.f32.mrb[0].mxu0
        %v3274 = vadd.f32 0.0, %v3273
        %3275 = vmatprep.mubr.f32.mxu0 %v3037
        %3276 = vmatmul.mubr.f32.gmra.mrb[0].mxu0 %v3034
        %v3277 = vpop.f32.mrb[0].mxu0
        %v3278 = vadd.f32 0.0, %v3277
        %v3279 = vpop.f32.mrb[0].mxu0
        %v3280 = vadd.f32 0.0, %v3279
        %3281 = vdwg.mxu0
        %3282 = vmatprep.subr.mxu0 %v2995
        %3283 = vmatpush1.msra.mxu0 %v2994
        %3284 = vmatprep.subr.mxu0 %v3000
        %3285 = vmatpush1.msra.mxu0 %v2999
        %3286 = vmatprep.subr.mxu0 %v3005
        %3287 = vmatpush1.msra.mxu0 %v3004
        %3288 = vmatprep.subr.mxu0 %v3010
        %3289 = vmatpush1.msra.mxu0 %v3009
        %3290 = vmatprep.subr.mxu0 %v3015
        %3291 = vmatpush1.msra.mxu0 %v3014
        %3292 = vmatprep.subr.mxu0 %v3020
        %3293 = vmatpush1.msra.mxu0 %v3019
        %3294 = vmatprep.subr.mxu0 %v3025
        %3295 = vmatpush1.msra.mxu0 %v3024
        %3296 = vmatprep.subr.mxu0 0.0
        %3297 = vmatpush1.msra.mxu0 0.0
        %3298 = vmatprep.subr.mxu0 0.0
        %3299 = vmatpush1.msra.mxu0 0.0
        %3300 = vmatprep.subr.mxu0 0.0
        %3301 = vmatpush1.msra.mxu0 0.0
        %3302 = vmatprep.subr.mxu0 0.0
        %3303 = vmatpush1.msra.mxu0 0.0
        %3304 = vmatprep.subr.mxu0 0.0
        %3305 = vmatpush1.msra.mxu0 0.0
        %3306 = vmatprep.subr.mxu0 0.0
        %3307 = vmatpush1.msra.mxu0 0.0
        %3308 = vmatprep.subr.mxu0 0.0
        %3309 = vmatpush1.msra.mxu0 0.0
        %3310 = vmatprep.subr.mxu0 0.0
        %3311 = vmatpush1.msra.mxu0 0.0
        %3312 = vmatprep.subr.mxu0 0.0
        %3313 = vmatpush1.msra.mxu0 0.0
        %3314 = vmatprep.subr.mxu0 0.0
        %3315 = vmatpush1.msra.mxu0 0.0
        %3316 = vmatprep.subr.mxu0 0.0
        %3317 = vmatpush1.msra.mxu0 0.0
        %3318 = vmatprep.subr.mxu0 0.0
        %3319 = vmatpush1.msra.mxu0 0.0
        %3320 = vmatprep.subr.mxu0 0.0
        %3321 = vmatpush1.msra.mxu0 0.0
        %3322 = vmatprep.subr.mxu0 0.0
        %3323 = vmatpush1.msra.mxu0 0.0
        %3324 = vmatprep.subr.mxu0 0.0
        %3325 = vmatpush1.msra.mxu0 0.0
        %3326 = vmatprep.subr.mxu0 0.0
        %3327 = vmatpush1.msra.mxu0 0.0
        %3328 = vmatprep.subr.mxu0 0.0
        %3329 = vmatpush1.msra.mxu0 0.0
        %3330 = vmatprep.subr.mxu0 0.0
        %3331 = vmatpush1.msra.mxu0 0.0
        %3332 = vmatprep.subr.mxu0 0.0
        %3333 = vmatpush1.msra.mxu0 0.0
        %3334 = vmatprep.subr.mxu0 0.0
        %3335 = vmatpush1.msra.mxu0 0.0
        %3336 = vmatprep.subr.mxu0 0.0
        %3337 = vmatpush1.msra.mxu0 0.0
        %3338 = vmatprep.subr.mxu0 0.0
        %3339 = vmatpush1.msra.mxu0 0.0
        %3340 = vmatprep.subr.mxu0 0.0
        %3341 = vmatpush1.msra.mxu0 0.0
        %3342 = vmatprep.subr.mxu0 0.0
        %3343 = vmatpush1.msra.mxu0 0.0
        %3344 = vmatprep.subr.mxu0 0.0
        %3345 = vmatpush1.msra.mxu0 0.0
        %3346 = vmatprep.mubr.f32.mxu0 0.0
        %3347 = vmatmul.mubr.f32.gmra.mrb[0].mxu0 %v3047
        %v3348 = vpop.f32.mrb[0].mxu0
        %v3349 = vadd.f32 %v3272, %v3348
        %v3350 = vpop.f32.mrb[0].mxu0
        %v3351 = vadd.f32 %v3274, %v3350
        %3352 = vmatprep.mubr.f32.mxu0 0.0
        %3353 = vmatmul.mubr.f32.gmra.mrb[0].mxu0 %v3049
        %v3354 = vpop.f32.mrb[0].mxu0
        %v3355 = vadd.f32 %v3278, %v3354
        %v3356 = vpop.f32.mrb[0].mxu0
        %v3357 = vadd.f32 %v3280, %v3356
        %3358 = vdwg.mxu0
        %3359 = vmatprep.subr.mxu0 0.0
        %3360 = vmatpush1.msra.mxu0 %v2836
        %3361 = vmatprep.subr.mxu0 0.0
        %3362 = vmatpush1.msra.mxu0 %v2841
        %3363 = vmatprep.subr.mxu0 0.0
        %3364 = vmatpush1.msra.mxu0 %v2846
        %3365 = vmatprep.subr.mxu0 0.0
        %3366 = vmatpush1.msra.mxu0 %v2851
        %3367 = vmatprep.subr.mxu0 0.0
        %3368 = vmatpush1.msra.mxu0 %v2856
        %3369 = vmatprep.subr.mxu0 0.0
        %3370 = vmatpush1.msra.mxu0 %v2861
        %3371 = vmatprep.subr.mxu0 0.0
        %3372 = vmatpush1.msra.mxu0 %v2866
        %3373 = vmatprep.subr.mxu0 0.0
        %3374 = vmatpush1.msra.mxu0 %v2871
        %3375 = vmatprep.subr.mxu0 0.0
        %3376 = vmatpush1.msra.mxu0 %v2876
        %3377 = vmatprep.subr.mxu0 0.0
        %3378 = vmatpush1.msra.mxu0 %v2881
        %3379 = vmatprep.subr.mxu0 0.0
        %3380 = vmatpush1.msra.mxu0 %v2886
        %3381 = vmatprep.subr.mxu0 0.0
        %3382 = vmatpush1.msra.mxu0 %v2891
        %3383 = vmatprep.subr.mxu0 0.0
        %3384 = vmatpush1.msra.mxu0 %v2896
        %3385 = vmatprep.subr.mxu0 0.0
        %3386 = vmatpush1.msra.mxu0 %v2901
        %3387 = vmatprep.subr.mxu0 0.0
        %3388 = vmatpush1.msra.mxu0 %v2906
        %3389 = vmatprep.subr.mxu0 0.0
        %3390 = vmatpush1.msra.mxu0 %v2911
        %3391 = vmatprep.subr.mxu0 0.0
        %3392 = vmatpush1.msra.mxu0 %v2916
        %3393 = vmatprep.subr.mxu0 0.0
        %3394 = vmatpush1.msra.mxu0 %v2921
        %3395 = vmatprep.subr.mxu0 0.0
        %3396 = vmatpush1.msra.mxu0 %v2926
        %3397 = vmatprep.subr.mxu0 0.0
        %3398 = vmatpush1.msra.mxu0 %v2931
        %3399 = vmatprep.subr.mxu0 0.0
        %3400 = vmatpush1.msra.mxu0 %v2936
        %3401 = vmatprep.subr.mxu0 0.0
        %3402 = vmatpush1.msra.mxu0 %v2941
        %3403 = vmatprep.subr.mxu0 0.0
        %3404 = vmatpush1.msra.mxu0 %v2946
        %3405 = vmatprep.subr.mxu0 0.0
        %3406 = vmatpush1.msra.mxu0 %v2951
        %3407 = vmatprep.subr.mxu0 0.0
        %3408 = vmatpush1.msra.mxu0 %v2956
        %3409 = vmatprep.subr.mxu0 0.0
        %3410 = vmatpush1.msra.mxu0 %v2961
        %3411 = vmatprep.subr.mxu0 0.0
        %3412 = vmatpush1.msra.mxu0 %v2966
        %3413 = vmatprep.subr.mxu0 0.0
        %3414 = vmatpush1.msra.mxu0 %v2971
        %3415 = vmatprep.subr.mxu0 0.0
        %3416 = vmatpush1.msra.mxu0 %v2976
        %3417 = vmatprep.subr.mxu0 0.0
        %3418 = vmatpush1.msra.mxu0 %v2981
        %3419 = vmatprep.subr.mxu0 0.0
        %3420 = vmatpush1.msra.mxu0 %v2986
        %3421 = vmatprep.subr.mxu0 0.0
        %3422 = vmatpush1.msra.mxu0 %v2991
        %3423 = vmatprep.mubr.f32.mxu0 %v3038
        %3424 = vmatmul.mubr.f32.gmra.mrb[0].mxu0 %v3035
        %v3425 = vpop.f32.mrb[0].mxu0
        %v3426 = vadd.f32 0.0, %v3425
        %v3427 = vpop.f32.mrb[0].mxu0
        %3428 = vmatprep.mubr.f32.mxu0 %v3037
        %3429 = vmatmul.mubr.f32.gmra.mrb[0].mxu0 %v3034
        %v3430 = vpop.f32.mrb[0].mxu0
        %v3431 = vadd.f32 0.0, %v3430
        %v3432 = vpop.f32.mrb[0].mxu0
        %3433 = vdwg.mxu0
        %3434 = vmatprep.subr.mxu0 0.0
        %3435 = vmatpush1.msra.mxu0 %v2996
        %3436 = vmatprep.subr.mxu0 0.0
        %3437 = vmatpush1.msra.mxu0 %v3001
        %3438 = vmatprep.subr.mxu0 0.0
        %3439 = vmatpush1.msra.mxu0 %v3006
        %3440 = vmatprep.subr.mxu0 0.0
        %3441 = vmatpush1.msra.mxu0 %v3011
        %3442 = vmatprep.subr.mxu0 0.0
        %3443 = vmatpush1.msra.mxu0 %v3016
        %3444 = vmatprep.subr.mxu0 0.0
        %3445 = vmatpush1.msra.mxu0 %v3021
        %3446 = vmatprep.subr.mxu0 0.0
        %3447 = vmatpush1.msra.mxu0 %v3026
        %3448 = vmatprep.subr.mxu0 0.0
        %3449 = vmatpush1.msra.mxu0 0.0
        %3450 = vmatprep.subr.mxu0 0.0
        %3451 = vmatpush1.msra.mxu0 0.0
        %3452 = vmatprep.subr.mxu0 0.0
        %3453 = vmatpush1.msra.mxu0 0.0
        %3454 = vmatprep.subr.mxu0 0.0
        %3455 = vmatpush1.msra.mxu0 0.0
        %3456 = vmatprep.subr.mxu0 0.0
        %3457 = vmatpush1.msra.mxu0 0.0
        %3458 = vmatprep.subr.mxu0 0.0
        %3459 = vmatpush1.msra.mxu0 0.0
        %3460 = vmatprep.subr.mxu0 0.0
        %3461 = vmatpush1.msra.mxu0 0.0
        %3462 = vmatprep.subr.mxu0 0.0
        %3463 = vmatpush1.msra.mxu0 0.0
        %3464 = vmatprep.subr.mxu0 0.0
        %3465 = vmatpush1.msra.mxu0 0.0
        %3466 = vmatprep.subr.mxu0 0.0
        %3467 = vmatpush1.msra.mxu0 0.0
        %3468 = vmatprep.subr.mxu0 0.0
        %3469 = vmatpush1.msra.mxu0 0.0
        %3470 = vmatprep.subr.mxu0 0.0
        %3471 = vmatpush1.msra.mxu0 0.0
        %3472 = vmatprep.subr.mxu0 0.0
        %3473 = vmatpush1.msra.mxu0 0.0
        %3474 = vmatprep.subr.mxu0 0.0
        %3475 = vmatpush1.msra.mxu0 0.0
        %3476 = vmatprep.subr.mxu0 0.0
        %3477 = vmatpush1.msra.mxu0 0.0
        %3478 = vmatprep.subr.mxu0 0.0
        %3479 = vmatpush1.msra.mxu0 0.0
        %3480 = vmatprep.subr.mxu0 0.0
        %3481 = vmatpush1.msra.mxu0 0.0
        %3482 = vmatprep.subr.mxu0 0.0
        %3483 = vmatpush1.msra.mxu0 0.0
        %3484 = vmatprep.subr.mxu0 0.0
        %3485 = vmatpush1.msra.mxu0 0.0
        %3486 = vmatprep.subr.mxu0 0.0
        %3487 = vmatpush1.msra.mxu0 0.0
        %3488 = vmatprep.subr.mxu0 0.0
        %3489 = vmatpush1.msra.mxu0 0.0
        %3490 = vmatprep.subr.mxu0 0.0
        %3491 = vmatpush1.msra.mxu0 0.0
        %3492 = vmatprep.subr.mxu0 0.0
        %3493 = vmatpush1.msra.mxu0 0.0
        %3494 = vmatprep.subr.mxu0 0.0
        %3495 = vmatpush1.msra.mxu0 0.0
        %3496 = vmatprep.subr.mxu0 0.0
        %3497 = vmatpush1.msra.mxu0 0.0
        %3498 = vmatprep.mubr.f32.mxu0 0.0
        %3499 = vmatmul.mubr.f32.gmra.mrb[0].mxu0 %v3047
        %v3500 = vpop.f32.mrb[0].mxu0
        %v3501 = vadd.f32 %v3426, %v3500
        %v3502 = vpop.f32.mrb[0].mxu0
        %3503 = vmatprep.mubr.f32.mxu0 0.0
        %3504 = vmatmul.mubr.f32.gmra.mrb[0].mxu0 %v3049
        %v3505 = vpop.f32.mrb[0].mxu0
        %v3506 = vadd.f32 %v3431, %v3505
        %v3507 = vpop.f32.mrb[0].mxu0
        %3508 = vdwg.mxu0
        %v3509 = vsel %vm3046, %v2628, 0
        %v3511 = vsel %vm3046, %v2633, 0
        %3513 = vmatprep.subr.mxu0 %v2637
        %3514 = vmatpush1.msra.mxu0 %v2636
        %3515 = vmatprep.subr.mxu0 %v2642
        %3516 = vmatpush1.msra.mxu0 %v2641
        %3517 = vmatprep.subr.mxu0 %v2647
        %3518 = vmatpush1.msra.mxu0 %v2646
        %3519 = vmatprep.subr.mxu0 %v2652
        %3520 = vmatpush1.msra.mxu0 %v2651
        %3521 = vmatprep.subr.mxu0 %v2657
        %3522 = vmatpush1.msra.mxu0 %v2656
        %3523 = vmatprep.subr.mxu0 %v2662
        %3524 = vmatpush1.msra.mxu0 %v2661
        %3525 = vmatprep.subr.mxu0 %v2667
        %3526 = vmatpush1.msra.mxu0 %v2666
        %3527 = vmatprep.subr.mxu0 %v2672
        %3528 = vmatpush1.msra.mxu0 %v2671
        %3529 = vmatprep.subr.mxu0 %v2677
        %3530 = vmatpush1.msra.mxu0 %v2676
        %3531 = vmatprep.subr.mxu0 %v2682
        %3532 = vmatpush1.msra.mxu0 %v2681
        %3533 = vmatprep.subr.mxu0 %v2687
        %3534 = vmatpush1.msra.mxu0 %v2686
        %3535 = vmatprep.subr.mxu0 %v2692
        %3536 = vmatpush1.msra.mxu0 %v2691
        %3537 = vmatprep.subr.mxu0 %v2697
        %3538 = vmatpush1.msra.mxu0 %v2696
        %3539 = vmatprep.subr.mxu0 %v2702
        %3540 = vmatpush1.msra.mxu0 %v2701
        %3541 = vmatprep.subr.mxu0 %v2707
        %3542 = vmatpush1.msra.mxu0 %v2706
        %3543 = vmatprep.subr.mxu0 %v2712
        %3544 = vmatpush1.msra.mxu0 %v2711
        %3545 = vmatprep.subr.mxu0 %v2717
        %3546 = vmatpush1.msra.mxu0 %v2716
        %3547 = vmatprep.subr.mxu0 %v2722
        %3548 = vmatpush1.msra.mxu0 %v2721
        %3549 = vmatprep.subr.mxu0 %v2727
        %3550 = vmatpush1.msra.mxu0 %v2726
        %3551 = vmatprep.subr.mxu0 %v2732
        %3552 = vmatpush1.msra.mxu0 %v2731
        %3553 = vmatprep.subr.mxu0 %v2737
        %3554 = vmatpush1.msra.mxu0 %v2736
        %3555 = vmatprep.subr.mxu0 %v2742
        %3556 = vmatpush1.msra.mxu0 %v2741
        %3557 = vmatprep.subr.mxu0 %v2747
        %3558 = vmatpush1.msra.mxu0 %v2746
        %3559 = vmatprep.subr.mxu0 %v2752
        %3560 = vmatpush1.msra.mxu0 %v2751
        %3561 = vmatprep.subr.mxu0 %v2757
        %3562 = vmatpush1.msra.mxu0 %v2756
        %3563 = vmatprep.subr.mxu0 %v2762
        %3564 = vmatpush1.msra.mxu0 %v2761
        %3565 = vmatprep.subr.mxu0 %v2767
        %3566 = vmatpush1.msra.mxu0 %v2766
        %3567 = vmatprep.subr.mxu0 %v2772
        %3568 = vmatpush1.msra.mxu0 %v2771
        %3569 = vmatprep.subr.mxu0 %v2777
        %3570 = vmatpush1.msra.mxu0 %v2776
        %3571 = vmatprep.subr.mxu0 %v2782
        %3572 = vmatpush1.msra.mxu0 %v2781
        %3573 = vmatprep.subr.mxu0 %v2787
        %3574 = vmatpush1.msra.mxu0 %v2786
        %3575 = vmatprep.subr.mxu0 %v2792
        %3576 = vmatpush1.msra.mxu0 %v2791
        %3577 = vmatprep.mubr.f32.mxu0 %v2403
        %3578 = vmatmul.mubr.f32.gmra.mrb[0].mxu0 %v2401
        %v3579 = vpop.f32.mrb[0].mxu0
        %v3580 = vadd.f32 %v3195, %v3579
        %v3581 = vpop.f32.mrb[0].mxu0
        %v3582 = vadd.f32 %v3197, %v3581
        %3583 = vmatprep.mubr.f32.mxu0 %v2409
        %3584 = vmatmul.mubr.f32.gmra.mrb[0].mxu0 %v2407
        %v3585 = vpop.f32.mrb[0].mxu0
        %v3586 = vadd.f32 %v3201, %v3585
        %v3587 = vpop.f32.mrb[0].mxu0
        %v3588 = vadd.f32 %v3203, %v3587
        %3589 = vdwg.mxu0
        %3590 = vmatprep.subr.mxu0 %v2797
        %3591 = vmatpush1.msra.mxu0 %v2796
        %3592 = vmatprep.subr.mxu0 %v2802
        %3593 = vmatpush1.msra.mxu0 %v2801
        %3594 = vmatprep.subr.mxu0 %v2807
        %3595 = vmatpush1.msra.mxu0 %v2806
        %3596 = vmatprep.subr.mxu0 %v2812
        %3597 = vmatpush1.msra.mxu0 %v2811
        %3598 = vmatprep.subr.mxu0 %v2817
        %3599 = vmatpush1.msra.mxu0 %v2816
        %3600 = vmatprep.subr.mxu0 %v2822
        %3601 = vmatpush1.msra.mxu0 %v2821
        %3602 = vmatprep.subr.mxu0 %v2827
        %3603 = vmatpush1.msra.mxu0 %v2826
        %3604 = vmatprep.subr.mxu0 0.0
        %3605 = vmatpush1.msra.mxu0 0.0
        %3606 = vmatprep.subr.mxu0 0.0
        %3607 = vmatpush1.msra.mxu0 0.0
        %3608 = vmatprep.subr.mxu0 0.0
        %3609 = vmatpush1.msra.mxu0 0.0
        %3610 = vmatprep.subr.mxu0 0.0
        %3611 = vmatpush1.msra.mxu0 0.0
        %3612 = vmatprep.subr.mxu0 0.0
        %3613 = vmatpush1.msra.mxu0 0.0
        %3614 = vmatprep.subr.mxu0 0.0
        %3615 = vmatpush1.msra.mxu0 0.0
        %3616 = vmatprep.subr.mxu0 0.0
        %3617 = vmatpush1.msra.mxu0 0.0
        %3618 = vmatprep.subr.mxu0 0.0
        %3619 = vmatpush1.msra.mxu0 0.0
        %3620 = vmatprep.subr.mxu0 0.0
        %3621 = vmatpush1.msra.mxu0 0.0
        %3622 = vmatprep.subr.mxu0 0.0
        %3623 = vmatpush1.msra.mxu0 0.0
        %3624 = vmatprep.subr.mxu0 0.0
        %3625 = vmatpush1.msra.mxu0 0.0
        %3626 = vmatprep.subr.mxu0 0.0
        %3627 = vmatpush1.msra.mxu0 0.0
        %3628 = vmatprep.subr.mxu0 0.0
        %3629 = vmatpush1.msra.mxu0 0.0
        %3630 = vmatprep.subr.mxu0 0.0
        %3631 = vmatpush1.msra.mxu0 0.0
        %3632 = vmatprep.subr.mxu0 0.0
        %3633 = vmatpush1.msra.mxu0 0.0
        %3634 = vmatprep.subr.mxu0 0.0
        %3635 = vmatpush1.msra.mxu0 0.0
        %3636 = vmatprep.subr.mxu0 0.0
        %3637 = vmatpush1.msra.mxu0 0.0
        %3638 = vmatprep.subr.mxu0 0.0
        %3639 = vmatpush1.msra.mxu0 0.0
        %3640 = vmatprep.subr.mxu0 0.0
        %3641 = vmatpush1.msra.mxu0 0.0
        %3642 = vmatprep.subr.mxu0 0.0
        %3643 = vmatpush1.msra.mxu0 0.0
        %3644 = vmatprep.subr.mxu0 0.0
        %3645 = vmatpush1.msra.mxu0 0.0
        %3646 = vmatprep.subr.mxu0 0.0
        %3647 = vmatpush1.msra.mxu0 0.0
        %3648 = vmatprep.subr.mxu0 0.0
        %3649 = vmatpush1.msra.mxu0 0.0
        %3650 = vmatprep.subr.mxu0 0.0
        %3651 = vmatpush1.msra.mxu0 0.0
        %3652 = vmatprep.subr.mxu0 0.0
        %3653 = vmatpush1.msra.mxu0 0.0
        %3654 = vmatprep.mubr.f32.mxu0 0.0
        %3655 = vmatmul.mubr.f32.gmra.mrb[0].mxu0 %v3509
        %v3656 = vpop.f32.mrb[0].mxu0
        %v3657 = vadd.f32 %v3580, %v3656
        %v3658 = vpop.f32.mrb[0].mxu0
        %v3659 = vadd.f32 %v3582, %v3658
        %3660 = vmatprep.mubr.f32.mxu0 0.0
        %3661 = vmatmul.mubr.f32.gmra.mrb[0].mxu0 %v3511
        %v3662 = vpop.f32.mrb[0].mxu0
        %v3663 = vadd.f32 %v3586, %v3662
        %v3664 = vpop.f32.mrb[0].mxu0
        %v3665 = vadd.f32 %v3588, %v3664
        %3666 = vdwg.mxu0
        %3667 = vmatprep.subr.mxu0 %v2639
        %3668 = vmatpush1.msra.mxu0 %v2638
        %3669 = vmatprep.subr.mxu0 %v2644
        %3670 = vmatpush1.msra.mxu0 %v2643
        %3671 = vmatprep.subr.mxu0 %v2649
        %3672 = vmatpush1.msra.mxu0 %v2648
        %3673 = vmatprep.subr.mxu0 %v2654
        %3674 = vmatpush1.msra.mxu0 %v2653
        %3675 = vmatprep.subr.mxu0 %v2659
        %3676 = vmatpush1.msra.mxu0 %v2658
        %3677 = vmatprep.subr.mxu0 %v2664
        %3678 = vmatpush1.msra.mxu0 %v2663
        %3679 = vmatprep.subr.mxu0 %v2669
        %3680 = vmatpush1.msra.mxu0 %v2668
        %3681 = vmatprep.subr.mxu0 %v2674
        %3682 = vmatpush1.msra.mxu0 %v2673
        %3683 = vmatprep.subr.mxu0 %v2679
        %3684 = vmatpush1.msra.mxu0 %v2678
        %3685 = vmatprep.subr.mxu0 %v2684
        %3686 = vmatpush1.msra.mxu0 %v2683
        %3687 = vmatprep.subr.mxu0 %v2689
        %3688 = vmatpush1.msra.mxu0 %v2688
        %3689 = vmatprep.subr.mxu0 %v2694
        %3690 = vmatpush1.msra.mxu0 %v2693
        %3691 = vmatprep.subr.mxu0 %v2699
        %3692 = vmatpush1.msra.mxu0 %v2698
        %3693 = vmatprep.subr.mxu0 %v2704
        %3694 = vmatpush1.msra.mxu0 %v2703
        %3695 = vmatprep.subr.mxu0 %v2709
        %3696 = vmatpush1.msra.mxu0 %v2708
        %3697 = vmatprep.subr.mxu0 %v2714
        %3698 = vmatpush1.msra.mxu0 %v2713
        %3699 = vmatprep.subr.mxu0 %v2719
        %3700 = vmatpush1.msra.mxu0 %v2718
        %3701 = vmatprep.subr.mxu0 %v2724
        %3702 = vmatpush1.msra.mxu0 %v2723
        %3703 = vmatprep.subr.mxu0 %v2729
        %3704 = vmatpush1.msra.mxu0 %v2728
        %3705 = vmatprep.subr.mxu0 %v2734
        %3706 = vmatpush1.msra.mxu0 %v2733
        %3707 = vmatprep.subr.mxu0 %v2739
        %3708 = vmatpush1.msra.mxu0 %v2738
        %3709 = vmatprep.subr.mxu0 %v2744
        %3710 = vmatpush1.msra.mxu0 %v2743
        %3711 = vmatprep.subr.mxu0 %v2749
        %3712 = vmatpush1.msra.mxu0 %v2748
        %3713 = vmatprep.subr.mxu0 %v2754
        %3714 = vmatpush1.msra.mxu0 %v2753
        %3715 = vmatprep.subr.mxu0 %v2759
        %3716 = vmatpush1.msra.mxu0 %v2758
        %3717 = vmatprep.subr.mxu0 %v2764
        %3718 = vmatpush1.msra.mxu0 %v2763
        %3719 = vmatprep.subr.mxu0 %v2769
        %3720 = vmatpush1.msra.mxu0 %v2768
        %3721 = vmatprep.subr.mxu0 %v2774
        %3722 = vmatpush1.msra.mxu0 %v2773
        %3723 = vmatprep.subr.mxu0 %v2779
        %3724 = vmatpush1.msra.mxu0 %v2778
        %3725 = vmatprep.subr.mxu0 %v2784
        %3726 = vmatpush1.msra.mxu0 %v2783
        %3727 = vmatprep.subr.mxu0 %v2789
        %3728 = vmatpush1.msra.mxu0 %v2788
        %3729 = vmatprep.subr.mxu0 %v2794
        %3730 = vmatpush1.msra.mxu0 %v2793
        %3731 = vmatprep.mubr.f32.mxu0 %v2403
        %3732 = vmatmul.mubr.f32.gmra.mrb[0].mxu0 %v2401
        %v3733 = vpop.f32.mrb[0].mxu0
        %v3734 = vadd.f32 %v3349, %v3733
        %v3735 = vpop.f32.mrb[0].mxu0
        %v3736 = vadd.f32 %v3351, %v3735
        %3737 = vmatprep.mubr.f32.mxu0 %v2409
        %3738 = vmatmul.mubr.f32.gmra.mrb[0].mxu0 %v2407
        %v3739 = vpop.f32.mrb[0].mxu0
        %v3740 = vadd.f32 %v3355, %v3739
        %v3741 = vpop.f32.mrb[0].mxu0
        %v3742 = vadd.f32 %v3357, %v3741
        %3743 = vdwg.mxu0
        %3744 = vmatprep.subr.mxu0 %v2799
        %3745 = vmatpush1.msra.mxu0 %v2798
        %3746 = vmatprep.subr.mxu0 %v2804
        %3747 = vmatpush1.msra.mxu0 %v2803
        %3748 = vmatprep.subr.mxu0 %v2809
        %3749 = vmatpush1.msra.mxu0 %v2808
        %3750 = vmatprep.subr.mxu0 %v2814
        %3751 = vmatpush1.msra.mxu0 %v2813
        %3752 = vmatprep.subr.mxu0 %v2819
        %3753 = vmatpush1.msra.mxu0 %v2818
        %3754 = vmatprep.subr.mxu0 %v2824
        %3755 = vmatpush1.msra.mxu0 %v2823
        %3756 = vmatprep.subr.mxu0 %v2829
        %3757 = vmatpush1.msra.mxu0 %v2828
        %3758 = vmatprep.subr.mxu0 0.0
        %3759 = vmatpush1.msra.mxu0 0.0
        %3760 = vmatprep.subr.mxu0 0.0
        %3761 = vmatpush1.msra.mxu0 0.0
        %3762 = vmatprep.subr.mxu0 0.0
        %3763 = vmatpush1.msra.mxu0 0.0
        %3764 = vmatprep.subr.mxu0 0.0
        %3765 = vmatpush1.msra.mxu0 0.0
        %3766 = vmatprep.subr.mxu0 0.0
        %3767 = vmatpush1.msra.mxu0 0.0
        %3768 = vmatprep.subr.mxu0 0.0
        %3769 = vmatpush1.msra.mxu0 0.0
        %3770 = vmatprep.subr.mxu0 0.0
        %3771 = vmatpush1.msra.mxu0 0.0
        %3772 = vmatprep.subr.mxu0 0.0
        %3773 = vmatpush1.msra.mxu0 0.0
        %3774 = vmatprep.subr.mxu0 0.0
        %3775 = vmatpush1.msra.mxu0 0.0
        %3776 = vmatprep.subr.mxu0 0.0
        %3777 = vmatpush1.msra.mxu0 0.0
        %3778 = vmatprep.subr.mxu0 0.0
        %3779 = vmatpush1.msra.mxu0 0.0
        %3780 = vmatprep.subr.mxu0 0.0
        %3781 = vmatpush1.msra.mxu0 0.0
        %3782 = vmatprep.subr.mxu0 0.0
        %3783 = vmatpush1.msra.mxu0 0.0
        %3784 = vmatprep.subr.mxu0 0.0
        %3785 = vmatpush1.msra.mxu0 0.0
        %3786 = vmatprep.subr.mxu0 0.0
        %3787 = vmatpush1.msra.mxu0 0.0
        %3788 = vmatprep.subr.mxu0 0.0
        %3789 = vmatpush1.msra.mxu0 0.0
        %3790 = vmatprep.subr.mxu0 0.0
        %3791 = vmatpush1.msra.mxu0 0.0
        %3792 = vmatprep.subr.mxu0 0.0
        %3793 = vmatpush1.msra.mxu0 0.0
        %3794 = vmatprep.subr.mxu0 0.0
        %3795 = vmatpush1.msra.mxu0 0.0
        %3796 = vmatprep.subr.mxu0 0.0
        %3797 = vmatpush1.msra.mxu0 0.0
        %3798 = vmatprep.subr.mxu0 0.0
        %3799 = vmatpush1.msra.mxu0 0.0
        %3800 = vmatprep.subr.mxu0 0.0
        %3801 = vmatpush1.msra.mxu0 0.0
        %3802 = vmatprep.subr.mxu0 0.0
        %3803 = vmatpush1.msra.mxu0 0.0
        %3804 = vmatprep.subr.mxu0 0.0
        %3805 = vmatpush1.msra.mxu0 0.0
        %3806 = vmatprep.subr.mxu0 0.0
        %3807 = vmatpush1.msra.mxu0 0.0
        %3808 = vmatprep.mubr.f32.mxu0 0.0
        %3809 = vmatmul.mubr.f32.gmra.mrb[0].mxu0 %v3509
        %v3810 = vpop.f32.mrb[0].mxu0
        %v3811 = vadd.f32 %v3734, %v3810
        %v3812 = vpop.f32.mrb[0].mxu0
        %v3813 = vadd.f32 %v3736, %v3812
        %3814 = vmatprep.mubr.f32.mxu0 0.0
        %3815 = vmatmul.mubr.f32.gmra.mrb[0].mxu0 %v3511
        %v3816 = vpop.f32.mrb[0].mxu0
        %v3817 = vadd.f32 %v3740, %v3816
        %v3818 = vpop.f32.mrb[0].mxu0
        %v3819 = vadd.f32 %v3742, %v3818
        %3820 = vdwg.mxu0
        %3821 = vmatprep.subr.mxu0 0.0
        %3822 = vmatpush1.msra.mxu0 %v2640
        %3823 = vmatprep.subr.mxu0 0.0
        %3824 = vmatpush1.msra.mxu0 %v2645
        %3825 = vmatprep.subr.mxu0 0.0
        %3826 = vmatpush1.msra.mxu0 %v2650
        %3827 = vmatprep.subr.mxu0 0.0
        %3828 = vmatpush1.msra.mxu0 %v2655
        %3829 = vmatprep.subr.mxu0 0.0
        %3830 = vmatpush1.msra.mxu0 %v2660
        %3831 = vmatprep.subr.mxu0 0.0
        %3832 = vmatpush1.msra.mxu0 %v2665
        %3833 = vmatprep.subr.mxu0 0.0
        %3834 = vmatpush1.msra.mxu0 %v2670
        %3835 = vmatprep.subr.mxu0 0.0
        %3836 = vmatpush1.msra.mxu0 %v2675
        %3837 = vmatprep.subr.mxu0 0.0
        %3838 = vmatpush1.msra.mxu0 %v2680
        %3839 = vmatprep.subr.mxu0 0.0
        %3840 = vmatpush1.msra.mxu0 %v2685
        %3841 = vmatprep.subr.mxu0 0.0
        %3842 = vmatpush1.msra.mxu0 %v2690
        %3843 = vmatprep.subr.mxu0 0.0
        %3844 = vmatpush1.msra.mxu0 %v2695
        %3845 = vmatprep.subr.mxu0 0.0
        %3846 = vmatpush1.msra.mxu0 %v2700
        %3847 = vmatprep.subr.mxu0 0.0
        %3848 = vmatpush1.msra.mxu0 %v2705
        %3849 = vmatprep.subr.mxu0 0.0
        %3850 = vmatpush1.msra.mxu0 %v2710
        %3851 = vmatprep.subr.mxu0 0.0
        %3852 = vmatpush1.msra.mxu0 %v2715
        %3853 = vmatprep.subr.mxu0 0.0
        %3854 = vmatpush1.msra.mxu0 %v2720
        %3855 = vmatprep.subr.mxu0 0.0
        %3856 = vmatpush1.msra.mxu0 %v2725
        %3857 = vmatprep.subr.mxu0 0.0
        %3858 = vmatpush1.msra.mxu0 %v2730
        %3859 = vmatprep.subr.mxu0 0.0
        %3860 = vmatpush1.msra.mxu0 %v2735
        %3861 = vmatprep.subr.mxu0 0.0
        %3862 = vmatpush1.msra.mxu0 %v2740
        %3863 = vmatprep.subr.mxu0 0.0
        %3864 = vmatpush1.msra.mxu0 %v2745
        %3865 = vmatprep.subr.mxu0 0.0
        %3866 = vmatpush1.msra.mxu0 %v2750
        %3867 = vmatprep.subr.mxu0 0.0
        %3868 = vmatpush1.msra.mxu0 %v2755
        %3869 = vmatprep.subr.mxu0 0.0
        %3870 = vmatpush1.msra.mxu0 %v2760
        %3871 = vmatprep.subr.mxu0 0.0
        %3872 = vmatpush1.msra.mxu0 %v2765
        %3873 = vmatprep.subr.mxu0 0.0
        %3874 = vmatpush1.msra.mxu0 %v2770
        %3875 = vmatprep.subr.mxu0 0.0
        %3876 = vmatpush1.msra.mxu0 %v2775
        %3877 = vmatprep.subr.mxu0 0.0
        %3878 = vmatpush1.msra.mxu0 %v2780
        %3879 = vmatprep.subr.mxu0 0.0
        %3880 = vmatpush1.msra.mxu0 %v2785
        %3881 = vmatprep.subr.mxu0 0.0
        %3882 = vmatpush1.msra.mxu0 %v2790
        %3883 = vmatprep.subr.mxu0 0.0
        %3884 = vmatpush1.msra.mxu0 %v2795
        %3885 = vmatprep.mubr.f32.mxu0 %v2403
        %3886 = vmatmul.mubr.f32.gmra.mrb[0].mxu0 %v2401
        %v3887 = vpop.f32.mrb[0].mxu0
        %v3888 = vadd.f32 %v3501, %v3887
        %v3889 = vpop.f32.mrb[0].mxu0
        %3890 = vmatprep.mubr.f32.mxu0 %v2409
        %3891 = vmatmul.mubr.f32.gmra.mrb[0].mxu0 %v2407
        %v3892 = vpop.f32.mrb[0].mxu0
        %v3893 = vadd.f32 %v3506, %v3892
        %v3894 = vpop.f32.mrb[0].mxu0
        %3895 = vdwg.mxu0
        %3896 = vmatprep.subr.mxu0 0.0
        %3897 = vmatpush1.msra.mxu0 %v2800
        %3898 = vmatprep.subr.mxu0 0.0
        %3899 = vmatpush1.msra.mxu0 %v2805
        %3900 = vmatprep.subr.mxu0 0.0
        %3901 = vmatpush1.msra.mxu0 %v2810
        %3902 = vmatprep.subr.mxu0 0.0
        %3903 = vmatpush1.msra.mxu0 %v2815
        %3904 = vmatprep.subr.mxu0 0.0
        %3905 = vmatpush1.msra.mxu0 %v2820
        %3906 = vmatprep.subr.mxu0 0.0
        %3907 = vmatpush1.msra.mxu0 %v2825
        %3908 = vmatprep.subr.mxu0 0.0
        %3909 = vmatpush1.msra.mxu0 %v2830
        %3910 = vmatprep.subr.mxu0 0.0
        %3911 = vmatpush1.msra.mxu0 0.0
        %3912 = vmatprep.subr.mxu0 0.0
        %3913 = vmatpush1.msra.mxu0 0.0
        %3914 = vmatprep.subr.mxu0 0.0
        %3915 = vmatpush1.msra.mxu0 0.0
        %3916 = vmatprep.subr.mxu0 0.0
        %3917 = vmatpush1.msra.mxu0 0.0
        %3918 = vmatprep.subr.mxu0 0.0
        %3919 = vmatpush1.msra.mxu0 0.0
        %3920 = vmatprep.subr.mxu0 0.0
        %3921 = vmatpush1.msra.mxu0 0.0
        %3922 = vmatprep.subr.mxu0 0.0
        %3923 = vmatpush1.msra.mxu0 0.0
        %3924 = vmatprep.subr.mxu0 0.0
        %3925 = vmatpush1.msra.mxu0 0.0
        %3926 = vmatprep.subr.mxu0 0.0
        %3927 = vmatpush1.msra.mxu0 0.0
        %3928 = vmatprep.subr.mxu0 0.0
        %3929 = vmatpush1.msra.mxu0 0.0
        %3930 = vmatprep.subr.mxu0 0.0
        %3931 = vmatpush1.msra.mxu0 0.0
        %3932 = vmatprep.subr.mxu0 0.0
        %3933 = vmatpush1.msra.mxu0 0.0
        %3934 = vmatprep.subr.mxu0 0.0
        %3935 = vmatpush1.msra.mxu0 0.0
        %3936 = vmatprep.subr.mxu0 0.0
        %3937 = vmatpush1.msra.mxu0 0.0
        %3938 = vmatprep.subr.mxu0 0.0
        %3939 = vmatpush1.msra.mxu0 0.0
        %3940 = vmatprep.subr.mxu0 0.0
        %3941 = vmatpush1.msra.mxu0 0.0
        %3942 = vmatprep.subr.mxu0 0.0
        %3943 = vmatpush1.msra.mxu0 0.0
        %3944 = vmatprep.subr.mxu0 0.0
        %3945 = vmatpush1.msra.mxu0 0.0
        %3946 = vmatprep.subr.mxu0 0.0
        %3947 = vmatpush1.msra.mxu0 0.0
        %3948 = vmatprep.subr.mxu0 0.0
        %3949 = vmatpush1.msra.mxu0 0.0
        %3950 = vmatprep.subr.mxu0 0.0
        %3951 = vmatpush1.msra.mxu0 0.0
        %3952 = vmatprep.subr.mxu0 0.0
        %3953 = vmatpush1.msra.mxu0 0.0
        %3954 = vmatprep.subr.mxu0 0.0
        %3955 = vmatpush1.msra.mxu0 0.0
        %3956 = vmatprep.subr.mxu0 0.0
        %3957 = vmatpush1.msra.mxu0 0.0
        %3958 = vmatprep.subr.mxu0 0.0
        %3959 = vmatpush1.msra.mxu0 0.0
        %3960 = vmatprep.mubr.f32.mxu0 0.0
        %3961 = vmatmul.mubr.f32.gmra.mrb[0].mxu0 %v3509
        %v3962 = vpop.f32.mrb[0].mxu0
        %v3963 = vadd.f32 %v3888, %v3962
        %v3964 = vpop.f32.mrb[0].mxu0
        %3965 = vmatprep.mubr.f32.mxu0 0.0
        %3966 = vmatmul.mubr.f32.gmra.mrb[0].mxu0 %v3511
        %v3967 = vpop.f32.mrb[0].mxu0
        %v3968 = vadd.f32 %v3893, %v3967
        %v3969 = vpop.f32.mrb[0].mxu0
        %3970 = vdwg.mxu0
        %s3971 = scalar_lea.vmem %s5, 3120
        %v3972 = vld [vmem:[%s3971] sm:$0xff]
        %v3973 = vld [vmem:[%s3971 + $0x8] sm:$0xff]
        %v3974 = vld [vmem:[%s3971 + $0x10] sm:$0xff]
        %v3975 = vld [vmem:[%s3971 + $0x18] sm:$0xff]
        %v3976 = vld [vmem:[%s3971 + $0x20] sm:$0xff]
        %v3977 = vld [vmem:[%s3971 + $0x28] sm:$0xff]
        %v3978 = vld [vmem:[%s3971 + $0x30] sm:$0xff]
        %v3979 = vld [vmem:[%s3971 + $0x38] sm:$0xff]
        %v3980 = vld [vmem:[%s3971 + $0x40] sm:$0xff]
        %v3981 = vld [vmem:[%s3971 + $0x48] sm:$0xff]
        %v3982 = vld [vmem:[%s3971 + $0x50] sm:$0xff]
        %v3983 = vld [vmem:[%s3971 + $0x58] sm:$0xff]
        %v3984 = vld [vmem:[%s3971 + $0x60] sm:$0xff]
        %v3985 = vld [vmem:[%s3971 + $0x68] sm:$0xff]
        %v3986 = vld [vmem:[%s3971 + $0x70] sm:$0xff]
        %v3987 = vld [vmem:[%s3971 + $0x78] sm:$0xff]
        %v3988 = vld [vmem:[%s3971 + $0x80] sm:$0xff]
        %v3989 = vld [vmem:[%s3971 + $0x88] sm:$0xff]
        %v3990 = vld [vmem:[%s3971 + $0x90] sm:$0xff]
        %v3991 = vld [vmem:[%s3971 + $0x98] sm:$0xff]
        %v3992 = vld [vmem:[%s3971 + $0xa0] sm:$0xff]
        %v3993 = vld [vmem:[%s3971 + $0xa8] sm:$0xff]
        %v3994 = vld [vmem:[%s3971 + $0xb0] sm:$0xff]
        %v3995 = vld [vmem:[%s3971 + $0xb8] sm:$0xff]
        %v3996 = vld [vmem:[%s3971 + $0xc0] sm:$0xff]
        %v3997 = vld [vmem:[%s3971 + $0xc8] sm:$0xff]
        %v3998 = vld [vmem:[%s3971 + $0xd0] sm:$0xff]
        %v3999 = vld [vmem:[%s3971 + $0xd8] sm:$0xff]
        %v4000 = vld [vmem:[%s3971 + $0xe0] sm:$0xff]
        %v4001 = vld [vmem:[%s3971 + $0xe8] sm:$0xff]
        %v4002 = vld [vmem:[%s3971 + $0xf0] sm:$0xff]
        %v4003 = vld [vmem:[%s3971 + $0xf8] sm:$0xff]
        %v4004 = vld [vmem:[%s3971 + $0x100] sm:$0xff]
        %v4005 = vld [vmem:[%s3971 + $0x108] sm:$0xff]
        %v4006 = vld [vmem:[%s3971 + $0x110] sm:$0xff]
        %v4007 = vld [vmem:[%s3971 + $0x118] sm:$0xff]
        %v4008 = vld [vmem:[%s3971 + $0x120] sm:$0xff]
        %v4009 = vld [vmem:[%s3971 + $0x128] sm:$0xff]
        %v4010 = vld [vmem:[%s3971 + $0x130] sm:$0xff]
        %v4011 = vld [vmem:[%s3971 + $0x138] sm:$0xff]
        %v4012 = vld [vmem:[%s3971 + $0x140] sm:$0xff]
        %v4013 = vld [vmem:[%s3971 + $0x148] sm:$0xff]
        %v4014 = vld [vmem:[%s3971 + $0x150] sm:$0xff]
        %v4015 = vld [vmem:[%s3971 + $0x158] sm:$0xff]
        %v4016 = vld [vmem:[%s3971 + $0x160] sm:$0xff]
        %v4017 = vld [vmem:[%s3971 + $0x168] sm:$0xff]
        %v4018 = vld [vmem:[%s3971 + $0x170] sm:$0xff]
        %v4019 = vld [vmem:[%s3971 + $0x178] sm:$0xff]
        %v4020 = vld [vmem:[%s3971 + $0x180] sm:$0xff]
        %v4021 = vld [vmem:[%s3971 + $0x188] sm:$0xff]
        %v4022 = vld [vmem:[%s3971 + $0x190] sm:$0xff]
        %v4023 = vld [vmem:[%s3971 + $0x198] sm:$0xff]
        %v4024 = vld [vmem:[%s3971 + $0x1a0] sm:$0xff]
        %v4025 = vld [vmem:[%s3971 + $0x1a8] sm:$0xff]
        %v4026 = vld [vmem:[%s3971 + $0x1b0] sm:$0xff]
        %v4027 = vld [vmem:[%s3971 + $0x1b8] sm:$0xff]
        %v4028 = vld [vmem:[%s3971 + $0x1c0] sm:$0xff]
        %v4029 = vld [vmem:[%s3971 + $0x1c8] sm:$0xff]
        %v4030 = vld [vmem:[%s3971 + $0x1d0] sm:$0xff]
        %v4031 = vld [vmem:[%s3971 + $0x1d8] sm:$0xff]
        %v4032 = vld [vmem:[%s3971 + $0x1e0] sm:$0xff]
        %v4033 = vld [vmem:[%s3971 + $0x1e8] sm:$0xff]
        %v4034 = vld [vmem:[%s3971 + $0x1f0] sm:$0xff]
        %v4035 = vld [vmem:[%s3971 + $0x1f8] sm:$0xff]
        %v4036 = vld [vmem:[%s3971 + $0x200] sm:$0xff]
        %v4037 = vld [vmem:[%s3971 + $0x208] sm:$0xff]
        %v4038 = vld [vmem:[%s3971 + $0x210] sm:$0xff]
        %v4039 = vld [vmem:[%s3971 + $0x218] sm:$0xff]
        %v4040 = vld [vmem:[%s3971 + $0x220] sm:$0xff]
        %v4041 = vld [vmem:[%s3971 + $0x228] sm:$0xff]
        %v4042 = vld [vmem:[%s3971 + $0x230] sm:$0xff]
        %v4043 = vld [vmem:[%s3971 + $0x238] sm:$0xff]
        %v4044 = vld [vmem:[%s3971 + $0x240] sm:$0xff]
        %v4045 = vld [vmem:[%s3971 + $0x248] sm:$0xff]
        %v4046 = vld [vmem:[%s3971 + $0x250] sm:$0xff]
        %v4047 = vld [vmem:[%s3971 + $0x258] sm:$0xff]
        %v4048 = vld [vmem:[%s3971 + $0x260] sm:$0xff]
        %v4049 = vld [vmem:[%s3971 + $0x268] sm:$0xff]
        %v4050 = vld [vmem:[%s3971 + $0x270] sm:$0xff]
        %v4051 = vld [vmem:[%s3971 + $0x278] sm:$0xff]
        %v4052 = vld [vmem:[%s3971 + $0x280] sm:$0xff]
        %v4053 = vld [vmem:[%s3971 + $0x288] sm:$0xff]
        %v4054 = vld [vmem:[%s3971 + $0x290] sm:$0xff]
        %v4055 = vld [vmem:[%s3971 + $0x298] sm:$0xff]
        %v4056 = vld [vmem:[%s3971 + $0x2a0] sm:$0xff]
        %v4057 = vld [vmem:[%s3971 + $0x2a8] sm:$0xff]
        %v4058 = vld [vmem:[%s3971 + $0x2b0] sm:$0xff]
        %v4059 = vld [vmem:[%s3971 + $0x2b8] sm:$0xff]
        %v4060 = vld [vmem:[%s3971 + $0x2c0] sm:$0xff]
        %v4061 = vld [vmem:[%s3971 + $0x2c8] sm:$0xff]
        %v4062 = vld [vmem:[%s3971 + $0x2d0] sm:$0xff]
        %v4063 = vld [vmem:[%s3971 + $0x2d8] sm:$0xff]
        %v4064 = vld [vmem:[%s3971 + $0x2e0] sm:$0xff]
        %v4065 = vld [vmem:[%s3971 + $0x2e8] sm:$0xff]
        %v4066 = vld [vmem:[%s3971 + $0x2f0] sm:$0xff]
        %v4067 = vld [vmem:[%s3971 + $0x2f8] sm:$0xff]
        %v4068 = vld [vmem:[%s3971 + $0x300] sm:$0xff]
        %v4069 = vld [vmem:[%s3971 + $0x308] sm:$0xff]
        %v4070 = vld [vmem:[%s3971 + $0x310] sm:$0xff]
        %v4071 = vld [vmem:[%s3971 + $0x318] sm:$0xff]
        %v4072 = vld [vmem:[%s3971 + $0x320] sm:$0xff]
        %v4073 = vld [vmem:[%s3971 + $0x328] sm:$0xff]
        %v4074 = vld [vmem:[%s3971 + $0x330] sm:$0xff]
        %v4075 = vld [vmem:[%s3971 + $0x338] sm:$0xff]
        %v4076 = vld [vmem:[%s3971 + $0x340] sm:$0xff]
        %v4077 = vld [vmem:[%s3971 + $0x348] sm:$0xff]
        %v4078 = vld [vmem:[%s3971 + $0x350] sm:$0xff]
        %v4079 = vld [vmem:[%s3971 + $0x358] sm:$0xff]
        %v4080 = vld [vmem:[%s3971 + $0x360] sm:$0xff]
        %v4081 = vld [vmem:[%s3971 + $0x368] sm:$0xff]
        %v4082 = vld [vmem:[%s3971 + $0x370] sm:$0xff]
        %v4083 = vld [vmem:[%s3971 + $0x378] sm:$0xff]
        %v4084 = vld [vmem:[%s3971 + $0x380] sm:$0xff]
        %v4085 = vld [vmem:[%s3971 + $0x388] sm:$0xff]
        %v4086 = vld [vmem:[%s3971 + $0x390] sm:$0xff]
        %v4087 = vld [vmem:[%s3971 + $0x398] sm:$0xff]
        %v4088 = vld [vmem:[%s3971 + $0x3a0] sm:$0xff]
        %v4089 = vld [vmem:[%s3971 + $0x3a8] sm:$0xff]
        %v4090 = vld [vmem:[%s3971 + $0x3b0] sm:$0xff]
        %v4091 = vld [vmem:[%s3971 + $0x3b8] sm:$0xff]
        %v4092 = vld [vmem:[%s3971 + $0x3c0] sm:$0xff]
        %v4093 = vld [vmem:[%s3971 + $0x3c8] sm:$0xff]
        %v4094 = vld [vmem:[%s3971 + $0x3d0] sm:$0xff]
        %v4095 = vld [vmem:[%s3971 + $0x3d8] sm:$0xff]
        %v4096 = vld [vmem:[%s3971 + $0x3e0] sm:$0xff]
        %v4097 = vld [vmem:[%s3971 + $0x3e8] sm:$0xff]
        %v4098 = vld [vmem:[%s3971 + $0x3f0] sm:$0xff]
        %v4099 = vld [vmem:[%s3971 + $0x3f8] sm:$0xff]
        %v4100 = vld [vmem:[%s3971 + $0x400] sm:$0xff]
        %v4101 = vld [vmem:[%s3971 + $0x408] sm:$0xff]
        %v4102 = vld [vmem:[%s3971 + $0x410] sm:$0xff]
        %v4103 = vld [vmem:[%s3971 + $0x418] sm:$0xff]
        %v4104 = vld [vmem:[%s3971 + $0x420] sm:$0xff]
        %v4105 = vld [vmem:[%s3971 + $0x428] sm:$0xff]
        %v4106 = vld [vmem:[%s3971 + $0x430] sm:$0xff]
        %v4107 = vld [vmem:[%s3971 + $0x438] sm:$0xff]
        %v4108 = vld [vmem:[%s3971 + $0x440] sm:$0xff]
        %v4109 = vld [vmem:[%s3971 + $0x448] sm:$0xff]
        %v4110 = vld [vmem:[%s3971 + $0x450] sm:$0xff]
        %v4111 = vld [vmem:[%s3971 + $0x458] sm:$0xff]
        %v4112 = vld [vmem:[%s3971 + $0x460] sm:$0xff]
        %v4113 = vld [vmem:[%s3971 + $0x468] sm:$0xff]
        %v4114 = vld [vmem:[%s3971 + $0x470] sm:$0xff]
        %v4115 = vld [vmem:[%s3971 + $0x478] sm:$0xff]
        %v4116 = vld [vmem:[%s3971 + $0x480] sm:$0xff]
        %v4117 = vld [vmem:[%s3971 + $0x488] sm:$0xff]
        %v4118 = vld [vmem:[%s3971 + $0x490] sm:$0xff]
        %v4119 = vld [vmem:[%s3971 + $0x498] sm:$0xff]
        %v4120 = vld [vmem:[%s3971 + $0x4a0] sm:$0xff]
        %v4121 = vld [vmem:[%s3971 + $0x4a8] sm:$0xff]
        %v4122 = vld [vmem:[%s3971 + $0x4b0] sm:$0xff]
        %v4123 = vld [vmem:[%s3971 + $0x4b8] sm:$0xff]
        %v4124 = vld [vmem:[%s3971 + $0x4c0] sm:$0xff]
        %v4125 = vld [vmem:[%s3971 + $0x4c8] sm:$0xff]
        %v4126 = vld [vmem:[%s3971 + $0x4d0] sm:$0xff]
        %v4127 = vld [vmem:[%s3971 + $0x4d8] sm:$0xff]
        %v4128 = vld [vmem:[%s3971 + $0x4e0] sm:$0xff]
        %v4129 = vld [vmem:[%s3971 + $0x4e8] sm:$0xff]
        %v4130 = vld [vmem:[%s3971 + $0x4f0] sm:$0xff]
        %v4131 = vld [vmem:[%s3971 + $0x4f8] sm:$0xff]
        %v4132 = vld [vmem:[%s3971 + $0x500] sm:$0xff]
        %v4133 = vld [vmem:[%s3971 + $0x508] sm:$0xff]
        %v4134 = vld [vmem:[%s3971 + $0x510] sm:$0xff]
        %v4135 = vld [vmem:[%s3971 + $0x518] sm:$0xff]
        %v4136 = vld [vmem:[%s3971 + $0x520] sm:$0xff]
        %v4137 = vld [vmem:[%s3971 + $0x528] sm:$0xff]
        %v4138 = vld [vmem:[%s3971 + $0x530] sm:$0xff]
        %v4139 = vld [vmem:[%s3971 + $0x538] sm:$0xff]
        %v4140 = vld [vmem:[%s3971 + $0x540] sm:$0xff]
        %v4141 = vld [vmem:[%s3971 + $0x548] sm:$0xff]
        %v4142 = vld [vmem:[%s3971 + $0x550] sm:$0xff]
        %v4143 = vld [vmem:[%s3971 + $0x558] sm:$0xff]
        %v4144 = vld [vmem:[%s3971 + $0x560] sm:$0xff]
        %v4145 = vld [vmem:[%s3971 + $0x568] sm:$0xff]
        %v4146 = vld [vmem:[%s3971 + $0x570] sm:$0xff]
        %v4147 = vld [vmem:[%s3971 + $0x578] sm:$0xff]
        %v4148 = vld [vmem:[%s3971 + $0x580] sm:$0xff]
        %v4149 = vld [vmem:[%s3971 + $0x588] sm:$0xff]
        %v4150 = vld [vmem:[%s3971 + $0x590] sm:$0xff]
        %v4151 = vld [vmem:[%s3971 + $0x598] sm:$0xff]
        %v4152 = vld [vmem:[%s3971 + $0x5a0] sm:$0xff]
        %v4153 = vld [vmem:[%s3971 + $0x5a8] sm:$0xff]
        %v4154 = vld [vmem:[%s3971 + $0x5b0] sm:$0xff]
        %v4155 = vld [vmem:[%s3971 + $0x5b8] sm:$0xff]
        %v4156 = vld [vmem:[%s3971 + $0x5c0] sm:$0xff]
        %v4157 = vld [vmem:[%s3971 + $0x5c8] sm:$0xff]
        %v4158 = vld [vmem:[%s3971 + $0x5d0] sm:$0xff]
        %v4159 = vld [vmem:[%s3971 + $0x5d8] sm:$0xff]
        %v4160 = vld [vmem:[%s3971 + $0x5e0] sm:$0xff]
        %v4161 = vld [vmem:[%s3971 + $0x5e8] sm:$0xff]
        %v4162 = vld [vmem:[%s3971 + $0x5f0] sm:$0xff]
        %v4163 = vld [vmem:[%s3971 + $0x5f8] sm:$0xff]
        %v4164 = vld [vmem:[%s3971 + $0x600] sm:$0xff]
        %v4165 = vld [vmem:[%s3971 + $0x608] sm:$0xff]
        %v4166 = vld [vmem:[%s3971 + $0x610] sm:$0xff]
        %v4167 = vrot.slane %v2401, 2
        %v4168 = vrot.slane %v2407, 2
        %v4169 = vsel %vm1159, %v4167, %v4168
        %v4170 = vrot.slane %v2403, 2
        %v4171 = vrot.slane %v2409, 2
        %v4172 = vsel %vm1159, %v4170, %v4171
        %v4173 = vrot.slane %v2628, 2
        %v4174 = vrot.slane %v2633, 2
        %v4175 = vsel %vm1159, %v4173, %v4174
        %v4180 = vsel %vm3046, %v4175, 0
        %v4182 = vsel %vm3046, %v4174, 0
        %4184 = vmatprep.subr.mxu0 %v3973
        %4185 = vmatpush1.msra.mxu0 %v3972
        %4186 = vmatprep.subr.mxu0 %v3978
        %4187 = vmatpush1.msra.mxu0 %v3977
        %4188 = vmatprep.subr.mxu0 %v3983
        %4189 = vmatpush1.msra.mxu0 %v3982
        %4190 = vmatprep.subr.mxu0 %v3988
        %4191 = vmatpush1.msra.mxu0 %v3987
        %4192 = vmatprep.subr.mxu0 %v3993
        %4193 = vmatpush1.msra.mxu0 %v3992
        %4194 = vmatprep.subr.mxu0 %v3998
        %4195 = vmatpush1.msra.mxu0 %v3997
        %4196 = vmatprep.subr.mxu0 %v4003
        %4197 = vmatpush1.msra.mxu0 %v4002
        %4198 = vmatprep.subr.mxu0 %v4008
        %4199 = vmatpush1.msra.mxu0 %v4007
        %4200 = vmatprep.subr.mxu0 %v4013
        %4201 = vmatpush1.msra.mxu0 %v4012
        %4202 = vmatprep.subr.mxu0 %v4018
        %4203 = vmatpush1.msra.mxu0 %v4017
        %4204 = vmatprep.subr.mxu0 %v4023
        %4205 = vmatpush1.msra.mxu0 %v4022
        %4206 = vmatprep.subr.mxu0 %v4028
        %4207 = vmatpush1.msra.mxu0 %v4027
        %4208 = vmatprep.subr.mxu0 %v4033
        %4209 = vmatpush1.msra.mxu0 %v4032
        %4210 = vmatprep.subr.mxu0 %v4038
        %4211 = vmatpush1.msra.mxu0 %v4037
        %4212 = vmatprep.subr.mxu0 %v4043
        %4213 = vmatpush1.msra.mxu0 %v4042
        %4214 = vmatprep.subr.mxu0 %v4048
        %4215 = vmatpush1.msra.mxu0 %v4047
        %4216 = vmatprep.subr.mxu0 %v4053
        %4217 = vmatpush1.msra.mxu0 %v4052
        %4218 = vmatprep.subr.mxu0 %v4058
        %4219 = vmatpush1.msra.mxu0 %v4057
        %4220 = vmatprep.subr.mxu0 %v4063
        %4221 = vmatpush1.msra.mxu0 %v4062
        %4222 = vmatprep.subr.mxu0 %v4068
        %4223 = vmatpush1.msra.mxu0 %v4067
        %4224 = vmatprep.subr.mxu0 %v4073
        %4225 = vmatpush1.msra.mxu0 %v4072
        %4226 = vmatprep.subr.mxu0 %v4078
        %4227 = vmatpush1.msra.mxu0 %v4077
        %4228 = vmatprep.subr.mxu0 %v4083
        %4229 = vmatpush1.msra.mxu0 %v4082
        %4230 = vmatprep.subr.mxu0 %v4088
        %4231 = vmatpush1.msra.mxu0 %v4087
        %4232 = vmatprep.subr.mxu0 %v4093
        %4233 = vmatpush1.msra.mxu0 %v4092
        %4234 = vmatprep.subr.mxu0 %v4098
        %4235 = vmatpush1.msra.mxu0 %v4097
        %4236 = vmatprep.subr.mxu0 %v4103
        %4237 = vmatpush1.msra.mxu0 %v4102
        %4238 = vmatprep.subr.mxu0 %v4108
        %4239 = vmatpush1.msra.mxu0 %v4107
        %4240 = vmatprep.subr.mxu0 %v4113
        %4241 = vmatpush1.msra.mxu0 %v4112
        %4242 = vmatprep.subr.mxu0 %v4118
        %4243 = vmatpush1.msra.mxu0 %v4117
        %4244 = vmatprep.subr.mxu0 %v4123
        %4245 = vmatpush1.msra.mxu0 %v4122
        %4246 = vmatprep.subr.mxu0 %v4128
        %4247 = vmatpush1.msra.mxu0 %v4127
        %4248 = vmatprep.mubr.f32.mxu0 %v4172
        %4249 = vmatmul.mubr.f32.gmra.mrb[0].mxu0 %v4169
        %v4250 = vpop.f32.mrb[0].mxu0
        %v4251 = vadd.f32 0.0, %v4250
        %v4252 = vpop.f32.mrb[0].mxu0
        %v4253 = vadd.f32 0.0, %v4252
        %4254 = vmatprep.mubr.f32.mxu0 %v4171
        %4255 = vmatmul.mubr.f32.gmra.mrb[0].mxu0 %v4168
        %v4256 = vpop.f32.mrb[0].mxu0
        %v4257 = vadd.f32 0.0, %v4256
        %v4258 = vpop.f32.mrb[0].mxu0
        %v4259 = vadd.f32 0.0, %v4258
        %4260 = vdwg.mxu0
        %4261 = vmatprep.subr.mxu0 %v4133
        %4262 = vmatpush1.msra.mxu0 %v4132
        %4263 = vmatprep.subr.mxu0 %v4138
        %4264 = vmatpush1.msra.mxu0 %v4137
        %4265 = vmatprep.subr.mxu0 %v4143
        %4266 = vmatpush1.msra.mxu0 %v4142
        %4267 = vmatprep.subr.mxu0 %v4148
        %4268 = vmatpush1.msra.mxu0 %v4147
        %4269 = vmatprep.subr.mxu0 %v4153
        %4270 = vmatpush1.msra.mxu0 %v4152
        %4271 = vmatprep.subr.mxu0 %v4158
        %4272 = vmatpush1.msra.mxu0 %v4157
        %4273 = vmatprep.subr.mxu0 %v4163
        %4274 = vmatpush1.msra.mxu0 %v4162
        %4275 = vmatprep.subr.mxu0 0.0
        %4276 = vmatpush1.msra.mxu0 0.0
        %4277 = vmatprep.subr.mxu0 0.0
        %4278 = vmatpush1.msra.mxu0 0.0
        %4279 = vmatprep.subr.mxu0 0.0
        %4280 = vmatpush1.msra.mxu0 0.0
        %4281 = vmatprep.subr.mxu0 0.0
        %4282 = vmatpush1.msra.mxu0 0.0
        %4283 = vmatprep.subr.mxu0 0.0
        %4284 = vmatpush1.msra.mxu0 0.0
        %4285 = vmatprep.subr.mxu0 0.0
        %4286 = vmatpush1.msra.mxu0 0.0
        %4287 = vmatprep.subr.mxu0 0.0
        %4288 = vmatpush1.msra.mxu0 0.0
        %4289 = vmatprep.subr.mxu0 0.0
        %4290 = vmatpush1.msra.mxu0 0.0
        %4291 = vmatprep.subr.mxu0 0.0
        %4292 = vmatpush1.msra.mxu0 0.0
        %4293 = vmatprep.subr.mxu0 0.0
        %4294 = vmatpush1.msra.mxu0 0.0
        %4295 = vmatprep.subr.mxu0 0.0
        %4296 = vmatpush1.msra.mxu0 0.0
        %4297 = vmatprep.subr.mxu0 0.0
        %4298 = vmatpush1.msra.mxu0 0.0
        %4299 = vmatprep.subr.mxu0 0.0
        %4300 = vmatpush1.msra.mxu0 0.0
        %4301 = vmatprep.subr.mxu0 0.0
        %4302 = vmatpush1.msra.mxu0 0.0
        %4303 = vmatprep.subr.mxu0 0.0
        %4304 = vmatpush1.msra.mxu0 0.0
        %4305 = vmatprep.subr.mxu0 0.0
        %4306 = vmatpush1.msra.mxu0 0.0
        %4307 = vmatprep.subr.mxu0 0.0
        %4308 = vmatpush1.msra.mxu0 0.0
        %4309 = vmatprep.subr.mxu0 0.0
        %4310 = vmatpush1.msra.mxu0 0.0
        %4311 = vmatprep.subr.mxu0 0.0
        %4312 = vmatpush1.msra.mxu0 0.0
        %4313 = vmatprep.subr.mxu0 0.0
        %4314 = vmatpush1.msra.mxu0 0.0
        %4315 = vmatprep.subr.mxu0 0.0
        %4316 = vmatpush1.msra.mxu0 0.0
        %4317 = vmatprep.subr.mxu0 0.0
        %4318 = vmatpush1.msra.mxu0 0.0
        %4319 = vmatprep.subr.mxu0 0.0
        %4320 = vmatpush1.msra.mxu0 0.0
        %4321 = vmatprep.subr.mxu0 0.0
        %4322 = vmatpush1.msra.mxu0 0.0
        %4323 = vmatprep.subr.mxu0 0.0
        %4324 = vmatpush1.msra.mxu0 0.0
        %4325 = vmatprep.mubr.f32.mxu0 0.0
        %4326 = vmatmul.mubr.f32.gmra.mrb[0].mxu0 %v4180
        %v4327 = vpop.f32.mrb[0].mxu0
        %v4328 = vadd.f32 %v4251, %v4327
        %v4329 = vpop.f32.mrb[0].mxu0
        %v4330 = vadd.f32 %v4253, %v4329
        %4331 = vmatprep.mubr.f32.mxu0 0.0
        %4332 = vmatmul.mubr.f32.gmra.mrb[0].mxu0 %v4182
        %v4333 = vpop.f32.mrb[0].mxu0
        %v4334 = vadd.f32 %v4257, %v4333
        %v4335 = vpop.f32.mrb[0].mxu0
        %v4336 = vadd.f32 %v4259, %v4335
        %4337 = vdwg.mxu0
        %4338 = vmatprep.subr.mxu0 %v3975
        %4339 = vmatpush1.msra.mxu0 %v3974
        %4340 = vmatprep.subr.mxu0 %v3980
        %4341 = vmatpush1.msra.mxu0 %v3979
        %4342 = vmatprep.subr.mxu0 %v3985
        %4343 = vmatpush1.msra.mxu0 %v3984
        %4344 = vmatprep.subr.mxu0 %v3990
        %4345 = vmatpush1.msra.mxu0 %v3989
        %4346 = vmatprep.subr.mxu0 %v3995
        %4347 = vmatpush1.msra.mxu0 %v3994
        %4348 = vmatprep.subr.mxu0 %v4000
        %4349 = vmatpush1.msra.mxu0 %v3999
        %4350 = vmatprep.subr.mxu0 %v4005
        %4351 = vmatpush1.msra.mxu0 %v4004
        %4352 = vmatprep.subr.mxu0 %v4010
        %4353 = vmatpush1.msra.mxu0 %v4009
        %4354 = vmatprep.subr.mxu0 %v4015
        %4355 = vmatpush1.msra.mxu0 %v4014
        %4356 = vmatprep.subr.mxu0 %v4020
        %4357 = vmatpush1.msra.mxu0 %v4019
        %4358 = vmatprep.subr.mxu0 %v4025
        %4359 = vmatpush1.msra.mxu0 %v4024
        %4360 = vmatprep.subr.mxu0 %v4030
        %4361 = vmatpush1.msra.mxu0 %v4029
        %4362 = vmatprep.subr.mxu0 %v4035
        %4363 = vmatpush1.msra.mxu0 %v4034
        %4364 = vmatprep.subr.mxu0 %v4040
        %4365 = vmatpush1.msra.mxu0 %v4039
        %4366 = vmatprep.subr.mxu0 %v4045
        %4367 = vmatpush1.msra.mxu0 %v4044
        %4368 = vmatprep.subr.mxu0 %v4050
        %4369 = vmatpush1.msra.mxu0 %v4049
        %4370 = vmatprep.subr.mxu0 %v4055
        %4371 = vmatpush1.msra.mxu0 %v4054
        %4372 = vmatprep.subr.mxu0 %v4060
        %4373 = vmatpush1.msra.mxu0 %v4059
        %4374 = vmatprep.subr.mxu0 %v4065
        %4375 = vmatpush1.msra.mxu0 %v4064
        %4376 = vmatprep.subr.mxu0 %v4070
        %4377 = vmatpush1.msra.mxu0 %v4069
        %4378 = vmatprep.subr.mxu0 %v4075
        %4379 = vmatpush1.msra.mxu0 %v4074
        %4380 = vmatprep.subr.mxu0 %v4080
        %4381 = vmatpush1.msra.mxu0 %v4079
        %4382 = vmatprep.subr.mxu0 %v4085
        %4383 = vmatpush1.msra.mxu0 %v4084
        %4384 = vmatprep.subr.mxu0 %v4090
        %4385 = vmatpush1.msra.mxu0 %v4089
        %4386 = vmatprep.subr.mxu0 %v4095
        %4387 = vmatpush1.msra.mxu0 %v4094
        %4388 = vmatprep.subr.mxu0 %v4100
        %4389 = vmatpush1.msra.mxu0 %v4099
        %4390 = vmatprep.subr.mxu0 %v4105
        %4391 = vmatpush1.msra.mxu0 %v4104
        %4392 = vmatprep.subr.mxu0 %v4110
        %4393 = vmatpush1.msra.mxu0 %v4109
        %4394 = vmatprep.subr.mxu0 %v4115
        %4395 = vmatpush1.msra.mxu0 %v4114
        %4396 = vmatprep.subr.mxu0 %v4120
        %4397 = vmatpush1.msra.mxu0 %v4119
        %4398 = vmatprep.subr.mxu0 %v4125
        %4399 = vmatpush1.msra.mxu0 %v4124
        %4400 = vmatprep.subr.mxu0 %v4130
        %4401 = vmatpush1.msra.mxu0 %v4129
        %4402 = vmatprep.mubr.f32.mxu0 %v4172
        %4403 = vmatmul.mubr.f32.gmra.mrb[0].mxu0 %v4169
        %v4404 = vpop.f32.mrb[0].mxu0
        %v4405 = vadd.f32 0.0, %v4404
        %v4406 = vpop.f32.mrb[0].mxu0
        %v4407 = vadd.f32 0.0, %v4406
        %4408 = vmatprep.mubr.f32.mxu0 %v4171
        %4409 = vmatmul.mubr.f32.gmra.mrb[0].mxu0 %v4168
        %v4410 = vpop.f32.mrb[0].mxu0
        %v4411 = vadd.f32 0.0, %v4410
        %v4412 = vpop.f32.mrb[0].mxu0
        %v4413 = vadd.f32 0.0, %v4412
        %4414 = vdwg.mxu0
        %4415 = vmatprep.subr.mxu0 %v4135
        %4416 = vmatpush1.msra.mxu0 %v4134
        %4417 = vmatprep.subr.mxu0 %v4140
        %4418 = vmatpush1.msra.mxu0 %v4139
        %4419 = vmatprep.subr.mxu0 %v4145
        %4420 = vmatpush1.msra.mxu0 %v4144
        %4421 = vmatprep.subr.mxu0 %v4150
        %4422 = vmatpush1.msra.mxu0 %v4149
        %4423 = vmatprep.subr.mxu0 %v4155
        %4424 = vmatpush1.msra.mxu0 %v4154
        %4425 = vmatprep.subr.mxu0 %v4160
        %4426 = vmatpush1.msra.mxu0 %v4159
        %4427 = vmatprep.subr.mxu0 %v4165
        %4428 = vmatpush1.msra.mxu0 %v4164
        %4429 = vmatprep.subr.mxu0 0.0
        %4430 = vmatpush1.msra.mxu0 0.0
        %4431 = vmatprep.subr.mxu0 0.0
        %4432 = vmatpush1.msra.mxu0 0.0
        %4433 = vmatprep.subr.mxu0 0.0
        %4434 = vmatpush1.msra.mxu0 0.0
        %4435 = vmatprep.subr.mxu0 0.0
        %4436 = vmatpush1.msra.mxu0 0.0
        %4437 = vmatprep.subr.mxu0 0.0
        %4438 = vmatpush1.msra.mxu0 0.0
        %4439 = vmatprep.subr.mxu0 0.0
        %4440 = vmatpush1.msra.mxu0 0.0
        %4441 = vmatprep.subr.mxu0 0.0
        %4442 = vmatpush1.msra.mxu0 0.0
        %4443 = vmatprep.subr.mxu0 0.0
        %4444 = vmatpush1.msra.mxu0 0.0
        %4445 = vmatprep.subr.mxu0 0.0
        %4446 = vmatpush1.msra.mxu0 0.0
        %4447 = vmatprep.subr.mxu0 0.0
        %4448 = vmatpush1.msra.mxu0 0.0
        %4449 = vmatprep.subr.mxu0 0.0
        %4450 = vmatpush1.msra.mxu0 0.0
        %4451 = vmatprep.subr.mxu0 0.0
        %4452 = vmatpush1.msra.mxu0 0.0
        %4453 = vmatprep.subr.mxu0 0.0
        %4454 = vmatpush1.msra.mxu0 0.0
        %4455 = vmatprep.subr.mxu0 0.0
        %4456 = vmatpush1.msra.mxu0 0.0
        %4457 = vmatprep.subr.mxu0 0.0
        %4458 = vmatpush1.msra.mxu0 0.0
        %4459 = vmatprep.subr.mxu0 0.0
        %4460 = vmatpush1.msra.mxu0 0.0
        %4461 = vmatprep.subr.mxu0 0.0
        %4462 = vmatpush1.msra.mxu0 0.0
        %4463 = vmatprep.subr.mxu0 0.0
        %4464 = vmatpush1.msra.mxu0 0.0
        %4465 = vmatprep.subr.mxu0 0.0
        %4466 = vmatpush1.msra.mxu0 0.0
        %4467 = vmatprep.subr.mxu0 0.0
        %4468 = vmatpush1.msra.mxu0 0.0
        %4469 = vmatprep.subr.mxu0 0.0
        %4470 = vmatpush1.msra.mxu0 0.0
        %4471 = vmatprep.subr.mxu0 0.0
        %4472 = vmatpush1.msra.mxu0 0.0
        %4473 = vmatprep.subr.mxu0 0.0
        %4474 = vmatpush1.msra.mxu0 0.0
        %4475 = vmatprep.subr.mxu0 0.0
        %4476 = vmatpush1.msra.mxu0 0.0
        %4477 = vmatprep.subr.mxu0 0.0
        %4478 = vmatpush1.msra.mxu0 0.0
        %4479 = vmatprep.mubr.f32.mxu0 0.0
        %4480 = vmatmul.mubr.f32.gmra.mrb[0].mxu0 %v4180
        %v4481 = vpop.f32.mrb[0].mxu0
        %v4482 = vadd.f32 %v4405, %v4481
        %v4483 = vpop.f32.mrb[0].mxu0
        %v4484 = vadd.f32 %v4407, %v4483
        %4485 = vmatprep.mubr.f32.mxu0 0.0
        %4486 = vmatmul.mubr.f32.gmra.mrb[0].mxu0 %v4182
        %v4487 = vpop.f32.mrb[0].mxu0
        %v4488 = vadd.f32 %v4411, %v4487
        %v4489 = vpop.f32.mrb[0].mxu0
        %v4490 = vadd.f32 %v4413, %v4489
        %4491 = vdwg.mxu0
        %4492 = vmatprep.subr.mxu0 0.0
        %4493 = vmatpush1.msra.mxu0 %v3976
        %4494 = vmatprep.subr.mxu0 0.0
        %4495 = vmatpush1.msra.mxu0 %v3981
        %4496 = vmatprep.subr.mxu0 0.0
        %4497 = vmatpush1.msra.mxu0 %v3986
        %4498 = vmatprep.subr.mxu0 0.0
        %4499 = vmatpush1.msra.mxu0 %v3991
        %4500 = vmatprep.subr.mxu0 0.0
        %4501 = vmatpush1.msra.mxu0 %v3996
        %4502 = vmatprep.subr.mxu0 0.0
        %4503 = vmatpush1.msra.mxu0 %v4001
        %4504 = vmatprep.subr.mxu0 0.0
        %4505 = vmatpush1.msra.mxu0 %v4006
        %4506 = vmatprep.subr.mxu0 0.0
        %4507 = vmatpush1.msra.mxu0 %v4011
        %4508 = vmatprep.subr.mxu0 0.0
        %4509 = vmatpush1.msra.mxu0 %v4016
        %4510 = vmatprep.subr.mxu0 0.0
        %4511 = vmatpush1.msra.mxu0 %v4021
        %4512 = vmatprep.subr.mxu0 0.0
        %4513 = vmatpush1.msra.mxu0 %v4026
        %4514 = vmatprep.subr.mxu0 0.0
        %4515 = vmatpush1.msra.mxu0 %v4031
        %4516 = vmatprep.subr.mxu0 0.0
        %4517 = vmatpush1.msra.mxu0 %v4036
        %4518 = vmatprep.subr.mxu0 0.0
        %4519 = vmatpush1.msra.mxu0 %v4041
        %4520 = vmatprep.subr.mxu0 0.0
        %4521 = vmatpush1.msra.mxu0 %v4046
        %4522 = vmatprep.subr.mxu0 0.0
        %4523 = vmatpush1.msra.mxu0 %v4051
        %4524 = vmatprep.subr.mxu0 0.0
        %4525 = vmatpush1.msra.mxu0 %v4056
        %4526 = vmatprep.subr.mxu0 0.0
        %4527 = vmatpush1.msra.mxu0 %v4061
        %4528 = vmatprep.subr.mxu0 0.0
        %4529 = vmatpush1.msra.mxu0 %v4066
        %4530 = vmatprep.subr.mxu0 0.0
        %4531 = vmatpush1.msra.mxu0 %v4071
        %4532 = vmatprep.subr.mxu0 0.0
        %4533 = vmatpush1.msra.mxu0 %v4076
        %4534 = vmatprep.subr.mxu0 0.0
        %4535 = vmatpush1.msra.mxu0 %v4081
        %4536 = vmatprep.subr.mxu0 0.0
        %4537 = vmatpush1.msra.mxu0 %v4086
        %4538 = vmatprep.subr.mxu0 0.0
        %4539 = vmatpush1.msra.mxu0 %v4091
        %4540 = vmatprep.subr.mxu0 0.0
        %4541 = vmatpush1.msra.mxu0 %v4096
        %4542 = vmatprep.subr.mxu0 0.0
        %4543 = vmatpush1.msra.mxu0 %v4101
        %4544 = vmatprep.subr.mxu0 0.0
        %4545 = vmatpush1.msra.mxu0 %v4106
        %4546 = vmatprep.subr.mxu0 0.0
        %4547 = vmatpush1.msra.mxu0 %v4111
        %4548 = vmatprep.subr.mxu0 0.0
        %4549 = vmatpush1.msra.mxu0 %v4116
        %4550 = vmatprep.subr.mxu0 0.0
        %4551 = vmatpush1.msra.mxu0 %v4121
        %4552 = vmatprep.subr.mxu0 0.0
        %4553 = vmatpush1.msra.mxu0 %v4126
        %4554 = vmatprep.subr.mxu0 0.0
        %4555 = vmatpush1.msra.mxu0 %v4131
        %4556 = vmatprep.mubr.f32.mxu0 %v4172
        %4557 = vmatmul.mubr.f32.gmra.mrb[0].mxu0 %v4169
        %v4558 = vpop.f32.mrb[0].mxu0
        %v4559 = vadd.f32 0.0, %v4558
        %v4560 = vpop.f32.mrb[0].mxu0
        %4561 = vmatprep.mubr.f32.mxu0 %v4171
        %4562 = vmatmul.mubr.f32.gmra.mrb[0].mxu0 %v4168
        %v4563 = vpop.f32.mrb[0].mxu0
        %v4564 = vadd.f32 0.0, %v4563
        %v4565 = vpop.f32.mrb[0].mxu0
        %4566 = vdwg.mxu0
        %4567 = vmatprep.subr.mxu0 0.0
        %4568 = vmatpush1.msra.mxu0 %v4136
        %4569 = vmatprep.subr.mxu0 0.0
        %4570 = vmatpush1.msra.mxu0 %v4141
        %4571 = vmatprep.subr.mxu0 0.0
        %4572 = vmatpush1.msra.mxu0 %v4146
        %4573 = vmatprep.subr.mxu0 0.0
        %4574 = vmatpush1.msra.mxu0 %v4151
        %4575 = vmatprep.subr.mxu0 0.0
        %4576 = vmatpush1.msra.mxu0 %v4156
        %4577 = vmatprep.subr.mxu0 0.0
        %4578 = vmatpush1.msra.mxu0 %v4161
        %4579 = vmatprep.subr.mxu0 0.0
        %4580 = vmatpush1.msra.mxu0 %v4166
        %4581 = vmatprep.subr.mxu0 0.0
        %4582 = vmatpush1.msra.mxu0 0.0
        %4583 = vmatprep.subr.mxu0 0.0
        %4584 = vmatpush1.msra.mxu0 0.0
        %4585 = vmatprep.subr.mxu0 0.0
        %4586 = vmatpush1.msra.mxu0 0.0
        %4587 = vmatprep.subr.mxu0 0.0
        %4588 = vmatpush1.msra.mxu0 0.0
        %4589 = vmatprep.subr.mxu0 0.0
        %4590 = vmatpush1.msra.mxu0 0.0
        %4591 = vmatprep.subr.mxu0 0.0
        %4592 = vmatpush1.msra.mxu0 0.0
        %4593 = vmatprep.subr.mxu0 0.0
        %4594 = vmatpush1.msra.mxu0 0.0
        %4595 = vmatprep.subr.mxu0 0.0
        %4596 = vmatpush1.msra.mxu0 0.0
        %4597 = vmatprep.subr.mxu0 0.0
        %4598 = vmatpush1.msra.mxu0 0.0
        %4599 = vmatprep.subr.mxu0 0.0
        %4600 = vmatpush1.msra.mxu0 0.0
        %4601 = vmatprep.subr.mxu0 0.0
        %4602 = vmatpush1.msra.mxu0 0.0
        %4603 = vmatprep.subr.mxu0 0.0
        %4604 = vmatpush1.msra.mxu0 0.0
        %4605 = vmatprep.subr.mxu0 0.0
        %4606 = vmatpush1.msra.mxu0 0.0
        %4607 = vmatprep.subr.mxu0 0.0
        %4608 = vmatpush1.msra.mxu0 0.0
        %4609 = vmatprep.subr.mxu0 0.0
        %4610 = vmatpush1.msra.mxu0 0.0
        %4611 = vmatprep.subr.mxu0 0.0
        %4612 = vmatpush1.msra.mxu0 0.0
        %4613 = vmatprep.subr.mxu0 0.0
        %4614 = vmatpush1.msra.mxu0 0.0
        %4615 = vmatprep.subr.mxu0 0.0
        %4616 = vmatpush1.msra.mxu0 0.0
        %4617 = vmatprep.subr.mxu0 0.0
        %4618 = vmatpush1.msra.mxu0 0.0
        %4619 = vmatprep.subr.mxu0 0.0
        %4620 = vmatpush1.msra.mxu0 0.0
        %4621 = vmatprep.subr.mxu0 0.0
        %4622 = vmatpush1.msra.mxu0 0.0
        %4623 = vmatprep.subr.mxu0 0.0
        %4624 = vmatpush1.msra.mxu0 0.0
        %4625 = vmatprep.subr.mxu0 0.0
        %4626 = vmatpush1.msra.mxu0 0.0
        %4627 = vmatprep.subr.mxu0 0.0
        %4628 = vmatpush1.msra.mxu0 0.0
        %4629 = vmatprep.subr.mxu0 0.0
        %4630 = vmatpush1.msra.mxu0 0.0
        %4631 = vmatprep.mubr.f32.mxu0 0.0
        %4632 = vmatmul.mubr.f32.gmra.mrb[0].mxu0 %v4180
        %v4633 = vpop.f32.mrb[0].mxu0
        %v4634 = vadd.f32 %v4559, %v4633
        %v4635 = vpop.f32.mrb[0].mxu0
        %4636 = vmatprep.mubr.f32.mxu0 0.0
        %4637 = vmatmul.mubr.f32.gmra.mrb[0].mxu0 %v4182
        %v4638 = vpop.f32.mrb[0].mxu0
        %v4639 = vadd.f32 %v4564, %v4638
        %v4640 = vpop.f32.mrb[0].mxu0
        %4641 = vdwg.mxu0
        %v4642 = vadd.f32 %v3657, %v4328
        %v4643 = vadd.f32 %v3659, %v4330
        %v4644 = vadd.f32 %v3811, %v4482
        %v4645 = vadd.f32 %v3813, %v4484
        %v4646 = vadd.f32 %v3963, %v4634
        %v4647 = vadd.f32 %v3663, %v4334
        %v4648 = vadd.f32 %v3665, %v4336
        %v4649 = vadd.f32 %v3817, %v4488
        %v4650 = vadd.f32 %v3819, %v4490
        %v4651 = vadd.f32 %v3968, %v4639
        %v4652 = vld [vmem:[%s6] sm:$0x1f]
        %v4654 = vlaneseq
        %v4655 = vshrl.u32 %v4654, 7
        %v4656 = vsub.s32 0, %v4655
        %v4657 = vrot.slane %v4652, %v4656
        %v4658 = vlaneseq
        %v4659 = vshrl.u32 %v4658, 7
        %v4660 = vsub.s32 1, %v4659
        %v4661 = vrot.slane %v4652, %v4660
        %v4662 = vlaneseq
        %v4663 = vshrl.u32 %v4662, 7
        %v4664 = vsub.s32 2, %v4663
        %v4665 = vrot.slane %v4652, %v4664
        %v4666 = vlaneseq
        %v4667 = vshrl.u32 %v4666, 7
        %v4668 = vsub.s32 3, %v4667
        %v4669 = vrot.slane %v4652, %v4668
        %v4670 = vlaneseq
        %v4671 = vshrl.u32 %v4670, 7
        %v4672 = vsub.s32 4, %v4671
        %v4673 = vrot.slane %v4652, %v4672
        %v4679 = vadd.f32 %v4642, %v4657
        %v4680 = vadd.f32 %v4643, %v4661
        %v4681 = vadd.f32 %v4644, %v4665
        %v4682 = vadd.f32 %v4645, %v4669
        %v4683 = vadd.f32 %v4646, %v4673
        %v4684 = vadd.f32 %v4647, %v4657
        %v4685 = vadd.f32 %v4648, %v4661
        %v4686 = vadd.f32 %v4649, %v4665
        %v4687 = vadd.f32 %v4650, %v4669
        %v4688 = vadd.f32 %v4651, %v4673
        %v4689 = vmax.f32 %v4679, 0.0
        %v4690 = vmax.f32 %v4680, 0.0
        %v4691 = vmax.f32 %v4681, 0.0
        %v4692 = vmax.f32 %v4682, 0.0
        %v4693 = vmax.f32 %v4683, 0.0
        %v4694 = vmax.f32 %v4684, 0.0
        %v4695 = vmax.f32 %v4685, 0.0
        %v4696 = vmax.f32 %v4686, 0.0
        %v4697 = vmax.f32 %v4687, 0.0
        %v4698 = vmax.f32 %v4688, 0.0
        %v4709 = vrot.slane %v4689, 1
        %v4710 = vrot.slane %v4694, 1
        %v4711 = vsel %vm556, %v4709, %v4710
        %v4712 = vrot.slane %v4690, 1
        %v4713 = vrot.slane %v4695, 1
        %v4714 = vsel %vm556, %v4712, %v4713
        %v4715 = vrot.slane %v4691, 1
        %v4716 = vrot.slane %v4696, 1
        %v4717 = vsel %vm556, %v4715, %v4716
        %v4718 = vrot.slane %v4692, 1
        %v4719 = vrot.slane %v4697, 1
        %v4720 = vsel %vm556, %v4718, %v4719
        %v4721 = vrot.slane %v4693, 1
        %v4722 = vrot.slane %v4698, 1
        %v4723 = vsel %vm556, %v4721, %v4722
        %v4734 = vmax.f32 %v4689, %v4711
        %v4735 = vmax.f32 %v4690, %v4714
        %v4736 = vmax.f32 %v4691, %v4717
        %v4737 = vmax.f32 %v4692, %v4720
        %v4738 = vmax.f32 %v4693, %v4723
        %v4739 = vmax.f32 %v4694, %v4710
        %v4740 = vmax.f32 %v4695, %v4713
        %v4741 = vmax.f32 %v4696, %v4716
        %v4742 = vmax.f32 %v4697, %v4719
        %v4743 = vmax.f32 %v4698, %v4722
        %v4744 = vld [vmem:[%s7] sm:$0x1f]
        %vm4745 = vcmask 80896
        %v4747 = vsel %vm4745, %v4744, 0
        %vm4749 = vcmask 1041408
        %v4751 = vsel %vm4749, %v4739, 0
        %v4754 = vsel %vm4749, %v4740, 0
        %v4757 = vsel %vm4749, %v4741, 0
        %v4760 = vsel %vm4749, %v4742, 0
        %v4763 = vsel %vm4749, %v4743, 0
        %4765 = vmatprep.subr.mxu0 %v4735
        %4766 = vmatpush1.msra.mxu0 %v4734
        %4767 = vmatprep.subr.mxu0 %v4754
        %4768 = vmatpush1.msra.mxu0 %v4751
        %4769 = vmatprep.subr.mxu0 0.0
        %4770 = vmatpush1.msra.mxu0 0.0
        %4771 = vmatprep.subr.mxu0 0.0
        %4772 = vmatpush1.msra.mxu0 0.0
        %4773 = vmatprep.subr.mxu0 0.0
        %4774 = vmatpush1.msra.mxu0 0.0
        %4775 = vmatprep.subr.mxu0 0.0
        %4776 = vmatpush1.msra.mxu0 0.0
        %4777 = vmatprep.subr.mxu0 0.0
        %4778 = vmatpush1.msra.mxu0 0.0
        %4779 = vmatprep.subr.mxu0 0.0
        %4780 = vmatpush1.msra.mxu0 0.0
        %4781 = vmatprep.subr.mxu0 0.0
        %4782 = vmatpush1.msra.mxu0 0.0
        %4783 = vmatprep.subr.mxu0 0.0
        %4784 = vmatpush1.msra.mxu0 0.0
        %4785 = vmatprep.subr.mxu0 0.0
        %4786 = vmatpush1.msra.mxu0 0.0
        %4787 = vmatprep.subr.mxu0 0.0
        %4788 = vmatpush1.msra.mxu0 0.0
        %4789 = vmatprep.subr.mxu0 0.0
        %4790 = vmatpush1.msra.mxu0 0.0
        %4791 = vmatprep.subr.mxu0 0.0
        %4792 = vmatpush1.msra.mxu0 0.0
        %4793 = vmatprep.subr.mxu0 0.0
        %4794 = vmatpush1.msra.mxu0 0.0
        %4795 = vmatprep.subr.mxu0 0.0
        %4796 = vmatpush1.msra.mxu0 0.0
        %4797 = vmatprep.subr.mxu0 0.0
        %4798 = vmatpush1.msra.mxu0 0.0
        %4799 = vmatprep.subr.mxu0 0.0
        %4800 = vmatpush1.msra.mxu0 0.0
        %4801 = vmatprep.subr.mxu0 0.0
        %4802 = vmatpush1.msra.mxu0 0.0
        %4803 = vmatprep.subr.mxu0 0.0
        %4804 = vmatpush1.msra.mxu0 0.0
        %4805 = vmatprep.subr.mxu0 0.0
        %4806 = vmatpush1.msra.mxu0 0.0
        %4807 = vmatprep.subr.mxu0 0.0
        %4808 = vmatpush1.msra.mxu0 0.0
        %4809 = vmatprep.subr.mxu0 0.0
        %4810 = vmatpush1.msra.mxu0 0.0
        %4811 = vmatprep.subr.mxu0 0.0
        %4812 = vmatpush1.msra.mxu0 0.0
        %4813 = vmatprep.subr.mxu0 0.0
        %4814 = vmatpush1.msra.mxu0 0.0
        %4815 = vmatprep.subr.mxu0 0.0
        %4816 = vmatpush1.msra.mxu0 0.0
        %4817 = vmatprep.subr.mxu0 0.0
        %4818 = vmatpush1.msra.mxu0 0.0
        %4819 = vmatprep.subr.mxu0 0.0
        %4820 = vmatpush1.msra.mxu0 0.0
        %4821 = vmatprep.subr.mxu0 0.0
        %4822 = vmatpush1.msra.mxu0 0.0
        %4823 = vmatprep.subr.mxu0 0.0
        %4824 = vmatpush1.msra.mxu0 0.0
        %4825 = vmatprep.subr.mxu0 0.0
        %4826 = vmatpush1.msra.mxu0 0.0
        %4827 = vmatprep.subr.mxu0 0.0
        %4828 = vmatpush1.msra.mxu0 0.0
        %4829 = vmatprep.mubr.f32.mxu0 0.0
        %4830 = vmatmul.mubr.f32.gmra.mrb[0].mxu0 %v4747
        %v4831 = vpop.f32.mrb[0].mxu0
        %v4832 = vadd.f32 0.0, %v4831
        %v4833 = vpop.f32.mrb[0].mxu0
        %v4834 = vadd.f32 0.0, %v4833
        %4835 = vdwg.mxu0
        %4836 = vmatprep.subr.mxu0 %v4737
        %4837 = vmatpush1.msra.mxu0 %v4736
        %4838 = vmatprep.subr.mxu0 %v4760
        %4839 = vmatpush1.msra.mxu0 %v4757
        %4840 = vmatprep.subr.mxu0 0.0
        %4841 = vmatpush1.msra.mxu0 0.0
        %4842 = vmatprep.subr.mxu0 0.0
        %4843 = vmatpush1.msra.mxu0 0.0
        %4844 = vmatprep.subr.mxu0 0.0
        %4845 = vmatpush1.msra.mxu0 0.0
        %4846 = vmatprep.subr.mxu0 0.0
        %4847 = vmatpush1.msra.mxu0 0.0
        %4848 = vmatprep.subr.mxu0 0.0
        %4849 = vmatpush1.msra.mxu0 0.0
        %4850 = vmatprep.subr.mxu0 0.0
        %4851 = vmatpush1.msra.mxu0 0.0
        %4852 = vmatprep.subr.mxu0 0.0
        %4853 = vmatpush1.msra.mxu0 0.0
        %4854 = vmatprep.subr.mxu0 0.0
        %4855 = vmatpush1.msra.mxu0 0.0
        %4856 = vmatprep.subr.mxu0 0.0
        %4857 = vmatpush1.msra.mxu0 0.0
        %4858 = vmatprep.subr.mxu0 0.0
        %4859 = vmatpush1.msra.mxu0 0.0
        %4860 = vmatprep.subr.mxu0 0.0
        %4861 = vmatpush1.msra.mxu0 0.0
        %4862 = vmatprep.subr.mxu0 0.0
        %4863 = vmatpush1.msra.mxu0 0.0
        %4864 = vmatprep.subr.mxu0 0.0
        %4865 = vmatpush1.msra.mxu0 0.0
        %4866 = vmatprep.subr.mxu0 0.0
        %4867 = vmatpush1.msra.mxu0 0.0
        %4868 = vmatprep.subr.mxu0 0.0
        %4869 = vmatpush1.msra.mxu0 0.0
        %4870 = vmatprep.subr.mxu0 0.0
        %4871 = vmatpush1.msra.mxu0 0.0
        %4872 = vmatprep.subr.mxu0 0.0
        %4873 = vmatpush1.msra.mxu0 0.0
        %4874 = vmatprep.subr.mxu0 0.0
        %4875 = vmatpush1.msra.mxu0 0.0
        %4876 = vmatprep.subr.mxu0 0.0
        %4877 = vmatpush1.msra.mxu0 0.0
        %4878 = vmatprep.subr.mxu0 0.0
        %4879 = vmatpush1.msra.mxu0 0.0
        %4880 = vmatprep.subr.mxu0 0.0
        %4881 = vmatpush1.msra.mxu0 0.0
        %4882 = vmatprep.subr.mxu0 0.0
        %4883 = vmatpush1.msra.mxu0 0.0
        %4884 = vmatprep.subr.mxu0 0.0
        %4885 = vmatpush1.msra.mxu0 0.0
        %4886 = vmatprep.subr.mxu0 0.0
        %4887 = vmatpush1.msra.mxu0 0.0
        %4888 = vmatprep.subr.mxu0 0.0
        %4889 = vmatpush1.msra.mxu0 0.0
        %4890 = vmatprep.subr.mxu0 0.0
        %4891 = vmatpush1.msra.mxu0 0.0
        %4892 = vmatprep.subr.mxu0 0.0
        %4893 = vmatpush1.msra.mxu0 0.0
        %4894 = vmatprep.subr.mxu0 0.0
        %4895 = vmatpush1.msra.mxu0 0.0
        %4896 = vmatprep.subr.mxu0 0.0
        %4897 = vmatpush1.msra.mxu0 0.0
        %4898 = vmatprep.subr.mxu0 0.0
        %4899 = vmatpush1.msra.mxu0 0.0
        %4900 = vmatprep.mubr.f32.mxu0 0.0
        %4901 = vmatmul.mubr.f32.gmra.mrb[0].mxu0 %v4747
        %v4902 = vpop.f32.mrb[0].mxu0
        %v4903 = vadd.f32 0.0, %v4902
        %v4904 = vpop.f32.mrb[0].mxu0
        %v4905 = vadd.f32 0.0, %v4904
        %4906 = vdwg.mxu0
        %4907 = vmatprep.subr.mxu0 0.0
        %4908 = vmatpush1.msra.mxu0 %v4738
        %4909 = vmatprep.subr.mxu0 0.0
        %4910 = vmatpush1.msra.mxu0 %v4763
        %4911 = vmatprep.subr.mxu0 0.0
        %4912 = vmatpush1.msra.mxu0 0.0
        %4913 = vmatprep.subr.mxu0 0.0
        %4914 = vmatpush1.msra.mxu0 0.0
        %4915 = vmatprep.subr.mxu0 0.0
        %4916 = vmatpush1.msra.mxu0 0.0
        %4917 = vmatprep.subr.mxu0 0.0
        %4918 = vmatpush1.msra.mxu0 0.0
        %4919 = vmatprep.subr.mxu0 0.0
        %4920 = vmatpush1.msra.mxu0 0.0
        %4921 = vmatprep.subr.mxu0 0.0
        %4922 = vmatpush1.msra.mxu0 0.0
        %4923 = vmatprep.subr.mxu0 0.0
        %4924 = vmatpush1.msra.mxu0 0.0
        %4925 = vmatprep.subr.mxu0 0.0
        %4926 = vmatpush1.msra.mxu0 0.0
        %4927 = vmatprep.subr.mxu0 0.0
        %4928 = vmatpush1.msra.mxu0 0.0
        %4929 = vmatprep.subr.mxu0 0.0
        %4930 = vmatpush1.msra.mxu0 0.0
        %4931 = vmatprep.subr.mxu0 0.0
        %4932 = vmatpush1.msra.mxu0 0.0
        %4933 = vmatprep.subr.mxu0 0.0
        %4934 = vmatpush1.msra.mxu0 0.0
        %4935 = vmatprep.subr.mxu0 0.0
        %4936 = vmatpush1.msra.mxu0 0.0
        %4937 = vmatprep.subr.mxu0 0.0
        %4938 = vmatpush1.msra.mxu0 0.0
        %4939 = vmatprep.subr.mxu0 0.0
        %4940 = vmatpush1.msra.mxu0 0.0
        %4941 = vmatprep.subr.mxu0 0.0
        %4942 = vmatpush1.msra.mxu0 0.0
        %4943 = vmatprep.subr.mxu0 0.0
        %4944 = vmatpush1.msra.mxu0 0.0
        %4945 = vmatprep.subr.mxu0 0.0
        %4946 = vmatpush1.msra.mxu0 0.0
        %4947 = vmatprep.subr.mxu0 0.0
        %4948 = vmatpush1.msra.mxu0 0.0
        %4949 = vmatprep.subr.mxu0 0.0
        %4950 = vmatpush1.msra.mxu0 0.0
        %4951 = vmatprep.subr.mxu0 0.0
        %4952 = vmatpush1.msra.mxu0 0.0
        %4953 = vmatprep.subr.mxu0 0.0
        %4954 = vmatpush1.msra.mxu0 0.0
        %4955 = vmatprep.subr.mxu0 0.0
        %4956 = vmatpush1.msra.mxu0 0.0
        %4957 = vmatprep.subr.mxu0 0.0
        %4958 = vmatpush1.msra.mxu0 0.0
        %4959 = vmatprep.subr.mxu0 0.0
        %4960 = vmatpush1.msra.mxu0 0.0
        %4961 = vmatprep.subr.mxu0 0.0
        %4962 = vmatpush1.msra.mxu0 0.0
        %4963 = vmatprep.subr.mxu0 0.0
        %4964 = vmatpush1.msra.mxu0 0.0
        %4965 = vmatprep.subr.mxu0 0.0
        %4966 = vmatpush1.msra.mxu0 0.0
        %4967 = vmatprep.subr.mxu0 0.0
        %4968 = vmatpush1.msra.mxu0 0.0
        %4969 = vmatprep.subr.mxu0 0.0
        %4970 = vmatpush1.msra.mxu0 0.0
        %4971 = vmatprep.mubr.f32.mxu0 0.0
        %4972 = vmatmul.mubr.f32.gmra.mrb[0].mxu0 %v4747
        %v4973 = vpop.f32.mrb[0].mxu0
        %v4974 = vadd.f32 0.0, %v4973
        %v4975 = vpop.f32.mrb[0].mxu0
        %4976 = vdwg.mxu0
        %4982 = vrot.lane.b32.xlu0 %v4832, 80
        %v4983 = vpop.permute.xlu0 %4982
        %4984 = vrot.lane.b32.xlu0 %v4834, 80
        %v4985 = vpop.permute.xlu0 %4984
        %4986 = vrot.lane.b32.xlu0 %v4903, 80
        %v4987 = vpop.permute.xlu0 %4986
        %4988 = vrot.lane.b32.xlu0 %v4905, 80
        %v4989 = vpop.permute.xlu0 %4988
        %4990 = vrot.lane.b32.xlu0 %v4974, 80
        %v4991 = vpop.permute.xlu0 %4990
        %vm4992 = vcmask 654336
        %v4993 = vsel %vm4992, %v4983, %v4985
        %v4994 = vsel %vm4992, %v4985, %v4987
        %v4995 = vsel %vm4992, %v4987, %v4989
        %v4996 = vsel %vm4992, %v4989, %v4991
        %v5001 = vmax.f32 %v4832, %v4993
        %v5002 = vmax.f32 %v4834, %v4994
        %v5003 = vmax.f32 %v4903, %v4995
        %v5004 = vmax.f32 %v4905, %v4996
        %v5005 = vld [vmem:[%s8] sm:$0xff]
        %v5006 = vld [vmem:[%s8 + $0x8] sm:$0xff]
        %v5007 = vld [vmem:[%s8 + $0x10] sm:$0xff]
        %v5008 = vld [vmem:[%s8 + $0x18] sm:$0xff]
        %v5009 = vld [vmem:[%s8 + $0x20] sm:$0xff]
        %v5010 = vld [vmem:[%s8 + $0x28] sm:$0xff]
        %v5011 = vld [vmem:[%s8 + $0x30] sm:$0xff]
        %v5012 = vld [vmem:[%s8 + $0x38] sm:$0xff]
        %v5013 = vld [vmem:[%s8 + $0x40] sm:$0xff]
        %v5014 = vld [vmem:[%s8 + $0x48] sm:$0xff]
        %v5015 = vld [vmem:[%s8 + $0x50] sm:$0xff]
        %v5016 = vld [vmem:[%s8 + $0x58] sm:$0xff]
        %v5017 = vld [vmem:[%s8 + $0x60] sm:$0xff]
        %v5018 = vld [vmem:[%s8 + $0x68] sm:$0xff]
        %v5019 = vld [vmem:[%s8 + $0x70] sm:$0xff]
        %v5020 = vld [vmem:[%s8 + $0x78] sm:$0xff]
        %v5021 = vld [vmem:[%s8 + $0x80] sm:$0xff]
        %v5022 = vld [vmem:[%s8 + $0x88] sm:$0xff]
        %v5023 = vld [vmem:[%s8 + $0x90] sm:$0xff]
        %v5024 = vld [vmem:[%s8 + $0x98] sm:$0xff]
        %v5025 = vld [vmem:[%s8 + $0xa0] sm:$0xff]
        %v5026 = vld [vmem:[%s8 + $0xa8] sm:$0xff]
        %v5027 = vld [vmem:[%s8 + $0xb0] sm:$0xff]
        %v5028 = vld [vmem:[%s8 + $0xb8] sm:$0xff]
        %v5029 = vld [vmem:[%s8 + $0xc0] sm:$0xff]
        %v5030 = vld [vmem:[%s8 + $0xc8] sm:$0xff]
        %v5031 = vld [vmem:[%s8 + $0xd0] sm:$0xff]
        %v5032 = vld [vmem:[%s8 + $0xd8] sm:$0xff]
        %v5033 = vld [vmem:[%s8 + $0xe0] sm:$0xff]
        %v5034 = vld [vmem:[%s8 + $0xe8] sm:$0xff]
        %v5035 = vld [vmem:[%s8 + $0xf0] sm:$0xff]
        %v5036 = vld [vmem:[%s8 + $0xf8] sm:$0xff]
        %v5037 = vld [vmem:[%s8 + $0x100] sm:$0xff]
        %v5038 = vld [vmem:[%s8 + $0x108] sm:$0xff]
        %v5039 = vld [vmem:[%s8 + $0x110] sm:$0xff]
        %v5040 = vld [vmem:[%s8 + $0x118] sm:$0xff]
        %v5041 = vld [vmem:[%s8 + $0x120] sm:$0xff]
        %v5042 = vld [vmem:[%s8 + $0x128] sm:$0xff]
        %v5043 = vld [vmem:[%s8 + $0x130] sm:$0xff]
        %v5044 = vld [vmem:[%s8 + $0x138] sm:$0xff]
        %v5045 = vld [vmem:[%s8 + $0x140] sm:$0xff]
        %v5046 = vld [vmem:[%s8 + $0x148] sm:$0xff]
        %v5047 = vld [vmem:[%s8 + $0x150] sm:$0xff]
        %v5048 = vld [vmem:[%s8 + $0x158] sm:$0xff]
        %v5049 = vld [vmem:[%s8 + $0x160] sm:$0xff]
        %v5050 = vld [vmem:[%s8 + $0x168] sm:$0xff]
        %v5051 = vld [vmem:[%s8 + $0x170] sm:$0xff]
        %v5052 = vld [vmem:[%s8 + $0x178] sm:$0xff]
        %v5053 = vld [vmem:[%s8 + $0x180] sm:$0xff]
        %v5054 = vld [vmem:[%s8 + $0x188] sm:$0xff]
        %v5055 = vld [vmem:[%s8 + $0x190] sm:$0xff]
        %v5056 = vld [vmem:[%s8 + $0x198] sm:$0xff]
        %v5057 = vld [vmem:[%s8 + $0x1a0] sm:$0xff]
        %v5058 = vld [vmem:[%s8 + $0x1a8] sm:$0xff]
        %v5059 = vld [vmem:[%s8 + $0x1b0] sm:$0xff]
        %v5060 = vld [vmem:[%s8 + $0x1b8] sm:$0xff]
        %v5061 = vld [vmem:[%s8 + $0x1c0] sm:$0xff]
        %v5062 = vld [vmem:[%s8 + $0x1c8] sm:$0xff]
        %v5063 = vld [vmem:[%s8 + $0x1d0] sm:$0xff]
        %v5064 = vld [vmem:[%s8 + $0x1d8] sm:$0xff]
        %v5065 = vld [vmem:[%s8 + $0x1e0] sm:$0xff]
        %v5066 = vld [vmem:[%s8 + $0x1e8] sm:$0xff]
        %v5067 = vld [vmem:[%s8 + $0x1f0] sm:$0xff]
        %v5068 = vld [vmem:[%s8 + $0x1f8] sm:$0xff]
        %v5069 = vld [vmem:[%s8 + $0x200] sm:$0xff]
        %v5070 = vld [vmem:[%s8 + $0x208] sm:$0xff]
        %v5071 = vld [vmem:[%s8 + $0x210] sm:$0xff]
        %v5072 = vld [vmem:[%s8 + $0x218] sm:$0xff]
        %v5073 = vld [vmem:[%s8 + $0x220] sm:$0xff]
        %v5074 = vld [vmem:[%s8 + $0x228] sm:$0xff]
        %v5075 = vld [vmem:[%s8 + $0x230] sm:$0xff]
        %v5076 = vld [vmem:[%s8 + $0x238] sm:$0xff]
        %v5077 = vld [vmem:[%s8 + $0x240] sm:$0xff]
        %v5078 = vld [vmem:[%s8 + $0x248] sm:$0xff]
        %v5079 = vld [vmem:[%s8 + $0x250] sm:$0xff]
        %v5080 = vld [vmem:[%s8 + $0x258] sm:$0xff]
        %v5081 = vld [vmem:[%s8 + $0x260] sm:$0xff]
        %v5082 = vld [vmem:[%s8 + $0x268] sm:$0xff]
        %v5083 = vld [vmem:[%s8 + $0x270] sm:$0xff]
        %v5084 = vld [vmem:[%s8 + $0x278] sm:$0xff]
        %v5085 = vld [vmem:[%s8 + $0x280] sm:$0xff]
        %v5086 = vld [vmem:[%s8 + $0x288] sm:$0xff]
        %v5087 = vld [vmem:[%s8 + $0x290] sm:$0xff]
        %v5088 = vld [vmem:[%s8 + $0x298] sm:$0xff]
        %v5089 = vld [vmem:[%s8 + $0x2a0] sm:$0xff]
        %v5090 = vld [vmem:[%s8 + $0x2a8] sm:$0xff]
        %v5091 = vld [vmem:[%s8 + $0x2b0] sm:$0xff]
        %v5092 = vld [vmem:[%s8 + $0x2b8] sm:$0xff]
        %v5093 = vld [vmem:[%s8 + $0x2c0] sm:$0xff]
        %v5094 = vld [vmem:[%s8 + $0x2c8] sm:$0xff]
        %v5095 = vld [vmem:[%s8 + $0x2d0] sm:$0xff]
        %v5096 = vld [vmem:[%s8 + $0x2d8] sm:$0xff]
        %v5097 = vld [vmem:[%s8 + $0x2e0] sm:$0xff]
        %v5098 = vld [vmem:[%s8 + $0x2e8] sm:$0xff]
        %v5099 = vld [vmem:[%s8 + $0x2f0] sm:$0xff]
        %v5100 = vld [vmem:[%s8 + $0x2f8] sm:$0xff]
        %v5101 = vld [vmem:[%s8 + $0x300] sm:$0xff]
        %v5102 = vld [vmem:[%s8 + $0x308] sm:$0xff]
        %v5103 = vld [vmem:[%s8 + $0x310] sm:$0xff]
        %v5104 = vld [vmem:[%s8 + $0x318] sm:$0xff]
        %v5105 = vld [vmem:[%s8 + $0x320] sm:$0xff]
        %v5106 = vld [vmem:[%s8 + $0x328] sm:$0xff]
        %v5107 = vld [vmem:[%s8 + $0x330] sm:$0xff]
        %v5108 = vld [vmem:[%s8 + $0x338] sm:$0xff]
        %v5109 = vld [vmem:[%s8 + $0x340] sm:$0xff]
        %v5110 = vld [vmem:[%s8 + $0x348] sm:$0xff]
        %v5111 = vld [vmem:[%s8 + $0x350] sm:$0xff]
        %v5112 = vld [vmem:[%s8 + $0x358] sm:$0xff]
        %v5113 = vld [vmem:[%s8 + $0x360] sm:$0xff]
        %v5114 = vld [vmem:[%s8 + $0x368] sm:$0xff]
        %v5115 = vld [vmem:[%s8 + $0x370] sm:$0xff]
        %v5116 = vld [vmem:[%s8 + $0x378] sm:$0xff]
        %v5117 = vld [vmem:[%s8 + $0x380] sm:$0xff]
        %v5118 = vld [vmem:[%s8 + $0x388] sm:$0xff]
        %v5119 = vld [vmem:[%s8 + $0x390] sm:$0xff]
        %v5120 = vld [vmem:[%s8 + $0x398] sm:$0xff]
        %v5121 = vld [vmem:[%s8 + $0x3a0] sm:$0xff]
        %v5122 = vld [vmem:[%s8 + $0x3a8] sm:$0xff]
        %v5123 = vld [vmem:[%s8 + $0x3b0] sm:$0xff]
        %v5124 = vld [vmem:[%s8 + $0x3b8] sm:$0xff]
        %vm5125 = vcmask 785408
        %v5127 = vsel %vm5125, %v5004, 0
        %5129 = vmatprep.subr.mxu0 %v5006
        %5130 = vmatpush1.msra.mxu0 %v5005
        %5131 = vmatprep.subr.mxu0 %v5008
        %5132 = vmatpush1.msra.mxu0 %v5007
        %5133 = vmatprep.subr.mxu0 %v5010
        %5134 = vmatpush1.msra.mxu0 %v5009
        %5135 = vmatprep.subr.mxu0 %v5012
        %5136 = vmatpush1.msra.mxu0 %v5011
        %5137 = vmatprep.subr.mxu0 %v5014
        %5138 = vmatpush1.msra.mxu0 %v5013
        %5139 = vmatprep.subr.mxu0 %v5016
        %5140 = vmatpush1.msra.mxu0 %v5015
        %5141 = vmatprep.subr.mxu0 %v5018
        %5142 = vmatpush1.msra.mxu0 %v5017
        %5143 = vmatprep.subr.mxu0 %v5020
        %5144 = vmatpush1.msra.mxu0 %v5019
        %5145 = vmatprep.subr.mxu0 %v5022
        %5146 = vmatpush1.msra.mxu0 %v5021
        %5147 = vmatprep.subr.mxu0 %v5024
        %5148 = vmatpush1.msra.mxu0 %v5023
        %5149 = vmatprep.subr.mxu0 %v5026
        %5150 = vmatpush1.msra.mxu0 %v5025
        %5151 = vmatprep.subr.mxu0 %v5028
        %5152 = vmatpush1.msra.mxu0 %v5027
        %5153 = vmatprep.subr.mxu0 %v5030
        %5154 = vmatpush1.msra.mxu0 %v5029
        %5155 = vmatprep.subr.mxu0 %v5032
        %5156 = vmatpush1.msra.mxu0 %v5031
        %5157 = vmatprep.subr.mxu0 %v5034
        %5158 = vmatpush1.msra.mxu0 %v5033
        %5159 = vmatprep.subr.mxu0 %v5036
        %5160 = vmatpush1.msra.mxu0 %v5035
        %5161 = vmatprep.subr.mxu0 %v5038
        %5162 = vmatpush1.msra.mxu0 %v5037
        %5163 = vmatprep.subr.mxu0 %v5040
        %5164 = vmatpush1.msra.mxu0 %v5039
        %5165 = vmatprep.subr.mxu0 %v5042
        %5166 = vmatpush1.msra.mxu0 %v5041
        %5167 = vmatprep.subr.mxu0 %v5044
        %5168 = vmatpush1.msra.mxu0 %v5043
        %5169 = vmatprep.subr.mxu0 %v5046
        %5170 = vmatpush1.msra.mxu0 %v5045
        %5171 = vmatprep.subr.mxu0 %v5048
        %5172 = vmatpush1.msra.mxu0 %v5047
        %5173 = vmatprep.subr.mxu0 %v5050
        %5174 = vmatpush1.msra.mxu0 %v5049
        %5175 = vmatprep.subr.mxu0 %v5052
        %5176 = vmatpush1.msra.mxu0 %v5051
        %5177 = vmatprep.subr.mxu0 %v5054
        %5178 = vmatpush1.msra.mxu0 %v5053
        %5179 = vmatprep.subr.mxu0 %v5056
        %5180 = vmatpush1.msra.mxu0 %v5055
        %5181 = vmatprep.subr.mxu0 %v5058
        %5182 = vmatpush1.msra.mxu0 %v5057
        %5183 = vmatprep.subr.mxu0 %v5060
        %5184 = vmatpush1.msra.mxu0 %v5059
        %5185 = vmatprep.subr.mxu0 %v5062
        %5186 = vmatpush1.msra.mxu0 %v5061
        %5187 = vmatprep.subr.mxu0 %v5064
        %5188 = vmatpush1.msra.mxu0 %v5063
        %5189 = vmatprep.subr.mxu0 %v5066
        %5190 = vmatpush1.msra.mxu0 %v5065
        %5191 = vmatprep.subr.mxu0 %v5068
        %5192 = vmatpush1.msra.mxu0 %v5067
        %5193 = vmatprep.mubr.f32.mxu0 %v5002
        %5194 = vmatmul.mubr.f32.gmra.mrb[0].mxu0 %v5001
        %v5195 = vpop.f32.mrb[0].mxu0
        %v5196 = vadd.f32 0.0, %v5195
        %v5197 = vpop.f32.mrb[0].mxu0
        %v5198 = vadd.f32 0.0, %v5197
        %5199 = vdwg.mxu0
        %5200 = vmatprep.subr.mxu0 %v5070
        %5201 = vmatpush1.msra.mxu0 %v5069
        %5202 = vmatprep.subr.mxu0 %v5072
        %5203 = vmatpush1.msra.mxu0 %v5071
        %5204 = vmatprep.subr.mxu0 %v5074
        %5205 = vmatpush1.msra.mxu0 %v5073
        %5206 = vmatprep.subr.mxu0 %v5076
        %5207 = vmatpush1.msra.mxu0 %v5075
        %5208 = vmatprep.subr.mxu0 %v5078
        %5209 = vmatpush1.msra.mxu0 %v5077
        %5210 = vmatprep.subr.mxu0 %v5080
        %5211 = vmatpush1.msra.mxu0 %v5079
        %5212 = vmatprep.subr.mxu0 %v5082
        %5213 = vmatpush1.msra.mxu0 %v5081
        %5214 = vmatprep.subr.mxu0 %v5084
        %5215 = vmatpush1.msra.mxu0 %v5083
        %5216 = vmatprep.subr.mxu0 %v5086
        %5217 = vmatpush1.msra.mxu0 %v5085
        %5218 = vmatprep.subr.mxu0 %v5088
        %5219 = vmatpush1.msra.mxu0 %v5087
        %5220 = vmatprep.subr.mxu0 %v5090
        %5221 = vmatpush1.msra.mxu0 %v5089
        %5222 = vmatprep.subr.mxu0 %v5092
        %5223 = vmatpush1.msra.mxu0 %v5091
        %5224 = vmatprep.subr.mxu0 %v5094
        %5225 = vmatpush1.msra.mxu0 %v5093
        %5226 = vmatprep.subr.mxu0 %v5096
        %5227 = vmatpush1.msra.mxu0 %v5095
        %5228 = vmatprep.subr.mxu0 %v5098
        %5229 = vmatpush1.msra.mxu0 %v5097
        %5230 = vmatprep.subr.mxu0 %v5100
        %5231 = vmatpush1.msra.mxu0 %v5099
        %5232 = vmatprep.subr.mxu0 %v5102
        %5233 = vmatpush1.msra.mxu0 %v5101
        %5234 = vmatprep.subr.mxu0 %v5104
        %5235 = vmatpush1.msra.mxu0 %v5103
        %5236 = vmatprep.subr.mxu0 %v5106
        %5237 = vmatpush1.msra.mxu0 %v5105
        %5238 = vmatprep.subr.mxu0 %v5108
        %5239 = vmatpush1.msra.mxu0 %v5107
        %5240 = vmatprep.subr.mxu0 %v5110
        %5241 = vmatpush1.msra.mxu0 %v5109
        %5242 = vmatprep.subr.mxu0 %v5112
        %5243 = vmatpush1.msra.mxu0 %v5111
        %5244 = vmatprep.subr.mxu0 %v5114
        %5245 = vmatpush1.msra.mxu0 %v5113
        %5246 = vmatprep.subr.mxu0 %v5116
        %5247 = vmatpush1.msra.mxu0 %v5115
        %5248 = vmatprep.subr.mxu0 %v5118
        %5249 = vmatpush1.msra.mxu0 %v5117
        %5250 = vmatprep.subr.mxu0 %v5120
        %5251 = vmatpush1.msra.mxu0 %v5119
        %5252 = vmatprep.subr.mxu0 %v5122
        %5253 = vmatpush1.msra.mxu0 %v5121
        %5254 = vmatprep.subr.mxu0 %v5124
        %5255 = vmatpush1.msra.mxu0 %v5123
        %5256 = vmatprep.subr.mxu0 0.0
        %5257 = vmatpush1.msra.mxu0 0.0
        %5258 = vmatprep.subr.mxu0 0.0
        %5259 = vmatpush1.msra.mxu0 0.0
        %5260 = vmatprep.subr.mxu0 0.0
        %5261 = vmatpush1.msra.mxu0 0.0
        %5262 = vmatprep.subr.mxu0 0.0
        %5263 = vmatpush1.msra.mxu0 0.0
        %5264 = vmatprep.mubr.f32.mxu0 %v5127
        %5265 = vmatmul.mubr.f32.gmra.mrb[0].mxu0 %v5003
        %v5266 = vpop.f32.mrb[0].mxu0
        %v5267 = vadd.f32 %v5196, %v5266
        %v5268 = vpop.f32.mrb[0].mxu0
        %v5269 = vadd.f32 %v5198, %v5268
        %5270 = vdwg.mxu0
        %v5271 = vld [vmem:[%s9] sm:$0xff]
        %v5272 = vld [vmem:[%s9 + $0x8] sm:$0xff]
        %v5273 = vld [vmem:[%s9 + $0x10] sm:$0xff]
        %v5274 = vld [vmem:[%s9 + $0x18] sm:$0xff]
        %v5275 = vld [vmem:[%s9 + $0x20] sm:$0xff]
        %v5276 = vld [vmem:[%s9 + $0x28] sm:$0xff]
        %v5277 = vld [vmem:[%s9 + $0x30] sm:$0xff]
        %v5278 = vld [vmem:[%s9 + $0x38] sm:$0xff]
        %v5279 = vld [vmem:[%s9 + $0x40] sm:$0xff]
        %v5280 = vld [vmem:[%s9 + $0x48] sm:$0xff]
        %v5281 = vld [vmem:[%s9 + $0x50] sm:$0xff]
        %v5282 = vld [vmem:[%s9 + $0x58] sm:$0xff]
        %v5283 = vld [vmem:[%s9 + $0x60] sm:$0xff]
        %v5284 = vld [vmem:[%s9 + $0x68] sm:$0xff]
        %v5285 = vld [vmem:[%s9 + $0x70] sm:$0xff]
        %v5286 = vld [vmem:[%s9 + $0x78] sm:$0xff]
        %v5287 = vld [vmem:[%s9 + $0x80] sm:$0xff]
        %v5288 = vld [vmem:[%s9 + $0x88] sm:$0xff]
        %v5289 = vld [vmem:[%s9 + $0x90] sm:$0xff]
        %v5290 = vld [vmem:[%s9 + $0x98] sm:$0xff]
        %v5291 = vld [vmem:[%s9 + $0xa0] sm:$0xff]
        %v5292 = vld [vmem:[%s9 + $0xa8] sm:$0xff]
        %v5293 = vld [vmem:[%s9 + $0xb0] sm:$0xff]
        %v5294 = vld [vmem:[%s9 + $0xb8] sm:$0xff]
        %v5295 = vld [vmem:[%s9 + $0xc0] sm:$0xff]
        %v5296 = vld [vmem:[%s9 + $0xc8] sm:$0xff]
        %v5297 = vld [vmem:[%s9 + $0xd0] sm:$0xff]
        %v5298 = vld [vmem:[%s9 + $0xd8] sm:$0xff]
        %v5299 = vld [vmem:[%s9 + $0xe0] sm:$0xff]
        %v5300 = vld [vmem:[%s9 + $0xe8] sm:$0xff]
        %v5301 = vld [vmem:[%s9 + $0xf0] sm:$0xff]
        %v5302 = vld [vmem:[%s9 + $0xf8] sm:$0xff]
        %v5303 = vld [vmem:[%s9 + $0x100] sm:$0xff]
        %v5304 = vld [vmem:[%s9 + $0x108] sm:$0xff]
        %v5305 = vld [vmem:[%s9 + $0x110] sm:$0xff]
        %v5306 = vld [vmem:[%s9 + $0x118] sm:$0xff]
        %v5307 = vld [vmem:[%s9 + $0x120] sm:$0xff]
        %v5308 = vld [vmem:[%s9 + $0x128] sm:$0xff]
        %v5309 = vld [vmem:[%s9 + $0x130] sm:$0xff]
        %v5310 = vld [vmem:[%s9 + $0x138] sm:$0xff]
        %v5311 = vld [vmem:[%s9 + $0x140] sm:$0xff]
        %v5312 = vld [vmem:[%s9 + $0x148] sm:$0xff]
        %v5313 = vld [vmem:[%s9 + $0x150] sm:$0xff]
        %v5314 = vld [vmem:[%s9 + $0x158] sm:$0xff]
        %v5315 = vld [vmem:[%s9 + $0x160] sm:$0xff]
        %v5316 = vld [vmem:[%s9 + $0x168] sm:$0xff]
        %v5317 = vld [vmem:[%s9 + $0x170] sm:$0xff]
        %v5318 = vld [vmem:[%s9 + $0x178] sm:$0xff]
        %v5319 = vld [vmem:[%s9 + $0x180] sm:$0xff]
        %v5320 = vld [vmem:[%s9 + $0x188] sm:$0xff]
        %v5321 = vld [vmem:[%s9 + $0x190] sm:$0xff]
        %v5322 = vld [vmem:[%s9 + $0x198] sm:$0xff]
        %v5323 = vld [vmem:[%s9 + $0x1a0] sm:$0xff]
        %v5324 = vld [vmem:[%s9 + $0x1a8] sm:$0xff]
        %v5325 = vld [vmem:[%s9 + $0x1b0] sm:$0xff]
        %v5326 = vld [vmem:[%s9 + $0x1b8] sm:$0xff]
        %v5327 = vld [vmem:[%s9 + $0x1c0] sm:$0xff]
        %v5328 = vld [vmem:[%s9 + $0x1c8] sm:$0xff]
        %v5329 = vld [vmem:[%s9 + $0x1d0] sm:$0xff]
        %v5330 = vld [vmem:[%s9 + $0x1d8] sm:$0xff]
        %s5331 = scalar_lea.vmem %s9, 480
        %v5332 = vld [vmem:[%s5331] sm:$0xff]
        %v5333 = vld [vmem:[%s5331 + $0x8] sm:$0xff]
        %v5334 = vld [vmem:[%s5331 + $0x10] sm:$0xff]
        %v5335 = vld [vmem:[%s5331 + $0x18] sm:$0xff]
        %v5336 = vld [vmem:[%s5331 + $0x20] sm:$0xff]
        %v5337 = vld [vmem:[%s5331 + $0x28] sm:$0xff]
        %v5338 = vld [vmem:[%s5331 + $0x30] sm:$0xff]
        %v5339 = vld [vmem:[%s5331 + $0x38] sm:$0xff]
        %v5340 = vld [vmem:[%s5331 + $0x40] sm:$0xff]
        %v5341 = vld [vmem:[%s5331 + $0x48] sm:$0xff]
        %v5342 = vld [vmem:[%s5331 + $0x50] sm:$0xff]
        %v5343 = vld [vmem:[%s5331 + $0x58] sm:$0xff]
        %v5344 = vld [vmem:[%s5331 + $0x60] sm:$0xff]
        %v5345 = vld [vmem:[%s5331 + $0x68] sm:$0xff]
        %v5346 = vld [vmem:[%s5331 + $0x70] sm:$0xff]
        %v5347 = vld [vmem:[%s5331 + $0x78] sm:$0xff]
        %v5348 = vld [vmem:[%s5331 + $0x80] sm:$0xff]
        %v5349 = vld [vmem:[%s5331 + $0x88] sm:$0xff]
        %v5350 = vld [vmem:[%s5331 + $0x90] sm:$0xff]
        %v5351 = vld [vmem:[%s5331 + $0x98] sm:$0xff]
        %v5352 = vld [vmem:[%s5331 + $0xa0] sm:$0xff]
        %v5353 = vld [vmem:[%s5331 + $0xa8] sm:$0xff]
        %v5354 = vld [vmem:[%s5331 + $0xb0] sm:$0xff]
        %v5355 = vld [vmem:[%s5331 + $0xb8] sm:$0xff]
        %v5356 = vld [vmem:[%s5331 + $0xc0] sm:$0xff]
        %v5357 = vld [vmem:[%s5331 + $0xc8] sm:$0xff]
        %v5358 = vld [vmem:[%s5331 + $0xd0] sm:$0xff]
        %v5359 = vld [vmem:[%s5331 + $0xd8] sm:$0xff]
        %v5360 = vld [vmem:[%s5331 + $0xe0] sm:$0xff]
        %v5361 = vld [vmem:[%s5331 + $0xe8] sm:$0xff]
        %v5362 = vld [vmem:[%s5331 + $0xf0] sm:$0xff]
        %v5363 = vld [vmem:[%s5331 + $0xf8] sm:$0xff]
        %v5364 = vld [vmem:[%s5331 + $0x100] sm:$0xff]
        %v5365 = vld [vmem:[%s5331 + $0x108] sm:$0xff]
        %v5366 = vld [vmem:[%s5331 + $0x110] sm:$0xff]
        %v5367 = vld [vmem:[%s5331 + $0x118] sm:$0xff]
        %v5368 = vld [vmem:[%s5331 + $0x120] sm:$0xff]
        %v5369 = vld [vmem:[%s5331 + $0x128] sm:$0xff]
        %v5370 = vld [vmem:[%s5331 + $0x130] sm:$0xff]
        %v5371 = vld [vmem:[%s5331 + $0x138] sm:$0xff]
        %v5372 = vld [vmem:[%s5331 + $0x140] sm:$0xff]
        %v5373 = vld [vmem:[%s5331 + $0x148] sm:$0xff]
        %v5374 = vld [vmem:[%s5331 + $0x150] sm:$0xff]
        %v5375 = vld [vmem:[%s5331 + $0x158] sm:$0xff]
        %v5376 = vld [vmem:[%s5331 + $0x160] sm:$0xff]
        %v5377 = vld [vmem:[%s5331 + $0x168] sm:$0xff]
        %v5378 = vld [vmem:[%s5331 + $0x170] sm:$0xff]
        %v5379 = vld [vmem:[%s5331 + $0x178] sm:$0xff]
        %v5380 = vld [vmem:[%s5331 + $0x180] sm:$0xff]
        %v5381 = vld [vmem:[%s5331 + $0x188] sm:$0xff]
        %v5382 = vld [vmem:[%s5331 + $0x190] sm:$0xff]
        %v5383 = vld [vmem:[%s5331 + $0x198] sm:$0xff]
        %v5384 = vld [vmem:[%s5331 + $0x1a0] sm:$0xff]
        %v5385 = vld [vmem:[%s5331 + $0x1a8] sm:$0xff]
        %v5386 = vld [vmem:[%s5331 + $0x1b0] sm:$0xff]
        %v5387 = vld [vmem:[%s5331 + $0x1b8] sm:$0xff]
        %v5388 = vld [vmem:[%s5331 + $0x1c0] sm:$0xff]
        %v5389 = vld [vmem:[%s5331 + $0x1c8] sm:$0xff]
        %v5390 = vld [vmem:[%s5331 + $0x1d0] sm:$0xff]
        %v5391 = vld [vmem:[%s5331 + $0x1d8] sm:$0xff]
        %v5394 = vrot.slane %v5267, 1
        %v5395 = vrot.slane %v5269, 1
        %vm5397 = vcmask 916480
        %v5398 = vsel %vm5397, %v5395, 0
        %5400 = vmatprep.subr.mxu0 %v5333
        %5401 = vmatpush1.msra.mxu0 %v5332
        %5402 = vmatprep.subr.mxu0 %v5335
        %5403 = vmatpush1.msra.mxu0 %v5334
        %5404 = vmatprep.subr.mxu0 %v5337
        %5405 = vmatpush1.msra.mxu0 %v5336
        %5406 = vmatprep.subr.mxu0 %v5339
        %5407 = vmatpush1.msra.mxu0 %v5338
        %5408 = vmatprep.subr.mxu0 %v5341
        %5409 = vmatpush1.msra.mxu0 %v5340
        %5410 = vmatprep.subr.mxu0 %v5343
        %5411 = vmatpush1.msra.mxu0 %v5342
        %5412 = vmatprep.subr.mxu0 %v5345
        %5413 = vmatpush1.msra.mxu0 %v5344
        %5414 = vmatprep.subr.mxu0 %v5347
        %5415 = vmatpush1.msra.mxu0 %v5346
        %5416 = vmatprep.subr.mxu0 %v5349
        %5417 = vmatpush1.msra.mxu0 %v5348
        %5418 = vmatprep.subr.mxu0 %v5351
        %5419 = vmatpush1.msra.mxu0 %v5350
        %5420 = vmatprep.subr.mxu0 %v5353
        %5421 = vmatpush1.msra.mxu0 %v5352
        %5422 = vmatprep.subr.mxu0 %v5355
        %5423 = vmatpush1.msra.mxu0 %v5354
        %5424 = vmatprep.subr.mxu0 %v5357
        %5425 = vmatpush1.msra.mxu0 %v5356
        %5426 = vmatprep.subr.mxu0 %v5359
        %5427 = vmatpush1.msra.mxu0 %v5358
        %5428 = vmatprep.subr.mxu0 %v5361
        %5429 = vmatpush1.msra.mxu0 %v5360
        %5430 = vmatprep.subr.mxu0 %v5363
        %5431 = vmatpush1.msra.mxu0 %v5362
        %5432 = vmatprep.subr.mxu0 %v5365
        %5433 = vmatpush1.msra.mxu0 %v5364
        %5434 = vmatprep.subr.mxu0 %v5367
        %5435 = vmatpush1.msra.mxu0 %v5366
        %5436 = vmatprep.subr.mxu0 %v5369
        %5437 = vmatpush1.msra.mxu0 %v5368
        %5438 = vmatprep.subr.mxu0 %v5371
        %5439 = vmatpush1.msra.mxu0 %v5370
        %5440 = vmatprep.subr.mxu0 %v5373
        %5441 = vmatpush1.msra.mxu0 %v5372
        %5442 = vmatprep.subr.mxu0 %v5375
        %5443 = vmatpush1.msra.mxu0 %v5374
        %5444 = vmatprep.subr.mxu0 %v5377
        %5445 = vmatpush1.msra.mxu0 %v5376
        %5446 = vmatprep.subr.mxu0 %v5379
        %5447 = vmatpush1.msra.mxu0 %v5378
        %5448 = vmatprep.subr.mxu0 %v5381
        %5449 = vmatpush1.msra.mxu0 %v5380
        %5450 = vmatprep.subr.mxu0 %v5383
        %5451 = vmatpush1.msra.mxu0 %v5382
        %5452 = vmatprep.subr.mxu0 %v5385
        %5453 = vmatpush1.msra.mxu0 %v5384
        %5454 = vmatprep.subr.mxu0 %v5387
        %5455 = vmatpush1.msra.mxu0 %v5386
        %5456 = vmatprep.subr.mxu0 %v5389
        %5457 = vmatpush1.msra.mxu0 %v5388
        %5458 = vmatprep.subr.mxu0 %v5391
        %5459 = vmatpush1.msra.mxu0 %v5390
        %5460 = vmatprep.subr.mxu0 0.0
        %5461 = vmatpush1.msra.mxu0 0.0
        %5462 = vmatprep.subr.mxu0 0.0
        %5463 = vmatpush1.msra.mxu0 0.0
        %5464 = vmatprep.mubr.f32.mxu0 %v5398
        %5465 = vmatmul.mubr.f32.gmra.mrb[0].mxu0 %v5394
        %v5466 = vpop.f32.mrb[0].mxu0
        %v5467 = vadd.f32 0.0, %v5466
        %v5468 = vpop.f32.mrb[0].mxu0
        %v5469 = vadd.f32 0.0, %v5468
        %5470 = vdwg.mxu0
        %v5471 = vsel %vm5397, %v5269, 0
        %5473 = vmatprep.subr.mxu0 %v5272
        %5474 = vmatpush1.msra.mxu0 %v5271
        %5475 = vmatprep.subr.mxu0 %v5274
        %5476 = vmatpush1.msra.mxu0 %v5273
        %5477 = vmatprep.subr.mxu0 %v5276
        %5478 = vmatpush1.msra.mxu0 %v5275
        %5479 = vmatprep.subr.mxu0 %v5278
        %5480 = vmatpush1.msra.mxu0 %v5277
        %5481 = vmatprep.subr.mxu0 %v5280
        %5482 = vmatpush1.msra.mxu0 %v5279
        %5483 = vmatprep.subr.mxu0 %v5282
        %5484 = vmatpush1.msra.mxu0 %v5281
        %5485 = vmatprep.subr.mxu0 %v5284
        %5486 = vmatpush1.msra.mxu0 %v5283
        %5487 = vmatprep.subr.mxu0 %v5286
        %5488 = vmatpush1.msra.mxu0 %v5285
        %5489 = vmatprep.subr.mxu0 %v5288
        %5490 = vmatpush1.msra.mxu0 %v5287
        %5491 = vmatprep.subr.mxu0 %v5290
        %5492 = vmatpush1.msra.mxu0 %v5289
        %5493 = vmatprep.subr.mxu0 %v5292
        %5494 = vmatpush1.msra.mxu0 %v5291
        %5495 = vmatprep.subr.mxu0 %v5294
        %5496 = vmatpush1.msra.mxu0 %v5293
        %5497 = vmatprep.subr.mxu0 %v5296
        %5498 = vmatpush1.msra.mxu0 %v5295
        %5499 = vmatprep.subr.mxu0 %v5298
        %5500 = vmatpush1.msra.mxu0 %v5297
        %5501 = vmatprep.subr.mxu0 %v5300
        %5502 = vmatpush1.msra.mxu0 %v5299
        %5503 = vmatprep.subr.mxu0 %v5302
        %5504 = vmatpush1.msra.mxu0 %v5301
        %5505 = vmatprep.subr.mxu0 %v5304
        %5506 = vmatpush1.msra.mxu0 %v5303
        %5507 = vmatprep.subr.mxu0 %v5306
        %5508 = vmatpush1.msra.mxu0 %v5305
        %5509 = vmatprep.subr.mxu0 %v5308
        %5510 = vmatpush1.msra.mxu0 %v5307
        %5511 = vmatprep.subr.mxu0 %v5310
        %5512 = vmatpush1.msra.mxu0 %v5309
        %5513 = vmatprep.subr.mxu0 %v5312
        %5514 = vmatpush1.msra.mxu0 %v5311
        %5515 = vmatprep.subr.mxu0 %v5314
        %5516 = vmatpush1.msra.mxu0 %v5313
        %5517 = vmatprep.subr.mxu0 %v5316
        %5518 = vmatpush1.msra.mxu0 %v5315
        %5519 = vmatprep.subr.mxu0 %v5318
        %5520 = vmatpush1.msra.mxu0 %v5317
        %5521 = vmatprep.subr.mxu0 %v5320
        %5522 = vmatpush1.msra.mxu0 %v5319
        %5523 = vmatprep.subr.mxu0 %v5322
        %5524 = vmatpush1.msra.mxu0 %v5321
        %5525 = vmatprep.subr.mxu0 %v5324
        %5526 = vmatpush1.msra.mxu0 %v5323
        %5527 = vmatprep.subr.mxu0 %v5326
        %5528 = vmatpush1.msra.mxu0 %v5325
        %5529 = vmatprep.subr.mxu0 %v5328
        %5530 = vmatpush1.msra.mxu0 %v5327
        %5531 = vmatprep.subr.mxu0 %v5330
        %5532 = vmatpush1.msra.mxu0 %v5329
        %5533 = vmatprep.subr.mxu0 0.0
        %5534 = vmatpush1.msra.mxu0 0.0
        %5535 = vmatprep.subr.mxu0 0.0
        %5536 = vmatpush1.msra.mxu0 0.0
        %5537 = vmatprep.mubr.f32.mxu0 %v5471
        %5538 = vmatmul.mubr.f32.gmra.mrb[0].mxu0 %v5267
        %v5539 = vpop.f32.mrb[0].mxu0
        %v5540 = vadd.f32 %v5467, %v5539
        %v5541 = vpop.f32.mrb[0].mxu0
        %v5542 = vadd.f32 %v5469, %v5541
        %5543 = vdwg.mxu0
        %s5544 = scalar_lea.vmem %s9, 960
        %v5545 = vld [vmem:[%s5544] sm:$0xff]
        %v5546 = vld [vmem:[%s5544 + $0x8] sm:$0xff]
        %v5547 = vld [vmem:[%s5544 + $0x10] sm:$0xff]
        %v5548 = vld [vmem:[%s5544 + $0x18] sm:$0xff]
        %v5549 = vld [vmem:[%s5544 + $0x20] sm:$0xff]
        %v5550 = vld [vmem:[%s5544 + $0x28] sm:$0xff]
        %v5551 = vld [vmem:[%s5544 + $0x30] sm:$0xff]
        %v5552 = vld [vmem:[%s5544 + $0x38] sm:$0xff]
        %v5553 = vld [vmem:[%s5544 + $0x40] sm:$0xff]
        %v5554 = vld [vmem:[%s5544 + $0x48] sm:$0xff]
        %v5555 = vld [vmem:[%s5544 + $0x50] sm:$0xff]
        %v5556 = vld [vmem:[%s5544 + $0x58] sm:$0xff]
        %v5557 = vld [vmem:[%s5544 + $0x60] sm:$0xff]
        %v5558 = vld [vmem:[%s5544 + $0x68] sm:$0xff]
        %v5559 = vld [vmem:[%s5544 + $0x70] sm:$0xff]
        %v5560 = vld [vmem:[%s5544 + $0x78] sm:$0xff]
        %v5561 = vld [vmem:[%s5544 + $0x80] sm:$0xff]
        %v5562 = vld [vmem:[%s5544 + $0x88] sm:$0xff]
        %v5563 = vld [vmem:[%s5544 + $0x90] sm:$0xff]
        %v5564 = vld [vmem:[%s5544 + $0x98] sm:$0xff]
        %v5565 = vld [vmem:[%s5544 + $0xa0] sm:$0xff]
        %v5566 = vld [vmem:[%s5544 + $0xa8] sm:$0xff]
        %v5567 = vld [vmem:[%s5544 + $0xb0] sm:$0xff]
        %v5568 = vld [vmem:[%s5544 + $0xb8] sm:$0xff]
        %v5569 = vld [vmem:[%s5544 + $0xc0] sm:$0xff]
        %v5570 = vld [vmem:[%s5544 + $0xc8] sm:$0xff]
        %v5571 = vld [vmem:[%s5544 + $0xd0] sm:$0xff]
        %v5572 = vld [vmem:[%s5544 + $0xd8] sm:$0xff]
        %v5573 = vld [vmem:[%s5544 + $0xe0] sm:$0xff]
        %v5574 = vld [vmem:[%s5544 + $0xe8] sm:$0xff]
        %v5575 = vld [vmem:[%s5544 + $0xf0] sm:$0xff]
        %v5576 = vld [vmem:[%s5544 + $0xf8] sm:$0xff]
        %v5577 = vld [vmem:[%s5544 + $0x100] sm:$0xff]
        %v5578 = vld [vmem:[%s5544 + $0x108] sm:$0xff]
        %v5579 = vld [vmem:[%s5544 + $0x110] sm:$0xff]
        %v5580 = vld [vmem:[%s5544 + $0x118] sm:$0xff]
        %v5581 = vld [vmem:[%s5544 + $0x120] sm:$0xff]
        %v5582 = vld [vmem:[%s5544 + $0x128] sm:$0xff]
        %v5583 = vld [vmem:[%s5544 + $0x130] sm:$0xff]
        %v5584 = vld [vmem:[%s5544 + $0x138] sm:$0xff]
        %v5585 = vld [vmem:[%s5544 + $0x140] sm:$0xff]
        %v5586 = vld [vmem:[%s5544 + $0x148] sm:$0xff]
        %v5587 = vld [vmem:[%s5544 + $0x150] sm:$0xff]
        %v5588 = vld [vmem:[%s5544 + $0x158] sm:$0xff]
        %v5589 = vld [vmem:[%s5544 + $0x160] sm:$0xff]
        %v5590 = vld [vmem:[%s5544 + $0x168] sm:$0xff]
        %v5591 = vld [vmem:[%s5544 + $0x170] sm:$0xff]
        %v5592 = vld [vmem:[%s5544 + $0x178] sm:$0xff]
        %v5593 = vld [vmem:[%s5544 + $0x180] sm:$0xff]
        %v5594 = vld [vmem:[%s5544 + $0x188] sm:$0xff]
        %v5595 = vld [vmem:[%s5544 + $0x190] sm:$0xff]
        %v5596 = vld [vmem:[%s5544 + $0x198] sm:$0xff]
        %v5597 = vld [vmem:[%s5544 + $0x1a0] sm:$0xff]
        %v5598 = vld [vmem:[%s5544 + $0x1a8] sm:$0xff]
        %v5599 = vld [vmem:[%s5544 + $0x1b0] sm:$0xff]
        %v5600 = vld [vmem:[%s5544 + $0x1b8] sm:$0xff]
        %v5601 = vld [vmem:[%s5544 + $0x1c0] sm:$0xff]
        %v5602 = vld [vmem:[%s5544 + $0x1c8] sm:$0xff]
        %v5603 = vld [vmem:[%s5544 + $0x1d0] sm:$0xff]
        %v5604 = vld [vmem:[%s5544 + $0x1d8] sm:$0xff]
        %v5605 = vrot.slane %v5267, 2
        %v5606 = vrot.slane %v5269, 2
        %v5608 = vsel %vm5397, %v5606, 0
        %5610 = vmatprep.subr.mxu0 %v5546
        %5611 = vmatpush1.msra.mxu0 %v5545
        %5612 = vmatprep.subr.mxu0 %v5548
        %5613 = vmatpush1.msra.mxu0 %v5547
        %5614 = vmatprep.subr.mxu0 %v5550
        %5615 = vmatpush1.msra.mxu0 %v5549
        %5616 = vmatprep.subr.mxu0 %v5552
        %5617 = vmatpush1.msra.mxu0 %v5551
        %5618 = vmatprep.subr.mxu0 %v5554
        %5619 = vmatpush1.msra.mxu0 %v5553
        %5620 = vmatprep.subr.mxu0 %v5556
        %5621 = vmatpush1.msra.mxu0 %v5555
        %5622 = vmatprep.subr.mxu0 %v5558
        %5623 = vmatpush1.msra.mxu0 %v5557
        %5624 = vmatprep.subr.mxu0 %v5560
        %5625 = vmatpush1.msra.mxu0 %v5559
        %5626 = vmatprep.subr.mxu0 %v5562
        %5627 = vmatpush1.msra.mxu0 %v5561
        %5628 = vmatprep.subr.mxu0 %v5564
        %5629 = vmatpush1.msra.mxu0 %v5563
        %5630 = vmatprep.subr.mxu0 %v5566
        %5631 = vmatpush1.msra.mxu0 %v5565
        %5632 = vmatprep.subr.mxu0 %v5568
        %5633 = vmatpush1.msra.mxu0 %v5567
        %5634 = vmatprep.subr.mxu0 %v5570
        %5635 = vmatpush1.msra.mxu0 %v5569
        %5636 = vmatprep.subr.mxu0 %v5572
        %5637 = vmatpush1.msra.mxu0 %v5571
        %5638 = vmatprep.subr.mxu0 %v5574
        %5639 = vmatpush1.msra.mxu0 %v5573
        %5640 = vmatprep.subr.mxu0 %v5576
        %5641 = vmatpush1.msra.mxu0 %v5575
        %5642 = vmatprep.subr.mxu0 %v5578
        %5643 = vmatpush1.msra.mxu0 %v5577
        %5644 = vmatprep.subr.mxu0 %v5580
        %5645 = vmatpush1.msra.mxu0 %v5579
        %5646 = vmatprep.subr.mxu0 %v5582
        %5647 = vmatpush1.msra.mxu0 %v5581
        %5648 = vmatprep.subr.mxu0 %v5584
        %5649 = vmatpush1.msra.mxu0 %v5583
        %5650 = vmatprep.subr.mxu0 %v5586
        %5651 = vmatpush1.msra.mxu0 %v5585
        %5652 = vmatprep.subr.mxu0 %v5588
        %5653 = vmatpush1.msra.mxu0 %v5587
        %5654 = vmatprep.subr.mxu0 %v5590
        %5655 = vmatpush1.msra.mxu0 %v5589
        %5656 = vmatprep.subr.mxu0 %v5592
        %5657 = vmatpush1.msra.mxu0 %v5591
        %5658 = vmatprep.subr.mxu0 %v5594
        %5659 = vmatpush1.msra.mxu0 %v5593
        %5660 = vmatprep.subr.mxu0 %v5596
        %5661 = vmatpush1.msra.mxu0 %v5595
        %5662 = vmatprep.subr.mxu0 %v5598
        %5663 = vmatpush1.msra.mxu0 %v5597
        %5664 = vmatprep.subr.mxu0 %v5600
        %5665 = vmatpush1.msra.mxu0 %v5599
        %5666 = vmatprep.subr.mxu0 %v5602
        %5667 = vmatpush1.msra.mxu0 %v5601
        %5668 = vmatprep.subr.mxu0 %v5604
        %5669 = vmatpush1.msra.mxu0 %v5603
        %5670 = vmatprep.subr.mxu0 0.0
        %5671 = vmatpush1.msra.mxu0 0.0
        %5672 = vmatprep.subr.mxu0 0.0
        %5673 = vmatpush1.msra.mxu0 0.0
        %5674 = vmatprep.mubr.f32.mxu0 %v5608
        %5675 = vmatmul.mubr.f32.gmra.mrb[0].mxu0 %v5605
        %v5676 = vpop.f32.mrb[0].mxu0
        %v5677 = vadd.f32 0.0, %v5676
        %v5678 = vpop.f32.mrb[0].mxu0
        %v5679 = vadd.f32 0.0, %v5678
        %5680 = vdwg.mxu0
        %v5681 = vadd.f32 %v5540, %v5677
        %v5682 = vadd.f32 %v5542, %v5679
        %v5683 = vld [vmem:[%s10] sm:$0x3]
        %v5685 = vlaneseq
        %v5686 = vshrl.u32 %v5685, 7
        %v5687 = vsub.s32 0, %v5686
        %v5688 = vrot.slane %v5683, %v5687
        %v5689 = vlaneseq
        %v5690 = vshrl.u32 %v5689, 7
        %v5691 = vsub.s32 1, %v5690
        %v5692 = vrot.slane %v5683, %v5691
        %v5695 = vadd.f32 %v5681, %v5688
        %v5696 = vadd.f32 %v5682, %v5692
        %v5697 = vmax.f32 %v5695, 0.0
        %v5698 = vmax.f32 %v5696, 0.0
        %v5699 = vld [vmem:[%s12] sm:$0x1f]
        %v5700 = vld [vmem:[#allocation2] sm:$0xff]
        %v5701 = vld [vmem:[#allocation2 + $0x8] sm:$0xff]
        %v5702 = vld [vmem:[#allocation2 + $0x10] sm:$0xff]
        %v5703 = vld [vmem:[#allocation2 + $0x18] sm:$0xff]
        %v5704 = vld [vmem:[#allocation2 + $0x20] sm:$0xff]
        %v5705 = vld [vmem:[#allocation2 + $0x28] sm:$0xff]
        %v5706 = vld [vmem:[#allocation2 + $0x30] sm:$0xff]
        %v5707 = vld [vmem:[#allocation2 + $0x38] sm:$0xff]
        %v5708 = vld [vmem:[#allocation2 + $0x40] sm:$0xff]
        %v5709 = vld [vmem:[#allocation2 + $0x48] sm:$0xff]
        %v5710 = vld [vmem:[#allocation2 + $0x50] sm:$0xff]
        %v5711 = vld [vmem:[#allocation2 + $0x58] sm:$0xff]
        %v5712 = vld [vmem:[#allocation2 + $0x60] sm:$0xff]
        %v5713 = vld [vmem:[#allocation2 + $0x68] sm:$0xff]
        %v5714 = vld [vmem:[#allocation2 + $0x70] sm:$0xff]
        %v5715 = vld [vmem:[#allocation2 + $0x78] sm:$0xff]
        %v5716 = vld [vmem:[#allocation2 + $0x80] sm:$0xff]
        %v5717 = vld [vmem:[#allocation2 + $0x88] sm:$0xff]
        %v5718 = vld [vmem:[#allocation2 + $0x90] sm:$0xff]
        %v5719 = vld [vmem:[#allocation2 + $0x98] sm:$0xff]
        %v5720 = vld [vmem:[#allocation2 + $0xa0] sm:$0xff]
        %v5721 = vld [vmem:[#allocation2 + $0xa8] sm:$0xff]
        %v5722 = vld [vmem:[#allocation2 + $0xb0] sm:$0xff]
        %v5723 = vld [vmem:[#allocation2 + $0xb8] sm:$0xff]
        %v5724 = vld [vmem:[#allocation2 + $0xc0] sm:$0xff]
        %v5725 = vld [vmem:[#allocation2 + $0xc8] sm:$0xff]
        %v5726 = vld [vmem:[#allocation2 + $0xd0] sm:$0xff]
        %v5727 = vld [vmem:[#allocation2 + $0xd8] sm:$0xff]
        %v5728 = vld [vmem:[#allocation2 + $0xe0] sm:$0xff]
        %v5729 = vld [vmem:[#allocation2 + $0xe8] sm:$0xff]
        %v5730 = vld [vmem:[#allocation2 + $0xf0] sm:$0xff]
        %v5731 = vld [vmem:[#allocation2 + $0xf8] sm:$0xff]
        %v5732 = vld [vmem:[#allocation2 + $0x100] sm:$0xff]
        %v5733 = vld [vmem:[#allocation2 + $0x108] sm:$0xff]
        %v5734 = vld [vmem:[#allocation2 + $0x110] sm:$0xff]
        %v5735 = vld [vmem:[#allocation2 + $0x118] sm:$0xff]
        %v5736 = vld [vmem:[#allocation2 + $0x120] sm:$0xff]
        %v5737 = vld [vmem:[#allocation2 + $0x128] sm:$0xff]
        %v5738 = vld [vmem:[#allocation2 + $0x130] sm:$0xff]
        %v5739 = vld [vmem:[#allocation2 + $0x138] sm:$0xff]
        %v5740 = vld [vmem:[#allocation2 + $0x140] sm:$0xff]
        %v5741 = vld [vmem:[#allocation2 + $0x148] sm:$0xff]
        %v5742 = vld [vmem:[#allocation2 + $0x150] sm:$0xff]
        %v5743 = vld [vmem:[#allocation2 + $0x158] sm:$0xff]
        %v5744 = vld [vmem:[#allocation2 + $0x160] sm:$0xff]
        %v5745 = vld [vmem:[#allocation2 + $0x168] sm:$0xff]
        %v5746 = vld [vmem:[#allocation2 + $0x170] sm:$0xff]
        %v5747 = vld [vmem:[#allocation2 + $0x178] sm:$0xff]
        %v5748 = vld [vmem:[#allocation2 + $0x180] sm:$0xff]
        %v5749 = vld [vmem:[#allocation2 + $0x188] sm:$0xff]
        %v5750 = vld [vmem:[#allocation2 + $0x190] sm:$0xff]
        %v5751 = vld [vmem:[#allocation2 + $0x198] sm:$0xff]
        %v5752 = vld [vmem:[#allocation2 + $0x1a0] sm:$0xff]
        %v5753 = vld [vmem:[#allocation2 + $0x1a8] sm:$0xff]
        %v5754 = vld [vmem:[#allocation2 + $0x1b0] sm:$0xff]
        %v5755 = vld [vmem:[#allocation2 + $0x1b8] sm:$0xff]
        %v5756 = vld [vmem:[#allocation2 + $0x1c0] sm:$0xff]
        %v5757 = vld [vmem:[#allocation2 + $0x1c8] sm:$0xff]
        %v5758 = vld [vmem:[#allocation2 + $0x1d0] sm:$0xff]
        %v5759 = vld [vmem:[#allocation2 + $0x1d8] sm:$0xff]
        %v5760 = vld [vmem:[#allocation2 + $0x1e0] sm:$0xff]
        %v5761 = vld [vmem:[#allocation2 + $0x1e8] sm:$0xff]
        %v5762 = vld [vmem:[#allocation2 + $0x1f0] sm:$0xff]
        %v5763 = vld [vmem:[#allocation2 + $0x1f8] sm:$0xff]
        %v5764 = vld [vmem:[#allocation2 + $0x200] sm:$0xff]
        %v5765 = vld [vmem:[#allocation2 + $0x208] sm:$0xff]
        %v5766 = vld [vmem:[#allocation2 + $0x210] sm:$0xff]
        %v5767 = vld [vmem:[#allocation2 + $0x218] sm:$0xff]
        %v5768 = vld [vmem:[#allocation2 + $0x220] sm:$0xff]
        %v5769 = vld [vmem:[#allocation2 + $0x228] sm:$0xff]
        %v5770 = vld [vmem:[#allocation2 + $0x230] sm:$0xff]
        %v5771 = vld [vmem:[#allocation2 + $0x238] sm:$0xff]
        %v5772 = vld [vmem:[#allocation2 + $0x240] sm:$0xff]
        %v5773 = vld [vmem:[#allocation2 + $0x248] sm:$0xff]
        %v5774 = vld [vmem:[#allocation2 + $0x250] sm:$0xff]
        %v5775 = vld [vmem:[#allocation2 + $0x258] sm:$0xff]
        %v5776 = vld [vmem:[#allocation2 + $0x260] sm:$0xff]
        %v5777 = vld [vmem:[#allocation2 + $0x268] sm:$0xff]
        %v5778 = vld [vmem:[#allocation2 + $0x270] sm:$0xff]
        %v5779 = vld [vmem:[#allocation2 + $0x278] sm:$0xff]
        %v5780 = vld [vmem:[#allocation2 + $0x280] sm:$0xff]
        %v5781 = vld [vmem:[#allocation2 + $0x288] sm:$0xff]
        %v5782 = vld [vmem:[#allocation2 + $0x290] sm:$0xff]
        %v5783 = vld [vmem:[#allocation2 + $0x298] sm:$0xff]
        %v5784 = vld [vmem:[#allocation2 + $0x2a0] sm:$0xff]
        %v5785 = vld [vmem:[#allocation2 + $0x2a8] sm:$0xff]
        %v5786 = vld [vmem:[#allocation2 + $0x2b0] sm:$0xff]
        %v5787 = vld [vmem:[#allocation2 + $0x2b8] sm:$0xff]
        %v5788 = vld [vmem:[#allocation2 + $0x2c0] sm:$0xff]
        %v5789 = vld [vmem:[#allocation2 + $0x2c8] sm:$0xff]
        %v5790 = vld [vmem:[#allocation2 + $0x2d0] sm:$0xff]
        %v5791 = vld [vmem:[#allocation2 + $0x2d8] sm:$0xff]
        %v5792 = vld [vmem:[#allocation2 + $0x2e0] sm:$0xff]
        %v5793 = vld [vmem:[#allocation2 + $0x2e8] sm:$0xff]
        %v5794 = vld [vmem:[#allocation2 + $0x2f0] sm:$0xff]
        %v5795 = vld [vmem:[#allocation2 + $0x2f8] sm:$0xff]
        %v5796 = vld [vmem:[#allocation2 + $0x300] sm:$0xff]
        %v5797 = vld [vmem:[#allocation2 + $0x308] sm:$0xff]
        %v5798 = vld [vmem:[#allocation2 + $0x310] sm:$0xff]
        %v5799 = vld [vmem:[#allocation2 + $0x318] sm:$0xff]
        %v5800 = vld [vmem:[#allocation2 + $0x320] sm:$0xff]
        %v5801 = vld [vmem:[#allocation2 + $0x328] sm:$0xff]
        %v5802 = vld [vmem:[#allocation2 + $0x330] sm:$0xff]
        %v5803 = vld [vmem:[#allocation2 + $0x338] sm:$0xff]
        %v5804 = vld [vmem:[#allocation2 + $0x340] sm:$0xff]
        %v5805 = vld [vmem:[#allocation2 + $0x348] sm:$0xff]
        %v5806 = vld [vmem:[#allocation2 + $0x350] sm:$0xff]
        %v5807 = vld [vmem:[#allocation2 + $0x358] sm:$0xff]
        %v5808 = vld [vmem:[#allocation2 + $0x360] sm:$0xff]
        %v5809 = vld [vmem:[#allocation2 + $0x368] sm:$0xff]
        %v5810 = vld [vmem:[#allocation2 + $0x370] sm:$0xff]
        %v5811 = vld [vmem:[#allocation2 + $0x378] sm:$0xff]
        %v5812 = vld [vmem:[#allocation2 + $0x380] sm:$0xff]
        %v5813 = vld [vmem:[#allocation2 + $0x388] sm:$0xff]
        %v5814 = vld [vmem:[#allocation2 + $0x390] sm:$0xff]
        %v5815 = vld [vmem:[#allocation2 + $0x398] sm:$0xff]
        %v5816 = vld [vmem:[#allocation2 + $0x3a0] sm:$0xff]
        %v5817 = vld [vmem:[#allocation2 + $0x3a8] sm:$0xff]
        %v5818 = vld [vmem:[#allocation2 + $0x3b0] sm:$0xff]
        %v5819 = vld [vmem:[#allocation2 + $0x3b8] sm:$0xff]
        %vm5820 = vcmask 523264
        %v5822 = vsel %vm5820, %v5698, 0
        %5824 = vmatprep.subr.mxu0 %v5701
        %5825 = vmatpush1.msra.mxu0 %v5700
        %5826 = vmatprep.subr.mxu0 %v5706
        %5827 = vmatpush1.msra.mxu0 %v5705
        %5828 = vmatprep.subr.mxu0 %v5711
        %5829 = vmatpush1.msra.mxu0 %v5710
        %5830 = vmatprep.subr.mxu0 %v5716
        %5831 = vmatpush1.msra.mxu0 %v5715
        %5832 = vmatprep.subr.mxu0 %v5721
        %5833 = vmatpush1.msra.mxu0 %v5720
        %5834 = vmatprep.subr.mxu0 %v5726
        %5835 = vmatpush1.msra.mxu0 %v5725
        %5836 = vmatprep.subr.mxu0 %v5731
        %5837 = vmatpush1.msra.mxu0 %v5730
        %5838 = vmatprep.subr.mxu0 %v5736
        %5839 = vmatpush1.msra.mxu0 %v5735
        %5840 = vmatprep.subr.mxu0 %v5741
        %5841 = vmatpush1.msra.mxu0 %v5740
        %5842 = vmatprep.subr.mxu0 %v5746
        %5843 = vmatpush1.msra.mxu0 %v5745
        %5844 = vmatprep.subr.mxu0 %v5751
        %5845 = vmatpush1.msra.mxu0 %v5750
        %5846 = vmatprep.subr.mxu0 %v5756
        %5847 = vmatpush1.msra.mxu0 %v5755
        %5848 = vmatprep.subr.mxu0 %v5761
        %5849 = vmatpush1.msra.mxu0 %v5760
        %5850 = vmatprep.subr.mxu0 %v5766
        %5851 = vmatpush1.msra.mxu0 %v5765
        %5852 = vmatprep.subr.mxu0 %v5771
        %5853 = vmatpush1.msra.mxu0 %v5770
        %5854 = vmatprep.subr.mxu0 %v5776
        %5855 = vmatpush1.msra.mxu0 %v5775
        %5856 = vmatprep.subr.mxu0 %v5781
        %5857 = vmatpush1.msra.mxu0 %v5780
        %5858 = vmatprep.subr.mxu0 %v5786
        %5859 = vmatpush1.msra.mxu0 %v5785
        %5860 = vmatprep.subr.mxu0 %v5791
        %5861 = vmatpush1.msra.mxu0 %v5790
        %5862 = vmatprep.subr.mxu0 %v5796
        %5863 = vmatpush1.msra.mxu0 %v5795
        %5864 = vmatprep.subr.mxu0 %v5801
        %5865 = vmatpush1.msra.mxu0 %v5800
        %5866 = vmatprep.subr.mxu0 %v5806
        %5867 = vmatpush1.msra.mxu0 %v5805
        %5868 = vmatprep.subr.mxu0 %v5811
        %5869 = vmatpush1.msra.mxu0 %v5810
        %5870 = vmatprep.subr.mxu0 %v5816
        %5871 = vmatpush1.msra.mxu0 %v5815
        %5872 = vmatprep.subr.mxu0 0.0
        %5873 = vmatpush1.msra.mxu0 0.0
        %5874 = vmatprep.subr.mxu0 0.0
        %5875 = vmatpush1.msra.mxu0 0.0
        %5876 = vmatprep.subr.mxu0 0.0
        %5877 = vmatpush1.msra.mxu0 0.0
        %5878 = vmatprep.subr.mxu0 0.0
        %5879 = vmatpush1.msra.mxu0 0.0
        %5880 = vmatprep.subr.mxu0 0.0
        %5881 = vmatpush1.msra.mxu0 0.0
        %5882 = vmatprep.subr.mxu0 0.0
        %5883 = vmatpush1.msra.mxu0 0.0
        %5884 = vmatprep.subr.mxu0 0.0
        %5885 = vmatpush1.msra.mxu0 0.0
        %5886 = vmatprep.subr.mxu0 0.0
        %5887 = vmatpush1.msra.mxu0 0.0
        %5888 = vmatprep.mubr.f32.mxu0 %v5822
        %5889 = vmatmul.mubr.f32.gmra.mrb[0].mxu0 %v5697
        %v5890 = vpop.f32.mrb[0].mxu0
        %v5891 = vadd.f32 0.0, %v5890
        %v5892 = vpop.f32.mrb[0].mxu0
        %v5893 = vadd.f32 0.0, %v5892
        %5894 = vdwg.mxu0
        %5895 = vmatprep.subr.mxu0 %v5703
        %5896 = vmatpush1.msra.mxu0 %v5702
        %5897 = vmatprep.subr.mxu0 %v5708
        %5898 = vmatpush1.msra.mxu0 %v5707
        %5899 = vmatprep.subr.mxu0 %v5713
        %5900 = vmatpush1.msra.mxu0 %v5712
        %5901 = vmatprep.subr.mxu0 %v5718
        %5902 = vmatpush1.msra.mxu0 %v5717
        %5903 = vmatprep.subr.mxu0 %v5723
        %5904 = vmatpush1.msra.mxu0 %v5722
        %5905 = vmatprep.subr.mxu0 %v5728
        %5906 = vmatpush1.msra.mxu0 %v5727
        %5907 = vmatprep.subr.mxu0 %v5733
        %5908 = vmatpush1.msra.mxu0 %v5732
        %5909 = vmatprep.subr.mxu0 %v5738
        %5910 = vmatpush1.msra.mxu0 %v5737
        %5911 = vmatprep.subr.mxu0 %v5743
        %5912 = vmatpush1.msra.mxu0 %v5742
        %5913 = vmatprep.subr.mxu0 %v5748
        %5914 = vmatpush1.msra.mxu0 %v5747
        %5915 = vmatprep.subr.mxu0 %v5753
        %5916 = vmatpush1.msra.mxu0 %v5752
        %5917 = vmatprep.subr.mxu0 %v5758
        %5918 = vmatpush1.msra.mxu0 %v5757
        %5919 = vmatprep.subr.mxu0 %v5763
        %5920 = vmatpush1.msra.mxu0 %v5762
        %5921 = vmatprep.subr.mxu0 %v5768
        %5922 = vmatpush1.msra.mxu0 %v5767
        %5923 = vmatprep.subr.mxu0 %v5773
        %5924 = vmatpush1.msra.mxu0 %v5772
        %5925 = vmatprep.subr.mxu0 %v5778
        %5926 = vmatpush1.msra.mxu0 %v5777
        %5927 = vmatprep.subr.mxu0 %v5783
        %5928 = vmatpush1.msra.mxu0 %v5782
        %5929 = vmatprep.subr.mxu0 %v5788
        %5930 = vmatpush1.msra.mxu0 %v5787
        %5931 = vmatprep.subr.mxu0 %v5793
        %5932 = vmatpush1.msra.mxu0 %v5792
        %5933 = vmatprep.subr.mxu0 %v5798
        %5934 = vmatpush1.msra.mxu0 %v5797
        %5935 = vmatprep.subr.mxu0 %v5803
        %5936 = vmatpush1.msra.mxu0 %v5802
        %5937 = vmatprep.subr.mxu0 %v5808
        %5938 = vmatpush1.msra.mxu0 %v5807
        %5939 = vmatprep.subr.mxu0 %v5813
        %5940 = vmatpush1.msra.mxu0 %v5812
        %5941 = vmatprep.subr.mxu0 %v5818
        %5942 = vmatpush1.msra.mxu0 %v5817
        %5943 = vmatprep.subr.mxu0 0.0
        %5944 = vmatpush1.msra.mxu0 0.0
        %5945 = vmatprep.subr.mxu0 0.0
        %5946 = vmatpush1.msra.mxu0 0.0
        %5947 = vmatprep.subr.mxu0 0.0
        %5948 = vmatpush1.msra.mxu0 0.0
        %5949 = vmatprep.subr.mxu0 0.0
        %5950 = vmatpush1.msra.mxu0 0.0
        %5951 = vmatprep.subr.mxu0 0.0
        %5952 = vmatpush1.msra.mxu0 0.0
        %5953 = vmatprep.subr.mxu0 0.0
        %5954 = vmatpush1.msra.mxu0 0.0
        %5955 = vmatprep.subr.mxu0 0.0
        %5956 = vmatpush1.msra.mxu0 0.0
        %5957 = vmatprep.subr.mxu0 0.0
        %5958 = vmatpush1.msra.mxu0 0.0
        %5959 = vmatprep.mubr.f32.mxu0 %v5822
        %5960 = vmatmul.mubr.f32.gmra.mrb[0].mxu0 %v5697
        %v5961 = vpop.f32.mrb[0].mxu0
        %v5962 = vadd.f32 0.0, %v5961
        %v5963 = vpop.f32.mrb[0].mxu0
        %v5964 = vadd.f32 0.0, %v5963
        %5965 = vdwg.mxu0
        %5966 = vmatprep.subr.mxu0 0.0
        %5967 = vmatpush1.msra.mxu0 %v5704
        %5968 = vmatprep.subr.mxu0 0.0
        %5969 = vmatpush1.msra.mxu0 %v5709
        %5970 = vmatprep.subr.mxu0 0.0
        %5971 = vmatpush1.msra.mxu0 %v5714
        %5972 = vmatprep.subr.mxu0 0.0
        %5973 = vmatpush1.msra.mxu0 %v5719
        %5974 = vmatprep.subr.mxu0 0.0
        %5975 = vmatpush1.msra.mxu0 %v5724
        %5976 = vmatprep.subr.mxu0 0.0
        %5977 = vmatpush1.msra.mxu0 %v5729
        %5978 = vmatprep.subr.mxu0 0.0
        %5979 = vmatpush1.msra.mxu0 %v5734
        %5980 = vmatprep.subr.mxu0 0.0
        %5981 = vmatpush1.msra.mxu0 %v5739
        %5982 = vmatprep.subr.mxu0 0.0
        %5983 = vmatpush1.msra.mxu0 %v5744
        %5984 = vmatprep.subr.mxu0 0.0
        %5985 = vmatpush1.msra.mxu0 %v5749
        %5986 = vmatprep.subr.mxu0 0.0
        %5987 = vmatpush1.msra.mxu0 %v5754
        %5988 = vmatprep.subr.mxu0 0.0
        %5989 = vmatpush1.msra.mxu0 %v5759
        %5990 = vmatprep.subr.mxu0 0.0
        %5991 = vmatpush1.msra.mxu0 %v5764
        %5992 = vmatprep.subr.mxu0 0.0
        %5993 = vmatpush1.msra.mxu0 %v5769
        %5994 = vmatprep.subr.mxu0 0.0
        %5995 = vmatpush1.msra.mxu0 %v5774
        %5996 = vmatprep.subr.mxu0 0.0
        %5997 = vmatpush1.msra.mxu0 %v5779
        %5998 = vmatprep.subr.mxu0 0.0
        %5999 = vmatpush1.msra.mxu0 %v5784
        %6000 = vmatprep.subr.mxu0 0.0
        %6001 = vmatpush1.msra.mxu0 %v5789
        %6002 = vmatprep.subr.mxu0 0.0
        %6003 = vmatpush1.msra.mxu0 %v5794
        %6004 = vmatprep.subr.mxu0 0.0
        %6005 = vmatpush1.msra.mxu0 %v5799
        %6006 = vmatprep.subr.mxu0 0.0
        %6007 = vmatpush1.msra.mxu0 %v5804
        %6008 = vmatprep.subr.mxu0 0.0
        %6009 = vmatpush1.msra.mxu0 %v5809
        %6010 = vmatprep.subr.mxu0 0.0
        %6011 = vmatpush1.msra.mxu0 %v5814
        %6012 = vmatprep.subr.mxu0 0.0
        %6013 = vmatpush1.msra.mxu0 %v5819
        %6014 = vmatprep.subr.mxu0 0.0
        %6015 = vmatpush1.msra.mxu0 0.0
        %6016 = vmatprep.subr.mxu0 0.0
        %6017 = vmatpush1.msra.mxu0 0.0
        %6018 = vmatprep.subr.mxu0 0.0
        %6019 = vmatpush1.msra.mxu0 0.0
        %6020 = vmatprep.subr.mxu0 0.0
        %6021 = vmatpush1.msra.mxu0 0.0
        %6022 = vmatprep.subr.mxu0 0.0
        %6023 = vmatpush1.msra.mxu0 0.0
        %6024 = vmatprep.subr.mxu0 0.0
        %6025 = vmatpush1.msra.mxu0 0.0
        %6026 = vmatprep.subr.mxu0 0.0
        %6027 = vmatpush1.msra.mxu0 0.0
        %6028 = vmatprep.subr.mxu0 0.0
        %6029 = vmatpush1.msra.mxu0 0.0
        %6030 = vmatprep.mubr.f32.mxu0 %v5822
        %6031 = vmatmul.mubr.f32.gmra.mrb[0].mxu0 %v5697
        %v6032 = vpop.f32.mrb[0].mxu0
        %v6033 = vadd.f32 0.0, %v6032
        %v6034 = vpop.f32.mrb[0].mxu0
        %6035 = vdwg.mxu0
        %v6041 = vcombine.low %v5891, %v5893
        %v6042 = vcombine.low %v5962, %v5964
        %v6044 = vunpack.c.l.s4 1966171168
        %v6045 = vunpack.c.0.s8 %v6044
        %v6046 = vlaneseq
        %v6047 = vshrl.u32 %v6046, 7
        %v6048 = vsub.s32 %v6045, %v6047
        %v6049 = vrot.slane %v6041, %v6048
        %v6051 = vunpack.c.l.s4 1966171168
        %v6052 = vunpack.c.0.s8 %v6051
        %v6053 = vlaneseq
        %v6054 = vshrl.u32 %v6053, 7
        %v6055 = vsub.s32 %v6052, %v6054
        %v6056 = vrot.slane %v6042, %v6055
        %v6058 = vunpack.c.l.s4 1966171168
        %v6059 = vunpack.c.0.s8 %v6058
        %v6060 = vlaneseq
        %v6061 = vshrl.u32 %v6060, 7
        %v6062 = vsub.s32 %v6059, %v6061
        %v6063 = vrot.slane %v6033, %v6062
        %v6064 = vcombine.low %v6049, %v6056
        %v6066 = vunpack.c.l.s4 1966171168
        %v6067 = vunpack.c.0.s8 %v6066
        %v6068 = vlaneseq
        %v6069 = vshrl.u32 %v6068, 7
        %v6070 = vsub.s32 %v6067, %v6069
        %v6071 = vrot.slane %v6064, %v6070
        %v6073 = vunpack.c.l.s4 1966171168
        %v6074 = vunpack.c.0.s8 %v6073
        %v6075 = vlaneseq
        %v6076 = vshrl.u32 %v6075, 7
        %v6077 = vsub.s32 %v6074, %v6076
        %v6078 = vrot.slane %v6063, %v6077
        %v6079 = vcombine.low %v6071, %v6078
        %v6081 = vadd.f32 %v5699, %v6079
        %v6082 = vld [vmem:[#allocation2 + $0x3c0] sm:$0xff]
        %v6083 = vld [vmem:[#allocation2 + $0x3c8] sm:$0xff]
        %v6084 = vld [vmem:[#allocation2 + $0x3d0] sm:$0xff]
        %v6085 = vld [vmem:[#allocation2 + $0x3d8] sm:$0xff]
        %v6086 = vld [vmem:[#allocation2 + $0x3e0] sm:$0xff]
        %v6087 = vld [vmem:[#allocation2 + $0x3e8] sm:$0xff]
        %v6088 = vld [vmem:[#allocation2 + $0x3f0] sm:$0xff]
        %v6089 = vld [vmem:[#allocation2 + $0x3f8] sm:$0xff]
        %v6090 = vld [vmem:[#allocation2 + $0x400] sm:$0xff]
        %v6091 = vld [vmem:[#allocation2 + $0x408] sm:$0xff]
        %v6092 = vld [vmem:[#allocation2 + $0x410] sm:$0xff]
        %v6093 = vld [vmem:[#allocation2 + $0x418] sm:$0xff]
        %v6094 = vld [vmem:[#allocation2 + $0x420] sm:$0xff]
        %v6095 = vld [vmem:[#allocation2 + $0x428] sm:$0xff]
        %v6096 = vld [vmem:[#allocation2 + $0x430] sm:$0xff]
        %v6097 = vld [vmem:[#allocation2 + $0x438] sm:$0xff]
        %v6098 = vld [vmem:[#allocation2 + $0x440] sm:$0xff]
        %v6099 = vld [vmem:[#allocation2 + $0x448] sm:$0xff]
        %v6100 = vld [vmem:[#allocation2 + $0x450] sm:$0xff]
        %v6101 = vld [vmem:[#allocation2 + $0x458] sm:$0xff]
        %v6102 = vld [vmem:[#allocation2 + $0x460] sm:$0xff]
        %v6103 = vld [vmem:[#allocation2 + $0x468] sm:$0xff]
        %v6104 = vld [vmem:[#allocation2 + $0x470] sm:$0xff]
        %v6105 = vld [vmem:[#allocation2 + $0x478] sm:$0xff]
        %v6106 = vld [vmem:[#allocation2 + $0x480] sm:$0xff]
        %v6107 = vld [vmem:[#allocation2 + $0x488] sm:$0xff]
        %v6108 = vld [vmem:[#allocation2 + $0x490] sm:$0xff]
        %v6109 = vld [vmem:[#allocation2 + $0x498] sm:$0xff]
        %v6110 = vld [vmem:[#allocation2 + $0x4a0] sm:$0xff]
        %v6111 = vld [vmem:[#allocation2 + $0x4a8] sm:$0xff]
        %v6112 = vld [vmem:[#allocation2 + $0x4b0] sm:$0xff]
        %v6113 = vld [vmem:[#allocation2 + $0x4b8] sm:$0xff]
        %v6114 = vld [vmem:[#allocation2 + $0x4c0] sm:$0xff]
        %v6115 = vld [vmem:[#allocation2 + $0x4c8] sm:$0xff]
        %v6116 = vld [vmem:[#allocation2 + $0x4d0] sm:$0xff]
        %v6117 = vld [vmem:[#allocation2 + $0x4d8] sm:$0xff]
        %v6118 = vld [vmem:[#allocation2 + $0x4e0] sm:$0xff]
        %v6119 = vld [vmem:[#allocation2 + $0x4e8] sm:$0xff]
        %v6120 = vld [vmem:[#allocation2 + $0x4f0] sm:$0xff]
        %v6121 = vld [vmem:[#allocation2 + $0x4f8] sm:$0xff]
        %v6122 = vld [vmem:[#allocation2 + $0x500] sm:$0xff]
        %v6123 = vld [vmem:[#allocation2 + $0x508] sm:$0xff]
        %v6124 = vld [vmem:[#allocation2 + $0x510] sm:$0xff]
        %v6125 = vld [vmem:[#allocation2 + $0x518] sm:$0xff]
        %v6126 = vld [vmem:[#allocation2 + $0x520] sm:$0xff]
        %v6127 = vld [vmem:[#allocation2 + $0x528] sm:$0xff]
        %v6128 = vld [vmem:[#allocation2 + $0x530] sm:$0xff]
        %v6129 = vld [vmem:[#allocation2 + $0x538] sm:$0xff]
        %v6130 = vld [vmem:[#allocation2 + $0x540] sm:$0xff]
        %v6131 = vld [vmem:[#allocation2 + $0x548] sm:$0xff]
        %v6132 = vld [vmem:[#allocation2 + $0x550] sm:$0xff]
        %v6133 = vld [vmem:[#allocation2 + $0x558] sm:$0xff]
        %v6134 = vld [vmem:[#allocation2 + $0x560] sm:$0xff]
        %v6135 = vld [vmem:[#allocation2 + $0x568] sm:$0xff]
        %v6136 = vld [vmem:[#allocation2 + $0x570] sm:$0xff]
        %v6137 = vld [vmem:[#allocation2 + $0x578] sm:$0xff]
        %v6138 = vld [vmem:[#allocation2 + $0x580] sm:$0xff]
        %v6139 = vld [vmem:[#allocation2 + $0x588] sm:$0xff]
        %v6140 = vld [vmem:[#allocation2 + $0x590] sm:$0xff]
        %v6141 = vld [vmem:[#allocation2 + $0x598] sm:$0xff]
        %v6142 = vld [vmem:[#allocation2 + $0x5a0] sm:$0xff]
        %v6143 = vld [vmem:[#allocation2 + $0x5a8] sm:$0xff]
        %v6144 = vld [vmem:[#allocation2 + $0x5b0] sm:$0xff]
        %v6145 = vld [vmem:[#allocation2 + $0x5b8] sm:$0xff]
        %v6146 = vld [vmem:[#allocation2 + $0x5c0] sm:$0xff]
        %v6147 = vld [vmem:[#allocation2 + $0x5c8] sm:$0xff]
        %v6148 = vld [vmem:[#allocation2 + $0x5d0] sm:$0xff]
        %v6149 = vld [vmem:[#allocation2 + $0x5d8] sm:$0xff]
        %v6150 = vld [vmem:[#allocation2 + $0x5e0] sm:$0xff]
        %v6151 = vld [vmem:[#allocation2 + $0x5e8] sm:$0xff]
        %v6152 = vld [vmem:[#allocation2 + $0x5f0] sm:$0xff]
        %v6153 = vld [vmem:[#allocation2 + $0x5f8] sm:$0xff]
        %v6154 = vld [vmem:[#allocation2 + $0x600] sm:$0xff]
        %v6155 = vld [vmem:[#allocation2 + $0x608] sm:$0xff]
        %v6156 = vld [vmem:[#allocation2 + $0x610] sm:$0xff]
        %v6157 = vld [vmem:[#allocation2 + $0x618] sm:$0xff]
        %v6158 = vld [vmem:[#allocation2 + $0x620] sm:$0xff]
        %v6159 = vld [vmem:[#allocation2 + $0x628] sm:$0xff]
        %v6160 = vld [vmem:[#allocation2 + $0x630] sm:$0xff]
        %v6161 = vld [vmem:[#allocation2 + $0x638] sm:$0xff]
        %v6162 = vld [vmem:[#allocation2 + $0x640] sm:$0xff]
        %v6163 = vld [vmem:[#allocation2 + $0x648] sm:$0xff]
        %v6164 = vld [vmem:[#allocation2 + $0x650] sm:$0xff]
        %v6165 = vld [vmem:[#allocation2 + $0x658] sm:$0xff]
        %v6166 = vld [vmem:[#allocation2 + $0x660] sm:$0xff]
        %v6167 = vld [vmem:[#allocation2 + $0x668] sm:$0xff]
        %v6168 = vld [vmem:[#allocation2 + $0x670] sm:$0xff]
        %v6169 = vld [vmem:[#allocation2 + $0x678] sm:$0xff]
        %v6170 = vld [vmem:[#allocation2 + $0x680] sm:$0xff]
        %v6171 = vld [vmem:[#allocation2 + $0x688] sm:$0xff]
        %v6172 = vld [vmem:[#allocation2 + $0x690] sm:$0xff]
        %v6173 = vld [vmem:[#allocation2 + $0x698] sm:$0xff]
        %v6174 = vld [vmem:[#allocation2 + $0x6a0] sm:$0xff]
        %v6175 = vld [vmem:[#allocation2 + $0x6a8] sm:$0xff]
        %v6176 = vld [vmem:[#allocation2 + $0x6b0] sm:$0xff]
        %v6177 = vld [vmem:[#allocation2 + $0x6b8] sm:$0xff]
        %v6178 = vld [vmem:[#allocation2 + $0x6c0] sm:$0xff]
        %v6179 = vld [vmem:[#allocation2 + $0x6c8] sm:$0xff]
        %v6180 = vld [vmem:[#allocation2 + $0x6d0] sm:$0xff]
        %v6181 = vld [vmem:[#allocation2 + $0x6d8] sm:$0xff]
        %v6182 = vld [vmem:[#allocation2 + $0x6e0] sm:$0xff]
        %v6183 = vld [vmem:[#allocation2 + $0x6e8] sm:$0xff]
        %v6184 = vld [vmem:[#allocation2 + $0x6f0] sm:$0xff]
        %v6185 = vld [vmem:[#allocation2 + $0x6f8] sm:$0xff]
        %v6186 = vld [vmem:[#allocation2 + $0x700] sm:$0xff]
        %v6187 = vld [vmem:[#allocation2 + $0x708] sm:$0xff]
        %v6188 = vld [vmem:[#allocation2 + $0x710] sm:$0xff]
        %v6189 = vld [vmem:[#allocation2 + $0x718] sm:$0xff]
        %v6190 = vld [vmem:[#allocation2 + $0x720] sm:$0xff]
        %v6191 = vld [vmem:[#allocation2 + $0x728] sm:$0xff]
        %v6192 = vld [vmem:[#allocation2 + $0x730] sm:$0xff]
        %v6193 = vld [vmem:[#allocation2 + $0x738] sm:$0xff]
        %v6194 = vld [vmem:[#allocation2 + $0x740] sm:$0xff]
        %v6195 = vld [vmem:[#allocation2 + $0x748] sm:$0xff]
        %v6196 = vld [vmem:[#allocation2 + $0x750] sm:$0xff]
        %v6197 = vld [vmem:[#allocation2 + $0x758] sm:$0xff]
        %v6198 = vld [vmem:[#allocation2 + $0x760] sm:$0xff]
        %v6199 = vld [vmem:[#allocation2 + $0x768] sm:$0xff]
        %v6200 = vld [vmem:[#allocation2 + $0x770] sm:$0xff]
        %v6201 = vld [vmem:[#allocation2 + $0x778] sm:$0xff]
        %v6203 = vrot.slane %v5697, 1
        %v6204 = vrot.slane %v5698, 1
        %v6206 = vsel %vm5820, %v6204, 0
        %6208 = vmatprep.subr.mxu0 %v6083
        %6209 = vmatpush1.msra.mxu0 %v6082
        %6210 = vmatprep.subr.mxu0 %v6088
        %6211 = vmatpush1.msra.mxu0 %v6087
        %6212 = vmatprep.subr.mxu0 %v6093
        %6213 = vmatpush1.msra.mxu0 %v6092
        %6214 = vmatprep.subr.mxu0 %v6098
        %6215 = vmatpush1.msra.mxu0 %v6097
        %6216 = vmatprep.subr.mxu0 %v6103
        %6217 = vmatpush1.msra.mxu0 %v6102
        %6218 = vmatprep.subr.mxu0 %v6108
        %6219 = vmatpush1.msra.mxu0 %v6107
        %6220 = vmatprep.subr.mxu0 %v6113
        %6221 = vmatpush1.msra.mxu0 %v6112
        %6222 = vmatprep.subr.mxu0 %v6118
        %6223 = vmatpush1.msra.mxu0 %v6117
        %6224 = vmatprep.subr.mxu0 %v6123
        %6225 = vmatpush1.msra.mxu0 %v6122
        %6226 = vmatprep.subr.mxu0 %v6128
        %6227 = vmatpush1.msra.mxu0 %v6127
        %6228 = vmatprep.subr.mxu0 %v6133
        %6229 = vmatpush1.msra.mxu0 %v6132
        %6230 = vmatprep.subr.mxu0 %v6138
        %6231 = vmatpush1.msra.mxu0 %v6137
        %6232 = vmatprep.subr.mxu0 %v6143
        %6233 = vmatpush1.msra.mxu0 %v6142
        %6234 = vmatprep.subr.mxu0 %v6148
        %6235 = vmatpush1.msra.mxu0 %v6147
        %6236 = vmatprep.subr.mxu0 %v6153
        %6237 = vmatpush1.msra.mxu0 %v6152
        %6238 = vmatprep.subr.mxu0 %v6158
        %6239 = vmatpush1.msra.mxu0 %v6157
        %6240 = vmatprep.subr.mxu0 %v6163
        %6241 = vmatpush1.msra.mxu0 %v6162
        %6242 = vmatprep.subr.mxu0 %v6168
        %6243 = vmatpush1.msra.mxu0 %v6167
        %6244 = vmatprep.subr.mxu0 %v6173
        %6245 = vmatpush1.msra.mxu0 %v6172
        %6246 = vmatprep.subr.mxu0 %v6178
        %6247 = vmatpush1.msra.mxu0 %v6177
        %6248 = vmatprep.subr.mxu0 %v6183
        %6249 = vmatpush1.msra.mxu0 %v6182
        %6250 = vmatprep.subr.mxu0 %v6188
        %6251 = vmatpush1.msra.mxu0 %v6187
        %6252 = vmatprep.subr.mxu0 %v6193
        %6253 = vmatpush1.msra.mxu0 %v6192
        %6254 = vmatprep.subr.mxu0 %v6198
        %6255 = vmatpush1.msra.mxu0 %v6197
        %6256 = vmatprep.subr.mxu0 0.0
        %6257 = vmatpush1.msra.mxu0 0.0
        %6258 = vmatprep.subr.mxu0 0.0
        %6259 = vmatpush1.msra.mxu0 0.0
        %6260 = vmatprep.subr.mxu0 0.0
        %6261 = vmatpush1.msra.mxu0 0.0
        %6262 = vmatprep.subr.mxu0 0.0
        %6263 = vmatpush1.msra.mxu0 0.0
        %6264 = vmatprep.subr.mxu0 0.0
        %6265 = vmatpush1.msra.mxu0 0.0
        %6266 = vmatprep.subr.mxu0 0.0
        %6267 = vmatpush1.msra.mxu0 0.0
        %6268 = vmatprep.subr.mxu0 0.0
        %6269 = vmatpush1.msra.mxu0 0.0
        %6270 = vmatprep.subr.mxu0 0.0
        %6271 = vmatpush1.msra.mxu0 0.0
        %6272 = vmatprep.mubr.f32.mxu0 %v6206
        %6273 = vmatmul.mubr.f32.gmra.mrb[0].mxu0 %v6203
        %v6274 = vpop.f32.mrb[0].mxu0
        %v6275 = vadd.f32 0.0, %v6274
        %v6276 = vpop.f32.mrb[0].mxu0
        %v6277 = vadd.f32 0.0, %v6276
        %6278 = vdwg.mxu0
        %6279 = vmatprep.subr.mxu0 %v6085
        %6280 = vmatpush1.msra.mxu0 %v6084
        %6281 = vmatprep.subr.mxu0 %v6090
        %6282 = vmatpush1.msra.mxu0 %v6089
        %6283 = vmatprep.subr.mxu0 %v6095
        %6284 = vmatpush1.msra.mxu0 %v6094
        %6285 = vmatprep.subr.mxu0 %v6100
        %6286 = vmatpush1.msra.mxu0 %v6099
        %6287 = vmatprep.subr.mxu0 %v6105
        %6288 = vmatpush1.msra.mxu0 %v6104
        %6289 = vmatprep.subr.mxu0 %v6110
        %6290 = vmatpush1.msra.mxu0 %v6109
        %6291 = vmatprep.subr.mxu0 %v6115
        %6292 = vmatpush1.msra.mxu0 %v6114
        %6293 = vmatprep.subr.mxu0 %v6120
        %6294 = vmatpush1.msra.mxu0 %v6119
        %6295 = vmatprep.subr.mxu0 %v6125
        %6296 = vmatpush1.msra.mxu0 %v6124
        %6297 = vmatprep.subr.mxu0 %v6130
        %6298 = vmatpush1.msra.mxu0 %v6129
        %6299 = vmatprep.subr.mxu0 %v6135
        %6300 = vmatpush1.msra.mxu0 %v6134
        %6301 = vmatprep.subr.mxu0 %v6140
        %6302 = vmatpush1.msra.mxu0 %v6139
        %6303 = vmatprep.subr.mxu0 %v6145
        %6304 = vmatpush1.msra.mxu0 %v6144
        %6305 = vmatprep.subr.mxu0 %v6150
        %6306 = vmatpush1.msra.mxu0 %v6149
        %6307 = vmatprep.subr.mxu0 %v6155
        %6308 = vmatpush1.msra.mxu0 %v6154
        %6309 = vmatprep.subr.mxu0 %v6160
        %6310 = vmatpush1.msra.mxu0 %v6159
        %6311 = vmatprep.subr.mxu0 %v6165
        %6312 = vmatpush1.msra.mxu0 %v6164
        %6313 = vmatprep.subr.mxu0 %v6170
        %6314 = vmatpush1.msra.mxu0 %v6169
        %6315 = vmatprep.subr.mxu0 %v6175
        %6316 = vmatpush1.msra.mxu0 %v6174
        %6317 = vmatprep.subr.mxu0 %v6180
        %6318 = vmatpush1.msra.mxu0 %v6179
        %6319 = vmatprep.subr.mxu0 %v6185
        %6320 = vmatpush1.msra.mxu0 %v6184
        %6321 = vmatprep.subr.mxu0 %v6190
        %6322 = vmatpush1.msra.mxu0 %v6189
        %6323 = vmatprep.subr.mxu0 %v6195
        %6324 = vmatpush1.msra.mxu0 %v6194
        %6325 = vmatprep.subr.mxu0 %v6200
        %6326 = vmatpush1.msra.mxu0 %v6199
        %6327 = vmatprep.subr.mxu0 0.0
        %6328 = vmatpush1.msra.mxu0 0.0
        %6329 = vmatprep.subr.mxu0 0.0
        %6330 = vmatpush1.msra.mxu0 0.0
        %6331 = vmatprep.subr.mxu0 0.0
        %6332 = vmatpush1.msra.mxu0 0.0
        %6333 = vmatprep.subr.mxu0 0.0
        %6334 = vmatpush1.msra.mxu0 0.0
        %6335 = vmatprep.subr.mxu0 0.0
        %6336 = vmatpush1.msra.mxu0 0.0
        %6337 = vmatprep.subr.mxu0 0.0
        %6338 = vmatpush1.msra.mxu0 0.0
        %6339 = vmatprep.subr.mxu0 0.0
        %6340 = vmatpush1.msra.mxu0 0.0
        %6341 = vmatprep.subr.mxu0 0.0
        %6342 = vmatpush1.msra.mxu0 0.0
        %6343 = vmatprep.mubr.f32.mxu0 %v6206
        %6344 = vmatmul.mubr.f32.gmra.mrb[0].mxu0 %v6203
        %v6345 = vpop.f32.mrb[0].mxu0
        %v6346 = vadd.f32 0.0, %v6345
        %v6347 = vpop.f32.mrb[0].mxu0
        %v6348 = vadd.f32 0.0, %v6347
        %6349 = vdwg.mxu0
        %6350 = vmatprep.subr.mxu0 0.0
        %6351 = vmatpush1.msra.mxu0 %v6086
        %6352 = vmatprep.subr.mxu0 0.0
        %6353 = vmatpush1.msra.mxu0 %v6091
        %6354 = vmatprep.subr.mxu0 0.0
        %6355 = vmatpush1.msra.mxu0 %v6096
        %6356 = vmatprep.subr.mxu0 0.0
        %6357 = vmatpush1.msra.mxu0 %v6101
        %6358 = vmatprep.subr.mxu0 0.0
        %6359 = vmatpush1.msra.mxu0 %v6106
        %6360 = vmatprep.subr.mxu0 0.0
        %6361 = vmatpush1.msra.mxu0 %v6111
        %6362 = vmatprep.subr.mxu0 0.0
        %6363 = vmatpush1.msra.mxu0 %v6116
        %6364 = vmatprep.subr.mxu0 0.0
        %6365 = vmatpush1.msra.mxu0 %v6121
        %6366 = vmatprep.subr.mxu0 0.0
        %6367 = vmatpush1.msra.mxu0 %v6126
        %6368 = vmatprep.subr.mxu0 0.0
        %6369 = vmatpush1.msra.mxu0 %v6131
        %6370 = vmatprep.subr.mxu0 0.0
        %6371 = vmatpush1.msra.mxu0 %v6136
        %6372 = vmatprep.subr.mxu0 0.0
        %6373 = vmatpush1.msra.mxu0 %v6141
        %6374 = vmatprep.subr.mxu0 0.0
        %6375 = vmatpush1.msra.mxu0 %v6146
        %6376 = vmatprep.subr.mxu0 0.0
        %6377 = vmatpush1.msra.mxu0 %v6151
        %6378 = vmatprep.subr.mxu0 0.0
        %6379 = vmatpush1.msra.mxu0 %v6156
        %6380 = vmatprep.subr.mxu0 0.0
        %6381 = vmatpush1.msra.mxu0 %v6161
        %6382 = vmatprep.subr.mxu0 0.0
        %6383 = vmatpush1.msra.mxu0 %v6166
        %6384 = vmatprep.subr.mxu0 0.0
        %6385 = vmatpush1.msra.mxu0 %v6171
        %6386 = vmatprep.subr.mxu0 0.0
        %6387 = vmatpush1.msra.mxu0 %v6176
        %6388 = vmatprep.subr.mxu0 0.0
        %6389 = vmatpush1.msra.mxu0 %v6181
        %6390 = vmatprep.subr.mxu0 0.0
        %6391 = vmatpush1.msra.mxu0 %v6186
        %6392 = vmatprep.subr.mxu0 0.0
        %6393 = vmatpush1.msra.mxu0 %v6191
        %6394 = vmatprep.subr.mxu0 0.0
        %6395 = vmatpush1.msra.mxu0 %v6196
        %6396 = vmatprep.subr.mxu0 0.0
        %6397 = vmatpush1.msra.mxu0 %v6201
        %6398 = vmatprep.subr.mxu0 0.0
        %6399 = vmatpush1.msra.mxu0 0.0
        %6400 = vmatprep.subr.mxu0 0.0
        %6401 = vmatpush1.msra.mxu0 0.0
        %6402 = vmatprep.subr.mxu0 0.0
        %6403 = vmatpush1.msra.mxu0 0.0
        %6404 = vmatprep.subr.mxu0 0.0
        %6405 = vmatpush1.msra.mxu0 0.0
        %6406 = vmatprep.subr.mxu0 0.0
        %6407 = vmatpush1.msra.mxu0 0.0
        %6408 = vmatprep.subr.mxu0 0.0
        %6409 = vmatpush1.msra.mxu0 0.0
        %6410 = vmatprep.subr.mxu0 0.0
        %6411 = vmatpush1.msra.mxu0 0.0
        %6412 = vmatprep.subr.mxu0 0.0
        %6413 = vmatpush1.msra.mxu0 0.0
        %6414 = vmatprep.mubr.f32.mxu0 %v6206
        %6415 = vmatmul.mubr.f32.gmra.mrb[0].mxu0 %v6203
        %v6416 = vpop.f32.mrb[0].mxu0
        %v6417 = vadd.f32 0.0, %v6416
        %v6418 = vpop.f32.mrb[0].mxu0
        %6419 = vdwg.mxu0
        %v6425 = vcombine.low %v6275, %v6277
        %v6426 = vcombine.low %v6346, %v6348
        %v6428 = vunpack.c.l.s4 1966171168
        %v6429 = vunpack.c.0.s8 %v6428
        %v6430 = vlaneseq
        %v6431 = vshrl.u32 %v6430, 7
        %v6432 = vsub.s32 %v6429, %v6431
        %v6433 = vrot.slane %v6425, %v6432
        %v6435 = vunpack.c.l.s4 1966171168
        %v6436 = vunpack.c.0.s8 %v6435
        %v6437 = vlaneseq
        %v6438 = vshrl.u32 %v6437, 7
        %v6439 = vsub.s32 %v6436, %v6438
        %v6440 = vrot.slane %v6426, %v6439
        %v6442 = vunpack.c.l.s4 1966171168
        %v6443 = vunpack.c.0.s8 %v6442
        %v6444 = vlaneseq
        %v6445 = vshrl.u32 %v6444, 7
        %v6446 = vsub.s32 %v6443, %v6445
        %v6447 = vrot.slane %v6417, %v6446
        %v6448 = vcombine.low %v6433, %v6440
        %v6450 = vunpack.c.l.s4 1966171168
        %v6451 = vunpack.c.0.s8 %v6450
        %v6452 = vlaneseq
        %v6453 = vshrl.u32 %v6452, 7
        %v6454 = vsub.s32 %v6451, %v6453
        %v6455 = vrot.slane %v6448, %v6454
        %v6457 = vunpack.c.l.s4 1966171168
        %v6458 = vunpack.c.0.s8 %v6457
        %v6459 = vlaneseq
        %v6460 = vshrl.u32 %v6459, 7
        %v6461 = vsub.s32 %v6458, %v6460
        %v6462 = vrot.slane %v6447, %v6461
        %v6463 = vcombine.low %v6455, %v6462
        %v6465 = vadd.f32 %v6081, %v6463
        %v6466 = vld [vmem:[#allocation2 + $0x780] sm:$0xff]
        %v6467 = vld [vmem:[#allocation2 + $0x788] sm:$0xff]
        %v6468 = vld [vmem:[#allocation2 + $0x790] sm:$0xff]
        %v6469 = vld [vmem:[#allocation2 + $0x798] sm:$0xff]
        %v6470 = vld [vmem:[#allocation2 + $0x7a0] sm:$0xff]
        %v6471 = vld [vmem:[#allocation2 + $0x7a8] sm:$0xff]
        %v6472 = vld [vmem:[#allocation2 + $0x7b0] sm:$0xff]
        %v6473 = vld [vmem:[#allocation2 + $0x7b8] sm:$0xff]
        %v6474 = vld [vmem:[#allocation2 + $0x7c0] sm:$0xff]
        %v6475 = vld [vmem:[#allocation2 + $0x7c8] sm:$0xff]
        %v6476 = vld [vmem:[#allocation2 + $0x7d0] sm:$0xff]
        %v6477 = vld [vmem:[#allocation2 + $0x7d8] sm:$0xff]
        %v6478 = vld [vmem:[#allocation2 + $0x7e0] sm:$0xff]
        %v6479 = vld [vmem:[#allocation2 + $0x7e8] sm:$0xff]
        %v6480 = vld [vmem:[#allocation2 + $0x7f0] sm:$0xff]
        %v6481 = vld [vmem:[#allocation2 + $0x7f8] sm:$0xff]
        %v6482 = vld [vmem:[#allocation2 + $0x800] sm:$0xff]
        %v6483 = vld [vmem:[#allocation2 + $0x808] sm:$0xff]
        %v6484 = vld [vmem:[#allocation2 + $0x810] sm:$0xff]
        %v6485 = vld [vmem:[#allocation2 + $0x818] sm:$0xff]
        %v6486 = vld [vmem:[#allocation2 + $0x820] sm:$0xff]
        %v6487 = vld [vmem:[#allocation2 + $0x828] sm:$0xff]
        %v6488 = vld [vmem:[#allocation2 + $0x830] sm:$0xff]
        %v6489 = vld [vmem:[#allocation2 + $0x838] sm:$0xff]
        %v6490 = vld [vmem:[#allocation2 + $0x840] sm:$0xff]
        %v6491 = vld [vmem:[#allocation2 + $0x848] sm:$0xff]
        %v6492 = vld [vmem:[#allocation2 + $0x850] sm:$0xff]
        %v6493 = vld [vmem:[#allocation2 + $0x858] sm:$0xff]
        %v6494 = vld [vmem:[#allocation2 + $0x860] sm:$0xff]
        %v6495 = vld [vmem:[#allocation2 + $0x868] sm:$0xff]
        %v6496 = vld [vmem:[#allocation2 + $0x870] sm:$0xff]
        %v6497 = vld [vmem:[#allocation2 + $0x878] sm:$0xff]
        %v6498 = vld [vmem:[#allocation2 + $0x880] sm:$0xff]
        %v6499 = vld [vmem:[#allocation2 + $0x888] sm:$0xff]
        %v6500 = vld [vmem:[#allocation2 + $0x890] sm:$0xff]
        %v6501 = vld [vmem:[#allocation2 + $0x898] sm:$0xff]
        %v6502 = vld [vmem:[#allocation2 + $0x8a0] sm:$0xff]
        %v6503 = vld [vmem:[#allocation2 + $0x8a8] sm:$0xff]
        %v6504 = vld [vmem:[#allocation2 + $0x8b0] sm:$0xff]
        %v6505 = vld [vmem:[#allocation2 + $0x8b8] sm:$0xff]
        %v6506 = vld [vmem:[#allocation2 + $0x8c0] sm:$0xff]
        %v6507 = vld [vmem:[#allocation2 + $0x8c8] sm:$0xff]
        %v6508 = vld [vmem:[#allocation2 + $0x8d0] sm:$0xff]
        %v6509 = vld [vmem:[#allocation2 + $0x8d8] sm:$0xff]
        %v6510 = vld [vmem:[#allocation2 + $0x8e0] sm:$0xff]
        %v6511 = vld [vmem:[#allocation2 + $0x8e8] sm:$0xff]
        %v6512 = vld [vmem:[#allocation2 + $0x8f0] sm:$0xff]
        %v6513 = vld [vmem:[#allocation2 + $0x8f8] sm:$0xff]
        %v6514 = vld [vmem:[#allocation2 + $0x900] sm:$0xff]
        %v6515 = vld [vmem:[#allocation2 + $0x908] sm:$0xff]
        %v6516 = vld [vmem:[#allocation2 + $0x910] sm:$0xff]
        %v6517 = vld [vmem:[#allocation2 + $0x918] sm:$0xff]
        %v6518 = vld [vmem:[#allocation2 + $0x920] sm:$0xff]
        %v6519 = vld [vmem:[#allocation2 + $0x928] sm:$0xff]
        %v6520 = vld [vmem:[#allocation2 + $0x930] sm:$0xff]
        %v6521 = vld [vmem:[#allocation2 + $0x938] sm:$0xff]
        %v6522 = vld [vmem:[#allocation2 + $0x940] sm:$0xff]
        %v6523 = vld [vmem:[#allocation2 + $0x948] sm:$0xff]
        %v6524 = vld [vmem:[#allocation2 + $0x950] sm:$0xff]
        %v6525 = vld [vmem:[#allocation2 + $0x958] sm:$0xff]
        %v6526 = vld [vmem:[#allocation2 + $0x960] sm:$0xff]
        %v6527 = vld [vmem:[#allocation2 + $0x968] sm:$0xff]
        %v6528 = vld [vmem:[#allocation2 + $0x970] sm:$0xff]
        %v6529 = vld [vmem:[#allocation2 + $0x978] sm:$0xff]
        %v6530 = vld [vmem:[#allocation2 + $0x980] sm:$0xff]
        %v6531 = vld [vmem:[#allocation2 + $0x988] sm:$0xff]
        %v6532 = vld [vmem:[#allocation2 + $0x990] sm:$0xff]
        %v6533 = vld [vmem:[#allocation2 + $0x998] sm:$0xff]
        %v6534 = vld [vmem:[#allocation2 + $0x9a0] sm:$0xff]
        %v6535 = vld [vmem:[#allocation2 + $0x9a8] sm:$0xff]
        %v6536 = vld [vmem:[#allocation2 + $0x9b0] sm:$0xff]
        %v6537 = vld [vmem:[#allocation2 + $0x9b8] sm:$0xff]
        %v6538 = vld [vmem:[#allocation2 + $0x9c0] sm:$0xff]
        %v6539 = vld [vmem:[#allocation2 + $0x9c8] sm:$0xff]
        %v6540 = vld [vmem:[#allocation2 + $0x9d0] sm:$0xff]
        %v6541 = vld [vmem:[#allocation2 + $0x9d8] sm:$0xff]
        %v6542 = vld [vmem:[#allocation2 + $0x9e0] sm:$0xff]
        %v6543 = vld [vmem:[#allocation2 + $0x9e8] sm:$0xff]
        %v6544 = vld [vmem:[#allocation2 + $0x9f0] sm:$0xff]
        %v6545 = vld [vmem:[#allocation2 + $0x9f8] sm:$0xff]
        %v6546 = vld [vmem:[#allocation2 + $0xa00] sm:$0xff]
        %v6547 = vld [vmem:[#allocation2 + $0xa08] sm:$0xff]
        %v6548 = vld [vmem:[#allocation2 + $0xa10] sm:$0xff]
        %v6549 = vld [vmem:[#allocation2 + $0xa18] sm:$0xff]
        %v6550 = vld [vmem:[#allocation2 + $0xa20] sm:$0xff]
        %v6551 = vld [vmem:[#allocation2 + $0xa28] sm:$0xff]
        %v6552 = vld [vmem:[#allocation2 + $0xa30] sm:$0xff]
        %v6553 = vld [vmem:[#allocation2 + $0xa38] sm:$0xff]
        %v6554 = vld [vmem:[#allocation2 + $0xa40] sm:$0xff]
        %v6555 = vld [vmem:[#allocation2 + $0xa48] sm:$0xff]
        %v6556 = vld [vmem:[#allocation2 + $0xa50] sm:$0xff]
        %v6557 = vld [vmem:[#allocation2 + $0xa58] sm:$0xff]
        %v6558 = vld [vmem:[#allocation2 + $0xa60] sm:$0xff]
        %v6559 = vld [vmem:[#allocation2 + $0xa68] sm:$0xff]
        %v6560 = vld [vmem:[#allocation2 + $0xa70] sm:$0xff]
        %v6561 = vld [vmem:[#allocation2 + $0xa78] sm:$0xff]
        %v6562 = vld [vmem:[#allocation2 + $0xa80] sm:$0xff]
        %v6563 = vld [vmem:[#allocation2 + $0xa88] sm:$0xff]
        %v6564 = vld [vmem:[#allocation2 + $0xa90] sm:$0xff]
        %v6565 = vld [vmem:[#allocation2 + $0xa98] sm:$0xff]
        %v6566 = vld [vmem:[#allocation2 + $0xaa0] sm:$0xff]
        %v6567 = vld [vmem:[#allocation2 + $0xaa8] sm:$0xff]
        %v6568 = vld [vmem:[#allocation2 + $0xab0] sm:$0xff]
        %v6569 = vld [vmem:[#allocation2 + $0xab8] sm:$0xff]
        %v6570 = vld [vmem:[#allocation2 + $0xac0] sm:$0xff]
        %v6571 = vld [vmem:[#allocation2 + $0xac8] sm:$0xff]
        %v6572 = vld [vmem:[#allocation2 + $0xad0] sm:$0xff]
        %v6573 = vld [vmem:[#allocation2 + $0xad8] sm:$0xff]
        %v6574 = vld [vmem:[#allocation2 + $0xae0] sm:$0xff]
        %v6575 = vld [vmem:[#allocation2 + $0xae8] sm:$0xff]
        %v6576 = vld [vmem:[#allocation2 + $0xaf0] sm:$0xff]
        %v6577 = vld [vmem:[#allocation2 + $0xaf8] sm:$0xff]
        %v6578 = vld [vmem:[#allocation2 + $0xb00] sm:$0xff]
        %v6579 = vld [vmem:[#allocation2 + $0xb08] sm:$0xff]
        %v6580 = vld [vmem:[#allocation2 + $0xb10] sm:$0xff]
        %v6581 = vld [vmem:[#allocation2 + $0xb18] sm:$0xff]
        %v6582 = vld [vmem:[#allocation2 + $0xb20] sm:$0xff]
        %v6583 = vld [vmem:[#allocation2 + $0xb28] sm:$0xff]
        %v6584 = vld [vmem:[#allocation2 + $0xb30] sm:$0xff]
        %v6585 = vld [vmem:[#allocation2 + $0xb38] sm:$0xff]
        %v6586 = vrot.slane %v5697, 2
        %v6587 = vrot.slane %v5698, 2
        %v6589 = vsel %vm5820, %v6587, 0
        %6591 = vmatprep.subr.mxu0 %v6467
        %6592 = vmatpush1.msra.mxu0 %v6466
        %6593 = vmatprep.subr.mxu0 %v6472
        %6594 = vmatpush1.msra.mxu0 %v6471
        %6595 = vmatprep.subr.mxu0 %v6477
        %6596 = vmatpush1.msra.mxu0 %v6476
        %6597 = vmatprep.subr.mxu0 %v6482
        %6598 = vmatpush1.msra.mxu0 %v6481
        %6599 = vmatprep.subr.mxu0 %v6487
        %6600 = vmatpush1.msra.mxu0 %v6486
        %6601 = vmatprep.subr.mxu0 %v6492
        %6602 = vmatpush1.msra.mxu0 %v6491
        %6603 = vmatprep.subr.mxu0 %v6497
        %6604 = vmatpush1.msra.mxu0 %v6496
        %6605 = vmatprep.subr.mxu0 %v6502
        %6606 = vmatpush1.msra.mxu0 %v6501
        %6607 = vmatprep.subr.mxu0 %v6507
        %6608 = vmatpush1.msra.mxu0 %v6506
        %6609 = vmatprep.subr.mxu0 %v6512
        %6610 = vmatpush1.msra.mxu0 %v6511
        %6611 = vmatprep.subr.mxu0 %v6517
        %6612 = vmatpush1.msra.mxu0 %v6516
        %6613 = vmatprep.subr.mxu0 %v6522
        %6614 = vmatpush1.msra.mxu0 %v6521
        %6615 = vmatprep.subr.mxu0 %v6527
        %6616 = vmatpush1.msra.mxu0 %v6526
        %6617 = vmatprep.subr.mxu0 %v6532
        %6618 = vmatpush1.msra.mxu0 %v6531
        %6619 = vmatprep.subr.mxu0 %v6537
        %6620 = vmatpush1.msra.mxu0 %v6536
        %6621 = vmatprep.subr.mxu0 %v6542
        %6622 = vmatpush1.msra.mxu0 %v6541
        %6623 = vmatprep.subr.mxu0 %v6547
        %6624 = vmatpush1.msra.mxu0 %v6546
        %6625 = vmatprep.subr.mxu0 %v6552
        %6626 = vmatpush1.msra.mxu0 %v6551
        %6627 = vmatprep.subr.mxu0 %v6557
        %6628 = vmatpush1.msra.mxu0 %v6556
        %6629 = vmatprep.subr.mxu0 %v6562
        %6630 = vmatpush1.msra.mxu0 %v6561
        %6631 = vmatprep.subr.mxu0 %v6567
        %6632 = vmatpush1.msra.mxu0 %v6566
        %6633 = vmatprep.subr.mxu0 %v6572
        %6634 = vmatpush1.msra.mxu0 %v6571
        %6635 = vmatprep.subr.mxu0 %v6577
        %6636 = vmatpush1.msra.mxu0 %v6576
        %6637 = vmatprep.subr.mxu0 %v6582
        %6638 = vmatpush1.msra.mxu0 %v6581
        %6639 = vmatprep.subr.mxu0 0.0
        %6640 = vmatpush1.msra.mxu0 0.0
        %6641 = vmatprep.subr.mxu0 0.0
        %6642 = vmatpush1.msra.mxu0 0.0
        %6643 = vmatprep.subr.mxu0 0.0
        %6644 = vmatpush1.msra.mxu0 0.0
        %6645 = vmatprep.subr.mxu0 0.0
        %6646 = vmatpush1.msra.mxu0 0.0
        %6647 = vmatprep.subr.mxu0 0.0
        %6648 = vmatpush1.msra.mxu0 0.0
        %6649 = vmatprep.subr.mxu0 0.0
        %6650 = vmatpush1.msra.mxu0 0.0
        %6651 = vmatprep.subr.mxu0 0.0
        %6652 = vmatpush1.msra.mxu0 0.0
        %6653 = vmatprep.subr.mxu0 0.0
        %6654 = vmatpush1.msra.mxu0 0.0
        %6655 = vmatprep.mubr.f32.mxu0 %v6589
        %6656 = vmatmul.mubr.f32.gmra.mrb[0].mxu0 %v6586
        %v6657 = vpop.f32.mrb[0].mxu0
        %v6658 = vadd.f32 0.0, %v6657
        %v6659 = vpop.f32.mrb[0].mxu0
        %v6660 = vadd.f32 0.0, %v6659
        %6661 = vdwg.mxu0
        %6662 = vmatprep.subr.mxu0 %v6469
        %6663 = vmatpush1.msra.mxu0 %v6468
        %6664 = vmatprep.subr.mxu0 %v6474
        %6665 = vmatpush1.msra.mxu0 %v6473
        %6666 = vmatprep.subr.mxu0 %v6479
        %6667 = vmatpush1.msra.mxu0 %v6478
        %6668 = vmatprep.subr.mxu0 %v6484
        %6669 = vmatpush1.msra.mxu0 %v6483
        %6670 = vmatprep.subr.mxu0 %v6489
        %6671 = vmatpush1.msra.mxu0 %v6488
        %6672 = vmatprep.subr.mxu0 %v6494
        %6673 = vmatpush1.msra.mxu0 %v6493
        %6674 = vmatprep.subr.mxu0 %v6499
        %6675 = vmatpush1.msra.mxu0 %v6498
        %6676 = vmatprep.subr.mxu0 %v6504
        %6677 = vmatpush1.msra.mxu0 %v6503
        %6678 = vmatprep.subr.mxu0 %v6509
        %6679 = vmatpush1.msra.mxu0 %v6508
        %6680 = vmatprep.subr.mxu0 %v6514
        %6681 = vmatpush1.msra.mxu0 %v6513
        %6682 = vmatprep.subr.mxu0 %v6519
        %6683 = vmatpush1.msra.mxu0 %v6518
        %6684 = vmatprep.subr.mxu0 %v6524
        %6685 = vmatpush1.msra.mxu0 %v6523
        %6686 = vmatprep.subr.mxu0 %v6529
        %6687 = vmatpush1.msra.mxu0 %v6528
        %6688 = vmatprep.subr.mxu0 %v6534
        %6689 = vmatpush1.msra.mxu0 %v6533
        %6690 = vmatprep.subr.mxu0 %v6539
        %6691 = vmatpush1.msra.mxu0 %v6538
        %6692 = vmatprep.subr.mxu0 %v6544
        %6693 = vmatpush1.msra.mxu0 %v6543
        %6694 = vmatprep.subr.mxu0 %v6549
        %6695 = vmatpush1.msra.mxu0 %v6548
        %6696 = vmatprep.subr.mxu0 %v6554
        %6697 = vmatpush1.msra.mxu0 %v6553
        %6698 = vmatprep.subr.mxu0 %v6559
        %6699 = vmatpush1.msra.mxu0 %v6558
        %6700 = vmatprep.subr.mxu0 %v6564
        %6701 = vmatpush1.msra.mxu0 %v6563
        %6702 = vmatprep.subr.mxu0 %v6569
        %6703 = vmatpush1.msra.mxu0 %v6568
        %6704 = vmatprep.subr.mxu0 %v6574
        %6705 = vmatpush1.msra.mxu0 %v6573
        %6706 = vmatprep.subr.mxu0 %v6579
        %6707 = vmatpush1.msra.mxu0 %v6578
        %6708 = vmatprep.subr.mxu0 %v6584
        %6709 = vmatpush1.msra.mxu0 %v6583
        %6710 = vmatprep.subr.mxu0 0.0
        %6711 = vmatpush1.msra.mxu0 0.0
        %6712 = vmatprep.subr.mxu0 0.0
        %6713 = vmatpush1.msra.mxu0 0.0
        %6714 = vmatprep.subr.mxu0 0.0
        %6715 = vmatpush1.msra.mxu0 0.0
        %6716 = vmatprep.subr.mxu0 0.0
        %6717 = vmatpush1.msra.mxu0 0.0
        %6718 = vmatprep.subr.mxu0 0.0
        %6719 = vmatpush1.msra.mxu0 0.0
        %6720 = vmatprep.subr.mxu0 0.0
        %6721 = vmatpush1.msra.mxu0 0.0
        %6722 = vmatprep.subr.mxu0 0.0
        %6723 = vmatpush1.msra.mxu0 0.0
        %6724 = vmatprep.subr.mxu0 0.0
        %6725 = vmatpush1.msra.mxu0 0.0
        %6726 = vmatprep.mubr.f32.mxu0 %v6589
        %6727 = vmatmul.mubr.f32.gmra.mrb[0].mxu0 %v6586
        %v6728 = vpop.f32.mrb[0].mxu0
        %v6729 = vadd.f32 0.0, %v6728
        %v6730 = vpop.f32.mrb[0].mxu0
        %v6731 = vadd.f32 0.0, %v6730
        %6732 = vdwg.mxu0
        %6733 = vmatprep.subr.mxu0 0.0
        %6734 = vmatpush1.msra.mxu0 %v6470
        %6735 = vmatprep.subr.mxu0 0.0
        %6736 = vmatpush1.msra.mxu0 %v6475
        %6737 = vmatprep.subr.mxu0 0.0
        %6738 = vmatpush1.msra.mxu0 %v6480
        %6739 = vmatprep.subr.mxu0 0.0
        %6740 = vmatpush1.msra.mxu0 %v6485
        %6741 = vmatprep.subr.mxu0 0.0
        %6742 = vmatpush1.msra.mxu0 %v6490
        %6743 = vmatprep.subr.mxu0 0.0
        %6744 = vmatpush1.msra.mxu0 %v6495
        %6745 = vmatprep.subr.mxu0 0.0
        %6746 = vmatpush1.msra.mxu0 %v6500
        %6747 = vmatprep.subr.mxu0 0.0
        %6748 = vmatpush1.msra.mxu0 %v6505
        %6749 = vmatprep.subr.mxu0 0.0
        %6750 = vmatpush1.msra.mxu0 %v6510
        %6751 = vmatprep.subr.mxu0 0.0
        %6752 = vmatpush1.msra.mxu0 %v6515
        %6753 = vmatprep.subr.mxu0 0.0
        %6754 = vmatpush1.msra.mxu0 %v6520
        %6755 = vmatprep.subr.mxu0 0.0
        %6756 = vmatpush1.msra.mxu0 %v6525
        %6757 = vmatprep.subr.mxu0 0.0
        %6758 = vmatpush1.msra.mxu0 %v6530
        %6759 = vmatprep.subr.mxu0 0.0
        %6760 = vmatpush1.msra.mxu0 %v6535
        %6761 = vmatprep.subr.mxu0 0.0
        %6762 = vmatpush1.msra.mxu0 %v6540
        %6763 = vmatprep.subr.mxu0 0.0
        %6764 = vmatpush1.msra.mxu0 %v6545
        %6765 = vmatprep.subr.mxu0 0.0
        %6766 = vmatpush1.msra.mxu0 %v6550
        %6767 = vmatprep.subr.mxu0 0.0
        %6768 = vmatpush1.msra.mxu0 %v6555
        %6769 = vmatprep.subr.mxu0 0.0
        %6770 = vmatpush1.msra.mxu0 %v6560
        %6771 = vmatprep.subr.mxu0 0.0
        %6772 = vmatpush1.msra.mxu0 %v6565
        %6773 = vmatprep.subr.mxu0 0.0
        %6774 = vmatpush1.msra.mxu0 %v6570
        %6775 = vmatprep.subr.mxu0 0.0
        %6776 = vmatpush1.msra.mxu0 %v6575
        %6777 = vmatprep.subr.mxu0 0.0
        %6778 = vmatpush1.msra.mxu0 %v6580
        %6779 = vmatprep.subr.mxu0 0.0
        %6780 = vmatpush1.msra.mxu0 %v6585
        %6781 = vmatprep.subr.mxu0 0.0
        %6782 = vmatpush1.msra.mxu0 0.0
        %6783 = vmatprep.subr.mxu0 0.0
        %6784 = vmatpush1.msra.mxu0 0.0
        %6785 = vmatprep.subr.mxu0 0.0
        %6786 = vmatpush1.msra.mxu0 0.0
        %6787 = vmatprep.subr.mxu0 0.0
        %6788 = vmatpush1.msra.mxu0 0.0
        %6789 = vmatprep.subr.mxu0 0.0
        %6790 = vmatpush1.msra.mxu0 0.0
        %6791 = vmatprep.subr.mxu0 0.0
        %6792 = vmatpush1.msra.mxu0 0.0
        %6793 = vmatprep.subr.mxu0 0.0
        %6794 = vmatpush1.msra.mxu0 0.0
        %6795 = vmatprep.subr.mxu0 0.0
        %6796 = vmatpush1.msra.mxu0 0.0
        %6797 = vmatprep.mubr.f32.mxu0 %v6589
        %6798 = vmatmul.mubr.f32.gmra.mrb[0].mxu0 %v6586
        %v6799 = vpop.f32.mrb[0].mxu0
        %v6800 = vadd.f32 0.0, %v6799
        %v6801 = vpop.f32.mrb[0].mxu0
        %6802 = vdwg.mxu0
        %v6808 = vcombine.low %v6658, %v6660
        %v6809 = vcombine.low %v6729, %v6731
        %v6811 = vunpack.c.l.s4 1966171168
        %v6812 = vunpack.c.0.s8 %v6811
        %v6813 = vlaneseq
        %v6814 = vshrl.u32 %v6813, 7
        %v6815 = vsub.s32 %v6812, %v6814
        %v6816 = vrot.slane %v6808, %v6815
        %v6818 = vunpack.c.l.s4 1966171168
        %v6819 = vunpack.c.0.s8 %v6818
        %v6820 = vlaneseq
        %v6821 = vshrl.u32 %v6820, 7
        %v6822 = vsub.s32 %v6819, %v6821
        %v6823 = vrot.slane %v6809, %v6822
        %v6825 = vunpack.c.l.s4 1966171168
        %v6826 = vunpack.c.0.s8 %v6825
        %v6827 = vlaneseq
        %v6828 = vshrl.u32 %v6827, 7
        %v6829 = vsub.s32 %v6826, %v6828
        %v6830 = vrot.slane %v6800, %v6829
        %v6831 = vcombine.low %v6816, %v6823
        %v6833 = vunpack.c.l.s4 1966171168
        %v6834 = vunpack.c.0.s8 %v6833
        %v6835 = vlaneseq
        %v6836 = vshrl.u32 %v6835, 7
        %v6837 = vsub.s32 %v6834, %v6836
        %v6838 = vrot.slane %v6831, %v6837
        %v6840 = vunpack.c.l.s4 1966171168
        %v6841 = vunpack.c.0.s8 %v6840
        %v6842 = vlaneseq
        %v6843 = vshrl.u32 %v6842, 7
        %v6844 = vsub.s32 %v6841, %v6843
        %v6845 = vrot.slane %v6830, %v6844
        %v6846 = vcombine.low %v6838, %v6845
        %v6848 = vadd.f32 %v6465, %v6846
        %v6849 = vmax.f32 %v6848, 0.0
        %v6850 = vld [vmem:[%s13] sm:$0xff]
        %v6851 = vld [vmem:[%s13 + $0x8] sm:$0xff]
        %v6852 = vld [vmem:[%s13 + $0x10] sm:$0xff]
        %v6853 = vld [vmem:[%s13 + $0x18] sm:$0xff]
        %v6854 = vld [vmem:[%s13 + $0x20] sm:$0xff]
        %v6855 = vld [vmem:[%s13 + $0x28] sm:$0xff]
        %v6856 = vld [vmem:[%s13 + $0x30] sm:$0xff]
        %v6857 = vld [vmem:[%s13 + $0x38] sm:$0xff]
        %v6858 = vld [vmem:[%s13 + $0x40] sm:$0xff]
        %v6859 = vld [vmem:[%s13 + $0x48] sm:$0xff]
        %v6860 = vld [vmem:[%s13 + $0x50] sm:$0xff]
        %v6861 = vld [vmem:[%s13 + $0x58] sm:$0xff]
        %v6862 = vld [vmem:[%s13 + $0x60] sm:$0xff]
        %v6863 = vld [vmem:[%s13 + $0x68] sm:$0xff]
        %v6864 = vld [vmem:[%s13 + $0x70] sm:$0xff]
        %v6865 = vld [vmem:[%s13 + $0x78] sm:$0xff]
        %v6866 = vld [vmem:[%s13 + $0x80] sm:$0xff]
        %v6867 = vld [vmem:[%s13 + $0x88] sm:$0xff]
        %v6868 = vld [vmem:[%s13 + $0x90] sm:$0xff]
        %v6869 = vld [vmem:[%s13 + $0x98] sm:$0xff]
        %v6870 = vld [vmem:[%s13 + $0xa0] sm:$0xff]
        %v6871 = vld [vmem:[%s13 + $0xa8] sm:$0xff]
        %v6872 = vld [vmem:[%s13 + $0xb0] sm:$0xff]
        %v6873 = vld [vmem:[%s13 + $0xb8] sm:$0xff]
        %v6874 = vld [vmem:[%s13 + $0xc0] sm:$0xff]
        %v6875 = vld [vmem:[%s13 + $0xc8] sm:$0xff]
        %v6876 = vld [vmem:[%s13 + $0xd0] sm:$0xff]
        %v6877 = vld [vmem:[%s13 + $0xd8] sm:$0xff]
        %v6878 = vld [vmem:[%s13 + $0xe0] sm:$0xff]
        %v6879 = vld [vmem:[%s13 + $0xe8] sm:$0xff]
        %v6880 = vld [vmem:[%s13 + $0xf0] sm:$0xff]
        %v6881 = vld [vmem:[%s13 + $0xf8] sm:$0xff]
        %v6882 = vld [vmem:[%s13 + $0x100] sm:$0xff]
        %v6883 = vld [vmem:[%s13 + $0x108] sm:$0xff]
        %v6884 = vld [vmem:[%s13 + $0x110] sm:$0xff]
        %v6885 = vld [vmem:[%s13 + $0x118] sm:$0xff]
        %v6886 = vld [vmem:[%s13 + $0x120] sm:$0xff]
        %v6887 = vld [vmem:[%s13 + $0x128] sm:$0xff]
        %v6888 = vld [vmem:[%s13 + $0x130] sm:$0xff]
        %v6889 = vld [vmem:[%s13 + $0x138] sm:$0xff]
        %v6890 = vld [vmem:[%s13 + $0x140] sm:$0xff]
        %v6891 = vld [vmem:[%s13 + $0x148] sm:$0xff]
        %v6892 = vld [vmem:[%s13 + $0x150] sm:$0xff]
        %v6893 = vld [vmem:[%s13 + $0x158] sm:$0xff]
        %v6894 = vld [vmem:[%s13 + $0x160] sm:$0xff]
        %v6895 = vld [vmem:[%s13 + $0x168] sm:$0xff]
        %v6896 = vld [vmem:[%s13 + $0x170] sm:$0xff]
        %v6897 = vld [vmem:[%s13 + $0x178] sm:$0xff]
        %v6898 = vld [vmem:[%s13 + $0x180] sm:$0xff]
        %v6899 = vld [vmem:[%s13 + $0x188] sm:$0xff]
        %v6900 = vld [vmem:[%s13 + $0x190] sm:$0xff]
        %v6901 = vld [vmem:[%s13 + $0x198] sm:$0xff]
        %v6902 = vld [vmem:[%s13 + $0x1a0] sm:$0xff]
        %v6903 = vld [vmem:[%s13 + $0x1a8] sm:$0xff]
        %v6904 = vld [vmem:[%s13 + $0x1b0] sm:$0xff]
        %v6905 = vld [vmem:[%s13 + $0x1b8] sm:$0xff]
        %v6906 = vld [vmem:[%s13 + $0x1c0] sm:$0xff]
        %v6907 = vld [vmem:[%s13 + $0x1c8] sm:$0xff]
        %v6908 = vld [vmem:[%s13 + $0x1d0] sm:$0xff]
        %v6909 = vld [vmem:[%s13 + $0x1d8] sm:$0xff]
        %v6910 = vld [vmem:[%s13 + $0x1e0] sm:$0xff]
        %v6911 = vld [vmem:[%s13 + $0x1e8] sm:$0xff]
        %v6912 = vld [vmem:[%s13 + $0x1f0] sm:$0xff]
        %v6913 = vld [vmem:[%s13 + $0x1f8] sm:$0xff]
        %v6914 = vld [vmem:[%s13 + $0x200] sm:$0xff]
        %v6915 = vld [vmem:[%s13 + $0x208] sm:$0xff]
        %v6916 = vld [vmem:[%s13 + $0x210] sm:$0xff]
        %v6917 = vld [vmem:[%s13 + $0x218] sm:$0xff]
        %v6918 = vld [vmem:[%s13 + $0x220] sm:$0xff]
        %v6919 = vld [vmem:[%s13 + $0x228] sm:$0xff]
        %v6920 = vld [vmem:[%s13 + $0x230] sm:$0xff]
        %v6921 = vld [vmem:[%s13 + $0x238] sm:$0xff]
        %v6922 = vld [vmem:[%s14] sm:$0x1]
        %v6924 = vlaneseq
        %v6925 = vshrl.u32 %v6924, 7
        %v6926 = vsub.s32 0, %v6925
        %v6927 = vrot.slane %v6849, %v6926
        %v6928 = vlaneseq
        %v6929 = vshrl.u32 %v6928, 7
        %v6930 = vsub.s32 1, %v6929
        %v6931 = vrot.slane %v6849, %v6930
        %v6932 = vlaneseq
        %v6933 = vshrl.u32 %v6932, 7
        %v6934 = vsub.s32 2, %v6933
        %v6935 = vrot.slane %v6849, %v6934
        %v6936 = vlaneseq
        %v6937 = vshrl.u32 %v6936, 7
        %v6938 = vsub.s32 3, %v6937
        %v6939 = vrot.slane %v6849, %v6938
        %v6940 = vlaneseq
        %v6941 = vshrl.u32 %v6940, 7
        %v6942 = vsub.s32 4, %v6941
        %v6943 = vrot.slane %v6849, %v6942
        %v6948 = vsel %vm5820, %v6943, 0
        %6950 = vmatprep.subr.mxu0 0.0
        %6951 = vmatpush1.msra.mxu0 %v6850
        %6952 = vmatprep.subr.mxu0 0.0
        %6953 = vmatpush1.msra.mxu0 %v6851
        %6954 = vmatprep.subr.mxu0 0.0
        %6955 = vmatpush1.msra.mxu0 %v6852
        %6956 = vmatprep.subr.mxu0 0.0
        %6957 = vmatpush1.msra.mxu0 %v6853
        %6958 = vmatprep.subr.mxu0 0.0
        %6959 = vmatpush1.msra.mxu0 %v6854
        %6960 = vmatprep.subr.mxu0 0.0
        %6961 = vmatpush1.msra.mxu0 %v6855
        %6962 = vmatprep.subr.mxu0 0.0
        %6963 = vmatpush1.msra.mxu0 %v6856
        %6964 = vmatprep.subr.mxu0 0.0
        %6965 = vmatpush1.msra.mxu0 %v6857
        %6966 = vmatprep.subr.mxu0 0.0
        %6967 = vmatpush1.msra.mxu0 %v6858
        %6968 = vmatprep.subr.mxu0 0.0
        %6969 = vmatpush1.msra.mxu0 %v6859
        %6970 = vmatprep.subr.mxu0 0.0
        %6971 = vmatpush1.msra.mxu0 %v6860
        %6972 = vmatprep.subr.mxu0 0.0
        %6973 = vmatpush1.msra.mxu0 %v6861
        %6974 = vmatprep.subr.mxu0 0.0
        %6975 = vmatpush1.msra.mxu0 %v6862
        %6976 = vmatprep.subr.mxu0 0.0
        %6977 = vmatpush1.msra.mxu0 %v6863
        %6978 = vmatprep.subr.mxu0 0.0
        %6979 = vmatpush1.msra.mxu0 %v6864
        %6980 = vmatprep.subr.mxu0 0.0
        %6981 = vmatpush1.msra.mxu0 %v6865
        %6982 = vmatprep.subr.mxu0 0.0
        %6983 = vmatpush1.msra.mxu0 %v6866
        %6984 = vmatprep.subr.mxu0 0.0
        %6985 = vmatpush1.msra.mxu0 %v6867
        %6986 = vmatprep.subr.mxu0 0.0
        %6987 = vmatpush1.msra.mxu0 %v6868
        %6988 = vmatprep.subr.mxu0 0.0
        %6989 = vmatpush1.msra.mxu0 %v6869
        %6990 = vmatprep.subr.mxu0 0.0
        %6991 = vmatpush1.msra.mxu0 %v6870
        %6992 = vmatprep.subr.mxu0 0.0
        %6993 = vmatpush1.msra.mxu0 %v6871
        %6994 = vmatprep.subr.mxu0 0.0
        %6995 = vmatpush1.msra.mxu0 %v6872
        %6996 = vmatprep.subr.mxu0 0.0
        %6997 = vmatpush1.msra.mxu0 %v6873
        %6998 = vmatprep.subr.mxu0 0.0
        %6999 = vmatpush1.msra.mxu0 %v6874
        %7000 = vmatprep.subr.mxu0 0.0
        %7001 = vmatpush1.msra.mxu0 %v6875
        %7002 = vmatprep.subr.mxu0 0.0
        %7003 = vmatpush1.msra.mxu0 %v6876
        %7004 = vmatprep.subr.mxu0 0.0
        %7005 = vmatpush1.msra.mxu0 %v6877
        %7006 = vmatprep.subr.mxu0 0.0
        %7007 = vmatpush1.msra.mxu0 %v6878
        %7008 = vmatprep.subr.mxu0 0.0
        %7009 = vmatpush1.msra.mxu0 %v6879
        %7010 = vmatprep.subr.mxu0 0.0
        %7011 = vmatpush1.msra.mxu0 %v6880
        %7012 = vmatprep.subr.mxu0 0.0
        %7013 = vmatpush1.msra.mxu0 %v6881
        %7014 = vmatprep.mubr.f32.mxu0 %v6931
        %7015 = vmatmul.mubr.f32.gmra.mrb[0].mxu0 %v6927
        %v7016 = vpop.f32.mrb[0].mxu0
        %v7017 = vadd.f32 %v6922, %v7016
        %v7018 = vpop.f32.mrb[0].mxu0
        %7019 = vdwg.mxu0
        %7020 = vmatprep.subr.mxu0 0.0
        %7021 = vmatpush1.msra.mxu0 %v6882
        %7022 = vmatprep.subr.mxu0 0.0
        %7023 = vmatpush1.msra.mxu0 %v6883
        %7024 = vmatprep.subr.mxu0 0.0
        %7025 = vmatpush1.msra.mxu0 %v6884
        %7026 = vmatprep.subr.mxu0 0.0
        %7027 = vmatpush1.msra.mxu0 %v6885
        %7028 = vmatprep.subr.mxu0 0.0
        %7029 = vmatpush1.msra.mxu0 %v6886
        %7030 = vmatprep.subr.mxu0 0.0
        %7031 = vmatpush1.msra.mxu0 %v6887
        %7032 = vmatprep.subr.mxu0 0.0
        %7033 = vmatpush1.msra.mxu0 %v6888
        %7034 = vmatprep.subr.mxu0 0.0
        %7035 = vmatpush1.msra.mxu0 %v6889
        %7036 = vmatprep.subr.mxu0 0.0
        %7037 = vmatpush1.msra.mxu0 %v6890
        %7038 = vmatprep.subr.mxu0 0.0
        %7039 = vmatpush1.msra.mxu0 %v6891
        %7040 = vmatprep.subr.mxu0 0.0
        %7041 = vmatpush1.msra.mxu0 %v6892
        %7042 = vmatprep.subr.mxu0 0.0
        %7043 = vmatpush1.msra.mxu0 %v6893
        %7044 = vmatprep.subr.mxu0 0.0
        %7045 = vmatpush1.msra.mxu0 %v6894
        %7046 = vmatprep.subr.mxu0 0.0
        %7047 = vmatpush1.msra.mxu0 %v6895
        %7048 = vmatprep.subr.mxu0 0.0
        %7049 = vmatpush1.msra.mxu0 %v6896
        %7050 = vmatprep.subr.mxu0 0.0
        %7051 = vmatpush1.msra.mxu0 %v6897
        %7052 = vmatprep.subr.mxu0 0.0
        %7053 = vmatpush1.msra.mxu0 %v6898
        %7054 = vmatprep.subr.mxu0 0.0
        %7055 = vmatpush1.msra.mxu0 %v6899
        %7056 = vmatprep.subr.mxu0 0.0
        %7057 = vmatpush1.msra.mxu0 %v6900
        %7058 = vmatprep.subr.mxu0 0.0
        %7059 = vmatpush1.msra.mxu0 %v6901
        %7060 = vmatprep.subr.mxu0 0.0
        %7061 = vmatpush1.msra.mxu0 %v6902
        %7062 = vmatprep.subr.mxu0 0.0
        %7063 = vmatpush1.msra.mxu0 %v6903
        %7064 = vmatprep.subr.mxu0 0.0
        %7065 = vmatpush1.msra.mxu0 %v6904
        %7066 = vmatprep.subr.mxu0 0.0
        %7067 = vmatpush1.msra.mxu0 %v6905
        %7068 = vmatprep.subr.mxu0 0.0
        %7069 = vmatpush1.msra.mxu0 %v6906
        %7070 = vmatprep.subr.mxu0 0.0
        %7071 = vmatpush1.msra.mxu0 %v6907
        %7072 = vmatprep.subr.mxu0 0.0
        %7073 = vmatpush1.msra.mxu0 %v6908
        %7074 = vmatprep.subr.mxu0 0.0
        %7075 = vmatpush1.msra.mxu0 %v6909
        %7076 = vmatprep.subr.mxu0 0.0
        %7077 = vmatpush1.msra.mxu0 %v6910
        %7078 = vmatprep.subr.mxu0 0.0
        %7079 = vmatpush1.msra.mxu0 %v6911
        %7080 = vmatprep.subr.mxu0 0.0
        %7081 = vmatpush1.msra.mxu0 %v6912
        %7082 = vmatprep.subr.mxu0 0.0
        %7083 = vmatpush1.msra.mxu0 %v6913
        %7084 = vmatprep.mubr.f32.mxu0 %v6939
        %7085 = vmatmul.mubr.f32.gmra.mrb[0].mxu0 %v6935
        %v7086 = vpop.f32.mrb[0].mxu0
        %v7087 = vadd.f32 %v7017, %v7086
        %v7088 = vpop.f32.mrb[0].mxu0
        %7089 = vdwg.mxu0
        %7090 = vmatprep.subr.mxu0 0.0
        %7091 = vmatpush1.msra.mxu0 %v6914
        %7092 = vmatprep.subr.mxu0 0.0
        %7093 = vmatpush1.msra.mxu0 %v6915
        %7094 = vmatprep.subr.mxu0 0.0
        %7095 = vmatpush1.msra.mxu0 %v6916
        %7096 = vmatprep.subr.mxu0 0.0
        %7097 = vmatpush1.msra.mxu0 %v6917
        %7098 = vmatprep.subr.mxu0 0.0
        %7099 = vmatpush1.msra.mxu0 %v6918
        %7100 = vmatprep.subr.mxu0 0.0
        %7101 = vmatpush1.msra.mxu0 %v6919
        %7102 = vmatprep.subr.mxu0 0.0
        %7103 = vmatpush1.msra.mxu0 %v6920
        %7104 = vmatprep.subr.mxu0 0.0
        %7105 = vmatpush1.msra.mxu0 %v6921
        %7106 = vmatprep.subr.mxu0 0.0
        %7107 = vmatpush1.msra.mxu0 0.0
        %7108 = vmatprep.subr.mxu0 0.0
        %7109 = vmatpush1.msra.mxu0 0.0
        %7110 = vmatprep.subr.mxu0 0.0
        %7111 = vmatpush1.msra.mxu0 0.0
        %7112 = vmatprep.subr.mxu0 0.0
        %7113 = vmatpush1.msra.mxu0 0.0
        %7114 = vmatprep.subr.mxu0 0.0
        %7115 = vmatpush1.msra.mxu0 0.0
        %7116 = vmatprep.subr.mxu0 0.0
        %7117 = vmatpush1.msra.mxu0 0.0
        %7118 = vmatprep.subr.mxu0 0.0
        %7119 = vmatpush1.msra.mxu0 0.0
        %7120 = vmatprep.subr.mxu0 0.0
        %7121 = vmatpush1.msra.mxu0 0.0
        %7122 = vmatprep.subr.mxu0 0.0
        %7123 = vmatpush1.msra.mxu0 0.0
        %7124 = vmatprep.subr.mxu0 0.0
        %7125 = vmatpush1.msra.mxu0 0.0
        %7126 = vmatprep.subr.mxu0 0.0
        %7127 = vmatpush1.msra.mxu0 0.0
        %7128 = vmatprep.subr.mxu0 0.0
        %7129 = vmatpush1.msra.mxu0 0.0
        %7130 = vmatprep.subr.mxu0 0.0
        %7131 = vmatpush1.msra.mxu0 0.0
        %7132 = vmatprep.subr.mxu0 0.0
        %7133 = vmatpush1.msra.mxu0 0.0
        %7134 = vmatprep.subr.mxu0 0.0
        %7135 = vmatpush1.msra.mxu0 0.0
        %7136 = vmatprep.subr.mxu0 0.0
        %7137 = vmatpush1.msra.mxu0 0.0
        %7138 = vmatprep.subr.mxu0 0.0
        %7139 = vmatpush1.msra.mxu0 0.0
        %7140 = vmatprep.subr.mxu0 0.0
        %7141 = vmatpush1.msra.mxu0 0.0
        %7142 = vmatprep.subr.mxu0 0.0
        %7143 = vmatpush1.msra.mxu0 0.0
        %7144 = vmatprep.subr.mxu0 0.0
        %7145 = vmatpush1.msra.mxu0 0.0
        %7146 = vmatprep.subr.mxu0 0.0
        %7147 = vmatpush1.msra.mxu0 0.0
        %7148 = vmatprep.subr.mxu0 0.0
        %7149 = vmatpush1.msra.mxu0 0.0
        %7150 = vmatprep.subr.mxu0 0.0
        %7151 = vmatpush1.msra.mxu0 0.0
        %7152 = vmatprep.subr.mxu0 0.0
        %7153 = vmatpush1.msra.mxu0 0.0
        %7154 = vmatprep.mubr.f32.mxu0 0.0
        %7155 = vmatmul.mubr.f32.gmra.mrb[0].mxu0 %v6948
        %v7156 = vpop.f32.mrb[0].mxu0
        %v7157 = vadd.f32 %v7087, %v7156
        %v7158 = vpop.f32.mrb[0].mxu0
        %7159 = vdwg.mxu0
        %v7160 = vmax.f32 %v7157, 0.0
        %vm7161 = vcmask 204800
        %v7162 = vsel %vm7161, %v7160, -inf
        %7163 = vmax.xlane.f32.xlu0 %v7162
        %v7164 = vpop.xlane.xlu0 %7163
        %v7165 = vsub.f32 %v7160, %v7164
        %v7166 = vmul.f32 %v7165, 1.442695
        %v7167 = vpow.pop %v7166
        %v7168 = vsel %vm7161, %v7167, 0.0
        %7169 = vadd.xlane.f32.xlu0 %v7168
        %v7170 = vpop.xlane.xlu0 %7169
        %v7171 = vlog2.pop %v7170
        %v7172 = vmul.f32 %v7171, 0.6931472
        %v7173 = vsub.f32 %v7165, %v7172
        %7174 = vst.msk [vmem:[%s501] sm:$0x1] %vm7161, %v7173
        %s7175 = sand.u32 %s358, 1
        %s7176 = scalar_lea.sflag [#allocation4], %s7175
        %s7177 = sand.u32 %s358, 1
        %s7178 = scalar_lea.vmem [#allocation5], %s7177
        // Predicated region
        $region85: #{e2e_forward_pallas.1} parent=79 // pred_check
          %p7179 = pneg %p368
        $region86: #{e2e_forward_pallas.1} parent=79 // pred_check_branch
          %7181 = sbr.rel (%p7179) target = $region88
        $region87: #{e2e_forward_pallas.1} parent=79 // pred_region
          %s7183 = ssub.s32 16, 16
          %7184 = vsyncadd %s7176, %s7183
          %s7185 = smul.addr %s30, 16
          %s7186 = scalar_lea.hbm %s15, %s7185
          %s7188 = sshll.u32 %s7178, 4
          %s7189 = int_to_ptr.vmem [resolvable:$true] %s7188
          %7191 = dma.vmem_to_hbm [thread:$0]  %s7189, 16, %s7186, %s7176
        $region88: #{e2e_forward_pallas.1} parent=79 // pred_fallthru
          _
      $region80: #{e2e_forward_pallas.1} parent=5 // pred_fallthru
        _
      %p7192 = scmp.le.s32.totalorder 2, %s25
      // Predicated region
      $region89: #{e2e_forward_pallas.1} parent=5 // pred_check
        %p7193 = pneg %p7192
      $region90: #{e2e_forward_pallas.1} parent=5 // pred_check_branch
        %7195 = sbr.rel (%p7193) target = $region92
      $region91: #{e2e_forward_pallas.1} parent=5 // pred_region
        %s7196 = ssub.s32 %s25, 2
        // Predicated region
        $region93: #{e2e_forward_pallas.1} parent=91 // pred_check
          %p7197 = pneg %p374
        $region94: #{e2e_forward_pallas.1} parent=91 // pred_check_branch
          %7199 = sbr.rel (%p7197) target = $region96
        $region95: #{e2e_forward_pallas.1} parent=91 // pred_region
          %s7200 = sand.u32 %s359, 1
          %s7201 = scalar_lea.sflag [#allocation4], %s7200
          %s7202 = sand.u32 %s359, 1
          %s7203 = scalar_lea.vmem [#allocation5], %s7202
          %7204 = dma.done %s7201, 16
        $region96: #{e2e_forward_pallas.1} parent=91 // pred_fallthru
          _
      $region92: #{e2e_forward_pallas.1} parent=5 // pred_fallthru
        _
    $region6: #{e2e_forward_pallas.1} parent=1 // loop_footer
      %s29 = sadd.s32 1, %s25
    $region7: #{e2e_forward_pallas.1} parent=1 // loop_footer_branch
      %24 = sbr.rel target = $region3
    $region8: #{e2e_forward_pallas.1} parent=1 // loop_exit
      _
    %7205 = vsyncpa [#allocation3], 1
    %s7206 = scalar_lea.sflag [#allocation3], 1
    %7207 = vsyncpa %s7206, 1
    %7208 = vsyncpa [#allocation4], 1
    %s7209 = scalar_lea.sflag [#allocation4], 1
    %7210 = vsyncpa %s7209, 1

</llo_original>
